<compile_context>
chip_gen: v6e
topology: v6e:2x2x1
jax: 0.10.0
libtpu: 0.0.40
codegen_flags: <defaults>
</compile_context>

<pallas_src>
import functools

import jax
import jax.numpy as jnp
from jax.experimental import pallas as pl
from jax.experimental.pallas import tpu as pltpu

LANE = 128                      # lane-dense channel padding target
_VMEM_LIMIT = 32 * 1024 * 1024  # safe on v5e/v6e (128 MiB) and v7x (64 MiB); blocks are ~1 MiB


def _compiler_params():
    return pltpu.CompilerParams(
        dimension_semantics=("parallel",),
        vmem_limit_bytes=_VMEM_LIMIT,
    )


# ----------------------------------------------------------------------------
# Pallas kernels
# ----------------------------------------------------------------------------
def _matmul_affine_kernel(x_ref, w_ref, s_ref, b_ref, o_ref, *, apply_relu):
    """o = relu?( (x @ w) * s + b ), s/b broadcast over rows.  Used for conv1 (K=9)."""
    y = jnp.dot(x_ref[...], w_ref[...], preferred_element_type=jnp.float32)
    y = y * s_ref[...] + b_ref[...]
    if apply_relu:
        y = jnp.maximum(y, 0.0)
    o_ref[...] = y.astype(o_ref.dtype)


def _conv3x3_strip_kernel(x_ref, w_ref, s_ref, b_ref, o_ref, *, w_strip, out_rows,
                          apply_relu):
    """3x3 conv + affine on a flattened, spatially padded NHWC 'strip'.

    x_ref: (rows_in, Cin_pad) f32  -- padded image flattened row-major (H_pad, W_strip, C)
    w_ref: (9, Cin_pad, Cout_pad) bf16, tap index t = dy*3 + dx
    out row r = h*w_strip + w; tap contribution = x[r + dy*w_strip + dx] @ W[t].
    """
    x = x_ref[...]
    cout = o_ref.shape[-1]
    acc = jnp.zeros((out_rows, cout), jnp.float32)
    for t in range(9):
        off = (t // 3) * w_strip + (t % 3)
        xt = x[off:off + out_rows, :].astype(jnp.bfloat16)
        acc = acc + jnp.dot(xt, w_ref[t], preferred_element_type=jnp.float32)
    y = acc * s_ref[...] + b_ref[...]
    if apply_relu:
        y = jnp.maximum(y, 0.0)
    o_ref[...] = y.astype(o_ref.dtype)


def _mlp_kernel(x_ref, w1_ref, b1_ref, w2_ref, b2_ref, o_ref):
    """Fused Linear(3136->128) + ReLU + Linear(128->num_classes, padded to 128)."""
    h = jnp.dot(x_ref[...], w1_ref[...], preferred_element_type=jnp.float32)
    h = jnp.maximum(h + b1_ref[...], 0.0)
    y = jnp.dot(h.astype(jnp.bfloat16), w2_ref[...], preferred_element_type=jnp.float32)
    o_ref[...] = (y + b2_ref[...]).astype(o_ref.dtype)


# ----------------------------------------------------------------------------
# pallas_call wrappers
# ----------------------------------------------------------------------------
def matmul_affine(x, w, s, b, *, relu, tm):
    M, K = x.shape
    N = w.shape[1]
    if M % tm != 0:
        tm = M                                   # fall back to a single block
    kernel = functools.partial(_matmul_affine_kernel, apply_relu=relu)
    return pl.pallas_call(
        kernel,
        out_shape=jax.ShapeDtypeStruct((M, N), jnp.float32),
        grid=(M // tm,),
        in_specs=[
            pl.BlockSpec((tm, K), lambda i: (i, 0)),
            pl.BlockSpec((K, N), lambda i: (0, 0)),
            pl.BlockSpec((1, N), lambda i: (0, 0)),
            pl.BlockSpec((1, N), lambda i: (0, 0)),
        ],
        out_specs=pl.BlockSpec((tm, N), lambda i: (i, 0)),
        compiler_params=_compiler_params(),
    )(x, w, s, b)


def conv3x3_strip(x_strip, w_taps, s, b, *, w_strip, out_rows, relu):
    B, rows_in, cin = x_strip.shape
    cout = w_taps.shape[2]
    kernel = functools.partial(_conv3x3_strip_kernel, w_strip=w_strip,
                               out_rows=out_rows, apply_relu=relu)
    return pl.pallas_call(
        kernel,
        out_shape=jax.ShapeDtypeStruct((B, out_rows, cout), jnp.float32),
        grid=(B,),
        in_specs=[
            pl.BlockSpec((None, rows_in, cin), lambda i: (i, 0, 0)),
            pl.BlockSpec((9, cin, cout), lambda i: (0, 0, 0)),
            pl.BlockSpec((1, cout), lambda i: (0, 0)),
            pl.BlockSpec((1, cout), lambda i: (0, 0)),
        ],
        out_specs=pl.BlockSpec((None, out_rows, cout), lambda i: (i, 0, 0)),
        compiler_params=_compiler_params(),
    )(x_strip, w_taps, s, b)


def mlp_fused(x, w1, b1, w2, b2):
    M, K = x.shape
    H = w1.shape[1]
    N = w2.shape[1]
    bm = M if M <= 256 else 256
    if M % bm != 0:
        bm = M                                   # fall back to a single block
    return pl.pallas_call(
        _mlp_kernel,
        out_shape=jax.ShapeDtypeStruct((M, N), jnp.float32),
        grid=(M // bm,),
        in_specs=[
            pl.BlockSpec((bm, K), lambda i: (i, 0)),
            pl.BlockSpec((K, H), lambda i: (0, 0)),
            pl.BlockSpec((1, H), lambda i: (0, 0)),
            pl.BlockSpec((H, N), lambda i: (0, 0)),
            pl.BlockSpec((1, N), lambda i: (0, 0)),
        ],
        out_specs=pl.BlockSpec((bm, N), lambda i: (i, 0)),
        compiler_params=_compiler_params(),
    )(x, w1, b1, w2, b2)


# ----------------------------------------------------------------------------
# Glue: im2col (conv1 only), pooling, parameter preparation, forward
# ----------------------------------------------------------------------------
def im2col_3x3_same(x_nhwc):
    """3x3 / pad=1 patches. Column ordering matches (kh, kw, Cin)."""
    B, H, W, C = x_nhwc.shape
    xp = jnp.pad(x_nhwc, ((0, 0), (1, 1), (1, 1), (0, 0)))
    cols = []
    for dy in range(3):
        for dx in range(3):
            cols.append(xp[:, dy:dy + H, dx:dx + W, :])
    patches = jnp.stack(cols, axis=-2)            # (B, H, W, 9, C)
    return patches.reshape(B * H * W, 9 * C)


def maxpool2x2(x):
    """2x2 max pool (stride 2) on NHWC with even H, W. Plain JAX glue."""
    B, H, W, C = x.shape
    return jnp.max(x.reshape(B, H // 2, 2, W // 2, 2, C), axis=(2, 4))


def init_params(key, num_classes=10):
    ks = jax.random.split(key, 12)
    p = {}
    p["conv1_w"] = 0.1 * jax.random.normal(ks[0], (32, 1, 3, 3), jnp.float32)
    p["conv1_b"] = 0.05 * jax.random.normal(ks[1], (32,), jnp.float32)
    p["bn1_gamma"] = 1.0 + 0.1 * jax.random.normal(ks[2], (32,), jnp.float32)
    p["bn1_beta"] = 0.1 * jax.random.normal(ks[3], (32,), jnp.float32)
    p["bn1_mean"] = 0.05 * jax.random.normal(ks[4], (32,), jnp.float32)
    p["bn1_var"] = jnp.abs(1.0 + 0.1 * jax.random.normal(ks[5], (32,), jnp.float32))
    p["conv2_w"] = 0.05 * jax.random.normal(ks[6], (64, 32, 3, 3), jnp.float32)
    p["conv2_b"] = 0.05 * jax.random.normal(ks[7], (64,), jnp.float32)
    p["bn2_gamma"] = 1.0 + 0.1 * jax.random.normal(ks[8], (64,), jnp.float32)
    p["bn2_beta"] = 0.1 * jax.random.normal(ks[9], (64,), jnp.float32)
    p["bn2_mean"] = 0.05 * jax.random.normal(ks[10], (64,), jnp.float32)
    p["bn2_var"] = jnp.abs(1.0 + 0.1 * jax.random.normal(ks[11], (64,), jnp.float32))
    k2 = jax.random.split(jax.random.fold_in(key, 1), 4)
    p["fc1_w"] = 0.02 * jax.random.normal(k2[0], (128, 64 * 7 * 7), jnp.float32)
    p["fc1_b"] = 0.02 * jax.random.normal(k2[1], (128,), jnp.float32)
    p["fc2_w"] = 0.05 * jax.random.normal(k2[2], (num_classes, 128), jnp.float32)
    p["fc2_b"] = 0.05 * jax.random.normal(k2[3], (num_classes,), jnp.float32)
    return p


def prepare_params(params, num_classes=10, eps=1e-5):
    """One-time prep: fold BN (eval), pad channels to 128 lanes, fold the PyTorch
    NCHW-flatten permutation into fc1, pre-transpose fc weights, cast to bf16."""
    f32 = jnp.float32
    # conv1 + BN1 fold (eval mode).
    s1 = params["bn1_gamma"] / jnp.sqrt(params["bn1_var"] + eps)
    b1 = (params["conv1_b"] - params["bn1_mean"]) * s1 + params["bn1_beta"]
    w1 = jnp.transpose(params["conv1_w"], (2, 3, 1, 0)).reshape(9, 32)   # (kh*kw*ci, co)
    w1 = jnp.pad(w1, ((0, 0), (0, LANE - 32)))
    s1p = jnp.pad(s1, (0, LANE - 32), constant_values=1.0).reshape(1, LANE)
    b1p = jnp.pad(b1, (0, LANE - 32)).reshape(1, LANE)
    # conv2 + BN2 fold; tap-major weights (9, Cin_pad, Cout_pad).
    s2 = params["bn2_gamma"] / jnp.sqrt(params["bn2_var"] + eps)
    b2 = (params["conv2_b"] - params["bn2_mean"]) * s2 + params["bn2_beta"]
    w2 = jnp.transpose(params["conv2_w"], (2, 3, 1, 0)).reshape(9, 32, 64)
    w2 = jnp.pad(w2, ((0, 0), (0, LANE - 32), (0, LANE - 64)))
    s2p = jnp.pad(s2, (0, LANE - 64), constant_values=1.0).reshape(1, LANE)
    b2p = jnp.pad(b2, (0, LANE - 64)).reshape(1, LANE)
    # fc1: fold PyTorch (c, h, w) flatten order + channel padding into the weight.
    w_fc1 = params["fc1_w"].reshape(128, 64, 7, 7)          # (out, c, h, w)
    w_fc1 = jnp.transpose(w_fc1, (2, 3, 1, 0))              # (h, w, c, out)
    w_fc1 = jnp.pad(w_fc1, ((0, 0), (0, 0), (0, LANE - 64), (0, 0)))
    w_fc1 = w_fc1.reshape(7 * 7 * LANE, 128)
    b_fc1 = params["fc1_b"].reshape(1, 128)
    # fc2: pre-transposed, output padded to 128 lanes.
    w_fc2 = jnp.pad(params["fc2_w"].T, ((0, 0), (0, LANE - num_classes)))
    b_fc2 = jnp.pad(params["fc2_b"], (0, LANE - num_classes)).reshape(1, LANE)
    return {
        "c1_w": w1.astype(f32), "c1_s": s1p.astype(f32), "c1_b": b1p.astype(f32),
        "c2_w": w2.astype(jnp.bfloat16), "c2_s": s2p.astype(f32), "c2_b": b2p.astype(f32),
        "fc1_w": w_fc1.astype(jnp.bfloat16), "fc1_b": b_fc1.astype(f32),
        "fc2_w": w_fc2.astype(jnp.bfloat16), "fc2_b": b_fc2.astype(f32),
    }


def forward(prepared, x_nchw, num_classes=10):
    B = x_nchw.shape[0]
    x = jnp.transpose(x_nchw, (0, 2, 3, 1)).astype(jnp.float32)      # NHWC (B,28,28,1)

    # ---- Conv2d(1,32,3,p=1) + BN(32) + ReLU: im2col (K=9, tiny) + tiled matmul ----
    cols1 = im2col_3x3_same(x)                                       # (B*784, 9)
    y = matmul_affine(cols1, prepared["c1_w"], prepared["c1_s"], prepared["c1_b"],
                      relu=True, tm=784)                             # (B*784, 128)
    y = y.reshape(B, 28, 28, LANE)

    # ---- MaxPool2d(2) -----------------------------------------------------------
    y = maxpool2x2(y)                                                # (B,14,14,128)

    # ---- Conv2d(32,64,3,p=1) + BN(64): in-kernel 9-tap accumulation (no im2col) --
    # Strip layout: pad H by (1,2), W by (1,1) -> (17,16), flatten to rows.
    xs = jnp.pad(y, ((0, 0), (1, 2), (1, 1), (0, 0))).reshape(B, 17 * 16, LANE)
    y = conv3x3_strip(xs, prepared["c2_w"], prepared["c2_s"], prepared["c2_b"],
                      w_strip=16, out_rows=14 * 16, relu=False)      # (B,224,128)
    y = y.reshape(B, 14, 16, LANE)[:, :, :14, :]                     # drop strip cols

    # ---- MaxPool2d(2) -----------------------------------------------------------
    y = maxpool2x2(y)                                                # (B,7,7,128)

    # ---- Flatten + Linear(3136,128) + ReLU + Linear(128,nc), fused --------------
    flat = y.reshape(B, 7 * 7 * LANE).astype(jnp.bfloat16)
    logits = mlp_fused(flat, prepared["fc1_w"], prepared["fc1_b"],
                       prepared["fc2_w"], prepared["fc2_b"])         # (B,128)
    return logits[:, :num_classes]


if __name__ == "__main__":
    key = jax.random.PRNGKey(0)
    kp, kx = jax.random.split(key)
    params = init_params(kp, num_classes=10)
    prepared = prepare_params(params, num_classes=10)
    # MNIST geometry is forced by the 64*7*7 Linear: input is (B, 1, 28, 28).
    x = jax.random.normal(kx, (2, 1, 28, 28), jnp.float32)
    out = jax.jit(forward)(prepared, x)
    out = jax.block_until_ready(out)
    assert out.shape == (2, 10) and out.dtype == jnp.float32
    print("KERNEL_OK")
</pallas_src>

<mosaic_0001>
module attributes {stable_mosaic.version = 11 : i64} {
  func.func @_matmul_affine_kernel(%arg0: i32, %arg1: memref<784x9xf32, #tpu.memory_space<vmem>>, %arg2: memref<9x128xf32, #tpu.memory_space<vmem>>, %arg3: memref<1x128xf32, #tpu.memory_space<vmem>>, %arg4: memref<1x128xf32, #tpu.memory_space<vmem>>, %arg5: memref<784x128xf32, #tpu.memory_space<vmem>>) attributes {dimension_semantics = [#tpu.dimension_semantics<parallel>], iteration_bounds = array<i64: 2>, scalar_prefetch = 0 : i64, scratch_operands = 0 : i64, tpu.core_type = #tpu.core_type<tc>, window_params = [{transform_indices = @transform_0, window_bounds = array<i64: 784, 9>}, {pipeline_mode = #tpu.pipeline_mode<synchronous>, transform_indices = @transform_1, window_bounds = array<i64: 9, 128>}, {pipeline_mode = #tpu.pipeline_mode<synchronous>, transform_indices = @transform_2, window_bounds = array<i64: 1, 128>}, {pipeline_mode = #tpu.pipeline_mode<synchronous>, transform_indices = @transform_3, window_bounds = array<i64: 1, 128>}, {transform_indices = @transform_4, window_bounds = array<i64: 784, 128>}]} {
    %c0 = arith.constant 0 : index
    %c0_0 = arith.constant 0 : index
    %0 = vector.load %arg1[%c0, %c0_0] : memref<784x9xf32, #tpu.memory_space<vmem>>, vector<784x9xf32>
    %c0_1 = arith.constant 0 : index
    %c0_2 = arith.constant 0 : index
    %1 = vector.load %arg2[%c0_1, %c0_2] : memref<9x128xf32, #tpu.memory_space<vmem>>, vector<9x128xf32>
    %cst = arith.constant dense<0.000000e+00> : vector<784x128xf32>
    %2 = tpu.matmul %0, %1, %cst {dimension_numbers = #tpu.dot_dimension_numbers<[1], [0], [0], [1], [0, 0, 1, 1], [], []>} : vector<784x9xf32>, vector<9x128xf32>, vector<784x128xf32> -> vector<784x128xf32>
    %c0_3 = arith.constant 0 : index
    %c0_4 = arith.constant 0 : index
    %3 = vector.load %arg3[%c0_3, %c0_4] : memref<1x128xf32, #tpu.memory_space<vmem>>, vector<1x128xf32>
    %4 = vector.broadcast %3 : vector<1x128xf32> to vector<784x128xf32>
    %5 = arith.mulf %2, %4 : vector<784x128xf32>
    %c0_5 = arith.constant 0 : index
    %c0_6 = arith.constant 0 : index
    %6 = vector.load %arg4[%c0_5, %c0_6] : memref<1x128xf32, #tpu.memory_space<vmem>>, vector<1x128xf32>
    %7 = vector.broadcast %6 : vector<1x128xf32> to vector<784x128xf32>
    %8 = arith.addf %5, %7 : vector<784x128xf32>
    %cst_7 = arith.constant 0.000000e+00 : f32
    %9 = vector.broadcast %cst_7 : f32 to vector<784x128xf32>
    %10 = arith.maximumf %8, %9 : vector<784x128xf32>
    %c0_8 = arith.constant 0 : index
    %c0_9 = arith.constant 0 : index
    %11 = vector.load %arg5[%c0_8, %c0_9] : memref<784x128xf32, #tpu.memory_space<vmem>>, vector<784x128xf32>
    tpu.vector_store %arg5[%c0_8, %c0_9], %10 {strides = array<i32>} : memref<784x128xf32, #tpu.memory_space<vmem>>, vector<784x128xf32>,
    return
  }
  func.func @transform_0(%arg0: i32) -> (i32, i32) {
    %c0_i32 = arith.constant 0 : i32
    %c0_i32_0 = arith.constant 0 : i32
    return %arg0, %c0_i32 : i32, i32
  }
  func.func @transform_1(%arg0: i32) -> (i32, i32) {
    %c0_i32 = arith.constant 0 : i32
    %c0_i32_0 = arith.constant 0 : i32
    %c0_i32_1 = arith.constant 0 : i32
    return %c0_i32, %c0_i32_0 : i32, i32
  }
  func.func @transform_2(%arg0: i32) -> (i32, i32) {
    %c0_i32 = arith.constant 0 : i32
    %c0_i32_0 = arith.constant 0 : i32
    %c0_i32_1 = arith.constant 0 : i32
    return %c0_i32, %c0_i32_0 : i32, i32
  }
  func.func @transform_3(%arg0: i32) -> (i32, i32) {
    %c0_i32 = arith.constant 0 : i32
    %c0_i32_0 = arith.constant 0 : i32
    %c0_i32_1 = arith.constant 0 : i32
    return %c0_i32, %c0_i32_0 : i32, i32
  }
  func.func @transform_4(%arg0: i32) -> (i32, i32) {
    %c0_i32 = arith.constant 0 : i32
    %c0_i32_0 = arith.constant 0 : i32
    return %arg0, %c0_i32 : i32, i32
  }
}

module attributes {stable_mosaic.version = 11 : i64} {
  func.func @_conv3x3_strip_kernel(%arg0: i32, %arg1: memref<1x272x128xf32, #tpu.memory_space<vmem>>, %arg2: memref<9x128x128xbf16, #tpu.memory_space<vmem>>, %arg3: memref<1x128xf32, #tpu.memory_space<vmem>>, %arg4: memref<1x128xf32, #tpu.memory_space<vmem>>, %arg5: memref<1x224x128xf32, #tpu.memory_space<vmem>>) attributes {dimension_semantics = [#tpu.dimension_semantics<parallel>], iteration_bounds = array<i64: 2>, scalar_prefetch = 0 : i64, scratch_operands = 0 : i64, tpu.core_type = #tpu.core_type<tc>, window_params = [{transform_indices = @transform_0, window_bounds = array<i64: 1, 272, 128>}, {pipeline_mode = #tpu.pipeline_mode<synchronous>, transform_indices = @transform_1, window_bounds = array<i64: 9, 128, 128>}, {pipeline_mode = #tpu.pipeline_mode<synchronous>, transform_indices = @transform_2, window_bounds = array<i64: 1, 128>}, {pipeline_mode = #tpu.pipeline_mode<synchronous>, transform_indices = @transform_3, window_bounds = array<i64: 1, 128>}, {transform_indices = @transform_4, window_bounds = array<i64: 1, 224, 128>}]} {
    %c0 = arith.constant 0 : index
    %c0_0 = arith.constant 0 : index
    %c0_1 = arith.constant 0 : index
    %0 = vector.load %arg1[%c0, %c0_0, %c0_1] : memref<1x272x128xf32, #tpu.memory_space<vmem>>, vector<1x272x128xf32>
    %1 = vector.shape_cast %0 : vector<1x272x128xf32> to vector<272x128xf32>
    %cst = arith.constant 0.000000e+00 : f32
    %2 = vector.broadcast %cst : f32 to vector<224x128xf32>
    %3 = vector.extract_strided_slice %1 {offsets = [0, 0], sizes = [224, 128], strides = [1, 1]} : vector<272x128xf32> to vector<224x128xf32>
    %4 = arith.truncf %3 : vector<224x128xf32> to vector<224x128xbf16>
    %c0_2 = arith.constant 0 : index
    %c0_3 = arith.constant 0 : index
    %c0_4 = arith.constant 0 : index
    %5 = vector.load %arg2[%c0_2, %c0_3, %c0_4] : memref<9x128x128xbf16, #tpu.memory_space<vmem>>, vector<1x128x128xbf16>
    %6 = vector.shape_cast %5 : vector<1x128x128xbf16> to vector<128x128xbf16>
    %cst_5 = arith.constant dense<0.000000e+00> : vector<224x128xf32>
    %7 = tpu.matmul %4, %6, %cst_5 {dimension_numbers = #tpu.dot_dimension_numbers<[1], [0], [0], [1], [0, 0, 1, 1], [], []>} : vector<224x128xbf16>, vector<128x128xbf16>, vector<224x128xf32> -> vector<224x128xf32>
    %8 = arith.addf %2, %7 : vector<224x128xf32>
    %9 = vector.extract_strided_slice %1 {offsets = [1, 0], sizes = [224, 128], strides = [1, 1]} : vector<272x128xf32> to vector<224x128xf32>
    %10 = arith.truncf %9 : vector<224x128xf32> to vector<224x128xbf16>
    %c1 = arith.constant 1 : index
    %c0_6 = arith.constant 0 : index
    %c0_7 = arith.constant 0 : index
    %11 = vector.load %arg2[%c1, %c0_6, %c0_7] : memref<9x128x128xbf16, #tpu.memory_space<vmem>>, vector<1x128x128xbf16>
    %12 = vector.shape_cast %11 : vector<1x128x128xbf16> to vector<128x128xbf16>
    %cst_8 = arith.constant dense<0.000000e+00> : vector<224x128xf32>
    %13 = tpu.matmul %10, %12, %cst_8 {dimension_numbers = #tpu.dot_dimension_numbers<[1], [0], [0], [1], [0, 0, 1, 1], [], []>} : vector<224x128xbf16>, vector<128x128xbf16>, vector<224x128xf32> -> vector<224x128xf32>
    %14 = arith.addf %8, %13 : vector<224x128xf32>
    %15 = vector.extract_strided_slice %1 {offsets = [2, 0], sizes = [224, 128], strides = [1, 1]} : vector<272x128xf32> to vector<224x128xf32>
    %16 = arith.truncf %15 : vector<224x128xf32> to vector<224x128xbf16>
    %c2 = arith.constant 2 : index
    %c0_9 = arith.constant 0 : index
    %c0_10 = arith.constant 0 : index
    %17 = vector.load %arg2[%c2, %c0_9, %c0_10] : memref<9x128x128xbf16, #tpu.memory_space<vmem>>, vector<1x128x128xbf16>
    %18 = vector.shape_cast %17 : vector<1x128x128xbf16> to vector<128x128xbf16>
    %cst_11 = arith.constant dense<0.000000e+00> : vector<224x128xf32>
    %19 = tpu.matmul %16, %18, %cst_11 {dimension_numbers = #tpu.dot_dimension_numbers<[1], [0], [0], [1], [0, 0, 1, 1], [], []>} : vector<224x128xbf16>, vector<128x128xbf16>, vector<224x128xf32> -> vector<224x128xf32>
    %20 = arith.addf %14, %19 : vector<224x128xf32>
    %21 = vector.extract_strided_slice %1 {offsets = [16, 0], sizes = [224, 128], strides = [1, 1]} : vector<272x128xf32> to vector<224x128xf32>
    %22 = arith.truncf %21 : vector<224x128xf32> to vector<224x128xbf16>
    %c3 = arith.constant 3 : index
    %c0_12 = arith.constant 0 : index
    %c0_13 = arith.constant 0 : index
    %23 = vector.load %arg2[%c3, %c0_12, %c0_13] : memref<9x128x128xbf16, #tpu.memory_space<vmem>>, vector<1x128x128xbf16>
    %24 = vector.shape_cast %23 : vector<1x128x128xbf16> to vector<128x128xbf16>
    %cst_14 = arith.constant dense<0.000000e+00> : vector<224x128xf32>
    %25 = tpu.matmul %22, %24, %cst_14 {dimension_numbers = #tpu.dot_dimension_numbers<[1], [0], [0], [1], [0, 0, 1, 1], [], []>} : vector<224x128xbf16>, vector<128x128xbf16>, vector<224x128xf32> -> vector<224x128xf32>
    %26 = arith.addf %20, %25 : vector<224x128xf32>
    %27 = vector.extract_strided_slice %1 {offsets = [17, 0], sizes = [224, 128], strides = [1, 1]} : vector<272x128xf32> to vector<224x128xf32>
    %28 = arith.truncf %27 : vector<224x128xf32> to vector<224x128xbf16>
    %c4 = arith.constant 4 : index
    %c0_15 = arith.constant 0 : index
    %c0_16 = arith.constant 0 : index
    %29 = vector.load %arg2[%c4, %c0_15, %c0_16] : memref<9x128x128xbf16, #tpu.memory_space<vmem>>, vector<1x128x128xbf16>
    %30 = vector.shape_cast %29 : vector<1x128x128xbf16> to vector<128x128xbf16>
    %cst_17 = arith.constant dense<0.000000e+00> : vector<224x128xf32>
    %31 = tpu.matmul %28, %30, %cst_17 {dimension_numbers = #tpu.dot_dimension_numbers<[1], [0], [0], [1], [0, 0, 1, 1], [], []>} : vector<224x128xbf16>, vector<128x128xbf16>, vector<224x128xf32> -> vector<224x128xf32>
    %32 = arith.addf %26, %31 : vector<224x128xf32>
    %33 = vector.extract_strided_slice %1 {offsets = [18, 0], sizes = [224, 128], strides = [1, 1]} : vector<272x128xf32> to vector<224x128xf32>
    %34 = arith.truncf %33 : vector<224x128xf32> to vector<224x128xbf16>
    %c5 = arith.constant 5 : index
    %c0_18 = arith.constant 0 : index
    %c0_19 = arith.constant 0 : index
    %35 = vector.load %arg2[%c5, %c0_18, %c0_19] : memref<9x128x128xbf16, #tpu.memory_space<vmem>>, vector<1x128x128xbf16>
    %36 = vector.shape_cast %35 : vector<1x128x128xbf16> to vector<128x128xbf16>
    %cst_20 = arith.constant dense<0.000000e+00> : vector<224x128xf32>
    %37 = tpu.matmul %34, %36, %cst_20 {dimension_numbers = #tpu.dot_dimension_numbers<[1], [0], [0], [1], [0, 0, 1, 1], [], []>} : vector<224x128xbf16>, vector<128x128xbf16>, vector<224x128xf32> -> vector<224x128xf32>
    %38 = arith.addf %32, %37 : vector<224x128xf32>
    %39 = vector.extract_strided_slice %1 {offsets = [32, 0], sizes = [224, 128], strides = [1, 1]} : vector<272x128xf32> to vector<224x128xf32>
    %40 = arith.truncf %39 : vector<224x128xf32> to vector<224x128xbf16>
    %c6 = arith.constant 6 : index
    %c0_21 = arith.constant 0 : index
    %c0_22 = arith.constant 0 : index
    %41 = vector.load %arg2[%c6, %c0_21, %c0_22] : memref<9x128x128xbf16, #tpu.memory_space<vmem>>, vector<1x128x128xbf16>
    %42 = vector.shape_cast %41 : vector<1x128x128xbf16> to vector<128x128xbf16>
    %cst_23 = arith.constant dense<0.000000e+00> : vector<224x128xf32>
    %43 = tpu.matmul %40, %42, %cst_23 {dimension_numbers = #tpu.dot_dimension_numbers<[1], [0], [0], [1], [0, 0, 1, 1], [], []>} : vector<224x128xbf16>, vector<128x128xbf16>, vector<224x128xf32> -> vector<224x128xf32>
    %44 = arith.addf %38, %43 : vector<224x128xf32>
    %45 = vector.extract_strided_slice %1 {offsets = [33, 0], sizes = [224, 128], strides = [1, 1]} : vector<272x128xf32> to vector<224x128xf32>
    %46 = arith.truncf %45 : vector<224x128xf32> to vector<224x128xbf16>
    %c7 = arith.constant 7 : index
    %c0_24 = arith.constant 0 : index
    %c0_25 = arith.constant 0 : index
    %47 = vector.load %arg2[%c7, %c0_24, %c0_25] : memref<9x128x128xbf16, #tpu.memory_space<vmem>>, vector<1x128x128xbf16>
    %48 = vector.shape_cast %47 : vector<1x128x128xbf16> to vector<128x128xbf16>
    %cst_26 = arith.constant dense<0.000000e+00> : vector<224x128xf32>
    %49 = tpu.matmul %46, %48, %cst_26 {dimension_numbers = #tpu.dot_dimension_numbers<[1], [0], [0], [1], [0, 0, 1, 1], [], []>} : vector<224x128xbf16>, vector<128x128xbf16>, vector<224x128xf32> -> vector<224x128xf32>
    %50 = arith.addf %44, %49 : vector<224x128xf32>
    %51 = vector.extract_strided_slice %1 {offsets = [34, 0], sizes = [224, 128], strides = [1, 1]} : vector<272x128xf32> to vector<224x128xf32>
    %52 = arith.truncf %51 : vector<224x128xf32> to vector<224x128xbf16>
    %c8 = arith.constant 8 : index
    %c0_27 = arith.constant 0 : index
    %c0_28 = arith.constant 0 : index
    %53 = vector.load %arg2[%c8, %c0_27, %c0_28] : memref<9x128x128xbf16, #tpu.memory_space<vmem>>, vector<1x128x128xbf16>
    %54 = vector.shape_cast %53 : vector<1x128x128xbf16> to vector<128x128xbf16>
    %cst_29 = arith.constant dense<0.000000e+00> : vector<224x128xf32>
    %55 = tpu.matmul %52, %54, %cst_29 {dimension_numbers = #tpu.dot_dimension_numbers<[1], [0], [0], [1], [0, 0, 1, 1], [], []>} : vector<224x128xbf16>, vector<128x128xbf16>, vector<224x128xf32> -> vector<224x128xf32>
    %56 = arith.addf %50, %55 : vector<224x128xf32>
    %c0_30 = arith.constant 0 : index
    %c0_31 = arith.constant 0 : index
    %57 = vector.load %arg3[%c0_30, %c0_31] : memref<1x128xf32, #tpu.memory_space<vmem>>, vector<1x128xf32>
    %58 = vector.broadcast %57 : vector<1x128xf32> to vector<224x128xf32>
    %59 = arith.mulf %56, %58 : vector<224x128xf32>
    %c0_32 = arith.constant 0 : index
    %c0_33 = arith.constant 0 : index
    %60 = vector.load %arg4[%c0_32, %c0_33] : memref<1x128xf32, #tpu.memory_space<vmem>>, vector<1x128xf32>
    %61 = vector.broadcast %60 : vector<1x128xf32> to vector<224x128xf32>
    %62 = arith.addf %59, %61 : vector<224x128xf32>
    %c0_34 = arith.constant 0 : index
    %c0_35 = arith.constant 0 : index
    %c0_36 = arith.constant 0 : index
    %63 = vector.load %arg5[%c0_34, %c0_35, %c0_36] : memref<1x224x128xf32, #tpu.memory_space<vmem>>, vector<1x224x128xf32>
    %64 = vector.shape_cast %63 : vector<1x224x128xf32> to vector<224x128xf32>
    %65 = vector.shape_cast %62 : vector<224x128xf32> to vector<1x224x128xf32>
    tpu.vector_store %arg5[%c0_34, %c0_35, %c0_36], %65 {strides = array<i32>} : memref<1x224x128xf32, #tpu.memory_space<vmem>>, vector<1x224x128xf32>,
    return
  }
  func.func @transform_0(%arg0: i32) -> (i32, i32, i32) {
    %c0_i32 = arith.constant 0 : i32
    %c0_i32_0 = arith.constant 0 : i32
    %c0_i32_1 = arith.constant 0 : i32
    return %arg0, %c0_i32, %c0_i32_0 : i32, i32, i32
  }
  func.func @transform_1(%arg0: i32) -> (i32, i32, i32) {
    %c0_i32 = arith.constant 0 : i32
    %c0_i32_0 = arith.constant 0 : i32
    %c0_i32_1 = arith.constant 0 : i32
    %c0_i32_2 = arith.constant 0 : i32
    return %c0_i32, %c0_i32_0, %c0_i32_1 : i32, i32, i32
  }
  func.func @transform_2(%arg0: i32) -> (i32, i32) {
    %c0_i32 = arith.constant 0 : i32
    %c0_i32_0 = arith.constant 0 : i32
    %c0_i32_1 = arith.constant 0 : i32
    return %c0_i32, %c0_i32_0 : i32, i32
  }
  func.func @transform_3(%arg0: i32) -> (i32, i32) {
    %c0_i32 = arith.constant 0 : i32
    %c0_i32_0 = arith.constant 0 : i32
    %c0_i32_1 = arith.constant 0 : i32
    return %c0_i32, %c0_i32_0 : i32, i32
  }
  func.func @transform_4(%arg0: i32) -> (i32, i32, i32) {
    %c0_i32 = arith.constant 0 : i32
    %c0_i32_0 = arith.constant 0 : i32
    %c0_i32_1 = arith.constant 0 : i32
    return %arg0, %c0_i32, %c0_i32_0 : i32, i32, i32
  }
}

module attributes {stable_mosaic.version = 11 : i64} {
  func.func @_mlp_kernel(%arg0: i32, %arg1: memref<2x6272xbf16, #tpu.memory_space<vmem>>, %arg2: memref<6272x128xbf16, #tpu.memory_space<vmem>>, %arg3: memref<1x128xf32, #tpu.memory_space<vmem>>, %arg4: memref<128x128xbf16, #tpu.memory_space<vmem>>, %arg5: memref<1x128xf32, #tpu.memory_space<vmem>>, %arg6: memref<2x128xf32, #tpu.memory_space<vmem>>) attributes {dimension_semantics = [#tpu.dimension_semantics<parallel>], iteration_bounds = array<i64: 1>, scalar_prefetch = 0 : i64, scratch_operands = 0 : i64, tpu.core_type = #tpu.core_type<tc>, window_params = [{transform_indices = @transform_0, window_bounds = array<i64: 2, 6272>}, {pipeline_mode = #tpu.pipeline_mode<synchronous>, transform_indices = @transform_1, window_bounds = array<i64: 6272, 128>}, {pipeline_mode = #tpu.pipeline_mode<synchronous>, transform_indices = @transform_2, window_bounds = array<i64: 1, 128>}, {pipeline_mode = #tpu.pipeline_mode<synchronous>, transform_indices = @transform_3, window_bounds = array<i64: 128, 128>}, {pipeline_mode = #tpu.pipeline_mode<synchronous>, transform_indices = @transform_4, window_bounds = array<i64: 1, 128>}, {transform_indices = @transform_5, window_bounds = array<i64: 2, 128>}]} {
    %c0 = arith.constant 0 : index
    %c0_0 = arith.constant 0 : index
    %0 = vector.load %arg1[%c0, %c0_0] : memref<2x6272xbf16, #tpu.memory_space<vmem>>, vector<2x6272xbf16>
    %c0_1 = arith.constant 0 : index
    %c0_2 = arith.constant 0 : index
    %1 = vector.load %arg2[%c0_1, %c0_2] : memref<6272x128xbf16, #tpu.memory_space<vmem>>, vector<6272x128xbf16>
    %cst = arith.constant dense<0.000000e+00> : vector<2x128xf32>
    %2 = tpu.matmul %0, %1, %cst {dimension_numbers = #tpu.dot_dimension_numbers<[1], [0], [0], [1], [0, 0, 1, 1], [], []>} : vector<2x6272xbf16>, vector<6272x128xbf16>, vector<2x128xf32> -> vector<2x128xf32>
    %c0_3 = arith.constant 0 : index
    %c0_4 = arith.constant 0 : index
    %3 = vector.load %arg3[%c0_3, %c0_4] : memref<1x128xf32, #tpu.memory_space<vmem>>, vector<1x128xf32>
    %4 = vector.broadcast %3 : vector<1x128xf32> to vector<2x128xf32>
    %5 = arith.addf %2, %4 : vector<2x128xf32>
    %cst_5 = arith.constant 0.000000e+00 : f32
    %6 = vector.broadcast %cst_5 : f32 to vector<2x128xf32>
    %7 = arith.maximumf %5, %6 : vector<2x128xf32>
    %8 = arith.truncf %7 : vector<2x128xf32> to vector<2x128xbf16>
    %c0_6 = arith.constant 0 : index
    %c0_7 = arith.constant 0 : index
    %9 = vector.load %arg4[%c0_6, %c0_7] : memref<128x128xbf16, #tpu.memory_space<vmem>>, vector<128x128xbf16>
    %cst_8 = arith.constant dense<0.000000e+00> : vector<2x128xf32>
    %10 = tpu.matmul %8, %9, %cst_8 {dimension_numbers = #tpu.dot_dimension_numbers<[1], [0], [0], [1], [0, 0, 1, 1], [], []>} : vector<2x128xbf16>, vector<128x128xbf16>, vector<2x128xf32> -> vector<2x128xf32>
    %c0_9 = arith.constant 0 : index
    %c0_10 = arith.constant 0 : index
    %11 = vector.load %arg5[%c0_9, %c0_10] : memref<1x128xf32, #tpu.memory_space<vmem>>, vector<1x128xf32>
    %12 = vector.broadcast %11 : vector<1x128xf32> to vector<2x128xf32>
    %13 = arith.addf %10, %12 : vector<2x128xf32>
    %c0_11 = arith.constant 0 : index
    %c0_12 = arith.constant 0 : index
    %14 = vector.load %arg6[%c0_11, %c0_12] : memref<2x128xf32, #tpu.memory_space<vmem>>, vector<2x128xf32>
    tpu.vector_store %arg6[%c0_11, %c0_12], %13 {strides = array<i32>} : memref<2x128xf32, #tpu.memory_space<vmem>>, vector<2x128xf32>,
    return
  }
  func.func @transform_0(%arg0: i32) -> (i32, i32) {
    %c0_i32 = arith.constant 0 : i32
    %c0_i32_0 = arith.constant 0 : i32
    return %arg0, %c0_i32 : i32, i32
  }
  func.func @transform_1(%arg0: i32) -> (i32, i32) {
    %c0_i32 = arith.constant 0 : i32
    %c0_i32_0 = arith.constant 0 : i32
    %c0_i32_1 = arith.constant 0 : i32
    return %c0_i32, %c0_i32_0 : i32, i32
  }
  func.func @transform_2(%arg0: i32) -> (i32, i32) {
    %c0_i32 = arith.constant 0 : i32
    %c0_i32_0 = arith.constant 0 : i32
    %c0_i32_1 = arith.constant 0 : i32
    return %c0_i32, %c0_i32_0 : i32, i32
  }
  func.func @transform_3(%arg0: i32) -> (i32, i32) {
    %c0_i32 = arith.constant 0 : i32
    %c0_i32_0 = arith.constant 0 : i32
    %c0_i32_1 = arith.constant 0 : i32
    return %c0_i32, %c0_i32_0 : i32, i32
  }
  func.func @transform_4(%arg0: i32) -> (i32, i32) {
    %c0_i32 = arith.constant 0 : i32
    %c0_i32_0 = arith.constant 0 : i32
    %c0_i32_1 = arith.constant 0 : i32
    return %c0_i32, %c0_i32_0 : i32, i32
  }
  func.func @transform_5(%arg0: i32) -> (i32, i32) {
    %c0_i32 = arith.constant 0 : i32
    %c0_i32_0 = arith.constant 0 : i32
    return %arg0, %c0_i32 : i32, i32
  }
}

</mosaic_0001>

<llo_original>
// kernel: forward.3
$region0: #{forward.3}
  #allocation0 [shape = 'u32[]', space=smem, size = 0x4, offset = 0x4, fixed_abs, tag = 'smem constant byte address 0x4 - core index']
  #allocation1 [shape = 'u32[144,128]{1,0:T(1,128)}', space=vmem, size = 0x12000, scoped, tag = 'internal scratch']
  %s0 = inlined_call_operand.vmem [shape: f32[1568,9], index: 0, kind: input, shape index: {}]
  %s1 = inlined_call_operand.vmem [shape: f32[9,128], index: 1, kind: input, shape index: {}]
  %s2 = inlined_call_operand.vmem [shape: f32[1,128], index: 2, kind: input, shape index: {}]
  %s3 = inlined_call_operand.vmem [shape: f32[1,128], index: 3, kind: input, shape index: {}]
  %s4 = inlined_call_operand.vmem [shape: f32[1568,128], index: 4, kind: output, shape index: {}]
  %s5 = sld [smem:[#allocation0]]
  $region49: #{forward.3} parent=0
    _
  %s7 = ssub.s32 1, %s5
  %s8 = scalar_select 0, %s7, %s5
  loop: start=0, step=1, limit=4
  $region2: #{forward.3} parent=0 // loop_pre_header
    _
  $region3: #{forward.3} parent=0 // loop_header
    %s10 = sphi 0, %s14
    %p11 = scmp.ge.s32.totalorder %s10, 4
    %s20 = sphi 0, %s22
    %s23 = sphi 0, %s20
    %s24 = sphi 0, %s23
    %s40 = sphi 0, %s24
    %s44 = sphi 0, %s44
    %s46 = sphi 0, %s44
    %s47 = sphi 0, %s46
    %s61 = sphi 0, %s47
    %s65 = sphi 0, %s65
    %s67 = sphi 0, %s65
    %s68 = sphi 0, %s67
    %s82 = sphi 0, %s68
    %s86 = sphi 0, %s86
    %s88 = sphi 0, %s86
    %s89 = sphi 0, %s88
    %s103 = sphi 0, %s89
    %s109 = sphi 0, %s111
    %s112 = sphi 0, %s109
    %s113 = sphi 0, %s112
    %s129 = sphi 0, %s113
  $region4: #{forward.3} parent=0 // loop_header_branch
    %13 = sbr.rel (%p11) target = $region8
  $region5: #{forward.3} parent=0 // loop_body
    %s15 = ssub.s32 %s10, 1
    %s16 = ssub.s32 %s10, 2
    %s17 = sadd.s32 %s10, 1
    %s18 = ssub.s32 %s10, %s17
    %p19 = scmp.eq.s32.totalorder %s18, 0
    %s21 = sadd.s32 %s20, 1
    %s22 = scalar_select %p19, %s20, %s21
    %p25 = pneg %p19
    %p26 = scmp.eq.s32.totalorder %s10, 1
    %p27 = por %p25, %p26
    %p28 = scmp.ne.s32.totalorder %s20, %s23
    %p29 = scmp.eq.s32.totalorder %s10, 0
    %p30 = por %p28, %p29
    %p31 = scmp.ne.s32.totalorder %s20, %s23
    %p32 = scmp.eq.s32.totalorder %s15, 1
    %p33 = por %p31, %p32
    %p34 = scmp.ne.s32.totalorder %s23, %s24
    %p35 = scmp.eq.s32.totalorder %s15, 0
    %p36 = por %p34, %p35
    %p37 = scmp.ne.s32.totalorder %s23, %s24
    %p38 = scmp.eq.s32.totalorder %s16, 1
    %p39 = por %p37, %p38
    %p41 = scmp.ne.s32.totalorder %s24, %s40
    %p42 = scmp.eq.s32.totalorder %s16, 0
    %p43 = por %p41, %p42
    %s45 = sadd.s32 %s44, 1
    %p48 = scmp.eq.s32.totalorder %s10, 1
    %p49 = scmp.ne.s32.totalorder %s44, %s46
    %p50 = scmp.eq.s32.totalorder %s10, 0
    %p51 = por %p49, %p50
    %p52 = scmp.ne.s32.totalorder %s44, %s46
    %p53 = scmp.eq.s32.totalorder %s15, 1
    %p54 = por %p52, %p53
    %p55 = scmp.ne.s32.totalorder %s46, %s47
    %p56 = scmp.eq.s32.totalorder %s15, 0
    %p57 = por %p55, %p56
    %p58 = scmp.ne.s32.totalorder %s46, %s47
    %p59 = scmp.eq.s32.totalorder %s16, 1
    %p60 = por %p58, %p59
    %p62 = scmp.ne.s32.totalorder %s47, %s61
    %p63 = scmp.eq.s32.totalorder %s16, 0
    %p64 = por %p62, %p63
    %s66 = sadd.s32 %s65, 1
    %p69 = scmp.eq.s32.totalorder %s10, 1
    %p70 = scmp.ne.s32.totalorder %s65, %s67
    %p71 = scmp.eq.s32.totalorder %s10, 0
    %p72 = por %p70, %p71
    %p73 = scmp.ne.s32.totalorder %s65, %s67
    %p74 = scmp.eq.s32.totalorder %s15, 1
    %p75 = por %p73, %p74
    %p76 = scmp.ne.s32.totalorder %s67, %s68
    %p77 = scmp.eq.s32.totalorder %s15, 0
    %p78 = por %p76, %p77
    %p79 = scmp.ne.s32.totalorder %s67, %s68
    %p80 = scmp.eq.s32.totalorder %s16, 1
    %p81 = por %p79, %p80
    %p83 = scmp.ne.s32.totalorder %s68, %s82
    %p84 = scmp.eq.s32.totalorder %s16, 0
    %p85 = por %p83, %p84
    %s87 = sadd.s32 %s86, 1
    %p90 = scmp.eq.s32.totalorder %s10, 1
    %p91 = scmp.ne.s32.totalorder %s86, %s88
    %p92 = scmp.eq.s32.totalorder %s10, 0
    %p93 = por %p91, %p92
    %p94 = scmp.ne.s32.totalorder %s86, %s88
    %p95 = scmp.eq.s32.totalorder %s15, 1
    %p96 = por %p94, %p95
    %p97 = scmp.ne.s32.totalorder %s88, %s89
    %p98 = scmp.eq.s32.totalorder %s15, 0
    %p99 = por %p97, %p98
    %p100 = scmp.ne.s32.totalorder %s88, %s89
    %p101 = scmp.eq.s32.totalorder %s16, 1
    %p102 = por %p100, %p101
    %p104 = scmp.ne.s32.totalorder %s89, %s103
    %p105 = scmp.eq.s32.totalorder %s16, 0
    %p106 = por %p104, %p105
    %s107 = ssub.s32 %s10, %s17
    %p108 = scmp.eq.s32.totalorder %s107, 0
    %s110 = sadd.s32 %s109, 1
    %s111 = scalar_select %p108, %s109, %s110
    %p114 = pneg %p108
    %p115 = scmp.eq.s32.totalorder %s10, 1
    %p116 = por %p114, %p115
    %p117 = scmp.ne.s32.totalorder %s109, %s112
    %p118 = scmp.eq.s32.totalorder %s10, 0
    %p119 = por %p117, %p118
    %p120 = scmp.ne.s32.totalorder %s109, %s112
    %p121 = scmp.eq.s32.totalorder %s15, 1
    %p122 = por %p120, %p121
    %p123 = scmp.ne.s32.totalorder %s112, %s113
    %p124 = scmp.eq.s32.totalorder %s15, 0
    %p125 = por %p123, %p124
    %p126 = scmp.ne.s32.totalorder %s112, %s113
    %p127 = scmp.eq.s32.totalorder %s16, 1
    %p128 = por %p126, %p127
    %p130 = scmp.ne.s32.totalorder %s113, %s129
    %p131 = scmp.eq.s32.totalorder %s16, 0
    %p132 = por %p130, %p131
    %p133 = scmp.le.s32.totalorder 1, %s10
    %p134 = scmp.lt.s32.totalorder %s10, 3
    %p135 = pnand %p133, %p134
    %p136 = pneg %p135
    // Predicated region
    $region9: #{forward.3} parent=5 // pred_check
      _
    $region10: #{forward.3} parent=5 // pred_check_branch
      %138 = sbr.rel (%p135) target = $region12
    $region11: #{forward.3} parent=5 // pred_region
      %s139 = ssub.s32 %s10, 1
      // Predicated region
      $region13: #{forward.3} parent=11 // pred_check
        %p140 = pneg %p57
      $region14: #{forward.3} parent=11 // pred_check_branch
        %142 = sbr.rel (%p140) target = $region16
      $region15: #{forward.3} parent=11 // pred_region
        _
      $region16: #{forward.3} parent=11 // pred_fallthru
        _
      // Predicated region
      $region17: #{forward.3} parent=11 // pred_check
        %p143 = pneg %p78
      $region18: #{forward.3} parent=11 // pred_check_branch
        %145 = sbr.rel (%p143) target = $region20
      $region19: #{forward.3} parent=11 // pred_region
        _
      $region20: #{forward.3} parent=11 // pred_fallthru
        _
      // Predicated region
      $region21: #{forward.3} parent=11 // pred_check
        %p146 = pneg %p99
      $region22: #{forward.3} parent=11 // pred_check_branch
        %148 = sbr.rel (%p146) target = $region24
      $region23: #{forward.3} parent=11 // pred_region
        _
      $region24: #{forward.3} parent=11 // pred_fallthru
        _
    $region12: #{forward.3} parent=5 // pred_fallthru
      _
    %p149 = scmp.lt.s32.totalorder %s10, 2
    // Predicated region
    $region25: #{forward.3} parent=5 // pred_check
      %p150 = pneg %p149
    $region26: #{forward.3} parent=5 // pred_check_branch
      %152 = sbr.rel (%p150) target = $region28
    $region27: #{forward.3} parent=5 // pred_region
      // Predicated region
      $region29: #{forward.3} parent=27 // pred_check
        %p153 = pneg %p30
      $region30: #{forward.3} parent=27 // pred_check_branch
        %155 = sbr.rel (%p153) target = $region32
      $region31: #{forward.3} parent=27 // pred_region
        %s156 = smul.u32 98, %s10
        %p157 = scmp.lt.s32.totalorder %s156, 195
        %s158 = scalar_select %p157, %s156, 195
        %s159 = smul.addr %s158, 8
        %s160 = scalar_lea.vmem %s0, %s159
        %s161 = smul.u32 98, %s10
      $region32: #{forward.3} parent=27 // pred_fallthru
        _
    $region28: #{forward.3} parent=5 // pred_fallthru
      _
    %p162 = scmp.le.s32.totalorder 1, %s10
    %p163 = scmp.lt.s32.totalorder %s10, 3
    %p164 = pnand %p162, %p163
    %p165 = pneg %p164
    // Predicated region
    $region33: #{forward.3} parent=5 // pred_check
      _
    $region34: #{forward.3} parent=5 // pred_check_branch
      %167 = sbr.rel (%p164) target = $region36
    $region35: #{forward.3} parent=5 // pred_region
      %s168 = ssub.s32 %s10, 1
      %s169 = smul.u32 98, %s15
      %p170 = scmp.lt.s32.totalorder %s169, 195
      %s171 = scalar_select %p170, %s169, 195
      %s172 = smul.addr %s171, 8
      %s173 = scalar_lea.vmem %s0, %s172
      %p174 = pneg %p36
      %p175 = pneg %p33
      %p176 = pneg %p57
      %p177 = pneg %p54
      %p178 = pneg %p78
      %p179 = pneg %p75
      %p180 = pneg %p99
      %p181 = pneg %p96
      %p182 = pneg %p125
      %p183 = pneg %p122
      %s184 = smul.u32 98, %s15
      %p185 = scmp.lt.s32.totalorder %s184, 195
      %s186 = scalar_select %p185, %s184, 195
      %s187 = smul.addr %s186, 8
      %s188 = scalar_lea.vmem %s4, %s187
      %s189 = smul.u32 98, %s15
      %p190 = scmp.lt.s32.totalorder %s189, 195
      %s191 = scalar_select %p190, %s189, 195
      %s192 = smul.addr %s191, 8
      %s193 = scalar_lea.vmem %s0, %s192
      %s194 = smul.u32 98, %s15
      %s195 = smul.u32 98, %s15
      %p196 = scmp.lt.s32.totalorder %s195, 195
      %s197 = scalar_select %p196, %s195, 195
      %s198 = smul.addr %s197, 8
      %s199 = scalar_lea.vmem %s4, %s198
      %s200 = smul.u32 98, %s15
      %v201 = vld [vmem:[%s193] sm:$0xff]
      %v202 = vld [vmem:[%s193 + $0x8] sm:$0xff]
      %v203 = vld [vmem:[%s193 + $0x10] sm:$0xff]
      %v204 = vld [vmem:[%s193 + $0x18] sm:$0xff]
      %v205 = vld [vmem:[%s193 + $0x20] sm:$0xff]
      %v206 = vld [vmem:[%s193 + $0x28] sm:$0xff]
      %v207 = vld [vmem:[%s193 + $0x30] sm:$0xff]
      %v208 = vld [vmem:[%s193 + $0x38] sm:$0xff]
      %v209 = vld [vmem:[%s193 + $0x40] sm:$0xff]
      %v210 = vld [vmem:[%s193 + $0x48] sm:$0xff]
      %v211 = vld [vmem:[%s193 + $0x50] sm:$0xff]
      %v212 = vld [vmem:[%s193 + $0x58] sm:$0xff]
      %v213 = vld [vmem:[%s193 + $0x60] sm:$0xff]
      %v214 = vld [vmem:[%s193 + $0x68] sm:$0xff]
      %v215 = vld [vmem:[%s193 + $0x70] sm:$0xff]
      %v216 = vld [vmem:[%s193 + $0x78] sm:$0xff]
      %v217 = vld [vmem:[%s193 + $0x80] sm:$0xff]
      %v218 = vld [vmem:[%s193 + $0x88] sm:$0xff]
      %v219 = vld [vmem:[%s193 + $0x90] sm:$0xff]
      %v220 = vld [vmem:[%s193 + $0x98] sm:$0xff]
      %v221 = vld [vmem:[%s193 + $0xa0] sm:$0xff]
      %v222 = vld [vmem:[%s193 + $0xa8] sm:$0xff]
      %v223 = vld [vmem:[%s193 + $0xb0] sm:$0xff]
      %v224 = vld [vmem:[%s193 + $0xb8] sm:$0xff]
      %v225 = vld [vmem:[%s193 + $0xc0] sm:$0xff]
      %v226 = vld [vmem:[%s193 + $0xc8] sm:$0xff]
      %v227 = vld [vmem:[%s193 + $0xd0] sm:$0xff]
      %v228 = vld [vmem:[%s193 + $0xd8] sm:$0xff]
      %v229 = vld [vmem:[%s193 + $0xe0] sm:$0xff]
      %v230 = vld [vmem:[%s193 + $0xe8] sm:$0xff]
      %v231 = vld [vmem:[%s193 + $0xf0] sm:$0xff]
      %v232 = vld [vmem:[%s193 + $0xf8] sm:$0xff]
      %v233 = vld [vmem:[%s193 + $0x100] sm:$0xff]
      %v234 = vld [vmem:[%s193 + $0x108] sm:$0xff]
      %v235 = vld [vmem:[%s193 + $0x110] sm:$0xff]
      %v236 = vld [vmem:[%s193 + $0x118] sm:$0xff]
      %v237 = vld [vmem:[%s193 + $0x120] sm:$0xff]
      %v238 = vld [vmem:[%s193 + $0x128] sm:$0xff]
      %v239 = vld [vmem:[%s193 + $0x130] sm:$0xff]
      %v240 = vld [vmem:[%s193 + $0x138] sm:$0xff]
      %v241 = vld [vmem:[%s193 + $0x140] sm:$0xff]
      %v242 = vld [vmem:[%s193 + $0x148] sm:$0xff]
      %v243 = vld [vmem:[%s193 + $0x150] sm:$0xff]
      %v244 = vld [vmem:[%s193 + $0x158] sm:$0xff]
      %v245 = vld [vmem:[%s193 + $0x160] sm:$0xff]
      %v246 = vld [vmem:[%s193 + $0x168] sm:$0xff]
      %v247 = vld [vmem:[%s193 + $0x170] sm:$0xff]
      %v248 = vld [vmem:[%s193 + $0x178] sm:$0xff]
      %v249 = vld [vmem:[%s193 + $0x180] sm:$0xff]
      %v250 = vld [vmem:[%s193 + $0x188] sm:$0xff]
      %v251 = vld [vmem:[%s193 + $0x190] sm:$0xff]
      %v252 = vld [vmem:[%s193 + $0x198] sm:$0xff]
      %v253 = vld [vmem:[%s193 + $0x1a0] sm:$0xff]
      %v254 = vld [vmem:[%s193 + $0x1a8] sm:$0xff]
      %v255 = vld [vmem:[%s193 + $0x1b0] sm:$0xff]
      %v256 = vld [vmem:[%s193 + $0x1b8] sm:$0xff]
      %v257 = vld [vmem:[%s193 + $0x1c0] sm:$0xff]
      %v258 = vld [vmem:[%s193 + $0x1c8] sm:$0xff]
      %v259 = vld [vmem:[%s193 + $0x1d0] sm:$0xff]
      %v260 = vld [vmem:[%s193 + $0x1d8] sm:$0xff]
      %v261 = vld [vmem:[%s193 + $0x1e0] sm:$0xff]
      %v262 = vld [vmem:[%s193 + $0x1e8] sm:$0xff]
      %v263 = vld [vmem:[%s193 + $0x1f0] sm:$0xff]
      %v264 = vld [vmem:[%s193 + $0x1f8] sm:$0xff]
      %v265 = vld [vmem:[%s193 + $0x200] sm:$0xff]
      %v266 = vld [vmem:[%s193 + $0x208] sm:$0xff]
      %v267 = vld [vmem:[%s193 + $0x210] sm:$0xff]
      %v268 = vld [vmem:[%s193 + $0x218] sm:$0xff]
      %v269 = vld [vmem:[%s193 + $0x220] sm:$0xff]
      %v270 = vld [vmem:[%s193 + $0x228] sm:$0xff]
      %v271 = vld [vmem:[%s193 + $0x230] sm:$0xff]
      %v272 = vld [vmem:[%s193 + $0x238] sm:$0xff]
      %v273 = vld [vmem:[%s193 + $0x240] sm:$0xff]
      %v274 = vld [vmem:[%s193 + $0x248] sm:$0xff]
      %v275 = vld [vmem:[%s193 + $0x250] sm:$0xff]
      %v276 = vld [vmem:[%s193 + $0x258] sm:$0xff]
      %v277 = vld [vmem:[%s193 + $0x260] sm:$0xff]
      %v278 = vld [vmem:[%s193 + $0x268] sm:$0xff]
      %v279 = vld [vmem:[%s193 + $0x270] sm:$0xff]
      %v280 = vld [vmem:[%s193 + $0x278] sm:$0xff]
      %v281 = vld [vmem:[%s193 + $0x280] sm:$0xff]
      %v282 = vld [vmem:[%s193 + $0x288] sm:$0xff]
      %v283 = vld [vmem:[%s193 + $0x290] sm:$0xff]
      %v284 = vld [vmem:[%s193 + $0x298] sm:$0xff]
      %v285 = vld [vmem:[%s193 + $0x2a0] sm:$0xff]
      %v286 = vld [vmem:[%s193 + $0x2a8] sm:$0xff]
      %v287 = vld [vmem:[%s193 + $0x2b0] sm:$0xff]
      %v288 = vld [vmem:[%s193 + $0x2b8] sm:$0xff]
      %v289 = vld [vmem:[%s193 + $0x2c0] sm:$0xff]
      %v290 = vld [vmem:[%s193 + $0x2c8] sm:$0xff]
      %v291 = vld [vmem:[%s193 + $0x2d0] sm:$0xff]
      %v292 = vld [vmem:[%s193 + $0x2d8] sm:$0xff]
      %v293 = vld [vmem:[%s193 + $0x2e0] sm:$0xff]
      %v294 = vld [vmem:[%s193 + $0x2e8] sm:$0xff]
      %v295 = vld [vmem:[%s193 + $0x2f0] sm:$0xff]
      %v296 = vld [vmem:[%s193 + $0x2f8] sm:$0xff]
      %v297 = vld [vmem:[%s193 + $0x300] sm:$0xff]
      %v298 = vld [vmem:[%s193 + $0x308] sm:$0xff]
      %v299 = vld [vmem:[%s1] sm:$0xff]
      %v300 = vld [vmem:[%s1 + $0x8] sm:$0x1]
      %vm301 = vcmask 72704
      %v303 = vsel %vm301, %v201, 0
      %v306 = vsel %vm301, %v202, 0
      %v309 = vsel %vm301, %v203, 0
      %v312 = vsel %vm301, %v204, 0
      %v315 = vsel %vm301, %v205, 0
      %v318 = vsel %vm301, %v206, 0
      %v321 = vsel %vm301, %v207, 0
      %v324 = vsel %vm301, %v208, 0
      %v327 = vsel %vm301, %v209, 0
      %v330 = vsel %vm301, %v210, 0
      %v333 = vsel %vm301, %v211, 0
      %v336 = vsel %vm301, %v212, 0
      %v339 = vsel %vm301, %v213, 0
      %v342 = vsel %vm301, %v214, 0
      %v345 = vsel %vm301, %v215, 0
      %v348 = vsel %vm301, %v216, 0
      %v351 = vsel %vm301, %v217, 0
      %v354 = vsel %vm301, %v218, 0
      %v357 = vsel %vm301, %v219, 0
      %v360 = vsel %vm301, %v220, 0
      %v363 = vsel %vm301, %v221, 0
      %v366 = vsel %vm301, %v222, 0
      %v369 = vsel %vm301, %v223, 0
      %v372 = vsel %vm301, %v224, 0
      %v375 = vsel %vm301, %v225, 0
      %v378 = vsel %vm301, %v226, 0
      %v381 = vsel %vm301, %v227, 0
      %v384 = vsel %vm301, %v228, 0
      %v387 = vsel %vm301, %v229, 0
      %v390 = vsel %vm301, %v230, 0
      %v393 = vsel %vm301, %v231, 0
      %v396 = vsel %vm301, %v232, 0
      %v399 = vsel %vm301, %v233, 0
      %v402 = vsel %vm301, %v234, 0
      %v405 = vsel %vm301, %v235, 0
      %v408 = vsel %vm301, %v236, 0
      %v411 = vsel %vm301, %v237, 0
      %v414 = vsel %vm301, %v238, 0
      %v417 = vsel %vm301, %v239, 0
      %v420 = vsel %vm301, %v240, 0
      %v423 = vsel %vm301, %v241, 0
      %v426 = vsel %vm301, %v242, 0
      %v429 = vsel %vm301, %v243, 0
      %v432 = vsel %vm301, %v244, 0
      %v435 = vsel %vm301, %v245, 0
      %v438 = vsel %vm301, %v246, 0
      %v441 = vsel %vm301, %v247, 0
      %v444 = vsel %vm301, %v248, 0
      %v447 = vsel %vm301, %v249, 0
      %v450 = vsel %vm301, %v250, 0
      %v453 = vsel %vm301, %v251, 0
      %v456 = vsel %vm301, %v252, 0
      %v459 = vsel %vm301, %v253, 0
      %v462 = vsel %vm301, %v254, 0
      %v465 = vsel %vm301, %v255, 0
      %v468 = vsel %vm301, %v256, 0
      %v471 = vsel %vm301, %v257, 0
      %v474 = vsel %vm301, %v258, 0
      %v477 = vsel %vm301, %v259, 0
      %v480 = vsel %vm301, %v260, 0
      %v483 = vsel %vm301, %v261, 0
      %v486 = vsel %vm301, %v262, 0
      %v489 = vsel %vm301, %v263, 0
      %v492 = vsel %vm301, %v264, 0
      %v495 = vsel %vm301, %v265, 0
      %v498 = vsel %vm301, %v266, 0
      %v501 = vsel %vm301, %v267, 0
      %v504 = vsel %vm301, %v268, 0
      %v507 = vsel %vm301, %v269, 0
      %v510 = vsel %vm301, %v270, 0
      %v513 = vsel %vm301, %v271, 0
      %v516 = vsel %vm301, %v272, 0
      %v519 = vsel %vm301, %v273, 0
      %v522 = vsel %vm301, %v274, 0
      %v525 = vsel %vm301, %v275, 0
      %v528 = vsel %vm301, %v276, 0
      %v531 = vsel %vm301, %v277, 0
      %v534 = vsel %vm301, %v278, 0
      %v537 = vsel %vm301, %v279, 0
      %v540 = vsel %vm301, %v280, 0
      %v543 = vsel %vm301, %v281, 0
      %v546 = vsel %vm301, %v282, 0
      %v549 = vsel %vm301, %v283, 0
      %v552 = vsel %vm301, %v284, 0
      %v555 = vsel %vm301, %v285, 0
      %v558 = vsel %vm301, %v286, 0
      %v561 = vsel %vm301, %v287, 0
      %v564 = vsel %vm301, %v288, 0
      %v567 = vsel %vm301, %v289, 0
      %v570 = vsel %vm301, %v290, 0
      %v573 = vsel %vm301, %v291, 0
      %v576 = vsel %vm301, %v292, 0
      %v579 = vsel %vm301, %v293, 0
      %v582 = vsel %vm301, %v294, 0
      %v585 = vsel %vm301, %v295, 0
      %v588 = vsel %vm301, %v296, 0
      %v591 = vsel %vm301, %v297, 0
      %v594 = vsel %vm301, %v298, 0
      %vm596 = vcmask 1040384
      %v598 = vsel %vm596, %v300, 0
      %600 = vmatprep.subr.mxu0 0.0
      %601 = vmatpush1.msra.mxu0 0.0
      %602 = vmatprep.subr.mxu0 0.0
      %603 = vmatpush1.msra.mxu0 0.0
      %604 = vmatprep.subr.mxu0 0.0
      %605 = vmatpush1.msra.mxu0 0.0
      %606 = vmatprep.subr.mxu0 0.0
      %607 = vmatpush1.msra.mxu0 0.0
      %608 = vmatprep.subr.mxu0 0.0
      %609 = vmatpush1.msra.mxu0 0.0
      %610 = vmatprep.subr.mxu0 0.0
      %611 = vmatpush1.msra.mxu0 0.0
      %612 = vmatprep.subr.mxu0 0.0
      %613 = vmatpush1.msra.mxu0 0.0
      %614 = vmatprep.subr.mxu0 0.0
      %615 = vmatpush1.msra.mxu0 0.0
      %616 = vmatprep.subr.mxu0 0.0
      %617 = vmatpush1.msra.mxu0 0.0
      %618 = vmatprep.subr.mxu0 0.0
      %619 = vmatpush1.msra.mxu0 0.0
      %620 = vmatprep.subr.mxu0 0.0
      %621 = vmatpush1.msra.mxu0 0.0
      %622 = vmatprep.subr.mxu0 0.0
      %623 = vmatpush1.msra.mxu0 0.0
      %624 = vmatprep.subr.mxu0 0.0
      %625 = vmatpush1.msra.mxu0 0.0
      %626 = vmatprep.subr.mxu0 0.0
      %627 = vmatpush1.msra.mxu0 0.0
      %628 = vmatprep.subr.mxu0 0.0
      %629 = vmatpush1.msra.mxu0 %v598
      %630 = vmatprep.subr.mxu0 0.0
      %631 = vmatpush1.msra.mxu0 %v299
      %632 = vmatprep.subr.mxu0 0.0
      %633 = vmatpush2.msra.mxu0 0.0
      %634 = vmatprep.subr.mxu0 0.0
      %635 = vmatpush2.msra.mxu0 0.0
      %636 = vmatprep.subr.mxu0 0.0
      %637 = vmatpush2.msra.mxu0 0.0
      %638 = vmatprep.subr.mxu0 0.0
      %639 = vmatpush2.msra.mxu0 0.0
      %640 = vmatprep.subr.mxu0 0.0
      %641 = vmatpush2.msra.mxu0 0.0
      %642 = vmatprep.subr.mxu0 0.0
      %643 = vmatpush2.msra.mxu0 0.0
      %644 = vmatprep.subr.mxu0 0.0
      %645 = vmatpush2.msra.mxu0 0.0
      %646 = vmatprep.subr.mxu0 0.0
      %647 = vmatpush2.msra.mxu0 0.0
      %648 = vmatprep.subr.mxu0 0.0
      %649 = vmatpush2.msra.mxu0 0.0
      %650 = vmatprep.subr.mxu0 0.0
      %651 = vmatpush2.msra.mxu0 0.0
      %652 = vmatprep.subr.mxu0 0.0
      %653 = vmatpush2.msra.mxu0 0.0
      %654 = vmatprep.subr.mxu0 0.0
      %655 = vmatpush2.msra.mxu0 0.0
      %656 = vmatprep.subr.mxu0 0.0
      %657 = vmatpush2.msra.mxu0 0.0
      %658 = vmatprep.subr.mxu0 0.0
      %659 = vmatpush2.msra.mxu0 0.0
      %660 = vmatprep.subr.mxu0 0.0
      %661 = vmatpush2.msra.mxu0 0.0
      %662 = vmatprep.subr.mxu0 0.0
      %663 = vmatpush2.msra.mxu0 0.0
      %664 = vmatprep.mubr.f32.mxu0 0.0
      %665 = vmatmul.mubr.f32.gmra.mxu0 %v303
      %v666 = vpop.f32.mrf.mxu0
      %v667 = vadd.f32 0.0, %v666
      %v668 = vpop.f32.mrf.mxu0
      %669 = vmatprep.mubr.f32.mxu0 0.0
      %670 = vmatmul.mubr.f32.gmra.mxu0 %v306
      %v671 = vpop.f32.mrf.mxu0
      %v672 = vadd.f32 0.0, %v671
      %v673 = vpop.f32.mrf.mxu0
      %674 = vmatprep.mubr.f32.mxu0 0.0
      %675 = vmatmul.mubr.f32.gmra.mxu0 %v309
      %v676 = vpop.f32.mrf.mxu0
      %v677 = vadd.f32 0.0, %v676
      %v678 = vpop.f32.mrf.mxu0
      %679 = vmatprep.mubr.f32.mxu0 0.0
      %680 = vmatmul.mubr.f32.gmra.mxu0 %v312
      %v681 = vpop.f32.mrf.mxu0
      %v682 = vadd.f32 0.0, %v681
      %v683 = vpop.f32.mrf.mxu0
      %684 = vmatprep.mubr.f32.mxu0 0.0
      %685 = vmatmul.mubr.f32.gmra.mxu0 %v315
      %v686 = vpop.f32.mrf.mxu0
      %v687 = vadd.f32 0.0, %v686
      %v688 = vpop.f32.mrf.mxu0
      %689 = vmatprep.mubr.f32.mxu0 0.0
      %690 = vmatmul.mubr.f32.gmra.mxu0 %v318
      %v691 = vpop.f32.mrf.mxu0
      %v692 = vadd.f32 0.0, %v691
      %v693 = vpop.f32.mrf.mxu0
      %694 = vmatprep.mubr.f32.mxu0 0.0
      %695 = vmatmul.mubr.f32.gmra.mxu0 %v321
      %v696 = vpop.f32.mrf.mxu0
      %v697 = vadd.f32 0.0, %v696
      %v698 = vpop.f32.mrf.mxu0
      %699 = vmatprep.mubr.f32.mxu0 0.0
      %700 = vmatmul.mubr.f32.gmra.mxu0 %v324
      %v701 = vpop.f32.mrf.mxu0
      %v702 = vadd.f32 0.0, %v701
      %v703 = vpop.f32.mrf.mxu0
      %704 = vmatprep.mubr.f32.mxu0 0.0
      %705 = vmatmul.mubr.f32.gmra.mxu0 %v327
      %v706 = vpop.f32.mrf.mxu0
      %v707 = vadd.f32 0.0, %v706
      %v708 = vpop.f32.mrf.mxu0
      %709 = vmatprep.mubr.f32.mxu0 0.0
      %710 = vmatmul.mubr.f32.gmra.mxu0 %v330
      %v711 = vpop.f32.mrf.mxu0
      %v712 = vadd.f32 0.0, %v711
      %v713 = vpop.f32.mrf.mxu0
      %714 = vmatprep.mubr.f32.mxu0 0.0
      %715 = vmatmul.mubr.f32.gmra.mxu0 %v333
      %v716 = vpop.f32.mrf.mxu0
      %v717 = vadd.f32 0.0, %v716
      %v718 = vpop.f32.mrf.mxu0
      %719 = vmatprep.mubr.f32.mxu0 0.0
      %720 = vmatmul.mubr.f32.gmra.mxu0 %v336
      %v721 = vpop.f32.mrf.mxu0
      %v722 = vadd.f32 0.0, %v721
      %v723 = vpop.f32.mrf.mxu0
      %724 = vmatprep.mubr.f32.mxu0 0.0
      %725 = vmatmul.mubr.f32.gmra.mxu0 %v339
      %v726 = vpop.f32.mrf.mxu0
      %v727 = vadd.f32 0.0, %v726
      %v728 = vpop.f32.mrf.mxu0
      %729 = vmatprep.mubr.f32.mxu0 0.0
      %730 = vmatmul.mubr.f32.gmra.mxu0 %v342
      %v731 = vpop.f32.mrf.mxu0
      %v732 = vadd.f32 0.0, %v731
      %v733 = vpop.f32.mrf.mxu0
      %734 = vmatprep.mubr.f32.mxu0 0.0
      %735 = vmatmul.mubr.f32.gmra.mxu0 %v345
      %v736 = vpop.f32.mrf.mxu0
      %v737 = vadd.f32 0.0, %v736
      %v738 = vpop.f32.mrf.mxu0
      %739 = vmatprep.mubr.f32.mxu0 0.0
      %740 = vmatmul.mubr.f32.gmra.mxu0 %v348
      %v741 = vpop.f32.mrf.mxu0
      %v742 = vadd.f32 0.0, %v741
      %v743 = vpop.f32.mrf.mxu0
      %744 = vmatprep.mubr.f32.mxu0 0.0
      %745 = vmatmul.mubr.f32.gmra.mxu0 %v351
      %v746 = vpop.f32.mrf.mxu0
      %v747 = vadd.f32 0.0, %v746
      %v748 = vpop.f32.mrf.mxu0
      %749 = vmatprep.mubr.f32.mxu0 0.0
      %750 = vmatmul.mubr.f32.gmra.mxu0 %v354
      %v751 = vpop.f32.mrf.mxu0
      %v752 = vadd.f32 0.0, %v751
      %v753 = vpop.f32.mrf.mxu0
      %754 = vmatprep.mubr.f32.mxu0 0.0
      %755 = vmatmul.mubr.f32.gmra.mxu0 %v357
      %v756 = vpop.f32.mrf.mxu0
      %v757 = vadd.f32 0.0, %v756
      %v758 = vpop.f32.mrf.mxu0
      %759 = vmatprep.mubr.f32.mxu0 0.0
      %760 = vmatmul.mubr.f32.gmra.mxu0 %v360
      %v761 = vpop.f32.mrf.mxu0
      %v762 = vadd.f32 0.0, %v761
      %v763 = vpop.f32.mrf.mxu0
      %764 = vmatprep.mubr.f32.mxu0 0.0
      %765 = vmatmul.mubr.f32.gmra.mxu0 %v363
      %v766 = vpop.f32.mrf.mxu0
      %v767 = vadd.f32 0.0, %v766
      %v768 = vpop.f32.mrf.mxu0
      %769 = vmatprep.mubr.f32.mxu0 0.0
      %770 = vmatmul.mubr.f32.gmra.mxu0 %v366
      %v771 = vpop.f32.mrf.mxu0
      %v772 = vadd.f32 0.0, %v771
      %v773 = vpop.f32.mrf.mxu0
      %774 = vmatprep.mubr.f32.mxu0 0.0
      %775 = vmatmul.mubr.f32.gmra.mxu0 %v369
      %v776 = vpop.f32.mrf.mxu0
      %v777 = vadd.f32 0.0, %v776
      %v778 = vpop.f32.mrf.mxu0
      %779 = vmatprep.mubr.f32.mxu0 0.0
      %780 = vmatmul.mubr.f32.gmra.mxu0 %v372
      %v781 = vpop.f32.mrf.mxu0
      %v782 = vadd.f32 0.0, %v781
      %v783 = vpop.f32.mrf.mxu0
      %784 = vmatprep.mubr.f32.mxu0 0.0
      %785 = vmatmul.mubr.f32.gmra.mxu0 %v375
      %v786 = vpop.f32.mrf.mxu0
      %v787 = vadd.f32 0.0, %v786
      %v788 = vpop.f32.mrf.mxu0
      %789 = vmatprep.mubr.f32.mxu0 0.0
      %790 = vmatmul.mubr.f32.gmra.mxu0 %v378
      %v791 = vpop.f32.mrf.mxu0
      %v792 = vadd.f32 0.0, %v791
      %v793 = vpop.f32.mrf.mxu0
      %794 = vmatprep.mubr.f32.mxu0 0.0
      %795 = vmatmul.mubr.f32.gmra.mxu0 %v381
      %v796 = vpop.f32.mrf.mxu0
      %v797 = vadd.f32 0.0, %v796
      %v798 = vpop.f32.mrf.mxu0
      %799 = vmatprep.mubr.f32.mxu0 0.0
      %800 = vmatmul.mubr.f32.gmra.mxu0 %v384
      %v801 = vpop.f32.mrf.mxu0
      %v802 = vadd.f32 0.0, %v801
      %v803 = vpop.f32.mrf.mxu0
      %804 = vmatprep.mubr.f32.mxu0 0.0
      %805 = vmatmul.mubr.f32.gmra.mxu0 %v387
      %v806 = vpop.f32.mrf.mxu0
      %v807 = vadd.f32 0.0, %v806
      %v808 = vpop.f32.mrf.mxu0
      %809 = vmatprep.mubr.f32.mxu0 0.0
      %810 = vmatmul.mubr.f32.gmra.mxu0 %v390
      %v811 = vpop.f32.mrf.mxu0
      %v812 = vadd.f32 0.0, %v811
      %v813 = vpop.f32.mrf.mxu0
      %814 = vmatprep.mubr.f32.mxu0 0.0
      %815 = vmatmul.mubr.f32.gmra.mxu0 %v393
      %v816 = vpop.f32.mrf.mxu0
      %v817 = vadd.f32 0.0, %v816
      %v818 = vpop.f32.mrf.mxu0
      %819 = vmatprep.mubr.f32.mxu0 0.0
      %820 = vmatmul.mubr.f32.gmra.mxu0 %v396
      %v821 = vpop.f32.mrf.mxu0
      %v822 = vadd.f32 0.0, %v821
      %v823 = vpop.f32.mrf.mxu0
      %824 = vmatprep.mubr.f32.mxu0 0.0
      %825 = vmatmul.mubr.f32.gmra.mxu0 %v399
      %v826 = vpop.f32.mrf.mxu0
      %v827 = vadd.f32 0.0, %v826
      %v828 = vpop.f32.mrf.mxu0
      %829 = vmatprep.mubr.f32.mxu0 0.0
      %830 = vmatmul.mubr.f32.gmra.mxu0 %v402
      %v831 = vpop.f32.mrf.mxu0
      %v832 = vadd.f32 0.0, %v831
      %v833 = vpop.f32.mrf.mxu0
      %834 = vmatprep.mubr.f32.mxu0 0.0
      %835 = vmatmul.mubr.f32.gmra.mxu0 %v405
      %v836 = vpop.f32.mrf.mxu0
      %v837 = vadd.f32 0.0, %v836
      %v838 = vpop.f32.mrf.mxu0
      %839 = vmatprep.mubr.f32.mxu0 0.0
      %840 = vmatmul.mubr.f32.gmra.mxu0 %v408
      %v841 = vpop.f32.mrf.mxu0
      %v842 = vadd.f32 0.0, %v841
      %v843 = vpop.f32.mrf.mxu0
      %844 = vmatprep.mubr.f32.mxu0 0.0
      %845 = vmatmul.mubr.f32.gmra.mxu0 %v411
      %v846 = vpop.f32.mrf.mxu0
      %v847 = vadd.f32 0.0, %v846
      %v848 = vpop.f32.mrf.mxu0
      %849 = vmatprep.mubr.f32.mxu0 0.0
      %850 = vmatmul.mubr.f32.gmra.mxu0 %v414
      %v851 = vpop.f32.mrf.mxu0
      %v852 = vadd.f32 0.0, %v851
      %v853 = vpop.f32.mrf.mxu0
      %854 = vmatprep.mubr.f32.mxu0 0.0
      %855 = vmatmul.mubr.f32.gmra.mxu0 %v417
      %v856 = vpop.f32.mrf.mxu0
      %v857 = vadd.f32 0.0, %v856
      %v858 = vpop.f32.mrf.mxu0
      %859 = vmatprep.mubr.f32.mxu0 0.0
      %860 = vmatmul.mubr.f32.gmra.mxu0 %v420
      %v861 = vpop.f32.mrf.mxu0
      %v862 = vadd.f32 0.0, %v861
      %v863 = vpop.f32.mrf.mxu0
      %864 = vmatprep.mubr.f32.mxu0 0.0
      %865 = vmatmul.mubr.f32.gmra.mxu0 %v423
      %v866 = vpop.f32.mrf.mxu0
      %v867 = vadd.f32 0.0, %v866
      %v868 = vpop.f32.mrf.mxu0
      %869 = vmatprep.mubr.f32.mxu0 0.0
      %870 = vmatmul.mubr.f32.gmra.mxu0 %v426
      %v871 = vpop.f32.mrf.mxu0
      %v872 = vadd.f32 0.0, %v871
      %v873 = vpop.f32.mrf.mxu0
      %874 = vmatprep.mubr.f32.mxu0 0.0
      %875 = vmatmul.mubr.f32.gmra.mxu0 %v429
      %v876 = vpop.f32.mrf.mxu0
      %v877 = vadd.f32 0.0, %v876
      %v878 = vpop.f32.mrf.mxu0
      %879 = vmatprep.mubr.f32.mxu0 0.0
      %880 = vmatmul.mubr.f32.gmra.mxu0 %v432
      %v881 = vpop.f32.mrf.mxu0
      %v882 = vadd.f32 0.0, %v881
      %v883 = vpop.f32.mrf.mxu0
      %884 = vmatprep.mubr.f32.mxu0 0.0
      %885 = vmatmul.mubr.f32.gmra.mxu0 %v435
      %v886 = vpop.f32.mrf.mxu0
      %v887 = vadd.f32 0.0, %v886
      %v888 = vpop.f32.mrf.mxu0
      %889 = vmatprep.mubr.f32.mxu0 0.0
      %890 = vmatmul.mubr.f32.gmra.mxu0 %v438
      %v891 = vpop.f32.mrf.mxu0
      %v892 = vadd.f32 0.0, %v891
      %v893 = vpop.f32.mrf.mxu0
      %894 = vmatprep.mubr.f32.mxu0 0.0
      %895 = vmatmul.mubr.f32.gmra.mxu0 %v441
      %v896 = vpop.f32.mrf.mxu0
      %v897 = vadd.f32 0.0, %v896
      %v898 = vpop.f32.mrf.mxu0
      %899 = vmatprep.mubr.f32.mxu0 0.0
      %900 = vmatmul.mubr.f32.gmra.mxu0 %v444
      %v901 = vpop.f32.mrf.mxu0
      %v902 = vadd.f32 0.0, %v901
      %v903 = vpop.f32.mrf.mxu0
      %904 = vmatprep.mubr.f32.mxu0 0.0
      %905 = vmatmul.mubr.f32.gmra.mxu0 %v447
      %v906 = vpop.f32.mrf.mxu0
      %v907 = vadd.f32 0.0, %v906
      %v908 = vpop.f32.mrf.mxu0
      %909 = vmatprep.mubr.f32.mxu0 0.0
      %910 = vmatmul.mubr.f32.gmra.mxu0 %v450
      %v911 = vpop.f32.mrf.mxu0
      %v912 = vadd.f32 0.0, %v911
      %v913 = vpop.f32.mrf.mxu0
      %914 = vmatprep.mubr.f32.mxu0 0.0
      %915 = vmatmul.mubr.f32.gmra.mxu0 %v453
      %v916 = vpop.f32.mrf.mxu0
      %v917 = vadd.f32 0.0, %v916
      %v918 = vpop.f32.mrf.mxu0
      %919 = vmatprep.mubr.f32.mxu0 0.0
      %920 = vmatmul.mubr.f32.gmra.mxu0 %v456
      %v921 = vpop.f32.mrf.mxu0
      %v922 = vadd.f32 0.0, %v921
      %v923 = vpop.f32.mrf.mxu0
      %924 = vmatprep.mubr.f32.mxu0 0.0
      %925 = vmatmul.mubr.f32.gmra.mxu0 %v459
      %v926 = vpop.f32.mrf.mxu0
      %v927 = vadd.f32 0.0, %v926
      %v928 = vpop.f32.mrf.mxu0
      %929 = vmatprep.mubr.f32.mxu0 0.0
      %930 = vmatmul.mubr.f32.gmra.mxu0 %v462
      %v931 = vpop.f32.mrf.mxu0
      %v932 = vadd.f32 0.0, %v931
      %v933 = vpop.f32.mrf.mxu0
      %934 = vmatprep.mubr.f32.mxu0 0.0
      %935 = vmatmul.mubr.f32.gmra.mxu0 %v465
      %v936 = vpop.f32.mrf.mxu0
      %v937 = vadd.f32 0.0, %v936
      %v938 = vpop.f32.mrf.mxu0
      %939 = vmatprep.mubr.f32.mxu0 0.0
      %940 = vmatmul.mubr.f32.gmra.mxu0 %v468
      %v941 = vpop.f32.mrf.mxu0
      %v942 = vadd.f32 0.0, %v941
      %v943 = vpop.f32.mrf.mxu0
      %944 = vmatprep.mubr.f32.mxu0 0.0
      %945 = vmatmul.mubr.f32.gmra.mxu0 %v471
      %v946 = vpop.f32.mrf.mxu0
      %v947 = vadd.f32 0.0, %v946
      %v948 = vpop.f32.mrf.mxu0
      %949 = vmatprep.mubr.f32.mxu0 0.0
      %950 = vmatmul.mubr.f32.gmra.mxu0 %v474
      %v951 = vpop.f32.mrf.mxu0
      %v952 = vadd.f32 0.0, %v951
      %v953 = vpop.f32.mrf.mxu0
      %954 = vmatprep.mubr.f32.mxu0 0.0
      %955 = vmatmul.mubr.f32.gmra.mxu0 %v477
      %v956 = vpop.f32.mrf.mxu0
      %v957 = vadd.f32 0.0, %v956
      %v958 = vpop.f32.mrf.mxu0
      %959 = vmatprep.mubr.f32.mxu0 0.0
      %960 = vmatmul.mubr.f32.gmra.mxu0 %v480
      %v961 = vpop.f32.mrf.mxu0
      %v962 = vadd.f32 0.0, %v961
      %v963 = vpop.f32.mrf.mxu0
      %964 = vmatprep.mubr.f32.mxu0 0.0
      %965 = vmatmul.mubr.f32.gmra.mxu0 %v483
      %v966 = vpop.f32.mrf.mxu0
      %v967 = vadd.f32 0.0, %v966
      %v968 = vpop.f32.mrf.mxu0
      %969 = vmatprep.mubr.f32.mxu0 0.0
      %970 = vmatmul.mubr.f32.gmra.mxu0 %v486
      %v971 = vpop.f32.mrf.mxu0
      %v972 = vadd.f32 0.0, %v971
      %v973 = vpop.f32.mrf.mxu0
      %974 = vmatprep.mubr.f32.mxu0 0.0
      %975 = vmatmul.mubr.f32.gmra.mxu0 %v489
      %v976 = vpop.f32.mrf.mxu0
      %v977 = vadd.f32 0.0, %v976
      %v978 = vpop.f32.mrf.mxu0
      %979 = vmatprep.mubr.f32.mxu0 0.0
      %980 = vmatmul.mubr.f32.gmra.mxu0 %v492
      %v981 = vpop.f32.mrf.mxu0
      %v982 = vadd.f32 0.0, %v981
      %v983 = vpop.f32.mrf.mxu0
      %984 = vmatprep.mubr.f32.mxu0 0.0
      %985 = vmatmul.mubr.f32.gmra.mxu0 %v495
      %v986 = vpop.f32.mrf.mxu0
      %v987 = vadd.f32 0.0, %v986
      %v988 = vpop.f32.mrf.mxu0
      %989 = vmatprep.mubr.f32.mxu0 0.0
      %990 = vmatmul.mubr.f32.gmra.mxu0 %v498
      %v991 = vpop.f32.mrf.mxu0
      %v992 = vadd.f32 0.0, %v991
      %v993 = vpop.f32.mrf.mxu0
      %994 = vmatprep.mubr.f32.mxu0 0.0
      %995 = vmatmul.mubr.f32.gmra.mxu0 %v501
      %v996 = vpop.f32.mrf.mxu0
      %v997 = vadd.f32 0.0, %v996
      %v998 = vpop.f32.mrf.mxu0
      %999 = vmatprep.mubr.f32.mxu0 0.0
      %1000 = vmatmul.mubr.f32.gmra.mxu0 %v504
      %v1001 = vpop.f32.mrf.mxu0
      %v1002 = vadd.f32 0.0, %v1001
      %v1003 = vpop.f32.mrf.mxu0
      %1004 = vmatprep.mubr.f32.mxu0 0.0
      %1005 = vmatmul.mubr.f32.gmra.mxu0 %v507
      %v1006 = vpop.f32.mrf.mxu0
      %v1007 = vadd.f32 0.0, %v1006
      %v1008 = vpop.f32.mrf.mxu0
      %1009 = vmatprep.mubr.f32.mxu0 0.0
      %1010 = vmatmul.mubr.f32.gmra.mxu0 %v510
      %v1011 = vpop.f32.mrf.mxu0
      %v1012 = vadd.f32 0.0, %v1011
      %v1013 = vpop.f32.mrf.mxu0
      %1014 = vmatprep.mubr.f32.mxu0 0.0
      %1015 = vmatmul.mubr.f32.gmra.mxu0 %v513
      %v1016 = vpop.f32.mrf.mxu0
      %v1017 = vadd.f32 0.0, %v1016
      %v1018 = vpop.f32.mrf.mxu0
      %1019 = vmatprep.mubr.f32.mxu0 0.0
      %1020 = vmatmul.mubr.f32.gmra.mxu0 %v516
      %v1021 = vpop.f32.mrf.mxu0
      %v1022 = vadd.f32 0.0, %v1021
      %v1023 = vpop.f32.mrf.mxu0
      %1024 = vmatprep.mubr.f32.mxu0 0.0
      %1025 = vmatmul.mubr.f32.gmra.mxu0 %v519
      %v1026 = vpop.f32.mrf.mxu0
      %v1027 = vadd.f32 0.0, %v1026
      %v1028 = vpop.f32.mrf.mxu0
      %1029 = vmatprep.mubr.f32.mxu0 0.0
      %1030 = vmatmul.mubr.f32.gmra.mxu0 %v522
      %v1031 = vpop.f32.mrf.mxu0
      %v1032 = vadd.f32 0.0, %v1031
      %v1033 = vpop.f32.mrf.mxu0
      %1034 = vmatprep.mubr.f32.mxu0 0.0
      %1035 = vmatmul.mubr.f32.gmra.mxu0 %v525
      %v1036 = vpop.f32.mrf.mxu0
      %v1037 = vadd.f32 0.0, %v1036
      %v1038 = vpop.f32.mrf.mxu0
      %1039 = vmatprep.mubr.f32.mxu0 0.0
      %1040 = vmatmul.mubr.f32.gmra.mxu0 %v528
      %v1041 = vpop.f32.mrf.mxu0
      %v1042 = vadd.f32 0.0, %v1041
      %v1043 = vpop.f32.mrf.mxu0
      %1044 = vmatprep.mubr.f32.mxu0 0.0
      %1045 = vmatmul.mubr.f32.gmra.mxu0 %v531
      %v1046 = vpop.f32.mrf.mxu0
      %v1047 = vadd.f32 0.0, %v1046
      %v1048 = vpop.f32.mrf.mxu0
      %1049 = vmatprep.mubr.f32.mxu0 0.0
      %1050 = vmatmul.mubr.f32.gmra.mxu0 %v534
      %v1051 = vpop.f32.mrf.mxu0
      %v1052 = vadd.f32 0.0, %v1051
      %v1053 = vpop.f32.mrf.mxu0
      %1054 = vmatprep.mubr.f32.mxu0 0.0
      %1055 = vmatmul.mubr.f32.gmra.mxu0 %v537
      %v1056 = vpop.f32.mrf.mxu0
      %v1057 = vadd.f32 0.0, %v1056
      %v1058 = vpop.f32.mrf.mxu0
      %1059 = vmatprep.mubr.f32.mxu0 0.0
      %1060 = vmatmul.mubr.f32.gmra.mxu0 %v540
      %v1061 = vpop.f32.mrf.mxu0
      %v1062 = vadd.f32 0.0, %v1061
      %v1063 = vpop.f32.mrf.mxu0
      %1064 = vmatprep.mubr.f32.mxu0 0.0
      %1065 = vmatmul.mubr.f32.gmra.mxu0 %v543
      %v1066 = vpop.f32.mrf.mxu0
      %v1067 = vadd.f32 0.0, %v1066
      %v1068 = vpop.f32.mrf.mxu0
      %1069 = vmatprep.mubr.f32.mxu0 0.0
      %1070 = vmatmul.mubr.f32.gmra.mxu0 %v546
      %v1071 = vpop.f32.mrf.mxu0
      %v1072 = vadd.f32 0.0, %v1071
      %v1073 = vpop.f32.mrf.mxu0
      %1074 = vmatprep.mubr.f32.mxu0 0.0
      %1075 = vmatmul.mubr.f32.gmra.mxu0 %v549
      %v1076 = vpop.f32.mrf.mxu0
      %v1077 = vadd.f32 0.0, %v1076
      %v1078 = vpop.f32.mrf.mxu0
      %1079 = vmatprep.mubr.f32.mxu0 0.0
      %1080 = vmatmul.mubr.f32.gmra.mxu0 %v552
      %v1081 = vpop.f32.mrf.mxu0
      %v1082 = vadd.f32 0.0, %v1081
      %v1083 = vpop.f32.mrf.mxu0
      %1084 = vmatprep.mubr.f32.mxu0 0.0
      %1085 = vmatmul.mubr.f32.gmra.mxu0 %v555
      %v1086 = vpop.f32.mrf.mxu0
      %v1087 = vadd.f32 0.0, %v1086
      %v1088 = vpop.f32.mrf.mxu0
      %1089 = vmatprep.mubr.f32.mxu0 0.0
      %1090 = vmatmul.mubr.f32.gmra.mxu0 %v558
      %v1091 = vpop.f32.mrf.mxu0
      %v1092 = vadd.f32 0.0, %v1091
      %v1093 = vpop.f32.mrf.mxu0
      %1094 = vmatprep.mubr.f32.mxu0 0.0
      %1095 = vmatmul.mubr.f32.gmra.mxu0 %v561
      %v1096 = vpop.f32.mrf.mxu0
      %v1097 = vadd.f32 0.0, %v1096
      %v1098 = vpop.f32.mrf.mxu0
      %1099 = vmatprep.mubr.f32.mxu0 0.0
      %1100 = vmatmul.mubr.f32.gmra.mxu0 %v564
      %v1101 = vpop.f32.mrf.mxu0
      %v1102 = vadd.f32 0.0, %v1101
      %v1103 = vpop.f32.mrf.mxu0
      %1104 = vmatprep.mubr.f32.mxu0 0.0
      %1105 = vmatmul.mubr.f32.gmra.mxu0 %v567
      %v1106 = vpop.f32.mrf.mxu0
      %v1107 = vadd.f32 0.0, %v1106
      %v1108 = vpop.f32.mrf.mxu0
      %1109 = vmatprep.mubr.f32.mxu0 0.0
      %1110 = vmatmul.mubr.f32.gmra.mxu0 %v570
      %v1111 = vpop.f32.mrf.mxu0
      %v1112 = vadd.f32 0.0, %v1111
      %v1113 = vpop.f32.mrf.mxu0
      %1114 = vmatprep.mubr.f32.mxu0 0.0
      %1115 = vmatmul.mubr.f32.gmra.mxu0 %v573
      %v1116 = vpop.f32.mrf.mxu0
      %v1117 = vadd.f32 0.0, %v1116
      %v1118 = vpop.f32.mrf.mxu0
      %1119 = vmatprep.mubr.f32.mxu0 0.0
      %1120 = vmatmul.mubr.f32.gmra.mxu0 %v576
      %v1121 = vpop.f32.mrf.mxu0
      %v1122 = vadd.f32 0.0, %v1121
      %v1123 = vpop.f32.mrf.mxu0
      %1124 = vmatprep.mubr.f32.mxu0 0.0
      %1125 = vmatmul.mubr.f32.gmra.mxu0 %v579
      %v1126 = vpop.f32.mrf.mxu0
      %v1127 = vadd.f32 0.0, %v1126
      %v1128 = vpop.f32.mrf.mxu0
      %1129 = vmatprep.mubr.f32.mxu0 0.0
      %1130 = vmatmul.mubr.f32.gmra.mxu0 %v582
      %v1131 = vpop.f32.mrf.mxu0
      %v1132 = vadd.f32 0.0, %v1131
      %v1133 = vpop.f32.mrf.mxu0
      %1134 = vmatprep.mubr.f32.mxu0 0.0
      %1135 = vmatmul.mubr.f32.gmra.mxu0 %v585
      %v1136 = vpop.f32.mrf.mxu0
      %v1137 = vadd.f32 0.0, %v1136
      %v1138 = vpop.f32.mrf.mxu0
      %1139 = vmatprep.mubr.f32.mxu0 0.0
      %1140 = vmatmul.mubr.f32.gmra.mxu0 %v588
      %v1141 = vpop.f32.mrf.mxu0
      %v1142 = vadd.f32 0.0, %v1141
      %v1143 = vpop.f32.mrf.mxu0
      %1144 = vmatprep.mubr.f32.mxu0 0.0
      %1145 = vmatmul.mubr.f32.gmra.mxu0 %v591
      %v1146 = vpop.f32.mrf.mxu0
      %v1147 = vadd.f32 0.0, %v1146
      %v1148 = vpop.f32.mrf.mxu0
      %1149 = vmatprep.mubr.f32.mxu0 0.0
      %1150 = vmatmul.mubr.f32.gmra.mxu0 %v594
      %v1151 = vpop.f32.mrf.mxu0
      %v1152 = vadd.f32 0.0, %v1151
      %v1153 = vpop.f32.mrf.mxu0
      %1154 = vdwg.mxu0
      %v1155 = vld [vmem:[%s2] sm:$0x1]
      %v1157 = vlaneseq
      %v1158 = vshrl.u32 %v1157, 7
      %v1159 = vsub.s32 0, %v1158
      %v1160 = vrot.slane %v1155, %v1159
      %v1162 = vmul.f32 %v667, %v1160
      %v1163 = vmul.f32 %v672, %v1160
      %v1164 = vmul.f32 %v677, %v1160
      %v1165 = vmul.f32 %v682, %v1160
      %v1166 = vmul.f32 %v687, %v1160
      %v1167 = vmul.f32 %v692, %v1160
      %v1168 = vmul.f32 %v697, %v1160
      %v1169 = vmul.f32 %v702, %v1160
      %v1170 = vmul.f32 %v707, %v1160
      %v1171 = vmul.f32 %v712, %v1160
      %v1172 = vmul.f32 %v717, %v1160
      %v1173 = vmul.f32 %v722, %v1160
      %v1174 = vmul.f32 %v727, %v1160
      %v1175 = vmul.f32 %v732, %v1160
      %v1176 = vmul.f32 %v737, %v1160
      %v1177 = vmul.f32 %v742, %v1160
      %v1178 = vmul.f32 %v747, %v1160
      %v1179 = vmul.f32 %v752, %v1160
      %v1180 = vmul.f32 %v757, %v1160
      %v1181 = vmul.f32 %v762, %v1160
      %v1182 = vmul.f32 %v767, %v1160
      %v1183 = vmul.f32 %v772, %v1160
      %v1184 = vmul.f32 %v777, %v1160
      %v1185 = vmul.f32 %v782, %v1160
      %v1186 = vmul.f32 %v787, %v1160
      %v1187 = vmul.f32 %v792, %v1160
      %v1188 = vmul.f32 %v797, %v1160
      %v1189 = vmul.f32 %v802, %v1160
      %v1190 = vmul.f32 %v807, %v1160
      %v1191 = vmul.f32 %v812, %v1160
      %v1192 = vmul.f32 %v817, %v1160
      %v1193 = vmul.f32 %v822, %v1160
      %v1194 = vmul.f32 %v827, %v1160
      %v1195 = vmul.f32 %v832, %v1160
      %v1196 = vmul.f32 %v837, %v1160
      %v1197 = vmul.f32 %v842, %v1160
      %v1198 = vmul.f32 %v847, %v1160
      %v1199 = vmul.f32 %v852, %v1160
      %v1200 = vmul.f32 %v857, %v1160
      %v1201 = vmul.f32 %v862, %v1160
      %v1202 = vmul.f32 %v867, %v1160
      %v1203 = vmul.f32 %v872, %v1160
      %v1204 = vmul.f32 %v877, %v1160
      %v1205 = vmul.f32 %v882, %v1160
      %v1206 = vmul.f32 %v887, %v1160
      %v1207 = vmul.f32 %v892, %v1160
      %v1208 = vmul.f32 %v897, %v1160
      %v1209 = vmul.f32 %v902, %v1160
      %v1210 = vmul.f32 %v907, %v1160
      %v1211 = vmul.f32 %v912, %v1160
      %v1212 = vmul.f32 %v917, %v1160
      %v1213 = vmul.f32 %v922, %v1160
      %v1214 = vmul.f32 %v927, %v1160
      %v1215 = vmul.f32 %v932, %v1160
      %v1216 = vmul.f32 %v937, %v1160
      %v1217 = vmul.f32 %v942, %v1160
      %v1218 = vmul.f32 %v947, %v1160
      %v1219 = vmul.f32 %v952, %v1160
      %v1220 = vmul.f32 %v957, %v1160
      %v1221 = vmul.f32 %v962, %v1160
      %v1222 = vmul.f32 %v967, %v1160
      %v1223 = vmul.f32 %v972, %v1160
      %v1224 = vmul.f32 %v977, %v1160
      %v1225 = vmul.f32 %v982, %v1160
      %v1226 = vmul.f32 %v987, %v1160
      %v1227 = vmul.f32 %v992, %v1160
      %v1228 = vmul.f32 %v997, %v1160
      %v1229 = vmul.f32 %v1002, %v1160
      %v1230 = vmul.f32 %v1007, %v1160
      %v1231 = vmul.f32 %v1012, %v1160
      %v1232 = vmul.f32 %v1017, %v1160
      %v1233 = vmul.f32 %v1022, %v1160
      %v1234 = vmul.f32 %v1027, %v1160
      %v1235 = vmul.f32 %v1032, %v1160
      %v1236 = vmul.f32 %v1037, %v1160
      %v1237 = vmul.f32 %v1042, %v1160
      %v1238 = vmul.f32 %v1047, %v1160
      %v1239 = vmul.f32 %v1052, %v1160
      %v1240 = vmul.f32 %v1057, %v1160
      %v1241 = vmul.f32 %v1062, %v1160
      %v1242 = vmul.f32 %v1067, %v1160
      %v1243 = vmul.f32 %v1072, %v1160
      %v1244 = vmul.f32 %v1077, %v1160
      %v1245 = vmul.f32 %v1082, %v1160
      %v1246 = vmul.f32 %v1087, %v1160
      %v1247 = vmul.f32 %v1092, %v1160
      %v1248 = vmul.f32 %v1097, %v1160
      %v1249 = vmul.f32 %v1102, %v1160
      %v1250 = vmul.f32 %v1107, %v1160
      %v1251 = vmul.f32 %v1112, %v1160
      %v1252 = vmul.f32 %v1117, %v1160
      %v1253 = vmul.f32 %v1122, %v1160
      %v1254 = vmul.f32 %v1127, %v1160
      %v1255 = vmul.f32 %v1132, %v1160
      %v1256 = vmul.f32 %v1137, %v1160
      %v1257 = vmul.f32 %v1142, %v1160
      %v1258 = vmul.f32 %v1147, %v1160
      %v1259 = vmul.f32 %v1152, %v1160
      %v1260 = vld [vmem:[%s3] sm:$0x1]
      %v1262 = vlaneseq
      %v1263 = vshrl.u32 %v1262, 7
      %v1264 = vsub.s32 0, %v1263
      %v1265 = vrot.slane %v1260, %v1264
      %v1267 = vadd.f32 %v1162, %v1265
      %v1268 = vadd.f32 %v1163, %v1265
      %v1269 = vadd.f32 %v1164, %v1265
      %v1270 = vadd.f32 %v1165, %v1265
      %v1271 = vadd.f32 %v1166, %v1265
      %v1272 = vadd.f32 %v1167, %v1265
      %v1273 = vadd.f32 %v1168, %v1265
      %v1274 = vadd.f32 %v1169, %v1265
      %v1275 = vadd.f32 %v1170, %v1265
      %v1276 = vadd.f32 %v1171, %v1265
      %v1277 = vadd.f32 %v1172, %v1265
      %v1278 = vadd.f32 %v1173, %v1265
      %v1279 = vadd.f32 %v1174, %v1265
      %v1280 = vadd.f32 %v1175, %v1265
      %v1281 = vadd.f32 %v1176, %v1265
      %v1282 = vadd.f32 %v1177, %v1265
      %v1283 = vadd.f32 %v1178, %v1265
      %v1284 = vadd.f32 %v1179, %v1265
      %v1285 = vadd.f32 %v1180, %v1265
      %v1286 = vadd.f32 %v1181, %v1265
      %v1287 = vadd.f32 %v1182, %v1265
      %v1288 = vadd.f32 %v1183, %v1265
      %v1289 = vadd.f32 %v1184, %v1265
      %v1290 = vadd.f32 %v1185, %v1265
      %v1291 = vadd.f32 %v1186, %v1265
      %v1292 = vadd.f32 %v1187, %v1265
      %v1293 = vadd.f32 %v1188, %v1265
      %v1294 = vadd.f32 %v1189, %v1265
      %v1295 = vadd.f32 %v1190, %v1265
      %v1296 = vadd.f32 %v1191, %v1265
      %v1297 = vadd.f32 %v1192, %v1265
      %v1298 = vadd.f32 %v1193, %v1265
      %v1299 = vadd.f32 %v1194, %v1265
      %v1300 = vadd.f32 %v1195, %v1265
      %v1301 = vadd.f32 %v1196, %v1265
      %v1302 = vadd.f32 %v1197, %v1265
      %v1303 = vadd.f32 %v1198, %v1265
      %v1304 = vadd.f32 %v1199, %v1265
      %v1305 = vadd.f32 %v1200, %v1265
      %v1306 = vadd.f32 %v1201, %v1265
      %v1307 = vadd.f32 %v1202, %v1265
      %v1308 = vadd.f32 %v1203, %v1265
      %v1309 = vadd.f32 %v1204, %v1265
      %v1310 = vadd.f32 %v1205, %v1265
      %v1311 = vadd.f32 %v1206, %v1265
      %v1312 = vadd.f32 %v1207, %v1265
      %v1313 = vadd.f32 %v1208, %v1265
      %v1314 = vadd.f32 %v1209, %v1265
      %v1315 = vadd.f32 %v1210, %v1265
      %v1316 = vadd.f32 %v1211, %v1265
      %v1317 = vadd.f32 %v1212, %v1265
      %v1318 = vadd.f32 %v1213, %v1265
      %v1319 = vadd.f32 %v1214, %v1265
      %v1320 = vadd.f32 %v1215, %v1265
      %v1321 = vadd.f32 %v1216, %v1265
      %v1322 = vadd.f32 %v1217, %v1265
      %v1323 = vadd.f32 %v1218, %v1265
      %v1324 = vadd.f32 %v1219, %v1265
      %v1325 = vadd.f32 %v1220, %v1265
      %v1326 = vadd.f32 %v1221, %v1265
      %v1327 = vadd.f32 %v1222, %v1265
      %v1328 = vadd.f32 %v1223, %v1265
      %v1329 = vadd.f32 %v1224, %v1265
      %v1330 = vadd.f32 %v1225, %v1265
      %v1331 = vadd.f32 %v1226, %v1265
      %v1332 = vadd.f32 %v1227, %v1265
      %v1333 = vadd.f32 %v1228, %v1265
      %v1334 = vadd.f32 %v1229, %v1265
      %v1335 = vadd.f32 %v1230, %v1265
      %v1336 = vadd.f32 %v1231, %v1265
      %v1337 = vadd.f32 %v1232, %v1265
      %v1338 = vadd.f32 %v1233, %v1265
      %v1339 = vadd.f32 %v1234, %v1265
      %v1340 = vadd.f32 %v1235, %v1265
      %v1341 = vadd.f32 %v1236, %v1265
      %v1342 = vadd.f32 %v1237, %v1265
      %v1343 = vadd.f32 %v1238, %v1265
      %v1344 = vadd.f32 %v1239, %v1265
      %v1345 = vadd.f32 %v1240, %v1265
      %v1346 = vadd.f32 %v1241, %v1265
      %v1347 = vadd.f32 %v1242, %v1265
      %v1348 = vadd.f32 %v1243, %v1265
      %v1349 = vadd.f32 %v1244, %v1265
      %v1350 = vadd.f32 %v1245, %v1265
      %v1351 = vadd.f32 %v1246, %v1265
      %v1352 = vadd.f32 %v1247, %v1265
      %v1353 = vadd.f32 %v1248, %v1265
      %v1354 = vadd.f32 %v1249, %v1265
      %v1355 = vadd.f32 %v1250, %v1265
      %v1356 = vadd.f32 %v1251, %v1265
      %v1357 = vadd.f32 %v1252, %v1265
      %v1358 = vadd.f32 %v1253, %v1265
      %v1359 = vadd.f32 %v1254, %v1265
      %v1360 = vadd.f32 %v1255, %v1265
      %v1361 = vadd.f32 %v1256, %v1265
      %v1362 = vadd.f32 %v1257, %v1265
      %v1363 = vadd.f32 %v1258, %v1265
      %v1364 = vadd.f32 %v1259, %v1265
      %v1365 = vmax.f32 %v1267, 0.0
      %v1366 = vmax.f32 %v1268, 0.0
      %v1367 = vmax.f32 %v1269, 0.0
      %v1368 = vmax.f32 %v1270, 0.0
      %v1369 = vmax.f32 %v1271, 0.0
      %v1370 = vmax.f32 %v1272, 0.0
      %v1371 = vmax.f32 %v1273, 0.0
      %v1372 = vmax.f32 %v1274, 0.0
      %v1373 = vmax.f32 %v1275, 0.0
      %v1374 = vmax.f32 %v1276, 0.0
      %v1375 = vmax.f32 %v1277, 0.0
      %v1376 = vmax.f32 %v1278, 0.0
      %v1377 = vmax.f32 %v1279, 0.0
      %v1378 = vmax.f32 %v1280, 0.0
      %v1379 = vmax.f32 %v1281, 0.0
      %v1380 = vmax.f32 %v1282, 0.0
      %v1381 = vmax.f32 %v1283, 0.0
      %v1382 = vmax.f32 %v1284, 0.0
      %v1383 = vmax.f32 %v1285, 0.0
      %v1384 = vmax.f32 %v1286, 0.0
      %v1385 = vmax.f32 %v1287, 0.0
      %v1386 = vmax.f32 %v1288, 0.0
      %v1387 = vmax.f32 %v1289, 0.0
      %v1388 = vmax.f32 %v1290, 0.0
      %v1389 = vmax.f32 %v1291, 0.0
      %v1390 = vmax.f32 %v1292, 0.0
      %v1391 = vmax.f32 %v1293, 0.0
      %v1392 = vmax.f32 %v1294, 0.0
      %v1393 = vmax.f32 %v1295, 0.0
      %v1394 = vmax.f32 %v1296, 0.0
      %v1395 = vmax.f32 %v1297, 0.0
      %v1396 = vmax.f32 %v1298, 0.0
      %v1397 = vmax.f32 %v1299, 0.0
      %v1398 = vmax.f32 %v1300, 0.0
      %v1399 = vmax.f32 %v1301, 0.0
      %v1400 = vmax.f32 %v1302, 0.0
      %v1401 = vmax.f32 %v1303, 0.0
      %v1402 = vmax.f32 %v1304, 0.0
      %v1403 = vmax.f32 %v1305, 0.0
      %v1404 = vmax.f32 %v1306, 0.0
      %v1405 = vmax.f32 %v1307, 0.0
      %v1406 = vmax.f32 %v1308, 0.0
      %v1407 = vmax.f32 %v1309, 0.0
      %v1408 = vmax.f32 %v1310, 0.0
      %v1409 = vmax.f32 %v1311, 0.0
      %v1410 = vmax.f32 %v1312, 0.0
      %v1411 = vmax.f32 %v1313, 0.0
      %v1412 = vmax.f32 %v1314, 0.0
      %v1413 = vmax.f32 %v1315, 0.0
      %v1414 = vmax.f32 %v1316, 0.0
      %v1415 = vmax.f32 %v1317, 0.0
      %v1416 = vmax.f32 %v1318, 0.0
      %v1417 = vmax.f32 %v1319, 0.0
      %v1418 = vmax.f32 %v1320, 0.0
      %v1419 = vmax.f32 %v1321, 0.0
      %v1420 = vmax.f32 %v1322, 0.0
      %v1421 = vmax.f32 %v1323, 0.0
      %v1422 = vmax.f32 %v1324, 0.0
      %v1423 = vmax.f32 %v1325, 0.0
      %v1424 = vmax.f32 %v1326, 0.0
      %v1425 = vmax.f32 %v1327, 0.0
      %v1426 = vmax.f32 %v1328, 0.0
      %v1427 = vmax.f32 %v1329, 0.0
      %v1428 = vmax.f32 %v1330, 0.0
      %v1429 = vmax.f32 %v1331, 0.0
      %v1430 = vmax.f32 %v1332, 0.0
      %v1431 = vmax.f32 %v1333, 0.0
      %v1432 = vmax.f32 %v1334, 0.0
      %v1433 = vmax.f32 %v1335, 0.0
      %v1434 = vmax.f32 %v1336, 0.0
      %v1435 = vmax.f32 %v1337, 0.0
      %v1436 = vmax.f32 %v1338, 0.0
      %v1437 = vmax.f32 %v1339, 0.0
      %v1438 = vmax.f32 %v1340, 0.0
      %v1439 = vmax.f32 %v1341, 0.0
      %v1440 = vmax.f32 %v1342, 0.0
      %v1441 = vmax.f32 %v1343, 0.0
      %v1442 = vmax.f32 %v1344, 0.0
      %v1443 = vmax.f32 %v1345, 0.0
      %v1444 = vmax.f32 %v1346, 0.0
      %v1445 = vmax.f32 %v1347, 0.0
      %v1446 = vmax.f32 %v1348, 0.0
      %v1447 = vmax.f32 %v1349, 0.0
      %v1448 = vmax.f32 %v1350, 0.0
      %v1449 = vmax.f32 %v1351, 0.0
      %v1450 = vmax.f32 %v1352, 0.0
      %v1451 = vmax.f32 %v1353, 0.0
      %v1452 = vmax.f32 %v1354, 0.0
      %v1453 = vmax.f32 %v1355, 0.0
      %v1454 = vmax.f32 %v1356, 0.0
      %v1455 = vmax.f32 %v1357, 0.0
      %v1456 = vmax.f32 %v1358, 0.0
      %v1457 = vmax.f32 %v1359, 0.0
      %v1458 = vmax.f32 %v1360, 0.0
      %v1459 = vmax.f32 %v1361, 0.0
      %v1460 = vmax.f32 %v1362, 0.0
      %v1461 = vmax.f32 %v1363, 0.0
      %v1462 = vmax.f32 %v1364, 0.0
      %1463 = vst [vmem:[%s199] sm:$0xff] %v1365
      %1464 = vst [vmem:[%s199 + $0x8] sm:$0xff] %v1366
      %1465 = vst [vmem:[%s199 + $0x10] sm:$0xff] %v1367
      %1466 = vst [vmem:[%s199 + $0x18] sm:$0xff] %v1368
      %1467 = vst [vmem:[%s199 + $0x20] sm:$0xff] %v1369
      %1468 = vst [vmem:[%s199 + $0x28] sm:$0xff] %v1370
      %1469 = vst [vmem:[%s199 + $0x30] sm:$0xff] %v1371
      %1470 = vst [vmem:[%s199 + $0x38] sm:$0xff] %v1372
      %1471 = vst [vmem:[%s199 + $0x40] sm:$0xff] %v1373
      %1472 = vst [vmem:[%s199 + $0x48] sm:$0xff] %v1374
      %1473 = vst [vmem:[%s199 + $0x50] sm:$0xff] %v1375
      %1474 = vst [vmem:[%s199 + $0x58] sm:$0xff] %v1376
      %1475 = vst [vmem:[%s199 + $0x60] sm:$0xff] %v1377
      %1476 = vst [vmem:[%s199 + $0x68] sm:$0xff] %v1378
      %1477 = vst [vmem:[%s199 + $0x70] sm:$0xff] %v1379
      %1478 = vst [vmem:[%s199 + $0x78] sm:$0xff] %v1380
      %1479 = vst [vmem:[%s199 + $0x80] sm:$0xff] %v1381
      %1480 = vst [vmem:[%s199 + $0x88] sm:$0xff] %v1382
      %1481 = vst [vmem:[%s199 + $0x90] sm:$0xff] %v1383
      %1482 = vst [vmem:[%s199 + $0x98] sm:$0xff] %v1384
      %1483 = vst [vmem:[%s199 + $0xa0] sm:$0xff] %v1385
      %1484 = vst [vmem:[%s199 + $0xa8] sm:$0xff] %v1386
      %1485 = vst [vmem:[%s199 + $0xb0] sm:$0xff] %v1387
      %1486 = vst [vmem:[%s199 + $0xb8] sm:$0xff] %v1388
      %1487 = vst [vmem:[%s199 + $0xc0] sm:$0xff] %v1389
      %1488 = vst [vmem:[%s199 + $0xc8] sm:$0xff] %v1390
      %1489 = vst [vmem:[%s199 + $0xd0] sm:$0xff] %v1391
      %1490 = vst [vmem:[%s199 + $0xd8] sm:$0xff] %v1392
      %1491 = vst [vmem:[%s199 + $0xe0] sm:$0xff] %v1393
      %1492 = vst [vmem:[%s199 + $0xe8] sm:$0xff] %v1394
      %1493 = vst [vmem:[%s199 + $0xf0] sm:$0xff] %v1395
      %1494 = vst [vmem:[%s199 + $0xf8] sm:$0xff] %v1396
      %1495 = vst [vmem:[%s199 + $0x100] sm:$0xff] %v1397
      %1496 = vst [vmem:[%s199 + $0x108] sm:$0xff] %v1398
      %1497 = vst [vmem:[%s199 + $0x110] sm:$0xff] %v1399
      %1498 = vst [vmem:[%s199 + $0x118] sm:$0xff] %v1400
      %1499 = vst [vmem:[%s199 + $0x120] sm:$0xff] %v1401
      %1500 = vst [vmem:[%s199 + $0x128] sm:$0xff] %v1402
      %1501 = vst [vmem:[%s199 + $0x130] sm:$0xff] %v1403
      %1502 = vst [vmem:[%s199 + $0x138] sm:$0xff] %v1404
      %1503 = vst [vmem:[%s199 + $0x140] sm:$0xff] %v1405
      %1504 = vst [vmem:[%s199 + $0x148] sm:$0xff] %v1406
      %1505 = vst [vmem:[%s199 + $0x150] sm:$0xff] %v1407
      %1506 = vst [vmem:[%s199 + $0x158] sm:$0xff] %v1408
      %1507 = vst [vmem:[%s199 + $0x160] sm:$0xff] %v1409
      %1508 = vst [vmem:[%s199 + $0x168] sm:$0xff] %v1410
      %1509 = vst [vmem:[%s199 + $0x170] sm:$0xff] %v1411
      %1510 = vst [vmem:[%s199 + $0x178] sm:$0xff] %v1412
      %1511 = vst [vmem:[%s199 + $0x180] sm:$0xff] %v1413
      %1512 = vst [vmem:[%s199 + $0x188] sm:$0xff] %v1414
      %1513 = vst [vmem:[%s199 + $0x190] sm:$0xff] %v1415
      %1514 = vst [vmem:[%s199 + $0x198] sm:$0xff] %v1416
      %1515 = vst [vmem:[%s199 + $0x1a0] sm:$0xff] %v1417
      %1516 = vst [vmem:[%s199 + $0x1a8] sm:$0xff] %v1418
      %1517 = vst [vmem:[%s199 + $0x1b0] sm:$0xff] %v1419
      %1518 = vst [vmem:[%s199 + $0x1b8] sm:$0xff] %v1420
      %1519 = vst [vmem:[%s199 + $0x1c0] sm:$0xff] %v1421
      %1520 = vst [vmem:[%s199 + $0x1c8] sm:$0xff] %v1422
      %1521 = vst [vmem:[%s199 + $0x1d0] sm:$0xff] %v1423
      %1522 = vst [vmem:[%s199 + $0x1d8] sm:$0xff] %v1424
      %1523 = vst [vmem:[%s199 + $0x1e0] sm:$0xff] %v1425
      %1524 = vst [vmem:[%s199 + $0x1e8] sm:$0xff] %v1426
      %1525 = vst [vmem:[%s199 + $0x1f0] sm:$0xff] %v1427
      %1526 = vst [vmem:[%s199 + $0x1f8] sm:$0xff] %v1428
      %1527 = vst [vmem:[%s199 + $0x200] sm:$0xff] %v1429
      %1528 = vst [vmem:[%s199 + $0x208] sm:$0xff] %v1430
      %1529 = vst [vmem:[%s199 + $0x210] sm:$0xff] %v1431
      %1530 = vst [vmem:[%s199 + $0x218] sm:$0xff] %v1432
      %1531 = vst [vmem:[%s199 + $0x220] sm:$0xff] %v1433
      %1532 = vst [vmem:[%s199 + $0x228] sm:$0xff] %v1434
      %1533 = vst [vmem:[%s199 + $0x230] sm:$0xff] %v1435
      %1534 = vst [vmem:[%s199 + $0x238] sm:$0xff] %v1436
      %1535 = vst [vmem:[%s199 + $0x240] sm:$0xff] %v1437
      %1536 = vst [vmem:[%s199 + $0x248] sm:$0xff] %v1438
      %1537 = vst [vmem:[%s199 + $0x250] sm:$0xff] %v1439
      %1538 = vst [vmem:[%s199 + $0x258] sm:$0xff] %v1440
      %1539 = vst [vmem:[%s199 + $0x260] sm:$0xff] %v1441
      %1540 = vst [vmem:[%s199 + $0x268] sm:$0xff] %v1442
      %1541 = vst [vmem:[%s199 + $0x270] sm:$0xff] %v1443
      %1542 = vst [vmem:[%s199 + $0x278] sm:$0xff] %v1444
      %1543 = vst [vmem:[%s199 + $0x280] sm:$0xff] %v1445
      %1544 = vst [vmem:[%s199 + $0x288] sm:$0xff] %v1446
      %1545 = vst [vmem:[%s199 + $0x290] sm:$0xff] %v1447
      %1546 = vst [vmem:[%s199 + $0x298] sm:$0xff] %v1448
      %1547 = vst [vmem:[%s199 + $0x2a0] sm:$0xff] %v1449
      %1548 = vst [vmem:[%s199 + $0x2a8] sm:$0xff] %v1450
      %1549 = vst [vmem:[%s199 + $0x2b0] sm:$0xff] %v1451
      %1550 = vst [vmem:[%s199 + $0x2b8] sm:$0xff] %v1452
      %1551 = vst [vmem:[%s199 + $0x2c0] sm:$0xff] %v1453
      %1552 = vst [vmem:[%s199 + $0x2c8] sm:$0xff] %v1454
      %1553 = vst [vmem:[%s199 + $0x2d0] sm:$0xff] %v1455
      %1554 = vst [vmem:[%s199 + $0x2d8] sm:$0xff] %v1456
      %1555 = vst [vmem:[%s199 + $0x2e0] sm:$0xff] %v1457
      %1556 = vst [vmem:[%s199 + $0x2e8] sm:$0xff] %v1458
      %1557 = vst [vmem:[%s199 + $0x2f0] sm:$0xff] %v1459
      %1558 = vst [vmem:[%s199 + $0x2f8] sm:$0xff] %v1460
      %1559 = vst [vmem:[%s199 + $0x300] sm:$0xff] %v1461
      %1560 = vst [vmem:[%s199 + $0x308] sm:$0xff] %v1462
      %s1561 = smul.u32 98, %s15
      %p1562 = scmp.lt.s32.totalorder %s1561, 195
      %s1563 = scalar_select %p1562, %s1561, 195
      %s1564 = smul.addr %s1563, 8
      %s1565 = scalar_lea.vmem %s4, %s1564
      // Predicated region
      $region37: #{forward.3} parent=35 // pred_check
        %p1566 = pneg %p122
      $region38: #{forward.3} parent=35 // pred_check_branch
        %1568 = sbr.rel (%p1566) target = $region40
      $region39: #{forward.3} parent=35 // pred_region
        %s1569 = smul.u32 98, %s15
      $region40: #{forward.3} parent=35 // pred_fallthru
        _
    $region36: #{forward.3} parent=5 // pred_fallthru
      _
    %p1570 = scmp.le.s32.totalorder 2, %s10
    // Predicated region
    $region41: #{forward.3} parent=5 // pred_check
      %p1571 = pneg %p1570
    $region42: #{forward.3} parent=5 // pred_check_branch
      %1573 = sbr.rel (%p1571) target = $region44
    $region43: #{forward.3} parent=5 // pred_region
      %s1574 = ssub.s32 %s10, 2
      // Predicated region
      $region45: #{forward.3} parent=43 // pred_check
        %p1575 = pneg %p128
      $region46: #{forward.3} parent=43 // pred_check_branch
        %1577 = sbr.rel (%p1575) target = $region48
      $region47: #{forward.3} parent=43 // pred_region
        %s1578 = smul.u32 98, %s16
        %p1579 = scmp.lt.s32.totalorder %s1578, 195
        %s1580 = scalar_select %p1579, %s1578, 195
        %s1581 = smul.addr %s1580, 8
        %s1582 = scalar_lea.vmem %s4, %s1581
      $region48: #{forward.3} parent=43 // pred_fallthru
        _
    $region44: #{forward.3} parent=5 // pred_fallthru
      _
  $region6: #{forward.3} parent=0 // loop_footer
    %s14 = sadd.s32 1, %s10
  $region7: #{forward.3} parent=0 // loop_footer_branch
    %9 = sbr.rel target = $region3
  $region8: #{forward.3} parent=0 // loop_exit
    _

// kernel: forward.4
$region0: #{forward.4}
  #allocation0 [shape = 'u32[]', space=smem, size = 0x4, offset = 0x4, fixed_abs, tag = 'smem constant byte address 0x4 - core index']
  #allocation1 [shape = 'u32[144,128]{1,0:T(1,128)}', space=vmem, size = 0x12000, scoped, tag = 'internal scratch']
  %s0 = inlined_call_operand.vmem [shape: f32[2,272,128], index: 0, kind: input, shape index: {}]
  %s1 = inlined_call_operand.vmem [shape: bf16[9,128,128], index: 1, kind: input, shape index: {}]
  %s2 = inlined_call_operand.vmem [shape: f32[1,128], index: 2, kind: input, shape index: {}]
  %s3 = inlined_call_operand.vmem [shape: f32[1,128], index: 3, kind: input, shape index: {}]
  %s4 = inlined_call_operand.vmem [shape: f32[2,224,128], index: 4, kind: output, shape index: {}]
  %s5 = sld [smem:[#allocation0]]
  $region49: #{forward.4} parent=0
    _
  %s7 = ssub.s32 1, %s5
  %s8 = scalar_select 0, %s7, %s5
  loop: start=0, step=1, limit=4
  $region2: #{forward.4} parent=0 // loop_pre_header
    _
  $region3: #{forward.4} parent=0 // loop_header
    %s10 = sphi 0, %s14
    %p11 = scmp.ge.s32.totalorder %s10, 4
    %s20 = sphi 0, %s22
    %s23 = sphi 0, %s20
    %s24 = sphi 0, %s23
    %s40 = sphi 0, %s24
    %s44 = sphi 0, %s44
    %s46 = sphi 0, %s44
    %s47 = sphi 0, %s46
    %s61 = sphi 0, %s47
    %s65 = sphi 0, %s65
    %s67 = sphi 0, %s65
    %s68 = sphi 0, %s67
    %s82 = sphi 0, %s68
    %s86 = sphi 0, %s86
    %s88 = sphi 0, %s86
    %s89 = sphi 0, %s88
    %s103 = sphi 0, %s89
    %s109 = sphi 0, %s111
    %s112 = sphi 0, %s109
    %s113 = sphi 0, %s112
    %s129 = sphi 0, %s113
  $region4: #{forward.4} parent=0 // loop_header_branch
    %13 = sbr.rel (%p11) target = $region8
  $region5: #{forward.4} parent=0 // loop_body
    %s15 = ssub.s32 %s10, 1
    %s16 = ssub.s32 %s10, 2
    %s17 = sadd.s32 %s10, 1
    %s18 = ssub.s32 %s10, %s17
    %p19 = scmp.eq.s32.totalorder %s18, 0
    %s21 = sadd.s32 %s20, 1
    %s22 = scalar_select %p19, %s20, %s21
    %p25 = pneg %p19
    %p26 = scmp.eq.s32.totalorder %s10, 1
    %p27 = por %p25, %p26
    %p28 = scmp.ne.s32.totalorder %s20, %s23
    %p29 = scmp.eq.s32.totalorder %s10, 0
    %p30 = por %p28, %p29
    %p31 = scmp.ne.s32.totalorder %s20, %s23
    %p32 = scmp.eq.s32.totalorder %s15, 1
    %p33 = por %p31, %p32
    %p34 = scmp.ne.s32.totalorder %s23, %s24
    %p35 = scmp.eq.s32.totalorder %s15, 0
    %p36 = por %p34, %p35
    %p37 = scmp.ne.s32.totalorder %s23, %s24
    %p38 = scmp.eq.s32.totalorder %s16, 1
    %p39 = por %p37, %p38
    %p41 = scmp.ne.s32.totalorder %s24, %s40
    %p42 = scmp.eq.s32.totalorder %s16, 0
    %p43 = por %p41, %p42
    %s45 = sadd.s32 %s44, 1
    %p48 = scmp.eq.s32.totalorder %s10, 1
    %p49 = scmp.ne.s32.totalorder %s44, %s46
    %p50 = scmp.eq.s32.totalorder %s10, 0
    %p51 = por %p49, %p50
    %p52 = scmp.ne.s32.totalorder %s44, %s46
    %p53 = scmp.eq.s32.totalorder %s15, 1
    %p54 = por %p52, %p53
    %p55 = scmp.ne.s32.totalorder %s46, %s47
    %p56 = scmp.eq.s32.totalorder %s15, 0
    %p57 = por %p55, %p56
    %p58 = scmp.ne.s32.totalorder %s46, %s47
    %p59 = scmp.eq.s32.totalorder %s16, 1
    %p60 = por %p58, %p59
    %p62 = scmp.ne.s32.totalorder %s47, %s61
    %p63 = scmp.eq.s32.totalorder %s16, 0
    %p64 = por %p62, %p63
    %s66 = sadd.s32 %s65, 1
    %p69 = scmp.eq.s32.totalorder %s10, 1
    %p70 = scmp.ne.s32.totalorder %s65, %s67
    %p71 = scmp.eq.s32.totalorder %s10, 0
    %p72 = por %p70, %p71
    %p73 = scmp.ne.s32.totalorder %s65, %s67
    %p74 = scmp.eq.s32.totalorder %s15, 1
    %p75 = por %p73, %p74
    %p76 = scmp.ne.s32.totalorder %s67, %s68
    %p77 = scmp.eq.s32.totalorder %s15, 0
    %p78 = por %p76, %p77
    %p79 = scmp.ne.s32.totalorder %s67, %s68
    %p80 = scmp.eq.s32.totalorder %s16, 1
    %p81 = por %p79, %p80
    %p83 = scmp.ne.s32.totalorder %s68, %s82
    %p84 = scmp.eq.s32.totalorder %s16, 0
    %p85 = por %p83, %p84
    %s87 = sadd.s32 %s86, 1
    %p90 = scmp.eq.s32.totalorder %s10, 1
    %p91 = scmp.ne.s32.totalorder %s86, %s88
    %p92 = scmp.eq.s32.totalorder %s10, 0
    %p93 = por %p91, %p92
    %p94 = scmp.ne.s32.totalorder %s86, %s88
    %p95 = scmp.eq.s32.totalorder %s15, 1
    %p96 = por %p94, %p95
    %p97 = scmp.ne.s32.totalorder %s88, %s89
    %p98 = scmp.eq.s32.totalorder %s15, 0
    %p99 = por %p97, %p98
    %p100 = scmp.ne.s32.totalorder %s88, %s89
    %p101 = scmp.eq.s32.totalorder %s16, 1
    %p102 = por %p100, %p101
    %p104 = scmp.ne.s32.totalorder %s89, %s103
    %p105 = scmp.eq.s32.totalorder %s16, 0
    %p106 = por %p104, %p105
    %s107 = ssub.s32 %s10, %s17
    %p108 = scmp.eq.s32.totalorder %s107, 0
    %s110 = sadd.s32 %s109, 1
    %s111 = scalar_select %p108, %s109, %s110
    %p114 = pneg %p108
    %p115 = scmp.eq.s32.totalorder %s10, 1
    %p116 = por %p114, %p115
    %p117 = scmp.ne.s32.totalorder %s109, %s112
    %p118 = scmp.eq.s32.totalorder %s10, 0
    %p119 = por %p117, %p118
    %p120 = scmp.ne.s32.totalorder %s109, %s112
    %p121 = scmp.eq.s32.totalorder %s15, 1
    %p122 = por %p120, %p121
    %p123 = scmp.ne.s32.totalorder %s112, %s113
    %p124 = scmp.eq.s32.totalorder %s15, 0
    %p125 = por %p123, %p124
    %p126 = scmp.ne.s32.totalorder %s112, %s113
    %p127 = scmp.eq.s32.totalorder %s16, 1
    %p128 = por %p126, %p127
    %p130 = scmp.ne.s32.totalorder %s113, %s129
    %p131 = scmp.eq.s32.totalorder %s16, 0
    %p132 = por %p130, %p131
    %p133 = scmp.le.s32.totalorder 1, %s10
    %p134 = scmp.lt.s32.totalorder %s10, 3
    %p135 = pnand %p133, %p134
    %p136 = pneg %p135
    // Predicated region
    $region9: #{forward.4} parent=5 // pred_check
      _
    $region10: #{forward.4} parent=5 // pred_check_branch
      %138 = sbr.rel (%p135) target = $region12
    $region11: #{forward.4} parent=5 // pred_region
      %s139 = ssub.s32 %s10, 1
      // Predicated region
      $region13: #{forward.4} parent=11 // pred_check
        %p140 = pneg %p57
      $region14: #{forward.4} parent=11 // pred_check_branch
        %142 = sbr.rel (%p140) target = $region16
      $region15: #{forward.4} parent=11 // pred_region
        _
      $region16: #{forward.4} parent=11 // pred_fallthru
        _
      // Predicated region
      $region17: #{forward.4} parent=11 // pred_check
        %p143 = pneg %p78
      $region18: #{forward.4} parent=11 // pred_check_branch
        %145 = sbr.rel (%p143) target = $region20
      $region19: #{forward.4} parent=11 // pred_region
        _
      $region20: #{forward.4} parent=11 // pred_fallthru
        _
      // Predicated region
      $region21: #{forward.4} parent=11 // pred_check
        %p146 = pneg %p99
      $region22: #{forward.4} parent=11 // pred_check_branch
        %148 = sbr.rel (%p146) target = $region24
      $region23: #{forward.4} parent=11 // pred_region
        _
      $region24: #{forward.4} parent=11 // pred_fallthru
        _
    $region12: #{forward.4} parent=5 // pred_fallthru
      _
    %p149 = scmp.lt.s32.totalorder %s10, 2
    // Predicated region
    $region25: #{forward.4} parent=5 // pred_check
      %p150 = pneg %p149
    $region26: #{forward.4} parent=5 // pred_check_branch
      %152 = sbr.rel (%p150) target = $region28
    $region27: #{forward.4} parent=5 // pred_region
      // Predicated region
      $region29: #{forward.4} parent=27 // pred_check
        %p153 = pneg %p30
      $region30: #{forward.4} parent=27 // pred_check_branch
        %155 = sbr.rel (%p153) target = $region32
      $region31: #{forward.4} parent=27 // pred_region
        %p156 = scmp.lt.s32.totalorder %s10, 1
        %s157 = scalar_select %p156, %s10, 1
        %s158 = smul.addr %s157, 34
        %s159 = smul.addr %s158, 8
        %s160 = scalar_lea.vmem %s0, %s159
      $region32: #{forward.4} parent=27 // pred_fallthru
        _
    $region28: #{forward.4} parent=5 // pred_fallthru
      _
    %p161 = scmp.le.s32.totalorder 1, %s10
    %p162 = scmp.lt.s32.totalorder %s10, 3
    %p163 = pnand %p161, %p162
    %p164 = pneg %p163
    // Predicated region
    $region33: #{forward.4} parent=5 // pred_check
      _
    $region34: #{forward.4} parent=5 // pred_check_branch
      %166 = sbr.rel (%p163) target = $region36
    $region35: #{forward.4} parent=5 // pred_region
      %s167 = ssub.s32 %s10, 1
      %p168 = scmp.lt.s32.totalorder %s15, 1
      %s169 = scalar_select %p168, %s15, 1
      %s170 = smul.addr %s169, 34
      %s171 = smul.addr %s170, 8
      %s172 = scalar_lea.vmem %s0, %s171
      %p173 = pneg %p36
      %p174 = pneg %p33
      %p175 = pneg %p57
      %p176 = pneg %p54
      %p177 = pneg %p78
      %p178 = pneg %p75
      %p179 = pneg %p99
      %p180 = pneg %p96
      %p181 = pneg %p125
      %p182 = pneg %p122
      %p183 = scmp.lt.s32.totalorder %s15, 1
      %s184 = scalar_select %p183, %s15, 1
      %s185 = smul.addr %s184, 28
      %s186 = smul.addr %s185, 8
      %s187 = scalar_lea.vmem %s4, %s186
      %p188 = scmp.lt.s32.totalorder %s15, 1
      %s189 = scalar_select %p188, %s15, 1
      %s190 = smul.addr %s189, 34
      %s191 = smul.addr %s190, 8
      %s192 = scalar_lea.vmem %s0, %s191
      %p193 = scmp.lt.s32.totalorder %s15, 1
      %s194 = scalar_select %p193, %s15, 1
      %s195 = smul.addr %s194, 28
      %s196 = smul.addr %s195, 8
      %s197 = scalar_lea.vmem %s4, %s196
      %v199 = vld [vmem:[%s192] sm:$0xff]
      %v200 = vld [vmem:[%s192 + $0x8] sm:$0xff]
      %v201 = vld [vmem:[%s192 + $0x10] sm:$0xff]
      %v202 = vld [vmem:[%s192 + $0x18] sm:$0xff]
      %v203 = vld [vmem:[%s192 + $0x20] sm:$0xff]
      %v204 = vld [vmem:[%s192 + $0x28] sm:$0xff]
      %v205 = vld [vmem:[%s192 + $0x30] sm:$0xff]
      %v206 = vld [vmem:[%s192 + $0x38] sm:$0xff]
      %v207 = vld [vmem:[%s192 + $0x40] sm:$0xff]
      %v208 = vld [vmem:[%s192 + $0x48] sm:$0xff]
      %v209 = vld [vmem:[%s192 + $0x50] sm:$0xff]
      %v210 = vld [vmem:[%s192 + $0x58] sm:$0xff]
      %v211 = vld [vmem:[%s192 + $0x60] sm:$0xff]
      %v212 = vld [vmem:[%s192 + $0x68] sm:$0xff]
      %v213 = vld [vmem:[%s192 + $0x70] sm:$0xff]
      %v214 = vld [vmem:[%s192 + $0x78] sm:$0xff]
      %v215 = vld [vmem:[%s192 + $0x80] sm:$0xff]
      %v216 = vld [vmem:[%s192 + $0x88] sm:$0xff]
      %v217 = vld [vmem:[%s192 + $0x90] sm:$0xff]
      %v218 = vld [vmem:[%s192 + $0x98] sm:$0xff]
      %v219 = vld [vmem:[%s192 + $0xa0] sm:$0xff]
      %v220 = vld [vmem:[%s192 + $0xa8] sm:$0xff]
      %v221 = vld [vmem:[%s192 + $0xb0] sm:$0xff]
      %v222 = vld [vmem:[%s192 + $0xb8] sm:$0xff]
      %v223 = vld [vmem:[%s192 + $0xc0] sm:$0xff]
      %v224 = vld [vmem:[%s192 + $0xc8] sm:$0xff]
      %v225 = vld [vmem:[%s192 + $0xd0] sm:$0xff]
      %v226 = vld [vmem:[%s192 + $0xd8] sm:$0xff]
      %v227 = vld [vmem:[%s192 + $0xe0] sm:$0xff]
      %v228 = vld [vmem:[%s192 + $0xe8] sm:$0xff]
      %v229 = vld [vmem:[%s192 + $0xf0] sm:$0xff]
      %v230 = vld [vmem:[%s192 + $0xf8] sm:$0xff]
      %v231 = vld [vmem:[%s192 + $0x100] sm:$0xff]
      %v232 = vpack.c.bf16 %v200, %v199
      %v233 = vpack.c.bf16 %v202, %v201
      %v234 = vpack.c.bf16 %v204, %v203
      %v235 = vpack.c.bf16 %v206, %v205
      %v236 = vpack.c.bf16 %v208, %v207
      %v237 = vpack.c.bf16 %v210, %v209
      %v238 = vpack.c.bf16 %v212, %v211
      %v239 = vpack.c.bf16 %v214, %v213
      %v240 = vpack.c.bf16 %v216, %v215
      %v241 = vpack.c.bf16 %v218, %v217
      %v242 = vpack.c.bf16 %v220, %v219
      %v243 = vpack.c.bf16 %v222, %v221
      %v244 = vpack.c.bf16 %v224, %v223
      %v245 = vpack.c.bf16 %v226, %v225
      %v246 = vld [vmem:[%s1] sm:$0xf]
      %v247 = vld [vmem:[%s1 + $0x4] sm:$0xf]
      %v248 = vld [vmem:[%s1 + $0x8] sm:$0xf]
      %v249 = vld [vmem:[%s1 + $0xc] sm:$0xf]
      %v250 = vld [vmem:[%s1 + $0x10] sm:$0xf]
      %v251 = vld [vmem:[%s1 + $0x14] sm:$0xf]
      %v252 = vld [vmem:[%s1 + $0x18] sm:$0xf]
      %v253 = vld [vmem:[%s1 + $0x1c] sm:$0xf]
      %v254 = vld [vmem:[%s1 + $0x20] sm:$0xf]
      %v255 = vld [vmem:[%s1 + $0x24] sm:$0xf]
      %v256 = vld [vmem:[%s1 + $0x28] sm:$0xf]
      %v257 = vld [vmem:[%s1 + $0x2c] sm:$0xf]
      %v258 = vld [vmem:[%s1 + $0x30] sm:$0xf]
      %v259 = vld [vmem:[%s1 + $0x34] sm:$0xf]
      %v260 = vld [vmem:[%s1 + $0x38] sm:$0xf]
      %v261 = vld [vmem:[%s1 + $0x3c] sm:$0xf]
      %v262 = vpack.c.bf16 %v227, %v227
      %s263 = scalar_lea.vmem %s1, 64
      %v264 = vld [vmem:[%s263] sm:$0xf]
      %v265 = vld [vmem:[%s263 + $0x4] sm:$0xf]
      %v266 = vld [vmem:[%s263 + $0x8] sm:$0xf]
      %v267 = vld [vmem:[%s263 + $0xc] sm:$0xf]
      %v268 = vld [vmem:[%s263 + $0x10] sm:$0xf]
      %v269 = vld [vmem:[%s263 + $0x14] sm:$0xf]
      %v270 = vld [vmem:[%s263 + $0x18] sm:$0xf]
      %v271 = vld [vmem:[%s263 + $0x1c] sm:$0xf]
      %v272 = vld [vmem:[%s263 + $0x20] sm:$0xf]
      %v273 = vld [vmem:[%s263 + $0x24] sm:$0xf]
      %v274 = vld [vmem:[%s263 + $0x28] sm:$0xf]
      %v275 = vld [vmem:[%s263 + $0x2c] sm:$0xf]
      %v276 = vld [vmem:[%s263 + $0x30] sm:$0xf]
      %v277 = vld [vmem:[%s263 + $0x34] sm:$0xf]
      %v278 = vld [vmem:[%s263 + $0x38] sm:$0xf]
      %v279 = vld [vmem:[%s263 + $0x3c] sm:$0xf]
      %vm280 = vsmask.f32 7424
      %v282 = vshrl.u32 %v232, 16
      %v284 = vshll.u32 %v232, 16
      %v286 = vrot.slane %v284, 1
      %v287 = vor.u32 %v282, %v286
      %v289 = vshll.u32 %v233, 16
      %v291 = vrot.slane %v289, 1
      %v292 = vsel %vm280, %v287, %v291
      %v293 = vshrl.u32 %v233, 16
      %v295 = vor.u32 %v293, %v291
      %v297 = vshll.u32 %v234, 16
      %v299 = vrot.slane %v297, 1
      %v300 = vsel %vm280, %v295, %v299
      %v301 = vshrl.u32 %v234, 16
      %v303 = vor.u32 %v301, %v299
      %v305 = vshll.u32 %v235, 16
      %v307 = vrot.slane %v305, 1
      %v308 = vsel %vm280, %v303, %v307
      %v309 = vshrl.u32 %v235, 16
      %v311 = vor.u32 %v309, %v307
      %v313 = vshll.u32 %v236, 16
      %v315 = vrot.slane %v313, 1
      %v316 = vsel %vm280, %v311, %v315
      %v317 = vshrl.u32 %v236, 16
      %v319 = vor.u32 %v317, %v315
      %v321 = vshll.u32 %v237, 16
      %v323 = vrot.slane %v321, 1
      %v324 = vsel %vm280, %v319, %v323
      %v325 = vshrl.u32 %v237, 16
      %v327 = vor.u32 %v325, %v323
      %v329 = vshll.u32 %v238, 16
      %v331 = vrot.slane %v329, 1
      %v332 = vsel %vm280, %v327, %v331
      %v333 = vshrl.u32 %v238, 16
      %v335 = vor.u32 %v333, %v331
      %v337 = vshll.u32 %v239, 16
      %v339 = vrot.slane %v337, 1
      %v340 = vsel %vm280, %v335, %v339
      %v341 = vshrl.u32 %v239, 16
      %v343 = vor.u32 %v341, %v339
      %v345 = vshll.u32 %v240, 16
      %v347 = vrot.slane %v345, 1
      %v348 = vsel %vm280, %v343, %v347
      %v349 = vshrl.u32 %v240, 16
      %v351 = vor.u32 %v349, %v347
      %v353 = vshll.u32 %v241, 16
      %v355 = vrot.slane %v353, 1
      %v356 = vsel %vm280, %v351, %v355
      %v357 = vshrl.u32 %v241, 16
      %v359 = vor.u32 %v357, %v355
      %v361 = vshll.u32 %v242, 16
      %v363 = vrot.slane %v361, 1
      %v364 = vsel %vm280, %v359, %v363
      %v365 = vshrl.u32 %v242, 16
      %v367 = vor.u32 %v365, %v363
      %v369 = vshll.u32 %v243, 16
      %v371 = vrot.slane %v369, 1
      %v372 = vsel %vm280, %v367, %v371
      %v373 = vshrl.u32 %v243, 16
      %v375 = vor.u32 %v373, %v371
      %v377 = vshll.u32 %v244, 16
      %v379 = vrot.slane %v377, 1
      %v380 = vsel %vm280, %v375, %v379
      %v381 = vshrl.u32 %v244, 16
      %v383 = vor.u32 %v381, %v379
      %v385 = vshll.u32 %v245, 16
      %v387 = vrot.slane %v385, 1
      %v388 = vsel %vm280, %v383, %v387
      %v389 = vshrl.u32 %v245, 16
      %v391 = vor.u32 %v389, %v387
      %v393 = vshll.u32 %v262, 16
      %v395 = vrot.slane %v393, 1
      %v396 = vsel %vm280, %v391, %v395
      %v427 = vunpack.c.l.b16 %v264
      %v428 = vunpack.c.l.b16 %v265
      %v429 = vunpack.c.l.b16 %v266
      %v430 = vunpack.c.l.b16 %v267
      %v431 = vunpack.c.l.b16 %v268
      %v432 = vunpack.c.l.b16 %v269
      %v433 = vunpack.c.l.b16 %v270
      %v434 = vunpack.c.l.b16 %v271
      %v435 = vunpack.c.l.b16 %v272
      %v436 = vunpack.c.l.b16 %v273
      %v437 = vunpack.c.l.b16 %v274
      %v438 = vunpack.c.l.b16 %v275
      %v439 = vunpack.c.l.b16 %v276
      %v440 = vunpack.c.l.b16 %v277
      %v441 = vunpack.c.l.b16 %v278
      %v442 = vunpack.c.l.b16 %v279
      %v443 = vpack.c.b16 %v428, %v427
      %v444 = vpack.c.b16 %v430, %v429
      %v445 = vpack.c.b16 %v432, %v431
      %v446 = vpack.c.b16 %v434, %v433
      %v447 = vpack.c.b16 %v436, %v435
      %v448 = vpack.c.b16 %v438, %v437
      %v449 = vpack.c.b16 %v440, %v439
      %v450 = vpack.c.b16 %v442, %v441
      %459 = vmatprep.subr.bf16.mxu0 0
      %460 = vmatpush1.bf16.msra.mxu0 %v450
      %461 = vmatprep.subr.bf16.mxu0 0
      %462 = vmatpush1.bf16.msra.mxu0 %v449
      %463 = vmatprep.subr.bf16.mxu0 0
      %464 = vmatpush1.bf16.msra.mxu0 %v448
      %465 = vmatprep.subr.bf16.mxu0 0
      %466 = vmatpush1.bf16.msra.mxu0 %v447
      %467 = vmatprep.subr.bf16.mxu0 0
      %468 = vmatpush1.bf16.msra.mxu0 %v446
      %469 = vmatprep.subr.bf16.mxu0 0
      %470 = vmatpush1.bf16.msra.mxu0 %v445
      %471 = vmatprep.subr.bf16.mxu0 0
      %472 = vmatpush1.bf16.msra.mxu0 %v444
      %473 = vmatprep.subr.bf16.mxu0 0
      %474 = vmatpush1.bf16.msra.mxu0 %v443
      %475 = vmatprep.subr.bf16.mxu0 0
      %476 = vmatpush2.bf16.msra.mxu0 0
      %477 = vmatprep.subr.bf16.mxu0 0
      %478 = vmatpush2.bf16.msra.mxu0 0
      %479 = vmatprep.subr.bf16.mxu0 0
      %480 = vmatpush2.bf16.msra.mxu0 0
      %481 = vmatprep.subr.bf16.mxu0 0
      %482 = vmatpush2.bf16.msra.mxu0 0
      %483 = vmatprep.subr.bf16.mxu0 0
      %484 = vmatpush2.bf16.msra.mxu0 0
      %485 = vmatprep.subr.bf16.mxu0 0
      %486 = vmatpush2.bf16.msra.mxu0 0
      %487 = vmatprep.subr.bf16.mxu0 0
      %488 = vmatpush2.bf16.msra.mxu0 0
      %489 = vmatprep.subr.bf16.mxu0 0
      %490 = vmatpush2.bf16.msra.mxu0 0
      %491 = vmatprep.mubr.bf16.mxu0 0
      %492 = vmatmul.mubr.bf16.gmra.mxu0 %v292
      %v493 = vpop.f32.mrf.mxu0
      %v494 = vadd.f32 0.0, %v493
      %v495 = vpop.f32.mrf.mxu0
      %v496 = vpop.f32.mrf.mxu0
      %v497 = vadd.f32 0.0, %v496
      %v498 = vpop.f32.mrf.mxu0
      %499 = vmatprep.mubr.bf16.mxu0 0
      %500 = vmatmul.mubr.bf16.gmra.mxu0 %v300
      %v501 = vpop.f32.mrf.mxu0
      %v502 = vadd.f32 0.0, %v501
      %v503 = vpop.f32.mrf.mxu0
      %v504 = vpop.f32.mrf.mxu0
      %v505 = vadd.f32 0.0, %v504
      %v506 = vpop.f32.mrf.mxu0
      %507 = vmatprep.mubr.bf16.mxu0 0
      %508 = vmatmul.mubr.bf16.gmra.mxu0 %v308
      %v509 = vpop.f32.mrf.mxu0
      %v510 = vadd.f32 0.0, %v509
      %v511 = vpop.f32.mrf.mxu0
      %v512 = vpop.f32.mrf.mxu0
      %v513 = vadd.f32 0.0, %v512
      %v514 = vpop.f32.mrf.mxu0
      %515 = vmatprep.mubr.bf16.mxu0 0
      %516 = vmatmul.mubr.bf16.gmra.mxu0 %v316
      %v517 = vpop.f32.mrf.mxu0
      %v518 = vadd.f32 0.0, %v517
      %v519 = vpop.f32.mrf.mxu0
      %v520 = vpop.f32.mrf.mxu0
      %v521 = vadd.f32 0.0, %v520
      %v522 = vpop.f32.mrf.mxu0
      %523 = vmatprep.mubr.bf16.mxu0 0
      %524 = vmatmul.mubr.bf16.gmra.mxu0 %v324
      %v525 = vpop.f32.mrf.mxu0
      %v526 = vadd.f32 0.0, %v525
      %v527 = vpop.f32.mrf.mxu0
      %v528 = vpop.f32.mrf.mxu0
      %v529 = vadd.f32 0.0, %v528
      %v530 = vpop.f32.mrf.mxu0
      %531 = vmatprep.mubr.bf16.mxu0 0
      %532 = vmatmul.mubr.bf16.gmra.mxu0 %v332
      %v533 = vpop.f32.mrf.mxu0
      %v534 = vadd.f32 0.0, %v533
      %v535 = vpop.f32.mrf.mxu0
      %v536 = vpop.f32.mrf.mxu0
      %v537 = vadd.f32 0.0, %v536
      %v538 = vpop.f32.mrf.mxu0
      %539 = vmatprep.mubr.bf16.mxu0 0
      %540 = vmatmul.mubr.bf16.gmra.mxu0 %v340
      %v541 = vpop.f32.mrf.mxu0
      %v542 = vadd.f32 0.0, %v541
      %v543 = vpop.f32.mrf.mxu0
      %v544 = vpop.f32.mrf.mxu0
      %v545 = vadd.f32 0.0, %v544
      %v546 = vpop.f32.mrf.mxu0
      %547 = vmatprep.mubr.bf16.mxu0 0
      %548 = vmatmul.mubr.bf16.gmra.mxu0 %v348
      %v549 = vpop.f32.mrf.mxu0
      %v550 = vadd.f32 0.0, %v549
      %v551 = vpop.f32.mrf.mxu0
      %v552 = vpop.f32.mrf.mxu0
      %v553 = vadd.f32 0.0, %v552
      %v554 = vpop.f32.mrf.mxu0
      %555 = vmatprep.mubr.bf16.mxu0 0
      %556 = vmatmul.mubr.bf16.gmra.mxu0 %v356
      %v557 = vpop.f32.mrf.mxu0
      %v558 = vadd.f32 0.0, %v557
      %v559 = vpop.f32.mrf.mxu0
      %v560 = vpop.f32.mrf.mxu0
      %v561 = vadd.f32 0.0, %v560
      %v562 = vpop.f32.mrf.mxu0
      %563 = vmatprep.mubr.bf16.mxu0 0
      %564 = vmatmul.mubr.bf16.gmra.mxu0 %v364
      %v565 = vpop.f32.mrf.mxu0
      %v566 = vadd.f32 0.0, %v565
      %v567 = vpop.f32.mrf.mxu0
      %v568 = vpop.f32.mrf.mxu0
      %v569 = vadd.f32 0.0, %v568
      %v570 = vpop.f32.mrf.mxu0
      %571 = vmatprep.mubr.bf16.mxu0 0
      %572 = vmatmul.mubr.bf16.gmra.mxu0 %v372
      %v573 = vpop.f32.mrf.mxu0
      %v574 = vadd.f32 0.0, %v573
      %v575 = vpop.f32.mrf.mxu0
      %v576 = vpop.f32.mrf.mxu0
      %v577 = vadd.f32 0.0, %v576
      %v578 = vpop.f32.mrf.mxu0
      %579 = vmatprep.mubr.bf16.mxu0 0
      %580 = vmatmul.mubr.bf16.gmra.mxu0 %v380
      %v581 = vpop.f32.mrf.mxu0
      %v582 = vadd.f32 0.0, %v581
      %v583 = vpop.f32.mrf.mxu0
      %v584 = vpop.f32.mrf.mxu0
      %v585 = vadd.f32 0.0, %v584
      %v586 = vpop.f32.mrf.mxu0
      %587 = vmatprep.mubr.bf16.mxu0 0
      %588 = vmatmul.mubr.bf16.gmra.mxu0 %v388
      %v589 = vpop.f32.mrf.mxu0
      %v590 = vadd.f32 0.0, %v589
      %v591 = vpop.f32.mrf.mxu0
      %v592 = vpop.f32.mrf.mxu0
      %v593 = vadd.f32 0.0, %v592
      %v594 = vpop.f32.mrf.mxu0
      %595 = vmatprep.mubr.bf16.mxu0 0
      %596 = vmatmul.mubr.bf16.gmra.mxu0 %v396
      %v597 = vpop.f32.mrf.mxu0
      %v598 = vadd.f32 0.0, %v597
      %v599 = vpop.f32.mrf.mxu0
      %v600 = vpop.f32.mrf.mxu0
      %v601 = vadd.f32 0.0, %v600
      %v602 = vpop.f32.mrf.mxu0
      %603 = vdwg.mxu0
      %v620 = vunpack.c.l.b16 %v246
      %v621 = vunpack.c.l.b16 %v247
      %v622 = vunpack.c.l.b16 %v248
      %v623 = vunpack.c.l.b16 %v249
      %v624 = vunpack.c.l.b16 %v250
      %v625 = vunpack.c.l.b16 %v251
      %v626 = vunpack.c.l.b16 %v252
      %v627 = vunpack.c.l.b16 %v253
      %v628 = vunpack.c.l.b16 %v254
      %v629 = vunpack.c.l.b16 %v255
      %v630 = vunpack.c.l.b16 %v256
      %v631 = vunpack.c.l.b16 %v257
      %v632 = vunpack.c.l.b16 %v258
      %v633 = vunpack.c.l.b16 %v259
      %v634 = vunpack.c.l.b16 %v260
      %v635 = vunpack.c.l.b16 %v261
      %v636 = vpack.c.b16 %v621, %v620
      %v637 = vpack.c.b16 %v623, %v622
      %v638 = vpack.c.b16 %v625, %v624
      %v639 = vpack.c.b16 %v627, %v626
      %v640 = vpack.c.b16 %v629, %v628
      %v641 = vpack.c.b16 %v631, %v630
      %v642 = vpack.c.b16 %v633, %v632
      %v643 = vpack.c.b16 %v635, %v634
      %652 = vmatprep.subr.bf16.mxu0 0
      %653 = vmatpush1.bf16.msra.mxu0 %v643
      %654 = vmatprep.subr.bf16.mxu0 0
      %655 = vmatpush1.bf16.msra.mxu0 %v642
      %656 = vmatprep.subr.bf16.mxu0 0
      %657 = vmatpush1.bf16.msra.mxu0 %v641
      %658 = vmatprep.subr.bf16.mxu0 0
      %659 = vmatpush1.bf16.msra.mxu0 %v640
      %660 = vmatprep.subr.bf16.mxu0 0
      %661 = vmatpush1.bf16.msra.mxu0 %v639
      %662 = vmatprep.subr.bf16.mxu0 0
      %663 = vmatpush1.bf16.msra.mxu0 %v638
      %664 = vmatprep.subr.bf16.mxu0 0
      %665 = vmatpush1.bf16.msra.mxu0 %v637
      %666 = vmatprep.subr.bf16.mxu0 0
      %667 = vmatpush1.bf16.msra.mxu0 %v636
      %668 = vmatprep.subr.bf16.mxu0 0
      %669 = vmatpush2.bf16.msra.mxu0 0
      %670 = vmatprep.subr.bf16.mxu0 0
      %671 = vmatpush2.bf16.msra.mxu0 0
      %672 = vmatprep.subr.bf16.mxu0 0
      %673 = vmatpush2.bf16.msra.mxu0 0
      %674 = vmatprep.subr.bf16.mxu0 0
      %675 = vmatpush2.bf16.msra.mxu0 0
      %676 = vmatprep.subr.bf16.mxu0 0
      %677 = vmatpush2.bf16.msra.mxu0 0
      %678 = vmatprep.subr.bf16.mxu0 0
      %679 = vmatpush2.bf16.msra.mxu0 0
      %680 = vmatprep.subr.bf16.mxu0 0
      %681 = vmatpush2.bf16.msra.mxu0 0
      %682 = vmatprep.subr.bf16.mxu0 0
      %683 = vmatpush2.bf16.msra.mxu0 0
      %684 = vmatprep.mubr.bf16.mxu0 0
      %685 = vmatmul.mubr.bf16.gmra.mxu0 %v232
      %v686 = vpop.f32.mrf.mxu0
      %v687 = vadd.f32 %v494, %v686
      %v688 = vpop.f32.mrf.mxu0
      %v689 = vpop.f32.mrf.mxu0
      %v690 = vadd.f32 %v497, %v689
      %v691 = vpop.f32.mrf.mxu0
      %692 = vmatprep.mubr.bf16.mxu0 0
      %693 = vmatmul.mubr.bf16.gmra.mxu0 %v233
      %v694 = vpop.f32.mrf.mxu0
      %v695 = vadd.f32 %v502, %v694
      %v696 = vpop.f32.mrf.mxu0
      %v697 = vpop.f32.mrf.mxu0
      %v698 = vadd.f32 %v505, %v697
      %v699 = vpop.f32.mrf.mxu0
      %700 = vmatprep.mubr.bf16.mxu0 0
      %701 = vmatmul.mubr.bf16.gmra.mxu0 %v234
      %v702 = vpop.f32.mrf.mxu0
      %v703 = vadd.f32 %v510, %v702
      %v704 = vpop.f32.mrf.mxu0
      %v705 = vpop.f32.mrf.mxu0
      %v706 = vadd.f32 %v513, %v705
      %v707 = vpop.f32.mrf.mxu0
      %708 = vmatprep.mubr.bf16.mxu0 0
      %709 = vmatmul.mubr.bf16.gmra.mxu0 %v235
      %v710 = vpop.f32.mrf.mxu0
      %v711 = vadd.f32 %v518, %v710
      %v712 = vpop.f32.mrf.mxu0
      %v713 = vpop.f32.mrf.mxu0
      %v714 = vadd.f32 %v521, %v713
      %v715 = vpop.f32.mrf.mxu0
      %716 = vmatprep.mubr.bf16.mxu0 0
      %717 = vmatmul.mubr.bf16.gmra.mxu0 %v236
      %v718 = vpop.f32.mrf.mxu0
      %v719 = vadd.f32 %v526, %v718
      %v720 = vpop.f32.mrf.mxu0
      %v721 = vpop.f32.mrf.mxu0
      %v722 = vadd.f32 %v529, %v721
      %v723 = vpop.f32.mrf.mxu0
      %724 = vmatprep.mubr.bf16.mxu0 0
      %725 = vmatmul.mubr.bf16.gmra.mxu0 %v237
      %v726 = vpop.f32.mrf.mxu0
      %v727 = vadd.f32 %v534, %v726
      %v728 = vpop.f32.mrf.mxu0
      %v729 = vpop.f32.mrf.mxu0
      %v730 = vadd.f32 %v537, %v729
      %v731 = vpop.f32.mrf.mxu0
      %732 = vmatprep.mubr.bf16.mxu0 0
      %733 = vmatmul.mubr.bf16.gmra.mxu0 %v238
      %v734 = vpop.f32.mrf.mxu0
      %v735 = vadd.f32 %v542, %v734
      %v736 = vpop.f32.mrf.mxu0
      %v737 = vpop.f32.mrf.mxu0
      %v738 = vadd.f32 %v545, %v737
      %v739 = vpop.f32.mrf.mxu0
      %740 = vmatprep.mubr.bf16.mxu0 0
      %741 = vmatmul.mubr.bf16.gmra.mxu0 %v239
      %v742 = vpop.f32.mrf.mxu0
      %v743 = vadd.f32 %v550, %v742
      %v744 = vpop.f32.mrf.mxu0
      %v745 = vpop.f32.mrf.mxu0
      %v746 = vadd.f32 %v553, %v745
      %v747 = vpop.f32.mrf.mxu0
      %748 = vmatprep.mubr.bf16.mxu0 0
      %749 = vmatmul.mubr.bf16.gmra.mxu0 %v240
      %v750 = vpop.f32.mrf.mxu0
      %v751 = vadd.f32 %v558, %v750
      %v752 = vpop.f32.mrf.mxu0
      %v753 = vpop.f32.mrf.mxu0
      %v754 = vadd.f32 %v561, %v753
      %v755 = vpop.f32.mrf.mxu0
      %756 = vmatprep.mubr.bf16.mxu0 0
      %757 = vmatmul.mubr.bf16.gmra.mxu0 %v241
      %v758 = vpop.f32.mrf.mxu0
      %v759 = vadd.f32 %v566, %v758
      %v760 = vpop.f32.mrf.mxu0
      %v761 = vpop.f32.mrf.mxu0
      %v762 = vadd.f32 %v569, %v761
      %v763 = vpop.f32.mrf.mxu0
      %764 = vmatprep.mubr.bf16.mxu0 0
      %765 = vmatmul.mubr.bf16.gmra.mxu0 %v242
      %v766 = vpop.f32.mrf.mxu0
      %v767 = vadd.f32 %v574, %v766
      %v768 = vpop.f32.mrf.mxu0
      %v769 = vpop.f32.mrf.mxu0
      %v770 = vadd.f32 %v577, %v769
      %v771 = vpop.f32.mrf.mxu0
      %772 = vmatprep.mubr.bf16.mxu0 0
      %773 = vmatmul.mubr.bf16.gmra.mxu0 %v243
      %v774 = vpop.f32.mrf.mxu0
      %v775 = vadd.f32 %v582, %v774
      %v776 = vpop.f32.mrf.mxu0
      %v777 = vpop.f32.mrf.mxu0
      %v778 = vadd.f32 %v585, %v777
      %v779 = vpop.f32.mrf.mxu0
      %780 = vmatprep.mubr.bf16.mxu0 0
      %781 = vmatmul.mubr.bf16.gmra.mxu0 %v244
      %v782 = vpop.f32.mrf.mxu0
      %v783 = vadd.f32 %v590, %v782
      %v784 = vpop.f32.mrf.mxu0
      %v785 = vpop.f32.mrf.mxu0
      %v786 = vadd.f32 %v593, %v785
      %v787 = vpop.f32.mrf.mxu0
      %788 = vmatprep.mubr.bf16.mxu0 0
      %789 = vmatmul.mubr.bf16.gmra.mxu0 %v245
      %v790 = vpop.f32.mrf.mxu0
      %v791 = vadd.f32 %v598, %v790
      %v792 = vpop.f32.mrf.mxu0
      %v793 = vpop.f32.mrf.mxu0
      %v794 = vadd.f32 %v601, %v793
      %v795 = vpop.f32.mrf.mxu0
      %796 = vdwg.mxu0
      %s797 = scalar_lea.vmem %s1, 128
      %v798 = vld [vmem:[%s797] sm:$0xf]
      %v799 = vld [vmem:[%s797 + $0x4] sm:$0xf]
      %v800 = vld [vmem:[%s797 + $0x8] sm:$0xf]
      %v801 = vld [vmem:[%s797 + $0xc] sm:$0xf]
      %v802 = vld [vmem:[%s797 + $0x10] sm:$0xf]
      %v803 = vld [vmem:[%s797 + $0x14] sm:$0xf]
      %v804 = vld [vmem:[%s797 + $0x18] sm:$0xf]
      %v805 = vld [vmem:[%s797 + $0x1c] sm:$0xf]
      %v806 = vld [vmem:[%s797 + $0x20] sm:$0xf]
      %v807 = vld [vmem:[%s797 + $0x24] sm:$0xf]
      %v808 = vld [vmem:[%s797 + $0x28] sm:$0xf]
      %v809 = vld [vmem:[%s797 + $0x2c] sm:$0xf]
      %v810 = vld [vmem:[%s797 + $0x30] sm:$0xf]
      %v811 = vld [vmem:[%s797 + $0x34] sm:$0xf]
      %v812 = vld [vmem:[%s797 + $0x38] sm:$0xf]
      %v813 = vld [vmem:[%s797 + $0x3c] sm:$0xf]
      %vm829 = vcmask 1046528
      %v830 = vrot.slane %v232, 1
      %v831 = vrot.slane %v233, 1
      %v832 = vsel %vm829, %v830, %v831
      %v833 = vrot.slane %v234, 1
      %v834 = vsel %vm829, %v831, %v833
      %v835 = vrot.slane %v235, 1
      %v836 = vsel %vm829, %v833, %v835
      %v837 = vrot.slane %v236, 1
      %v838 = vsel %vm829, %v835, %v837
      %v839 = vrot.slane %v237, 1
      %v840 = vsel %vm829, %v837, %v839
      %v841 = vrot.slane %v238, 1
      %v842 = vsel %vm829, %v839, %v841
      %v843 = vrot.slane %v239, 1
      %v844 = vsel %vm829, %v841, %v843
      %v845 = vrot.slane %v240, 1
      %v846 = vsel %vm829, %v843, %v845
      %v847 = vrot.slane %v241, 1
      %v848 = vsel %vm829, %v845, %v847
      %v849 = vrot.slane %v242, 1
      %v850 = vsel %vm829, %v847, %v849
      %v851 = vrot.slane %v243, 1
      %v852 = vsel %vm829, %v849, %v851
      %v853 = vrot.slane %v244, 1
      %v854 = vsel %vm829, %v851, %v853
      %v855 = vrot.slane %v245, 1
      %v856 = vsel %vm829, %v853, %v855
      %v857 = vrot.slane %v262, 1
      %v858 = vsel %vm829, %v855, %v857
      %v889 = vunpack.c.l.b16 %v798
      %v890 = vunpack.c.l.b16 %v799
      %v891 = vunpack.c.l.b16 %v800
      %v892 = vunpack.c.l.b16 %v801
      %v893 = vunpack.c.l.b16 %v802
      %v894 = vunpack.c.l.b16 %v803
      %v895 = vunpack.c.l.b16 %v804
      %v896 = vunpack.c.l.b16 %v805
      %v897 = vunpack.c.l.b16 %v806
      %v898 = vunpack.c.l.b16 %v807
      %v899 = vunpack.c.l.b16 %v808
      %v900 = vunpack.c.l.b16 %v809
      %v901 = vunpack.c.l.b16 %v810
      %v902 = vunpack.c.l.b16 %v811
      %v903 = vunpack.c.l.b16 %v812
      %v904 = vunpack.c.l.b16 %v813
      %v905 = vpack.c.b16 %v890, %v889
      %v906 = vpack.c.b16 %v892, %v891
      %v907 = vpack.c.b16 %v894, %v893
      %v908 = vpack.c.b16 %v896, %v895
      %v909 = vpack.c.b16 %v898, %v897
      %v910 = vpack.c.b16 %v900, %v899
      %v911 = vpack.c.b16 %v902, %v901
      %v912 = vpack.c.b16 %v904, %v903
      %921 = vmatprep.subr.bf16.mxu0 0
      %922 = vmatpush1.bf16.msra.mxu0 %v912
      %923 = vmatprep.subr.bf16.mxu0 0
      %924 = vmatpush1.bf16.msra.mxu0 %v911
      %925 = vmatprep.subr.bf16.mxu0 0
      %926 = vmatpush1.bf16.msra.mxu0 %v910
      %927 = vmatprep.subr.bf16.mxu0 0
      %928 = vmatpush1.bf16.msra.mxu0 %v909
      %929 = vmatprep.subr.bf16.mxu0 0
      %930 = vmatpush1.bf16.msra.mxu0 %v908
      %931 = vmatprep.subr.bf16.mxu0 0
      %932 = vmatpush1.bf16.msra.mxu0 %v907
      %933 = vmatprep.subr.bf16.mxu0 0
      %934 = vmatpush1.bf16.msra.mxu0 %v906
      %935 = vmatprep.subr.bf16.mxu0 0
      %936 = vmatpush1.bf16.msra.mxu0 %v905
      %937 = vmatprep.subr.bf16.mxu0 0
      %938 = vmatpush2.bf16.msra.mxu0 0
      %939 = vmatprep.subr.bf16.mxu0 0
      %940 = vmatpush2.bf16.msra.mxu0 0
      %941 = vmatprep.subr.bf16.mxu0 0
      %942 = vmatpush2.bf16.msra.mxu0 0
      %943 = vmatprep.subr.bf16.mxu0 0
      %944 = vmatpush2.bf16.msra.mxu0 0
      %945 = vmatprep.subr.bf16.mxu0 0
      %946 = vmatpush2.bf16.msra.mxu0 0
      %947 = vmatprep.subr.bf16.mxu0 0
      %948 = vmatpush2.bf16.msra.mxu0 0
      %949 = vmatprep.subr.bf16.mxu0 0
      %950 = vmatpush2.bf16.msra.mxu0 0
      %951 = vmatprep.subr.bf16.mxu0 0
      %952 = vmatpush2.bf16.msra.mxu0 0
      %953 = vmatprep.mubr.bf16.mxu0 0
      %954 = vmatmul.mubr.bf16.gmra.mxu0 %v832
      %v955 = vpop.f32.mrf.mxu0
      %v956 = vadd.f32 0.0, %v955
      %v957 = vpop.f32.mrf.mxu0
      %v958 = vpop.f32.mrf.mxu0
      %v959 = vadd.f32 0.0, %v958
      %v960 = vpop.f32.mrf.mxu0
      %961 = vmatprep.mubr.bf16.mxu0 0
      %962 = vmatmul.mubr.bf16.gmra.mxu0 %v834
      %v963 = vpop.f32.mrf.mxu0
      %v964 = vadd.f32 0.0, %v963
      %v965 = vpop.f32.mrf.mxu0
      %v966 = vpop.f32.mrf.mxu0
      %v967 = vadd.f32 0.0, %v966
      %v968 = vpop.f32.mrf.mxu0
      %969 = vmatprep.mubr.bf16.mxu0 0
      %970 = vmatmul.mubr.bf16.gmra.mxu0 %v836
      %v971 = vpop.f32.mrf.mxu0
      %v972 = vadd.f32 0.0, %v971
      %v973 = vpop.f32.mrf.mxu0
      %v974 = vpop.f32.mrf.mxu0
      %v975 = vadd.f32 0.0, %v974
      %v976 = vpop.f32.mrf.mxu0
      %977 = vmatprep.mubr.bf16.mxu0 0
      %978 = vmatmul.mubr.bf16.gmra.mxu0 %v838
      %v979 = vpop.f32.mrf.mxu0
      %v980 = vadd.f32 0.0, %v979
      %v981 = vpop.f32.mrf.mxu0
      %v982 = vpop.f32.mrf.mxu0
      %v983 = vadd.f32 0.0, %v982
      %v984 = vpop.f32.mrf.mxu0
      %985 = vmatprep.mubr.bf16.mxu0 0
      %986 = vmatmul.mubr.bf16.gmra.mxu0 %v840
      %v987 = vpop.f32.mrf.mxu0
      %v988 = vadd.f32 0.0, %v987
      %v989 = vpop.f32.mrf.mxu0
      %v990 = vpop.f32.mrf.mxu0
      %v991 = vadd.f32 0.0, %v990
      %v992 = vpop.f32.mrf.mxu0
      %993 = vmatprep.mubr.bf16.mxu0 0
      %994 = vmatmul.mubr.bf16.gmra.mxu0 %v842
      %v995 = vpop.f32.mrf.mxu0
      %v996 = vadd.f32 0.0, %v995
      %v997 = vpop.f32.mrf.mxu0
      %v998 = vpop.f32.mrf.mxu0
      %v999 = vadd.f32 0.0, %v998
      %v1000 = vpop.f32.mrf.mxu0
      %1001 = vmatprep.mubr.bf16.mxu0 0
      %1002 = vmatmul.mubr.bf16.gmra.mxu0 %v844
      %v1003 = vpop.f32.mrf.mxu0
      %v1004 = vadd.f32 0.0, %v1003
      %v1005 = vpop.f32.mrf.mxu0
      %v1006 = vpop.f32.mrf.mxu0
      %v1007 = vadd.f32 0.0, %v1006
      %v1008 = vpop.f32.mrf.mxu0
      %1009 = vmatprep.mubr.bf16.mxu0 0
      %1010 = vmatmul.mubr.bf16.gmra.mxu0 %v846
      %v1011 = vpop.f32.mrf.mxu0
      %v1012 = vadd.f32 0.0, %v1011
      %v1013 = vpop.f32.mrf.mxu0
      %v1014 = vpop.f32.mrf.mxu0
      %v1015 = vadd.f32 0.0, %v1014
      %v1016 = vpop.f32.mrf.mxu0
      %1017 = vmatprep.mubr.bf16.mxu0 0
      %1018 = vmatmul.mubr.bf16.gmra.mxu0 %v848
      %v1019 = vpop.f32.mrf.mxu0
      %v1020 = vadd.f32 0.0, %v1019
      %v1021 = vpop.f32.mrf.mxu0
      %v1022 = vpop.f32.mrf.mxu0
      %v1023 = vadd.f32 0.0, %v1022
      %v1024 = vpop.f32.mrf.mxu0
      %1025 = vmatprep.mubr.bf16.mxu0 0
      %1026 = vmatmul.mubr.bf16.gmra.mxu0 %v850
      %v1027 = vpop.f32.mrf.mxu0
      %v1028 = vadd.f32 0.0, %v1027
      %v1029 = vpop.f32.mrf.mxu0
      %v1030 = vpop.f32.mrf.mxu0
      %v1031 = vadd.f32 0.0, %v1030
      %v1032 = vpop.f32.mrf.mxu0
      %1033 = vmatprep.mubr.bf16.mxu0 0
      %1034 = vmatmul.mubr.bf16.gmra.mxu0 %v852
      %v1035 = vpop.f32.mrf.mxu0
      %v1036 = vadd.f32 0.0, %v1035
      %v1037 = vpop.f32.mrf.mxu0
      %v1038 = vpop.f32.mrf.mxu0
      %v1039 = vadd.f32 0.0, %v1038
      %v1040 = vpop.f32.mrf.mxu0
      %1041 = vmatprep.mubr.bf16.mxu0 0
      %1042 = vmatmul.mubr.bf16.gmra.mxu0 %v854
      %v1043 = vpop.f32.mrf.mxu0
      %v1044 = vadd.f32 0.0, %v1043
      %v1045 = vpop.f32.mrf.mxu0
      %v1046 = vpop.f32.mrf.mxu0
      %v1047 = vadd.f32 0.0, %v1046
      %v1048 = vpop.f32.mrf.mxu0
      %1049 = vmatprep.mubr.bf16.mxu0 0
      %1050 = vmatmul.mubr.bf16.gmra.mxu0 %v856
      %v1051 = vpop.f32.mrf.mxu0
      %v1052 = vadd.f32 0.0, %v1051
      %v1053 = vpop.f32.mrf.mxu0
      %v1054 = vpop.f32.mrf.mxu0
      %v1055 = vadd.f32 0.0, %v1054
      %v1056 = vpop.f32.mrf.mxu0
      %1057 = vmatprep.mubr.bf16.mxu0 0
      %1058 = vmatmul.mubr.bf16.gmra.mxu0 %v858
      %v1059 = vpop.f32.mrf.mxu0
      %v1060 = vadd.f32 0.0, %v1059
      %v1061 = vpop.f32.mrf.mxu0
      %v1062 = vpop.f32.mrf.mxu0
      %v1063 = vadd.f32 0.0, %v1062
      %v1064 = vpop.f32.mrf.mxu0
      %1065 = vdwg.mxu0
      %v1066 = vadd.f32 %v687, %v956
      %v1067 = vadd.f32 %v690, %v959
      %v1068 = vadd.f32 %v695, %v964
      %v1069 = vadd.f32 %v698, %v967
      %v1070 = vadd.f32 %v703, %v972
      %v1071 = vadd.f32 %v706, %v975
      %v1072 = vadd.f32 %v711, %v980
      %v1073 = vadd.f32 %v714, %v983
      %v1074 = vadd.f32 %v719, %v988
      %v1075 = vadd.f32 %v722, %v991
      %v1076 = vadd.f32 %v727, %v996
      %v1077 = vadd.f32 %v730, %v999
      %v1078 = vadd.f32 %v735, %v1004
      %v1079 = vadd.f32 %v738, %v1007
      %v1080 = vadd.f32 %v743, %v1012
      %v1081 = vadd.f32 %v746, %v1015
      %v1082 = vadd.f32 %v751, %v1020
      %v1083 = vadd.f32 %v754, %v1023
      %v1084 = vadd.f32 %v759, %v1028
      %v1085 = vadd.f32 %v762, %v1031
      %v1086 = vadd.f32 %v767, %v1036
      %v1087 = vadd.f32 %v770, %v1039
      %v1088 = vadd.f32 %v775, %v1044
      %v1089 = vadd.f32 %v778, %v1047
      %v1090 = vadd.f32 %v783, %v1052
      %v1091 = vadd.f32 %v786, %v1055
      %v1092 = vadd.f32 %v791, %v1060
      %v1093 = vadd.f32 %v794, %v1063
      %v1094 = vpack.c.bf16 %v228, %v227
      %s1095 = scalar_lea.vmem %s1, 192
      %v1096 = vld [vmem:[%s1095] sm:$0xf]
      %v1097 = vld [vmem:[%s1095 + $0x4] sm:$0xf]
      %v1098 = vld [vmem:[%s1095 + $0x8] sm:$0xf]
      %v1099 = vld [vmem:[%s1095 + $0xc] sm:$0xf]
      %v1100 = vld [vmem:[%s1095 + $0x10] sm:$0xf]
      %v1101 = vld [vmem:[%s1095 + $0x14] sm:$0xf]
      %v1102 = vld [vmem:[%s1095 + $0x18] sm:$0xf]
      %v1103 = vld [vmem:[%s1095 + $0x1c] sm:$0xf]
      %v1104 = vld [vmem:[%s1095 + $0x20] sm:$0xf]
      %v1105 = vld [vmem:[%s1095 + $0x24] sm:$0xf]
      %v1106 = vld [vmem:[%s1095 + $0x28] sm:$0xf]
      %v1107 = vld [vmem:[%s1095 + $0x2c] sm:$0xf]
      %v1108 = vld [vmem:[%s1095 + $0x30] sm:$0xf]
      %v1109 = vld [vmem:[%s1095 + $0x34] sm:$0xf]
      %v1110 = vld [vmem:[%s1095 + $0x38] sm:$0xf]
      %v1111 = vld [vmem:[%s1095 + $0x3c] sm:$0xf]
      %v1128 = vunpack.c.l.b16 %v1096
      %v1129 = vunpack.c.l.b16 %v1097
      %v1130 = vunpack.c.l.b16 %v1098
      %v1131 = vunpack.c.l.b16 %v1099
      %v1132 = vunpack.c.l.b16 %v1100
      %v1133 = vunpack.c.l.b16 %v1101
      %v1134 = vunpack.c.l.b16 %v1102
      %v1135 = vunpack.c.l.b16 %v1103
      %v1136 = vunpack.c.l.b16 %v1104
      %v1137 = vunpack.c.l.b16 %v1105
      %v1138 = vunpack.c.l.b16 %v1106
      %v1139 = vunpack.c.l.b16 %v1107
      %v1140 = vunpack.c.l.b16 %v1108
      %v1141 = vunpack.c.l.b16 %v1109
      %v1142 = vunpack.c.l.b16 %v1110
      %v1143 = vunpack.c.l.b16 %v1111
      %v1144 = vpack.c.b16 %v1129, %v1128
      %v1145 = vpack.c.b16 %v1131, %v1130
      %v1146 = vpack.c.b16 %v1133, %v1132
      %v1147 = vpack.c.b16 %v1135, %v1134
      %v1148 = vpack.c.b16 %v1137, %v1136
      %v1149 = vpack.c.b16 %v1139, %v1138
      %v1150 = vpack.c.b16 %v1141, %v1140
      %v1151 = vpack.c.b16 %v1143, %v1142
      %1160 = vmatprep.subr.bf16.mxu0 0
      %1161 = vmatpush1.bf16.msra.mxu0 %v1151
      %1162 = vmatprep.subr.bf16.mxu0 0
      %1163 = vmatpush1.bf16.msra.mxu0 %v1150
      %1164 = vmatprep.subr.bf16.mxu0 0
      %1165 = vmatpush1.bf16.msra.mxu0 %v1149
      %1166 = vmatprep.subr.bf16.mxu0 0
      %1167 = vmatpush1.bf16.msra.mxu0 %v1148
      %1168 = vmatprep.subr.bf16.mxu0 0
      %1169 = vmatpush1.bf16.msra.mxu0 %v1147
      %1170 = vmatprep.subr.bf16.mxu0 0
      %1171 = vmatpush1.bf16.msra.mxu0 %v1146
      %1172 = vmatprep.subr.bf16.mxu0 0
      %1173 = vmatpush1.bf16.msra.mxu0 %v1145
      %1174 = vmatprep.subr.bf16.mxu0 0
      %1175 = vmatpush1.bf16.msra.mxu0 %v1144
      %1176 = vmatprep.subr.bf16.mxu0 0
      %1177 = vmatpush2.bf16.msra.mxu0 0
      %1178 = vmatprep.subr.bf16.mxu0 0
      %1179 = vmatpush2.bf16.msra.mxu0 0
      %1180 = vmatprep.subr.bf16.mxu0 0
      %1181 = vmatpush2.bf16.msra.mxu0 0
      %1182 = vmatprep.subr.bf16.mxu0 0
      %1183 = vmatpush2.bf16.msra.mxu0 0
      %1184 = vmatprep.subr.bf16.mxu0 0
      %1185 = vmatpush2.bf16.msra.mxu0 0
      %1186 = vmatprep.subr.bf16.mxu0 0
      %1187 = vmatpush2.bf16.msra.mxu0 0
      %1188 = vmatprep.subr.bf16.mxu0 0
      %1189 = vmatpush2.bf16.msra.mxu0 0
      %1190 = vmatprep.subr.bf16.mxu0 0
      %1191 = vmatpush2.bf16.msra.mxu0 0
      %1192 = vmatprep.mubr.bf16.mxu0 0
      %1193 = vmatmul.mubr.bf16.gmra.mxu0 %v233
      %v1194 = vpop.f32.mrf.mxu0
      %v1195 = vadd.f32 0.0, %v1194
      %v1196 = vpop.f32.mrf.mxu0
      %v1197 = vpop.f32.mrf.mxu0
      %v1198 = vadd.f32 0.0, %v1197
      %v1199 = vpop.f32.mrf.mxu0
      %1200 = vmatprep.mubr.bf16.mxu0 0
      %1201 = vmatmul.mubr.bf16.gmra.mxu0 %v234
      %v1202 = vpop.f32.mrf.mxu0
      %v1203 = vadd.f32 0.0, %v1202
      %v1204 = vpop.f32.mrf.mxu0
      %v1205 = vpop.f32.mrf.mxu0
      %v1206 = vadd.f32 0.0, %v1205
      %v1207 = vpop.f32.mrf.mxu0
      %1208 = vmatprep.mubr.bf16.mxu0 0
      %1209 = vmatmul.mubr.bf16.gmra.mxu0 %v235
      %v1210 = vpop.f32.mrf.mxu0
      %v1211 = vadd.f32 0.0, %v1210
      %v1212 = vpop.f32.mrf.mxu0
      %v1213 = vpop.f32.mrf.mxu0
      %v1214 = vadd.f32 0.0, %v1213
      %v1215 = vpop.f32.mrf.mxu0
      %1216 = vmatprep.mubr.bf16.mxu0 0
      %1217 = vmatmul.mubr.bf16.gmra.mxu0 %v236
      %v1218 = vpop.f32.mrf.mxu0
      %v1219 = vadd.f32 0.0, %v1218
      %v1220 = vpop.f32.mrf.mxu0
      %v1221 = vpop.f32.mrf.mxu0
      %v1222 = vadd.f32 0.0, %v1221
      %v1223 = vpop.f32.mrf.mxu0
      %1224 = vmatprep.mubr.bf16.mxu0 0
      %1225 = vmatmul.mubr.bf16.gmra.mxu0 %v237
      %v1226 = vpop.f32.mrf.mxu0
      %v1227 = vadd.f32 0.0, %v1226
      %v1228 = vpop.f32.mrf.mxu0
      %v1229 = vpop.f32.mrf.mxu0
      %v1230 = vadd.f32 0.0, %v1229
      %v1231 = vpop.f32.mrf.mxu0
      %1232 = vmatprep.mubr.bf16.mxu0 0
      %1233 = vmatmul.mubr.bf16.gmra.mxu0 %v238
      %v1234 = vpop.f32.mrf.mxu0
      %v1235 = vadd.f32 0.0, %v1234
      %v1236 = vpop.f32.mrf.mxu0
      %v1237 = vpop.f32.mrf.mxu0
      %v1238 = vadd.f32 0.0, %v1237
      %v1239 = vpop.f32.mrf.mxu0
      %1240 = vmatprep.mubr.bf16.mxu0 0
      %1241 = vmatmul.mubr.bf16.gmra.mxu0 %v239
      %v1242 = vpop.f32.mrf.mxu0
      %v1243 = vadd.f32 0.0, %v1242
      %v1244 = vpop.f32.mrf.mxu0
      %v1245 = vpop.f32.mrf.mxu0
      %v1246 = vadd.f32 0.0, %v1245
      %v1247 = vpop.f32.mrf.mxu0
      %1248 = vmatprep.mubr.bf16.mxu0 0
      %1249 = vmatmul.mubr.bf16.gmra.mxu0 %v240
      %v1250 = vpop.f32.mrf.mxu0
      %v1251 = vadd.f32 0.0, %v1250
      %v1252 = vpop.f32.mrf.mxu0
      %v1253 = vpop.f32.mrf.mxu0
      %v1254 = vadd.f32 0.0, %v1253
      %v1255 = vpop.f32.mrf.mxu0
      %1256 = vmatprep.mubr.bf16.mxu0 0
      %1257 = vmatmul.mubr.bf16.gmra.mxu0 %v241
      %v1258 = vpop.f32.mrf.mxu0
      %v1259 = vadd.f32 0.0, %v1258
      %v1260 = vpop.f32.mrf.mxu0
      %v1261 = vpop.f32.mrf.mxu0
      %v1262 = vadd.f32 0.0, %v1261
      %v1263 = vpop.f32.mrf.mxu0
      %1264 = vmatprep.mubr.bf16.mxu0 0
      %1265 = vmatmul.mubr.bf16.gmra.mxu0 %v242
      %v1266 = vpop.f32.mrf.mxu0
      %v1267 = vadd.f32 0.0, %v1266
      %v1268 = vpop.f32.mrf.mxu0
      %v1269 = vpop.f32.mrf.mxu0
      %v1270 = vadd.f32 0.0, %v1269
      %v1271 = vpop.f32.mrf.mxu0
      %1272 = vmatprep.mubr.bf16.mxu0 0
      %1273 = vmatmul.mubr.bf16.gmra.mxu0 %v243
      %v1274 = vpop.f32.mrf.mxu0
      %v1275 = vadd.f32 0.0, %v1274
      %v1276 = vpop.f32.mrf.mxu0
      %v1277 = vpop.f32.mrf.mxu0
      %v1278 = vadd.f32 0.0, %v1277
      %v1279 = vpop.f32.mrf.mxu0
      %1280 = vmatprep.mubr.bf16.mxu0 0
      %1281 = vmatmul.mubr.bf16.gmra.mxu0 %v244
      %v1282 = vpop.f32.mrf.mxu0
      %v1283 = vadd.f32 0.0, %v1282
      %v1284 = vpop.f32.mrf.mxu0
      %v1285 = vpop.f32.mrf.mxu0
      %v1286 = vadd.f32 0.0, %v1285
      %v1287 = vpop.f32.mrf.mxu0
      %1288 = vmatprep.mubr.bf16.mxu0 0
      %1289 = vmatmul.mubr.bf16.gmra.mxu0 %v245
      %v1290 = vpop.f32.mrf.mxu0
      %v1291 = vadd.f32 0.0, %v1290
      %v1292 = vpop.f32.mrf.mxu0
      %v1293 = vpop.f32.mrf.mxu0
      %v1294 = vadd.f32 0.0, %v1293
      %v1295 = vpop.f32.mrf.mxu0
      %1296 = vmatprep.mubr.bf16.mxu0 0
      %1297 = vmatmul.mubr.bf16.gmra.mxu0 %v1094
      %v1298 = vpop.f32.mrf.mxu0
      %v1299 = vadd.f32 0.0, %v1298
      %v1300 = vpop.f32.mrf.mxu0
      %v1301 = vpop.f32.mrf.mxu0
      %v1302 = vadd.f32 0.0, %v1301
      %v1303 = vpop.f32.mrf.mxu0
      %1304 = vdwg.mxu0
      %v1305 = vadd.f32 %v1066, %v1195
      %v1306 = vadd.f32 %v1067, %v1198
      %v1307 = vadd.f32 %v1068, %v1203
      %v1308 = vadd.f32 %v1069, %v1206
      %v1309 = vadd.f32 %v1070, %v1211
      %v1310 = vadd.f32 %v1071, %v1214
      %v1311 = vadd.f32 %v1072, %v1219
      %v1312 = vadd.f32 %v1073, %v1222
      %v1313 = vadd.f32 %v1074, %v1227
      %v1314 = vadd.f32 %v1075, %v1230
      %v1315 = vadd.f32 %v1076, %v1235
      %v1316 = vadd.f32 %v1077, %v1238
      %v1317 = vadd.f32 %v1078, %v1243
      %v1318 = vadd.f32 %v1079, %v1246
      %v1319 = vadd.f32 %v1080, %v1251
      %v1320 = vadd.f32 %v1081, %v1254
      %v1321 = vadd.f32 %v1082, %v1259
      %v1322 = vadd.f32 %v1083, %v1262
      %v1323 = vadd.f32 %v1084, %v1267
      %v1324 = vadd.f32 %v1085, %v1270
      %v1325 = vadd.f32 %v1086, %v1275
      %v1326 = vadd.f32 %v1087, %v1278
      %v1327 = vadd.f32 %v1088, %v1283
      %v1328 = vadd.f32 %v1089, %v1286
      %v1329 = vadd.f32 %v1090, %v1291
      %v1330 = vadd.f32 %v1091, %v1294
      %v1331 = vadd.f32 %v1092, %v1299
      %v1332 = vadd.f32 %v1093, %v1302
      %v1333 = vpack.c.bf16 %v229, %v229
      %s1334 = scalar_lea.vmem %s1, 256
      %v1335 = vld [vmem:[%s1334] sm:$0xf]
      %v1336 = vld [vmem:[%s1334 + $0x4] sm:$0xf]
      %v1337 = vld [vmem:[%s1334 + $0x8] sm:$0xf]
      %v1338 = vld [vmem:[%s1334 + $0xc] sm:$0xf]
      %v1339 = vld [vmem:[%s1334 + $0x10] sm:$0xf]
      %v1340 = vld [vmem:[%s1334 + $0x14] sm:$0xf]
      %v1341 = vld [vmem:[%s1334 + $0x18] sm:$0xf]
      %v1342 = vld [vmem:[%s1334 + $0x1c] sm:$0xf]
      %v1343 = vld [vmem:[%s1334 + $0x20] sm:$0xf]
      %v1344 = vld [vmem:[%s1334 + $0x24] sm:$0xf]
      %v1345 = vld [vmem:[%s1334 + $0x28] sm:$0xf]
      %v1346 = vld [vmem:[%s1334 + $0x2c] sm:$0xf]
      %v1347 = vld [vmem:[%s1334 + $0x30] sm:$0xf]
      %v1348 = vld [vmem:[%s1334 + $0x34] sm:$0xf]
      %v1349 = vld [vmem:[%s1334 + $0x38] sm:$0xf]
      %v1350 = vld [vmem:[%s1334 + $0x3c] sm:$0xf]
      %v1352 = vshll.u32 %v1094, 16
      %v1354 = vrot.slane %v1352, 1
      %v1355 = vsel %vm280, %v391, %v1354
      %v1356 = vshrl.u32 %v1094, 16
      %v1358 = vor.u32 %v1356, %v1354
      %v1360 = vshll.u32 %v1333, 16
      %v1362 = vrot.slane %v1360, 1
      %v1363 = vsel %vm280, %v1358, %v1362
      %v1382 = vunpack.c.l.b16 %v1335
      %v1383 = vunpack.c.l.b16 %v1336
      %v1384 = vunpack.c.l.b16 %v1337
      %v1385 = vunpack.c.l.b16 %v1338
      %v1386 = vunpack.c.l.b16 %v1339
      %v1387 = vunpack.c.l.b16 %v1340
      %v1388 = vunpack.c.l.b16 %v1341
      %v1389 = vunpack.c.l.b16 %v1342
      %v1390 = vunpack.c.l.b16 %v1343
      %v1391 = vunpack.c.l.b16 %v1344
      %v1392 = vunpack.c.l.b16 %v1345
      %v1393 = vunpack.c.l.b16 %v1346
      %v1394 = vunpack.c.l.b16 %v1347
      %v1395 = vunpack.c.l.b16 %v1348
      %v1396 = vunpack.c.l.b16 %v1349
      %v1397 = vunpack.c.l.b16 %v1350
      %v1398 = vpack.c.b16 %v1383, %v1382
      %v1399 = vpack.c.b16 %v1385, %v1384
      %v1400 = vpack.c.b16 %v1387, %v1386
      %v1401 = vpack.c.b16 %v1389, %v1388
      %v1402 = vpack.c.b16 %v1391, %v1390
      %v1403 = vpack.c.b16 %v1393, %v1392
      %v1404 = vpack.c.b16 %v1395, %v1394
      %v1405 = vpack.c.b16 %v1397, %v1396
      %1414 = vmatprep.subr.bf16.mxu0 0
      %1415 = vmatpush1.bf16.msra.mxu0 %v1405
      %1416 = vmatprep.subr.bf16.mxu0 0
      %1417 = vmatpush1.bf16.msra.mxu0 %v1404
      %1418 = vmatprep.subr.bf16.mxu0 0
      %1419 = vmatpush1.bf16.msra.mxu0 %v1403
      %1420 = vmatprep.subr.bf16.mxu0 0
      %1421 = vmatpush1.bf16.msra.mxu0 %v1402
      %1422 = vmatprep.subr.bf16.mxu0 0
      %1423 = vmatpush1.bf16.msra.mxu0 %v1401
      %1424 = vmatprep.subr.bf16.mxu0 0
      %1425 = vmatpush1.bf16.msra.mxu0 %v1400
      %1426 = vmatprep.subr.bf16.mxu0 0
      %1427 = vmatpush1.bf16.msra.mxu0 %v1399
      %1428 = vmatprep.subr.bf16.mxu0 0
      %1429 = vmatpush1.bf16.msra.mxu0 %v1398
      %1430 = vmatprep.subr.bf16.mxu0 0
      %1431 = vmatpush2.bf16.msra.mxu0 0
      %1432 = vmatprep.subr.bf16.mxu0 0
      %1433 = vmatpush2.bf16.msra.mxu0 0
      %1434 = vmatprep.subr.bf16.mxu0 0
      %1435 = vmatpush2.bf16.msra.mxu0 0
      %1436 = vmatprep.subr.bf16.mxu0 0
      %1437 = vmatpush2.bf16.msra.mxu0 0
      %1438 = vmatprep.subr.bf16.mxu0 0
      %1439 = vmatpush2.bf16.msra.mxu0 0
      %1440 = vmatprep.subr.bf16.mxu0 0
      %1441 = vmatpush2.bf16.msra.mxu0 0
      %1442 = vmatprep.subr.bf16.mxu0 0
      %1443 = vmatpush2.bf16.msra.mxu0 0
      %1444 = vmatprep.subr.bf16.mxu0 0
      %1445 = vmatpush2.bf16.msra.mxu0 0
      %1446 = vmatprep.mubr.bf16.mxu0 0
      %1447 = vmatmul.mubr.bf16.gmra.mxu0 %v300
      %v1448 = vpop.f32.mrf.mxu0
      %v1449 = vadd.f32 0.0, %v1448
      %v1450 = vpop.f32.mrf.mxu0
      %v1451 = vpop.f32.mrf.mxu0
      %v1452 = vadd.f32 0.0, %v1451
      %v1453 = vpop.f32.mrf.mxu0
      %1454 = vmatprep.mubr.bf16.mxu0 0
      %1455 = vmatmul.mubr.bf16.gmra.mxu0 %v308
      %v1456 = vpop.f32.mrf.mxu0
      %v1457 = vadd.f32 0.0, %v1456
      %v1458 = vpop.f32.mrf.mxu0
      %v1459 = vpop.f32.mrf.mxu0
      %v1460 = vadd.f32 0.0, %v1459
      %v1461 = vpop.f32.mrf.mxu0
      %1462 = vmatprep.mubr.bf16.mxu0 0
      %1463 = vmatmul.mubr.bf16.gmra.mxu0 %v316
      %v1464 = vpop.f32.mrf.mxu0
      %v1465 = vadd.f32 0.0, %v1464
      %v1466 = vpop.f32.mrf.mxu0
      %v1467 = vpop.f32.mrf.mxu0
      %v1468 = vadd.f32 0.0, %v1467
      %v1469 = vpop.f32.mrf.mxu0
      %1470 = vmatprep.mubr.bf16.mxu0 0
      %1471 = vmatmul.mubr.bf16.gmra.mxu0 %v324
      %v1472 = vpop.f32.mrf.mxu0
      %v1473 = vadd.f32 0.0, %v1472
      %v1474 = vpop.f32.mrf.mxu0
      %v1475 = vpop.f32.mrf.mxu0
      %v1476 = vadd.f32 0.0, %v1475
      %v1477 = vpop.f32.mrf.mxu0
      %1478 = vmatprep.mubr.bf16.mxu0 0
      %1479 = vmatmul.mubr.bf16.gmra.mxu0 %v332
      %v1480 = vpop.f32.mrf.mxu0
      %v1481 = vadd.f32 0.0, %v1480
      %v1482 = vpop.f32.mrf.mxu0
      %v1483 = vpop.f32.mrf.mxu0
      %v1484 = vadd.f32 0.0, %v1483
      %v1485 = vpop.f32.mrf.mxu0
      %1486 = vmatprep.mubr.bf16.mxu0 0
      %1487 = vmatmul.mubr.bf16.gmra.mxu0 %v340
      %v1488 = vpop.f32.mrf.mxu0
      %v1489 = vadd.f32 0.0, %v1488
      %v1490 = vpop.f32.mrf.mxu0
      %v1491 = vpop.f32.mrf.mxu0
      %v1492 = vadd.f32 0.0, %v1491
      %v1493 = vpop.f32.mrf.mxu0
      %1494 = vmatprep.mubr.bf16.mxu0 0
      %1495 = vmatmul.mubr.bf16.gmra.mxu0 %v348
      %v1496 = vpop.f32.mrf.mxu0
      %v1497 = vadd.f32 0.0, %v1496
      %v1498 = vpop.f32.mrf.mxu0
      %v1499 = vpop.f32.mrf.mxu0
      %v1500 = vadd.f32 0.0, %v1499
      %v1501 = vpop.f32.mrf.mxu0
      %1502 = vmatprep.mubr.bf16.mxu0 0
      %1503 = vmatmul.mubr.bf16.gmra.mxu0 %v356
      %v1504 = vpop.f32.mrf.mxu0
      %v1505 = vadd.f32 0.0, %v1504
      %v1506 = vpop.f32.mrf.mxu0
      %v1507 = vpop.f32.mrf.mxu0
      %v1508 = vadd.f32 0.0, %v1507
      %v1509 = vpop.f32.mrf.mxu0
      %1510 = vmatprep.mubr.bf16.mxu0 0
      %1511 = vmatmul.mubr.bf16.gmra.mxu0 %v364
      %v1512 = vpop.f32.mrf.mxu0
      %v1513 = vadd.f32 0.0, %v1512
      %v1514 = vpop.f32.mrf.mxu0
      %v1515 = vpop.f32.mrf.mxu0
      %v1516 = vadd.f32 0.0, %v1515
      %v1517 = vpop.f32.mrf.mxu0
      %1518 = vmatprep.mubr.bf16.mxu0 0
      %1519 = vmatmul.mubr.bf16.gmra.mxu0 %v372
      %v1520 = vpop.f32.mrf.mxu0
      %v1521 = vadd.f32 0.0, %v1520
      %v1522 = vpop.f32.mrf.mxu0
      %v1523 = vpop.f32.mrf.mxu0
      %v1524 = vadd.f32 0.0, %v1523
      %v1525 = vpop.f32.mrf.mxu0
      %1526 = vmatprep.mubr.bf16.mxu0 0
      %1527 = vmatmul.mubr.bf16.gmra.mxu0 %v380
      %v1528 = vpop.f32.mrf.mxu0
      %v1529 = vadd.f32 0.0, %v1528
      %v1530 = vpop.f32.mrf.mxu0
      %v1531 = vpop.f32.mrf.mxu0
      %v1532 = vadd.f32 0.0, %v1531
      %v1533 = vpop.f32.mrf.mxu0
      %1534 = vmatprep.mubr.bf16.mxu0 0
      %1535 = vmatmul.mubr.bf16.gmra.mxu0 %v388
      %v1536 = vpop.f32.mrf.mxu0
      %v1537 = vadd.f32 0.0, %v1536
      %v1538 = vpop.f32.mrf.mxu0
      %v1539 = vpop.f32.mrf.mxu0
      %v1540 = vadd.f32 0.0, %v1539
      %v1541 = vpop.f32.mrf.mxu0
      %1542 = vmatprep.mubr.bf16.mxu0 0
      %1543 = vmatmul.mubr.bf16.gmra.mxu0 %v1355
      %v1544 = vpop.f32.mrf.mxu0
      %v1545 = vadd.f32 0.0, %v1544
      %v1546 = vpop.f32.mrf.mxu0
      %v1547 = vpop.f32.mrf.mxu0
      %v1548 = vadd.f32 0.0, %v1547
      %v1549 = vpop.f32.mrf.mxu0
      %1550 = vmatprep.mubr.bf16.mxu0 0
      %1551 = vmatmul.mubr.bf16.gmra.mxu0 %v1363
      %v1552 = vpop.f32.mrf.mxu0
      %v1553 = vadd.f32 0.0, %v1552
      %v1554 = vpop.f32.mrf.mxu0
      %v1555 = vpop.f32.mrf.mxu0
      %v1556 = vadd.f32 0.0, %v1555
      %v1557 = vpop.f32.mrf.mxu0
      %1558 = vdwg.mxu0
      %v1559 = vadd.f32 %v1305, %v1449
      %v1560 = vadd.f32 %v1306, %v1452
      %v1561 = vadd.f32 %v1307, %v1457
      %v1562 = vadd.f32 %v1308, %v1460
      %v1563 = vadd.f32 %v1309, %v1465
      %v1564 = vadd.f32 %v1310, %v1468
      %v1565 = vadd.f32 %v1311, %v1473
      %v1566 = vadd.f32 %v1312, %v1476
      %v1567 = vadd.f32 %v1313, %v1481
      %v1568 = vadd.f32 %v1314, %v1484
      %v1569 = vadd.f32 %v1315, %v1489
      %v1570 = vadd.f32 %v1316, %v1492
      %v1571 = vadd.f32 %v1317, %v1497
      %v1572 = vadd.f32 %v1318, %v1500
      %v1573 = vadd.f32 %v1319, %v1505
      %v1574 = vadd.f32 %v1320, %v1508
      %v1575 = vadd.f32 %v1321, %v1513
      %v1576 = vadd.f32 %v1322, %v1516
      %v1577 = vadd.f32 %v1323, %v1521
      %v1578 = vadd.f32 %v1324, %v1524
      %v1579 = vadd.f32 %v1325, %v1529
      %v1580 = vadd.f32 %v1326, %v1532
      %v1581 = vadd.f32 %v1327, %v1537
      %v1582 = vadd.f32 %v1328, %v1540
      %v1583 = vadd.f32 %v1329, %v1545
      %v1584 = vadd.f32 %v1330, %v1548
      %v1585 = vadd.f32 %v1331, %v1553
      %v1586 = vadd.f32 %v1332, %v1556
      %s1587 = scalar_lea.vmem %s1, 320
      %v1588 = vld [vmem:[%s1587] sm:$0xf]
      %v1589 = vld [vmem:[%s1587 + $0x4] sm:$0xf]
      %v1590 = vld [vmem:[%s1587 + $0x8] sm:$0xf]
      %v1591 = vld [vmem:[%s1587 + $0xc] sm:$0xf]
      %v1592 = vld [vmem:[%s1587 + $0x10] sm:$0xf]
      %v1593 = vld [vmem:[%s1587 + $0x14] sm:$0xf]
      %v1594 = vld [vmem:[%s1587 + $0x18] sm:$0xf]
      %v1595 = vld [vmem:[%s1587 + $0x1c] sm:$0xf]
      %v1596 = vld [vmem:[%s1587 + $0x20] sm:$0xf]
      %v1597 = vld [vmem:[%s1587 + $0x24] sm:$0xf]
      %v1598 = vld [vmem:[%s1587 + $0x28] sm:$0xf]
      %v1599 = vld [vmem:[%s1587 + $0x2c] sm:$0xf]
      %v1600 = vld [vmem:[%s1587 + $0x30] sm:$0xf]
      %v1601 = vld [vmem:[%s1587 + $0x34] sm:$0xf]
      %v1602 = vld [vmem:[%s1587 + $0x38] sm:$0xf]
      %v1603 = vld [vmem:[%s1587 + $0x3c] sm:$0xf]
      %v1606 = vrot.slane %v1094, 1
      %v1607 = vsel %vm829, %v855, %v1606
      %v1608 = vrot.slane %v1333, 1
      %v1609 = vsel %vm829, %v1606, %v1608
      %v1628 = vunpack.c.l.b16 %v1588
      %v1629 = vunpack.c.l.b16 %v1589
      %v1630 = vunpack.c.l.b16 %v1590
      %v1631 = vunpack.c.l.b16 %v1591
      %v1632 = vunpack.c.l.b16 %v1592
      %v1633 = vunpack.c.l.b16 %v1593
      %v1634 = vunpack.c.l.b16 %v1594
      %v1635 = vunpack.c.l.b16 %v1595
      %v1636 = vunpack.c.l.b16 %v1596
      %v1637 = vunpack.c.l.b16 %v1597
      %v1638 = vunpack.c.l.b16 %v1598
      %v1639 = vunpack.c.l.b16 %v1599
      %v1640 = vunpack.c.l.b16 %v1600
      %v1641 = vunpack.c.l.b16 %v1601
      %v1642 = vunpack.c.l.b16 %v1602
      %v1643 = vunpack.c.l.b16 %v1603
      %v1644 = vpack.c.b16 %v1629, %v1628
      %v1645 = vpack.c.b16 %v1631, %v1630
      %v1646 = vpack.c.b16 %v1633, %v1632
      %v1647 = vpack.c.b16 %v1635, %v1634
      %v1648 = vpack.c.b16 %v1637, %v1636
      %v1649 = vpack.c.b16 %v1639, %v1638
      %v1650 = vpack.c.b16 %v1641, %v1640
      %v1651 = vpack.c.b16 %v1643, %v1642
      %1660 = vmatprep.subr.bf16.mxu0 0
      %1661 = vmatpush1.bf16.msra.mxu0 %v1651
      %1662 = vmatprep.subr.bf16.mxu0 0
      %1663 = vmatpush1.bf16.msra.mxu0 %v1650
      %1664 = vmatprep.subr.bf16.mxu0 0
      %1665 = vmatpush1.bf16.msra.mxu0 %v1649
      %1666 = vmatprep.subr.bf16.mxu0 0
      %1667 = vmatpush1.bf16.msra.mxu0 %v1648
      %1668 = vmatprep.subr.bf16.mxu0 0
      %1669 = vmatpush1.bf16.msra.mxu0 %v1647
      %1670 = vmatprep.subr.bf16.mxu0 0
      %1671 = vmatpush1.bf16.msra.mxu0 %v1646
      %1672 = vmatprep.subr.bf16.mxu0 0
      %1673 = vmatpush1.bf16.msra.mxu0 %v1645
      %1674 = vmatprep.subr.bf16.mxu0 0
      %1675 = vmatpush1.bf16.msra.mxu0 %v1644
      %1676 = vmatprep.subr.bf16.mxu0 0
      %1677 = vmatpush2.bf16.msra.mxu0 0
      %1678 = vmatprep.subr.bf16.mxu0 0
      %1679 = vmatpush2.bf16.msra.mxu0 0
      %1680 = vmatprep.subr.bf16.mxu0 0
      %1681 = vmatpush2.bf16.msra.mxu0 0
      %1682 = vmatprep.subr.bf16.mxu0 0
      %1683 = vmatpush2.bf16.msra.mxu0 0
      %1684 = vmatprep.subr.bf16.mxu0 0
      %1685 = vmatpush2.bf16.msra.mxu0 0
      %1686 = vmatprep.subr.bf16.mxu0 0
      %1687 = vmatpush2.bf16.msra.mxu0 0
      %1688 = vmatprep.subr.bf16.mxu0 0
      %1689 = vmatpush2.bf16.msra.mxu0 0
      %1690 = vmatprep.subr.bf16.mxu0 0
      %1691 = vmatpush2.bf16.msra.mxu0 0
      %1692 = vmatprep.mubr.bf16.mxu0 0
      %1693 = vmatmul.mubr.bf16.gmra.mxu0 %v834
      %v1694 = vpop.f32.mrf.mxu0
      %v1695 = vadd.f32 0.0, %v1694
      %v1696 = vpop.f32.mrf.mxu0
      %v1697 = vpop.f32.mrf.mxu0
      %v1698 = vadd.f32 0.0, %v1697
      %v1699 = vpop.f32.mrf.mxu0
      %1700 = vmatprep.mubr.bf16.mxu0 0
      %1701 = vmatmul.mubr.bf16.gmra.mxu0 %v836
      %v1702 = vpop.f32.mrf.mxu0
      %v1703 = vadd.f32 0.0, %v1702
      %v1704 = vpop.f32.mrf.mxu0
      %v1705 = vpop.f32.mrf.mxu0
      %v1706 = vadd.f32 0.0, %v1705
      %v1707 = vpop.f32.mrf.mxu0
      %1708 = vmatprep.mubr.bf16.mxu0 0
      %1709 = vmatmul.mubr.bf16.gmra.mxu0 %v838
      %v1710 = vpop.f32.mrf.mxu0
      %v1711 = vadd.f32 0.0, %v1710
      %v1712 = vpop.f32.mrf.mxu0
      %v1713 = vpop.f32.mrf.mxu0
      %v1714 = vadd.f32 0.0, %v1713
      %v1715 = vpop.f32.mrf.mxu0
      %1716 = vmatprep.mubr.bf16.mxu0 0
      %1717 = vmatmul.mubr.bf16.gmra.mxu0 %v840
      %v1718 = vpop.f32.mrf.mxu0
      %v1719 = vadd.f32 0.0, %v1718
      %v1720 = vpop.f32.mrf.mxu0
      %v1721 = vpop.f32.mrf.mxu0
      %v1722 = vadd.f32 0.0, %v1721
      %v1723 = vpop.f32.mrf.mxu0
      %1724 = vmatprep.mubr.bf16.mxu0 0
      %1725 = vmatmul.mubr.bf16.gmra.mxu0 %v842
      %v1726 = vpop.f32.mrf.mxu0
      %v1727 = vadd.f32 0.0, %v1726
      %v1728 = vpop.f32.mrf.mxu0
      %v1729 = vpop.f32.mrf.mxu0
      %v1730 = vadd.f32 0.0, %v1729
      %v1731 = vpop.f32.mrf.mxu0
      %1732 = vmatprep.mubr.bf16.mxu0 0
      %1733 = vmatmul.mubr.bf16.gmra.mxu0 %v844
      %v1734 = vpop.f32.mrf.mxu0
      %v1735 = vadd.f32 0.0, %v1734
      %v1736 = vpop.f32.mrf.mxu0
      %v1737 = vpop.f32.mrf.mxu0
      %v1738 = vadd.f32 0.0, %v1737
      %v1739 = vpop.f32.mrf.mxu0
      %1740 = vmatprep.mubr.bf16.mxu0 0
      %1741 = vmatmul.mubr.bf16.gmra.mxu0 %v846
      %v1742 = vpop.f32.mrf.mxu0
      %v1743 = vadd.f32 0.0, %v1742
      %v1744 = vpop.f32.mrf.mxu0
      %v1745 = vpop.f32.mrf.mxu0
      %v1746 = vadd.f32 0.0, %v1745
      %v1747 = vpop.f32.mrf.mxu0
      %1748 = vmatprep.mubr.bf16.mxu0 0
      %1749 = vmatmul.mubr.bf16.gmra.mxu0 %v848
      %v1750 = vpop.f32.mrf.mxu0
      %v1751 = vadd.f32 0.0, %v1750
      %v1752 = vpop.f32.mrf.mxu0
      %v1753 = vpop.f32.mrf.mxu0
      %v1754 = vadd.f32 0.0, %v1753
      %v1755 = vpop.f32.mrf.mxu0
      %1756 = vmatprep.mubr.bf16.mxu0 0
      %1757 = vmatmul.mubr.bf16.gmra.mxu0 %v850
      %v1758 = vpop.f32.mrf.mxu0
      %v1759 = vadd.f32 0.0, %v1758
      %v1760 = vpop.f32.mrf.mxu0
      %v1761 = vpop.f32.mrf.mxu0
      %v1762 = vadd.f32 0.0, %v1761
      %v1763 = vpop.f32.mrf.mxu0
      %1764 = vmatprep.mubr.bf16.mxu0 0
      %1765 = vmatmul.mubr.bf16.gmra.mxu0 %v852
      %v1766 = vpop.f32.mrf.mxu0
      %v1767 = vadd.f32 0.0, %v1766
      %v1768 = vpop.f32.mrf.mxu0
      %v1769 = vpop.f32.mrf.mxu0
      %v1770 = vadd.f32 0.0, %v1769
      %v1771 = vpop.f32.mrf.mxu0
      %1772 = vmatprep.mubr.bf16.mxu0 0
      %1773 = vmatmul.mubr.bf16.gmra.mxu0 %v854
      %v1774 = vpop.f32.mrf.mxu0
      %v1775 = vadd.f32 0.0, %v1774
      %v1776 = vpop.f32.mrf.mxu0
      %v1777 = vpop.f32.mrf.mxu0
      %v1778 = vadd.f32 0.0, %v1777
      %v1779 = vpop.f32.mrf.mxu0
      %1780 = vmatprep.mubr.bf16.mxu0 0
      %1781 = vmatmul.mubr.bf16.gmra.mxu0 %v856
      %v1782 = vpop.f32.mrf.mxu0
      %v1783 = vadd.f32 0.0, %v1782
      %v1784 = vpop.f32.mrf.mxu0
      %v1785 = vpop.f32.mrf.mxu0
      %v1786 = vadd.f32 0.0, %v1785
      %v1787 = vpop.f32.mrf.mxu0
      %1788 = vmatprep.mubr.bf16.mxu0 0
      %1789 = vmatmul.mubr.bf16.gmra.mxu0 %v1607
      %v1790 = vpop.f32.mrf.mxu0
      %v1791 = vadd.f32 0.0, %v1790
      %v1792 = vpop.f32.mrf.mxu0
      %v1793 = vpop.f32.mrf.mxu0
      %v1794 = vadd.f32 0.0, %v1793
      %v1795 = vpop.f32.mrf.mxu0
      %1796 = vmatprep.mubr.bf16.mxu0 0
      %1797 = vmatmul.mubr.bf16.gmra.mxu0 %v1609
      %v1798 = vpop.f32.mrf.mxu0
      %v1799 = vadd.f32 0.0, %v1798
      %v1800 = vpop.f32.mrf.mxu0
      %v1801 = vpop.f32.mrf.mxu0
      %v1802 = vadd.f32 0.0, %v1801
      %v1803 = vpop.f32.mrf.mxu0
      %1804 = vdwg.mxu0
      %v1805 = vadd.f32 %v1559, %v1695
      %v1806 = vadd.f32 %v1560, %v1698
      %v1807 = vadd.f32 %v1561, %v1703
      %v1808 = vadd.f32 %v1562, %v1706
      %v1809 = vadd.f32 %v1563, %v1711
      %v1810 = vadd.f32 %v1564, %v1714
      %v1811 = vadd.f32 %v1565, %v1719
      %v1812 = vadd.f32 %v1566, %v1722
      %v1813 = vadd.f32 %v1567, %v1727
      %v1814 = vadd.f32 %v1568, %v1730
      %v1815 = vadd.f32 %v1569, %v1735
      %v1816 = vadd.f32 %v1570, %v1738
      %v1817 = vadd.f32 %v1571, %v1743
      %v1818 = vadd.f32 %v1572, %v1746
      %v1819 = vadd.f32 %v1573, %v1751
      %v1820 = vadd.f32 %v1574, %v1754
      %v1821 = vadd.f32 %v1575, %v1759
      %v1822 = vadd.f32 %v1576, %v1762
      %v1823 = vadd.f32 %v1577, %v1767
      %v1824 = vadd.f32 %v1578, %v1770
      %v1825 = vadd.f32 %v1579, %v1775
      %v1826 = vadd.f32 %v1580, %v1778
      %v1827 = vadd.f32 %v1581, %v1783
      %v1828 = vadd.f32 %v1582, %v1786
      %v1829 = vadd.f32 %v1583, %v1791
      %v1830 = vadd.f32 %v1584, %v1794
      %v1831 = vadd.f32 %v1585, %v1799
      %v1832 = vadd.f32 %v1586, %v1802
      %v1833 = vpack.c.bf16 %v230, %v229
      %s1834 = scalar_lea.vmem %s1, 384
      %v1835 = vld [vmem:[%s1834] sm:$0xf]
      %v1836 = vld [vmem:[%s1834 + $0x4] sm:$0xf]
      %v1837 = vld [vmem:[%s1834 + $0x8] sm:$0xf]
      %v1838 = vld [vmem:[%s1834 + $0xc] sm:$0xf]
      %v1839 = vld [vmem:[%s1834 + $0x10] sm:$0xf]
      %v1840 = vld [vmem:[%s1834 + $0x14] sm:$0xf]
      %v1841 = vld [vmem:[%s1834 + $0x18] sm:$0xf]
      %v1842 = vld [vmem:[%s1834 + $0x1c] sm:$0xf]
      %v1843 = vld [vmem:[%s1834 + $0x20] sm:$0xf]
      %v1844 = vld [vmem:[%s1834 + $0x24] sm:$0xf]
      %v1845 = vld [vmem:[%s1834 + $0x28] sm:$0xf]
      %v1846 = vld [vmem:[%s1834 + $0x2c] sm:$0xf]
      %v1847 = vld [vmem:[%s1834 + $0x30] sm:$0xf]
      %v1848 = vld [vmem:[%s1834 + $0x34] sm:$0xf]
      %v1849 = vld [vmem:[%s1834 + $0x38] sm:$0xf]
      %v1850 = vld [vmem:[%s1834 + $0x3c] sm:$0xf]
      %v1867 = vunpack.c.l.b16 %v1835
      %v1868 = vunpack.c.l.b16 %v1836
      %v1869 = vunpack.c.l.b16 %v1837
      %v1870 = vunpack.c.l.b16 %v1838
      %v1871 = vunpack.c.l.b16 %v1839
      %v1872 = vunpack.c.l.b16 %v1840
      %v1873 = vunpack.c.l.b16 %v1841
      %v1874 = vunpack.c.l.b16 %v1842
      %v1875 = vunpack.c.l.b16 %v1843
      %v1876 = vunpack.c.l.b16 %v1844
      %v1877 = vunpack.c.l.b16 %v1845
      %v1878 = vunpack.c.l.b16 %v1846
      %v1879 = vunpack.c.l.b16 %v1847
      %v1880 = vunpack.c.l.b16 %v1848
      %v1881 = vunpack.c.l.b16 %v1849
      %v1882 = vunpack.c.l.b16 %v1850
      %v1883 = vpack.c.b16 %v1868, %v1867
      %v1884 = vpack.c.b16 %v1870, %v1869
      %v1885 = vpack.c.b16 %v1872, %v1871
      %v1886 = vpack.c.b16 %v1874, %v1873
      %v1887 = vpack.c.b16 %v1876, %v1875
      %v1888 = vpack.c.b16 %v1878, %v1877
      %v1889 = vpack.c.b16 %v1880, %v1879
      %v1890 = vpack.c.b16 %v1882, %v1881
      %1899 = vmatprep.subr.bf16.mxu0 0
      %1900 = vmatpush1.bf16.msra.mxu0 %v1890
      %1901 = vmatprep.subr.bf16.mxu0 0
      %1902 = vmatpush1.bf16.msra.mxu0 %v1889
      %1903 = vmatprep.subr.bf16.mxu0 0
      %1904 = vmatpush1.bf16.msra.mxu0 %v1888
      %1905 = vmatprep.subr.bf16.mxu0 0
      %1906 = vmatpush1.bf16.msra.mxu0 %v1887
      %1907 = vmatprep.subr.bf16.mxu0 0
      %1908 = vmatpush1.bf16.msra.mxu0 %v1886
      %1909 = vmatprep.subr.bf16.mxu0 0
      %1910 = vmatpush1.bf16.msra.mxu0 %v1885
      %1911 = vmatprep.subr.bf16.mxu0 0
      %1912 = vmatpush1.bf16.msra.mxu0 %v1884
      %1913 = vmatprep.subr.bf16.mxu0 0
      %1914 = vmatpush1.bf16.msra.mxu0 %v1883
      %1915 = vmatprep.subr.bf16.mxu0 0
      %1916 = vmatpush2.bf16.msra.mxu0 0
      %1917 = vmatprep.subr.bf16.mxu0 0
      %1918 = vmatpush2.bf16.msra.mxu0 0
      %1919 = vmatprep.subr.bf16.mxu0 0
      %1920 = vmatpush2.bf16.msra.mxu0 0
      %1921 = vmatprep.subr.bf16.mxu0 0
      %1922 = vmatpush2.bf16.msra.mxu0 0
      %1923 = vmatprep.subr.bf16.mxu0 0
      %1924 = vmatpush2.bf16.msra.mxu0 0
      %1925 = vmatprep.subr.bf16.mxu0 0
      %1926 = vmatpush2.bf16.msra.mxu0 0
      %1927 = vmatprep.subr.bf16.mxu0 0
      %1928 = vmatpush2.bf16.msra.mxu0 0
      %1929 = vmatprep.subr.bf16.mxu0 0
      %1930 = vmatpush2.bf16.msra.mxu0 0
      %1931 = vmatprep.mubr.bf16.mxu0 0
      %1932 = vmatmul.mubr.bf16.gmra.mxu0 %v234
      %v1933 = vpop.f32.mrf.mxu0
      %v1934 = vadd.f32 0.0, %v1933
      %v1935 = vpop.f32.mrf.mxu0
      %v1936 = vpop.f32.mrf.mxu0
      %v1937 = vadd.f32 0.0, %v1936
      %v1938 = vpop.f32.mrf.mxu0
      %1939 = vmatprep.mubr.bf16.mxu0 0
      %1940 = vmatmul.mubr.bf16.gmra.mxu0 %v235
      %v1941 = vpop.f32.mrf.mxu0
      %v1942 = vadd.f32 0.0, %v1941
      %v1943 = vpop.f32.mrf.mxu0
      %v1944 = vpop.f32.mrf.mxu0
      %v1945 = vadd.f32 0.0, %v1944
      %v1946 = vpop.f32.mrf.mxu0
      %1947 = vmatprep.mubr.bf16.mxu0 0
      %1948 = vmatmul.mubr.bf16.gmra.mxu0 %v236
      %v1949 = vpop.f32.mrf.mxu0
      %v1950 = vadd.f32 0.0, %v1949
      %v1951 = vpop.f32.mrf.mxu0
      %v1952 = vpop.f32.mrf.mxu0
      %v1953 = vadd.f32 0.0, %v1952
      %v1954 = vpop.f32.mrf.mxu0
      %1955 = vmatprep.mubr.bf16.mxu0 0
      %1956 = vmatmul.mubr.bf16.gmra.mxu0 %v237
      %v1957 = vpop.f32.mrf.mxu0
      %v1958 = vadd.f32 0.0, %v1957
      %v1959 = vpop.f32.mrf.mxu0
      %v1960 = vpop.f32.mrf.mxu0
      %v1961 = vadd.f32 0.0, %v1960
      %v1962 = vpop.f32.mrf.mxu0
      %1963 = vmatprep.mubr.bf16.mxu0 0
      %1964 = vmatmul.mubr.bf16.gmra.mxu0 %v238
      %v1965 = vpop.f32.mrf.mxu0
      %v1966 = vadd.f32 0.0, %v1965
      %v1967 = vpop.f32.mrf.mxu0
      %v1968 = vpop.f32.mrf.mxu0
      %v1969 = vadd.f32 0.0, %v1968
      %v1970 = vpop.f32.mrf.mxu0
      %1971 = vmatprep.mubr.bf16.mxu0 0
      %1972 = vmatmul.mubr.bf16.gmra.mxu0 %v239
      %v1973 = vpop.f32.mrf.mxu0
      %v1974 = vadd.f32 0.0, %v1973
      %v1975 = vpop.f32.mrf.mxu0
      %v1976 = vpop.f32.mrf.mxu0
      %v1977 = vadd.f32 0.0, %v1976
      %v1978 = vpop.f32.mrf.mxu0
      %1979 = vmatprep.mubr.bf16.mxu0 0
      %1980 = vmatmul.mubr.bf16.gmra.mxu0 %v240
      %v1981 = vpop.f32.mrf.mxu0
      %v1982 = vadd.f32 0.0, %v1981
      %v1983 = vpop.f32.mrf.mxu0
      %v1984 = vpop.f32.mrf.mxu0
      %v1985 = vadd.f32 0.0, %v1984
      %v1986 = vpop.f32.mrf.mxu0
      %1987 = vmatprep.mubr.bf16.mxu0 0
      %1988 = vmatmul.mubr.bf16.gmra.mxu0 %v241
      %v1989 = vpop.f32.mrf.mxu0
      %v1990 = vadd.f32 0.0, %v1989
      %v1991 = vpop.f32.mrf.mxu0
      %v1992 = vpop.f32.mrf.mxu0
      %v1993 = vadd.f32 0.0, %v1992
      %v1994 = vpop.f32.mrf.mxu0
      %1995 = vmatprep.mubr.bf16.mxu0 0
      %1996 = vmatmul.mubr.bf16.gmra.mxu0 %v242
      %v1997 = vpop.f32.mrf.mxu0
      %v1998 = vadd.f32 0.0, %v1997
      %v1999 = vpop.f32.mrf.mxu0
      %v2000 = vpop.f32.mrf.mxu0
      %v2001 = vadd.f32 0.0, %v2000
      %v2002 = vpop.f32.mrf.mxu0
      %2003 = vmatprep.mubr.bf16.mxu0 0
      %2004 = vmatmul.mubr.bf16.gmra.mxu0 %v243
      %v2005 = vpop.f32.mrf.mxu0
      %v2006 = vadd.f32 0.0, %v2005
      %v2007 = vpop.f32.mrf.mxu0
      %v2008 = vpop.f32.mrf.mxu0
      %v2009 = vadd.f32 0.0, %v2008
      %v2010 = vpop.f32.mrf.mxu0
      %2011 = vmatprep.mubr.bf16.mxu0 0
      %2012 = vmatmul.mubr.bf16.gmra.mxu0 %v244
      %v2013 = vpop.f32.mrf.mxu0
      %v2014 = vadd.f32 0.0, %v2013
      %v2015 = vpop.f32.mrf.mxu0
      %v2016 = vpop.f32.mrf.mxu0
      %v2017 = vadd.f32 0.0, %v2016
      %v2018 = vpop.f32.mrf.mxu0
      %2019 = vmatprep.mubr.bf16.mxu0 0
      %2020 = vmatmul.mubr.bf16.gmra.mxu0 %v245
      %v2021 = vpop.f32.mrf.mxu0
      %v2022 = vadd.f32 0.0, %v2021
      %v2023 = vpop.f32.mrf.mxu0
      %v2024 = vpop.f32.mrf.mxu0
      %v2025 = vadd.f32 0.0, %v2024
      %v2026 = vpop.f32.mrf.mxu0
      %2027 = vmatprep.mubr.bf16.mxu0 0
      %2028 = vmatmul.mubr.bf16.gmra.mxu0 %v1094
      %v2029 = vpop.f32.mrf.mxu0
      %v2030 = vadd.f32 0.0, %v2029
      %v2031 = vpop.f32.mrf.mxu0
      %v2032 = vpop.f32.mrf.mxu0
      %v2033 = vadd.f32 0.0, %v2032
      %v2034 = vpop.f32.mrf.mxu0
      %2035 = vmatprep.mubr.bf16.mxu0 0
      %2036 = vmatmul.mubr.bf16.gmra.mxu0 %v1833
      %v2037 = vpop.f32.mrf.mxu0
      %v2038 = vadd.f32 0.0, %v2037
      %v2039 = vpop.f32.mrf.mxu0
      %v2040 = vpop.f32.mrf.mxu0
      %v2041 = vadd.f32 0.0, %v2040
      %v2042 = vpop.f32.mrf.mxu0
      %2043 = vdwg.mxu0
      %v2044 = vadd.f32 %v1805, %v1934
      %v2045 = vadd.f32 %v1806, %v1937
      %v2046 = vadd.f32 %v1807, %v1942
      %v2047 = vadd.f32 %v1808, %v1945
      %v2048 = vadd.f32 %v1809, %v1950
      %v2049 = vadd.f32 %v1810, %v1953
      %v2050 = vadd.f32 %v1811, %v1958
      %v2051 = vadd.f32 %v1812, %v1961
      %v2052 = vadd.f32 %v1813, %v1966
      %v2053 = vadd.f32 %v1814, %v1969
      %v2054 = vadd.f32 %v1815, %v1974
      %v2055 = vadd.f32 %v1816, %v1977
      %v2056 = vadd.f32 %v1817, %v1982
      %v2057 = vadd.f32 %v1818, %v1985
      %v2058 = vadd.f32 %v1819, %v1990
      %v2059 = vadd.f32 %v1820, %v1993
      %v2060 = vadd.f32 %v1821, %v1998
      %v2061 = vadd.f32 %v1822, %v2001
      %v2062 = vadd.f32 %v1823, %v2006
      %v2063 = vadd.f32 %v1824, %v2009
      %v2064 = vadd.f32 %v1825, %v2014
      %v2065 = vadd.f32 %v1826, %v2017
      %v2066 = vadd.f32 %v1827, %v2022
      %v2067 = vadd.f32 %v1828, %v2025
      %v2068 = vadd.f32 %v1829, %v2030
      %v2069 = vadd.f32 %v1830, %v2033
      %v2070 = vadd.f32 %v1831, %v2038
      %v2071 = vadd.f32 %v1832, %v2041
      %v2072 = vpack.c.bf16 %v231, %v231
      %s2073 = scalar_lea.vmem %s1, 448
      %v2074 = vld [vmem:[%s2073] sm:$0xf]
      %v2075 = vld [vmem:[%s2073 + $0x4] sm:$0xf]
      %v2076 = vld [vmem:[%s2073 + $0x8] sm:$0xf]
      %v2077 = vld [vmem:[%s2073 + $0xc] sm:$0xf]
      %v2078 = vld [vmem:[%s2073 + $0x10] sm:$0xf]
      %v2079 = vld [vmem:[%s2073 + $0x14] sm:$0xf]
      %v2080 = vld [vmem:[%s2073 + $0x18] sm:$0xf]
      %v2081 = vld [vmem:[%s2073 + $0x1c] sm:$0xf]
      %v2082 = vld [vmem:[%s2073 + $0x20] sm:$0xf]
      %v2083 = vld [vmem:[%s2073 + $0x24] sm:$0xf]
      %v2084 = vld [vmem:[%s2073 + $0x28] sm:$0xf]
      %v2085 = vld [vmem:[%s2073 + $0x2c] sm:$0xf]
      %v2086 = vld [vmem:[%s2073 + $0x30] sm:$0xf]
      %v2087 = vld [vmem:[%s2073 + $0x34] sm:$0xf]
      %v2088 = vld [vmem:[%s2073 + $0x38] sm:$0xf]
      %v2089 = vld [vmem:[%s2073 + $0x3c] sm:$0xf]
      %v2091 = vshll.u32 %v1833, 16
      %v2093 = vrot.slane %v2091, 1
      %v2094 = vsel %vm280, %v1358, %v2093
      %v2095 = vshrl.u32 %v1833, 16
      %v2097 = vor.u32 %v2095, %v2093
      %v2099 = vshll.u32 %v2072, 16
      %v2101 = vrot.slane %v2099, 1
      %v2102 = vsel %vm280, %v2097, %v2101
      %v2121 = vunpack.c.l.b16 %v2074
      %v2122 = vunpack.c.l.b16 %v2075
      %v2123 = vunpack.c.l.b16 %v2076
      %v2124 = vunpack.c.l.b16 %v2077
      %v2125 = vunpack.c.l.b16 %v2078
      %v2126 = vunpack.c.l.b16 %v2079
      %v2127 = vunpack.c.l.b16 %v2080
      %v2128 = vunpack.c.l.b16 %v2081
      %v2129 = vunpack.c.l.b16 %v2082
      %v2130 = vunpack.c.l.b16 %v2083
      %v2131 = vunpack.c.l.b16 %v2084
      %v2132 = vunpack.c.l.b16 %v2085
      %v2133 = vunpack.c.l.b16 %v2086
      %v2134 = vunpack.c.l.b16 %v2087
      %v2135 = vunpack.c.l.b16 %v2088
      %v2136 = vunpack.c.l.b16 %v2089
      %v2137 = vpack.c.b16 %v2122, %v2121
      %v2138 = vpack.c.b16 %v2124, %v2123
      %v2139 = vpack.c.b16 %v2126, %v2125
      %v2140 = vpack.c.b16 %v2128, %v2127
      %v2141 = vpack.c.b16 %v2130, %v2129
      %v2142 = vpack.c.b16 %v2132, %v2131
      %v2143 = vpack.c.b16 %v2134, %v2133
      %v2144 = vpack.c.b16 %v2136, %v2135
      %2153 = vmatprep.subr.bf16.mxu0 0
      %2154 = vmatpush1.bf16.msra.mxu0 %v2144
      %2155 = vmatprep.subr.bf16.mxu0 0
      %2156 = vmatpush1.bf16.msra.mxu0 %v2143
      %2157 = vmatprep.subr.bf16.mxu0 0
      %2158 = vmatpush1.bf16.msra.mxu0 %v2142
      %2159 = vmatprep.subr.bf16.mxu0 0
      %2160 = vmatpush1.bf16.msra.mxu0 %v2141
      %2161 = vmatprep.subr.bf16.mxu0 0
      %2162 = vmatpush1.bf16.msra.mxu0 %v2140
      %2163 = vmatprep.subr.bf16.mxu0 0
      %2164 = vmatpush1.bf16.msra.mxu0 %v2139
      %2165 = vmatprep.subr.bf16.mxu0 0
      %2166 = vmatpush1.bf16.msra.mxu0 %v2138
      %2167 = vmatprep.subr.bf16.mxu0 0
      %2168 = vmatpush1.bf16.msra.mxu0 %v2137
      %2169 = vmatprep.subr.bf16.mxu0 0
      %2170 = vmatpush2.bf16.msra.mxu0 0
      %2171 = vmatprep.subr.bf16.mxu0 0
      %2172 = vmatpush2.bf16.msra.mxu0 0
      %2173 = vmatprep.subr.bf16.mxu0 0
      %2174 = vmatpush2.bf16.msra.mxu0 0
      %2175 = vmatprep.subr.bf16.mxu0 0
      %2176 = vmatpush2.bf16.msra.mxu0 0
      %2177 = vmatprep.subr.bf16.mxu0 0
      %2178 = vmatpush2.bf16.msra.mxu0 0
      %2179 = vmatprep.subr.bf16.mxu0 0
      %2180 = vmatpush2.bf16.msra.mxu0 0
      %2181 = vmatprep.subr.bf16.mxu0 0
      %2182 = vmatpush2.bf16.msra.mxu0 0
      %2183 = vmatprep.subr.bf16.mxu0 0
      %2184 = vmatpush2.bf16.msra.mxu0 0
      %2185 = vmatprep.mubr.bf16.mxu0 0
      %2186 = vmatmul.mubr.bf16.gmra.mxu0 %v308
      %v2187 = vpop.f32.mrf.mxu0
      %v2188 = vadd.f32 0.0, %v2187
      %v2189 = vpop.f32.mrf.mxu0
      %v2190 = vpop.f32.mrf.mxu0
      %v2191 = vadd.f32 0.0, %v2190
      %v2192 = vpop.f32.mrf.mxu0
      %2193 = vmatprep.mubr.bf16.mxu0 0
      %2194 = vmatmul.mubr.bf16.gmra.mxu0 %v316
      %v2195 = vpop.f32.mrf.mxu0
      %v2196 = vadd.f32 0.0, %v2195
      %v2197 = vpop.f32.mrf.mxu0
      %v2198 = vpop.f32.mrf.mxu0
      %v2199 = vadd.f32 0.0, %v2198
      %v2200 = vpop.f32.mrf.mxu0
      %2201 = vmatprep.mubr.bf16.mxu0 0
      %2202 = vmatmul.mubr.bf16.gmra.mxu0 %v324
      %v2203 = vpop.f32.mrf.mxu0
      %v2204 = vadd.f32 0.0, %v2203
      %v2205 = vpop.f32.mrf.mxu0
      %v2206 = vpop.f32.mrf.mxu0
      %v2207 = vadd.f32 0.0, %v2206
      %v2208 = vpop.f32.mrf.mxu0
      %2209 = vmatprep.mubr.bf16.mxu0 0
      %2210 = vmatmul.mubr.bf16.gmra.mxu0 %v332
      %v2211 = vpop.f32.mrf.mxu0
      %v2212 = vadd.f32 0.0, %v2211
      %v2213 = vpop.f32.mrf.mxu0
      %v2214 = vpop.f32.mrf.mxu0
      %v2215 = vadd.f32 0.0, %v2214
      %v2216 = vpop.f32.mrf.mxu0
      %2217 = vmatprep.mubr.bf16.mxu0 0
      %2218 = vmatmul.mubr.bf16.gmra.mxu0 %v340
      %v2219 = vpop.f32.mrf.mxu0
      %v2220 = vadd.f32 0.0, %v2219
      %v2221 = vpop.f32.mrf.mxu0
      %v2222 = vpop.f32.mrf.mxu0
      %v2223 = vadd.f32 0.0, %v2222
      %v2224 = vpop.f32.mrf.mxu0
      %2225 = vmatprep.mubr.bf16.mxu0 0
      %2226 = vmatmul.mubr.bf16.gmra.mxu0 %v348
      %v2227 = vpop.f32.mrf.mxu0
      %v2228 = vadd.f32 0.0, %v2227
      %v2229 = vpop.f32.mrf.mxu0
      %v2230 = vpop.f32.mrf.mxu0
      %v2231 = vadd.f32 0.0, %v2230
      %v2232 = vpop.f32.mrf.mxu0
      %2233 = vmatprep.mubr.bf16.mxu0 0
      %2234 = vmatmul.mubr.bf16.gmra.mxu0 %v356
      %v2235 = vpop.f32.mrf.mxu0
      %v2236 = vadd.f32 0.0, %v2235
      %v2237 = vpop.f32.mrf.mxu0
      %v2238 = vpop.f32.mrf.mxu0
      %v2239 = vadd.f32 0.0, %v2238
      %v2240 = vpop.f32.mrf.mxu0
      %2241 = vmatprep.mubr.bf16.mxu0 0
      %2242 = vmatmul.mubr.bf16.gmra.mxu0 %v364
      %v2243 = vpop.f32.mrf.mxu0
      %v2244 = vadd.f32 0.0, %v2243
      %v2245 = vpop.f32.mrf.mxu0
      %v2246 = vpop.f32.mrf.mxu0
      %v2247 = vadd.f32 0.0, %v2246
      %v2248 = vpop.f32.mrf.mxu0
      %2249 = vmatprep.mubr.bf16.mxu0 0
      %2250 = vmatmul.mubr.bf16.gmra.mxu0 %v372
      %v2251 = vpop.f32.mrf.mxu0
      %v2252 = vadd.f32 0.0, %v2251
      %v2253 = vpop.f32.mrf.mxu0
      %v2254 = vpop.f32.mrf.mxu0
      %v2255 = vadd.f32 0.0, %v2254
      %v2256 = vpop.f32.mrf.mxu0
      %2257 = vmatprep.mubr.bf16.mxu0 0
      %2258 = vmatmul.mubr.bf16.gmra.mxu0 %v380
      %v2259 = vpop.f32.mrf.mxu0
      %v2260 = vadd.f32 0.0, %v2259
      %v2261 = vpop.f32.mrf.mxu0
      %v2262 = vpop.f32.mrf.mxu0
      %v2263 = vadd.f32 0.0, %v2262
      %v2264 = vpop.f32.mrf.mxu0
      %2265 = vmatprep.mubr.bf16.mxu0 0
      %2266 = vmatmul.mubr.bf16.gmra.mxu0 %v388
      %v2267 = vpop.f32.mrf.mxu0
      %v2268 = vadd.f32 0.0, %v2267
      %v2269 = vpop.f32.mrf.mxu0
      %v2270 = vpop.f32.mrf.mxu0
      %v2271 = vadd.f32 0.0, %v2270
      %v2272 = vpop.f32.mrf.mxu0
      %2273 = vmatprep.mubr.bf16.mxu0 0
      %2274 = vmatmul.mubr.bf16.gmra.mxu0 %v1355
      %v2275 = vpop.f32.mrf.mxu0
      %v2276 = vadd.f32 0.0, %v2275
      %v2277 = vpop.f32.mrf.mxu0
      %v2278 = vpop.f32.mrf.mxu0
      %v2279 = vadd.f32 0.0, %v2278
      %v2280 = vpop.f32.mrf.mxu0
      %2281 = vmatprep.mubr.bf16.mxu0 0
      %2282 = vmatmul.mubr.bf16.gmra.mxu0 %v2094
      %v2283 = vpop.f32.mrf.mxu0
      %v2284 = vadd.f32 0.0, %v2283
      %v2285 = vpop.f32.mrf.mxu0
      %v2286 = vpop.f32.mrf.mxu0
      %v2287 = vadd.f32 0.0, %v2286
      %v2288 = vpop.f32.mrf.mxu0
      %2289 = vmatprep.mubr.bf16.mxu0 0
      %2290 = vmatmul.mubr.bf16.gmra.mxu0 %v2102
      %v2291 = vpop.f32.mrf.mxu0
      %v2292 = vadd.f32 0.0, %v2291
      %v2293 = vpop.f32.mrf.mxu0
      %v2294 = vpop.f32.mrf.mxu0
      %v2295 = vadd.f32 0.0, %v2294
      %v2296 = vpop.f32.mrf.mxu0
      %2297 = vdwg.mxu0
      %v2298 = vadd.f32 %v2044, %v2188
      %v2299 = vadd.f32 %v2045, %v2191
      %v2300 = vadd.f32 %v2046, %v2196
      %v2301 = vadd.f32 %v2047, %v2199
      %v2302 = vadd.f32 %v2048, %v2204
      %v2303 = vadd.f32 %v2049, %v2207
      %v2304 = vadd.f32 %v2050, %v2212
      %v2305 = vadd.f32 %v2051, %v2215
      %v2306 = vadd.f32 %v2052, %v2220
      %v2307 = vadd.f32 %v2053, %v2223
      %v2308 = vadd.f32 %v2054, %v2228
      %v2309 = vadd.f32 %v2055, %v2231
      %v2310 = vadd.f32 %v2056, %v2236
      %v2311 = vadd.f32 %v2057, %v2239
      %v2312 = vadd.f32 %v2058, %v2244
      %v2313 = vadd.f32 %v2059, %v2247
      %v2314 = vadd.f32 %v2060, %v2252
      %v2315 = vadd.f32 %v2061, %v2255
      %v2316 = vadd.f32 %v2062, %v2260
      %v2317 = vadd.f32 %v2063, %v2263
      %v2318 = vadd.f32 %v2064, %v2268
      %v2319 = vadd.f32 %v2065, %v2271
      %v2320 = vadd.f32 %v2066, %v2276
      %v2321 = vadd.f32 %v2067, %v2279
      %v2322 = vadd.f32 %v2068, %v2284
      %v2323 = vadd.f32 %v2069, %v2287
      %v2324 = vadd.f32 %v2070, %v2292
      %v2325 = vadd.f32 %v2071, %v2295
      %s2326 = scalar_lea.vmem %s1, 512
      %v2327 = vld [vmem:[%s2326] sm:$0xf]
      %v2328 = vld [vmem:[%s2326 + $0x4] sm:$0xf]
      %v2329 = vld [vmem:[%s2326 + $0x8] sm:$0xf]
      %v2330 = vld [vmem:[%s2326 + $0xc] sm:$0xf]
      %v2331 = vld [vmem:[%s2326 + $0x10] sm:$0xf]
      %v2332 = vld [vmem:[%s2326 + $0x14] sm:$0xf]
      %v2333 = vld [vmem:[%s2326 + $0x18] sm:$0xf]
      %v2334 = vld [vmem:[%s2326 + $0x1c] sm:$0xf]
      %v2335 = vld [vmem:[%s2326 + $0x20] sm:$0xf]
      %v2336 = vld [vmem:[%s2326 + $0x24] sm:$0xf]
      %v2337 = vld [vmem:[%s2326 + $0x28] sm:$0xf]
      %v2338 = vld [vmem:[%s2326 + $0x2c] sm:$0xf]
      %v2339 = vld [vmem:[%s2326 + $0x30] sm:$0xf]
      %v2340 = vld [vmem:[%s2326 + $0x34] sm:$0xf]
      %v2341 = vld [vmem:[%s2326 + $0x38] sm:$0xf]
      %v2342 = vld [vmem:[%s2326 + $0x3c] sm:$0xf]
      %v2345 = vrot.slane %v1833, 1
      %v2346 = vsel %vm829, %v1606, %v2345
      %v2347 = vrot.slane %v2072, 1
      %v2348 = vsel %vm829, %v2345, %v2347
      %v2367 = vunpack.c.l.b16 %v2327
      %v2368 = vunpack.c.l.b16 %v2328
      %v2369 = vunpack.c.l.b16 %v2329
      %v2370 = vunpack.c.l.b16 %v2330
      %v2371 = vunpack.c.l.b16 %v2331
      %v2372 = vunpack.c.l.b16 %v2332
      %v2373 = vunpack.c.l.b16 %v2333
      %v2374 = vunpack.c.l.b16 %v2334
      %v2375 = vunpack.c.l.b16 %v2335
      %v2376 = vunpack.c.l.b16 %v2336
      %v2377 = vunpack.c.l.b16 %v2337
      %v2378 = vunpack.c.l.b16 %v2338
      %v2379 = vunpack.c.l.b16 %v2339
      %v2380 = vunpack.c.l.b16 %v2340
      %v2381 = vunpack.c.l.b16 %v2341
      %v2382 = vunpack.c.l.b16 %v2342
      %v2383 = vpack.c.b16 %v2368, %v2367
      %v2384 = vpack.c.b16 %v2370, %v2369
      %v2385 = vpack.c.b16 %v2372, %v2371
      %v2386 = vpack.c.b16 %v2374, %v2373
      %v2387 = vpack.c.b16 %v2376, %v2375
      %v2388 = vpack.c.b16 %v2378, %v2377
      %v2389 = vpack.c.b16 %v2380, %v2379
      %v2390 = vpack.c.b16 %v2382, %v2381
      %2399 = vmatprep.subr.bf16.mxu0 0
      %2400 = vmatpush1.bf16.msra.mxu0 %v2390
      %2401 = vmatprep.subr.bf16.mxu0 0
      %2402 = vmatpush1.bf16.msra.mxu0 %v2389
      %2403 = vmatprep.subr.bf16.mxu0 0
      %2404 = vmatpush1.bf16.msra.mxu0 %v2388
      %2405 = vmatprep.subr.bf16.mxu0 0
      %2406 = vmatpush1.bf16.msra.mxu0 %v2387
      %2407 = vmatprep.subr.bf16.mxu0 0
      %2408 = vmatpush1.bf16.msra.mxu0 %v2386
      %2409 = vmatprep.subr.bf16.mxu0 0
      %2410 = vmatpush1.bf16.msra.mxu0 %v2385
      %2411 = vmatprep.subr.bf16.mxu0 0
      %2412 = vmatpush1.bf16.msra.mxu0 %v2384
      %2413 = vmatprep.subr.bf16.mxu0 0
      %2414 = vmatpush1.bf16.msra.mxu0 %v2383
      %2415 = vmatprep.subr.bf16.mxu0 0
      %2416 = vmatpush2.bf16.msra.mxu0 0
      %2417 = vmatprep.subr.bf16.mxu0 0
      %2418 = vmatpush2.bf16.msra.mxu0 0
      %2419 = vmatprep.subr.bf16.mxu0 0
      %2420 = vmatpush2.bf16.msra.mxu0 0
      %2421 = vmatprep.subr.bf16.mxu0 0
      %2422 = vmatpush2.bf16.msra.mxu0 0
      %2423 = vmatprep.subr.bf16.mxu0 0
      %2424 = vmatpush2.bf16.msra.mxu0 0
      %2425 = vmatprep.subr.bf16.mxu0 0
      %2426 = vmatpush2.bf16.msra.mxu0 0
      %2427 = vmatprep.subr.bf16.mxu0 0
      %2428 = vmatpush2.bf16.msra.mxu0 0
      %2429 = vmatprep.subr.bf16.mxu0 0
      %2430 = vmatpush2.bf16.msra.mxu0 0
      %2431 = vmatprep.mubr.bf16.mxu0 0
      %2432 = vmatmul.mubr.bf16.gmra.mxu0 %v836
      %v2433 = vpop.f32.mrf.mxu0
      %v2434 = vadd.f32 0.0, %v2433
      %v2435 = vpop.f32.mrf.mxu0
      %v2436 = vpop.f32.mrf.mxu0
      %v2437 = vadd.f32 0.0, %v2436
      %v2438 = vpop.f32.mrf.mxu0
      %2439 = vmatprep.mubr.bf16.mxu0 0
      %2440 = vmatmul.mubr.bf16.gmra.mxu0 %v838
      %v2441 = vpop.f32.mrf.mxu0
      %v2442 = vadd.f32 0.0, %v2441
      %v2443 = vpop.f32.mrf.mxu0
      %v2444 = vpop.f32.mrf.mxu0
      %v2445 = vadd.f32 0.0, %v2444
      %v2446 = vpop.f32.mrf.mxu0
      %2447 = vmatprep.mubr.bf16.mxu0 0
      %2448 = vmatmul.mubr.bf16.gmra.mxu0 %v840
      %v2449 = vpop.f32.mrf.mxu0
      %v2450 = vadd.f32 0.0, %v2449
      %v2451 = vpop.f32.mrf.mxu0
      %v2452 = vpop.f32.mrf.mxu0
      %v2453 = vadd.f32 0.0, %v2452
      %v2454 = vpop.f32.mrf.mxu0
      %2455 = vmatprep.mubr.bf16.mxu0 0
      %2456 = vmatmul.mubr.bf16.gmra.mxu0 %v842
      %v2457 = vpop.f32.mrf.mxu0
      %v2458 = vadd.f32 0.0, %v2457
      %v2459 = vpop.f32.mrf.mxu0
      %v2460 = vpop.f32.mrf.mxu0
      %v2461 = vadd.f32 0.0, %v2460
      %v2462 = vpop.f32.mrf.mxu0
      %2463 = vmatprep.mubr.bf16.mxu0 0
      %2464 = vmatmul.mubr.bf16.gmra.mxu0 %v844
      %v2465 = vpop.f32.mrf.mxu0
      %v2466 = vadd.f32 0.0, %v2465
      %v2467 = vpop.f32.mrf.mxu0
      %v2468 = vpop.f32.mrf.mxu0
      %v2469 = vadd.f32 0.0, %v2468
      %v2470 = vpop.f32.mrf.mxu0
      %2471 = vmatprep.mubr.bf16.mxu0 0
      %2472 = vmatmul.mubr.bf16.gmra.mxu0 %v846
      %v2473 = vpop.f32.mrf.mxu0
      %v2474 = vadd.f32 0.0, %v2473
      %v2475 = vpop.f32.mrf.mxu0
      %v2476 = vpop.f32.mrf.mxu0
      %v2477 = vadd.f32 0.0, %v2476
      %v2478 = vpop.f32.mrf.mxu0
      %2479 = vmatprep.mubr.bf16.mxu0 0
      %2480 = vmatmul.mubr.bf16.gmra.mxu0 %v848
      %v2481 = vpop.f32.mrf.mxu0
      %v2482 = vadd.f32 0.0, %v2481
      %v2483 = vpop.f32.mrf.mxu0
      %v2484 = vpop.f32.mrf.mxu0
      %v2485 = vadd.f32 0.0, %v2484
      %v2486 = vpop.f32.mrf.mxu0
      %2487 = vmatprep.mubr.bf16.mxu0 0
      %2488 = vmatmul.mubr.bf16.gmra.mxu0 %v850
      %v2489 = vpop.f32.mrf.mxu0
      %v2490 = vadd.f32 0.0, %v2489
      %v2491 = vpop.f32.mrf.mxu0
      %v2492 = vpop.f32.mrf.mxu0
      %v2493 = vadd.f32 0.0, %v2492
      %v2494 = vpop.f32.mrf.mxu0
      %2495 = vmatprep.mubr.bf16.mxu0 0
      %2496 = vmatmul.mubr.bf16.gmra.mxu0 %v852
      %v2497 = vpop.f32.mrf.mxu0
      %v2498 = vadd.f32 0.0, %v2497
      %v2499 = vpop.f32.mrf.mxu0
      %v2500 = vpop.f32.mrf.mxu0
      %v2501 = vadd.f32 0.0, %v2500
      %v2502 = vpop.f32.mrf.mxu0
      %2503 = vmatprep.mubr.bf16.mxu0 0
      %2504 = vmatmul.mubr.bf16.gmra.mxu0 %v854
      %v2505 = vpop.f32.mrf.mxu0
      %v2506 = vadd.f32 0.0, %v2505
      %v2507 = vpop.f32.mrf.mxu0
      %v2508 = vpop.f32.mrf.mxu0
      %v2509 = vadd.f32 0.0, %v2508
      %v2510 = vpop.f32.mrf.mxu0
      %2511 = vmatprep.mubr.bf16.mxu0 0
      %2512 = vmatmul.mubr.bf16.gmra.mxu0 %v856
      %v2513 = vpop.f32.mrf.mxu0
      %v2514 = vadd.f32 0.0, %v2513
      %v2515 = vpop.f32.mrf.mxu0
      %v2516 = vpop.f32.mrf.mxu0
      %v2517 = vadd.f32 0.0, %v2516
      %v2518 = vpop.f32.mrf.mxu0
      %2519 = vmatprep.mubr.bf16.mxu0 0
      %2520 = vmatmul.mubr.bf16.gmra.mxu0 %v1607
      %v2521 = vpop.f32.mrf.mxu0
      %v2522 = vadd.f32 0.0, %v2521
      %v2523 = vpop.f32.mrf.mxu0
      %v2524 = vpop.f32.mrf.mxu0
      %v2525 = vadd.f32 0.0, %v2524
      %v2526 = vpop.f32.mrf.mxu0
      %2527 = vmatprep.mubr.bf16.mxu0 0
      %2528 = vmatmul.mubr.bf16.gmra.mxu0 %v2346
      %v2529 = vpop.f32.mrf.mxu0
      %v2530 = vadd.f32 0.0, %v2529
      %v2531 = vpop.f32.mrf.mxu0
      %v2532 = vpop.f32.mrf.mxu0
      %v2533 = vadd.f32 0.0, %v2532
      %v2534 = vpop.f32.mrf.mxu0
      %2535 = vmatprep.mubr.bf16.mxu0 0
      %2536 = vmatmul.mubr.bf16.gmra.mxu0 %v2348
      %v2537 = vpop.f32.mrf.mxu0
      %v2538 = vadd.f32 0.0, %v2537
      %v2539 = vpop.f32.mrf.mxu0
      %v2540 = vpop.f32.mrf.mxu0
      %v2541 = vadd.f32 0.0, %v2540
      %v2542 = vpop.f32.mrf.mxu0
      %2543 = vdwg.mxu0
      %v2544 = vadd.f32 %v2298, %v2434
      %v2545 = vadd.f32 %v2299, %v2437
      %v2546 = vadd.f32 %v2300, %v2442
      %v2547 = vadd.f32 %v2301, %v2445
      %v2548 = vadd.f32 %v2302, %v2450
      %v2549 = vadd.f32 %v2303, %v2453
      %v2550 = vadd.f32 %v2304, %v2458
      %v2551 = vadd.f32 %v2305, %v2461
      %v2552 = vadd.f32 %v2306, %v2466
      %v2553 = vadd.f32 %v2307, %v2469
      %v2554 = vadd.f32 %v2308, %v2474
      %v2555 = vadd.f32 %v2309, %v2477
      %v2556 = vadd.f32 %v2310, %v2482
      %v2557 = vadd.f32 %v2311, %v2485
      %v2558 = vadd.f32 %v2312, %v2490
      %v2559 = vadd.f32 %v2313, %v2493
      %v2560 = vadd.f32 %v2314, %v2498
      %v2561 = vadd.f32 %v2315, %v2501
      %v2562 = vadd.f32 %v2316, %v2506
      %v2563 = vadd.f32 %v2317, %v2509
      %v2564 = vadd.f32 %v2318, %v2514
      %v2565 = vadd.f32 %v2319, %v2517
      %v2566 = vadd.f32 %v2320, %v2522
      %v2567 = vadd.f32 %v2321, %v2525
      %v2568 = vadd.f32 %v2322, %v2530
      %v2569 = vadd.f32 %v2323, %v2533
      %v2570 = vadd.f32 %v2324, %v2538
      %v2571 = vadd.f32 %v2325, %v2541
      %v2572 = vld [vmem:[%s2] sm:$0x1]
      %v2574 = vlaneseq
      %v2575 = vshrl.u32 %v2574, 7
      %v2576 = vsub.s32 0, %v2575
      %v2577 = vrot.slane %v2572, %v2576
      %v2579 = vmul.f32 %v2544, %v2577
      %v2580 = vmul.f32 %v2545, %v2577
      %v2581 = vmul.f32 %v2546, %v2577
      %v2582 = vmul.f32 %v2547, %v2577
      %v2583 = vmul.f32 %v2548, %v2577
      %v2584 = vmul.f32 %v2549, %v2577
      %v2585 = vmul.f32 %v2550, %v2577
      %v2586 = vmul.f32 %v2551, %v2577
      %v2587 = vmul.f32 %v2552, %v2577
      %v2588 = vmul.f32 %v2553, %v2577
      %v2589 = vmul.f32 %v2554, %v2577
      %v2590 = vmul.f32 %v2555, %v2577
      %v2591 = vmul.f32 %v2556, %v2577
      %v2592 = vmul.f32 %v2557, %v2577
      %v2593 = vmul.f32 %v2558, %v2577
      %v2594 = vmul.f32 %v2559, %v2577
      %v2595 = vmul.f32 %v2560, %v2577
      %v2596 = vmul.f32 %v2561, %v2577
      %v2597 = vmul.f32 %v2562, %v2577
      %v2598 = vmul.f32 %v2563, %v2577
      %v2599 = vmul.f32 %v2564, %v2577
      %v2600 = vmul.f32 %v2565, %v2577
      %v2601 = vmul.f32 %v2566, %v2577
      %v2602 = vmul.f32 %v2567, %v2577
      %v2603 = vmul.f32 %v2568, %v2577
      %v2604 = vmul.f32 %v2569, %v2577
      %v2605 = vmul.f32 %v2570, %v2577
      %v2606 = vmul.f32 %v2571, %v2577
      %v2607 = vld [vmem:[%s3] sm:$0x1]
      %v2609 = vlaneseq
      %v2610 = vshrl.u32 %v2609, 7
      %v2611 = vsub.s32 0, %v2610
      %v2612 = vrot.slane %v2607, %v2611
      %v2614 = vadd.f32 %v2579, %v2612
      %v2615 = vadd.f32 %v2580, %v2612
      %v2616 = vadd.f32 %v2581, %v2612
      %v2617 = vadd.f32 %v2582, %v2612
      %v2618 = vadd.f32 %v2583, %v2612
      %v2619 = vadd.f32 %v2584, %v2612
      %v2620 = vadd.f32 %v2585, %v2612
      %v2621 = vadd.f32 %v2586, %v2612
      %v2622 = vadd.f32 %v2587, %v2612
      %v2623 = vadd.f32 %v2588, %v2612
      %v2624 = vadd.f32 %v2589, %v2612
      %v2625 = vadd.f32 %v2590, %v2612
      %v2626 = vadd.f32 %v2591, %v2612
      %v2627 = vadd.f32 %v2592, %v2612
      %v2628 = vadd.f32 %v2593, %v2612
      %v2629 = vadd.f32 %v2594, %v2612
      %v2630 = vadd.f32 %v2595, %v2612
      %v2631 = vadd.f32 %v2596, %v2612
      %v2632 = vadd.f32 %v2597, %v2612
      %v2633 = vadd.f32 %v2598, %v2612
      %v2634 = vadd.f32 %v2599, %v2612
      %v2635 = vadd.f32 %v2600, %v2612
      %v2636 = vadd.f32 %v2601, %v2612
      %v2637 = vadd.f32 %v2602, %v2612
      %v2638 = vadd.f32 %v2603, %v2612
      %v2639 = vadd.f32 %v2604, %v2612
      %v2640 = vadd.f32 %v2605, %v2612
      %v2641 = vadd.f32 %v2606, %v2612
      %2642 = vst [vmem:[%s197] sm:$0xff] %v2614
      %2643 = vst [vmem:[%s197 + $0x8] sm:$0xff] %v2615
      %2644 = vst [vmem:[%s197 + $0x10] sm:$0xff] %v2616
      %2645 = vst [vmem:[%s197 + $0x18] sm:$0xff] %v2617
      %2646 = vst [vmem:[%s197 + $0x20] sm:$0xff] %v2618
      %2647 = vst [vmem:[%s197 + $0x28] sm:$0xff] %v2619
      %2648 = vst [vmem:[%s197 + $0x30] sm:$0xff] %v2620
      %2649 = vst [vmem:[%s197 + $0x38] sm:$0xff] %v2621
      %2650 = vst [vmem:[%s197 + $0x40] sm:$0xff] %v2622
      %2651 = vst [vmem:[%s197 + $0x48] sm:$0xff] %v2623
      %2652 = vst [vmem:[%s197 + $0x50] sm:$0xff] %v2624
      %2653 = vst [vmem:[%s197 + $0x58] sm:$0xff] %v2625
      %2654 = vst [vmem:[%s197 + $0x60] sm:$0xff] %v2626
      %2655 = vst [vmem:[%s197 + $0x68] sm:$0xff] %v2627
      %2656 = vst [vmem:[%s197 + $0x70] sm:$0xff] %v2628
      %2657 = vst [vmem:[%s197 + $0x78] sm:$0xff] %v2629
      %2658 = vst [vmem:[%s197 + $0x80] sm:$0xff] %v2630
      %2659 = vst [vmem:[%s197 + $0x88] sm:$0xff] %v2631
      %2660 = vst [vmem:[%s197 + $0x90] sm:$0xff] %v2632
      %2661 = vst [vmem:[%s197 + $0x98] sm:$0xff] %v2633
      %2662 = vst [vmem:[%s197 + $0xa0] sm:$0xff] %v2634
      %2663 = vst [vmem:[%s197 + $0xa8] sm:$0xff] %v2635
      %2664 = vst [vmem:[%s197 + $0xb0] sm:$0xff] %v2636
      %2665 = vst [vmem:[%s197 + $0xb8] sm:$0xff] %v2637
      %2666 = vst [vmem:[%s197 + $0xc0] sm:$0xff] %v2638
      %2667 = vst [vmem:[%s197 + $0xc8] sm:$0xff] %v2639
      %2668 = vst [vmem:[%s197 + $0xd0] sm:$0xff] %v2640
      %2669 = vst [vmem:[%s197 + $0xd8] sm:$0xff] %v2641
      %p2670 = scmp.lt.s32.totalorder %s15, 1
      %s2671 = scalar_select %p2670, %s15, 1
      %s2672 = smul.addr %s2671, 28
      %s2673 = smul.addr %s2672, 8
      %s2674 = scalar_lea.vmem %s4, %s2673
      // Predicated region
      $region37: #{forward.4} parent=35 // pred_check
        %p2675 = pneg %p122
      $region38: #{forward.4} parent=35 // pred_check_branch
        %2677 = sbr.rel (%p2675) target = $region40
      $region39: #{forward.4} parent=35 // pred_region
        _
      $region40: #{forward.4} parent=35 // pred_fallthru
        _
    $region36: #{forward.4} parent=5 // pred_fallthru
      _
    %p2678 = scmp.le.s32.totalorder 2, %s10
    // Predicated region
    $region41: #{forward.4} parent=5 // pred_check
      %p2679 = pneg %p2678
    $region42: #{forward.4} parent=5 // pred_check_branch
      %2681 = sbr.rel (%p2679) target = $region44
    $region43: #{forward.4} parent=5 // pred_region
      %s2682 = ssub.s32 %s10, 2
      // Predicated region
      $region45: #{forward.4} parent=43 // pred_check
        %p2683 = pneg %p128
      $region46: #{forward.4} parent=43 // pred_check_branch
        %2685 = sbr.rel (%p2683) target = $region48
      $region47: #{forward.4} parent=43 // pred_region
        %p2686 = scmp.lt.s32.totalorder %s16, 1
        %s2687 = scalar_select %p2686, %s16, 1
        %s2688 = smul.addr %s2687, 28
        %s2689 = smul.addr %s2688, 8
        %s2690 = scalar_lea.vmem %s4, %s2689
      $region48: #{forward.4} parent=43 // pred_fallthru
        _
    $region44: #{forward.4} parent=5 // pred_fallthru
      _
  $region6: #{forward.4} parent=0 // loop_footer
    %s14 = sadd.s32 1, %s10
  $region7: #{forward.4} parent=0 // loop_footer_branch
    %9 = sbr.rel target = $region3
  $region8: #{forward.4} parent=0 // loop_exit
    _

// kernel: forward.5
$region0: #{forward.5}
  #allocation0 [shape = 'u32[]', space=smem, size = 0x4, offset = 0x4, fixed_abs, tag = 'smem constant byte address 0x4 - core index']
  #allocation1 [shape = 'u32[144,128]{1,0:T(1,128)}', space=vmem, size = 0x12000, scoped, tag = 'internal scratch']
  %s0 = inlined_call_operand.vmem [shape: bf16[2,6272], index: 0, kind: input, shape index: {}]
  %s1 = inlined_call_operand.vmem [shape: bf16[6272,128], index: 1, kind: input, shape index: {}]
  %s2 = inlined_call_operand.vmem [shape: f32[1,128], index: 2, kind: input, shape index: {}]
  %s3 = inlined_call_operand.vmem [shape: bf16[128,128], index: 3, kind: input, shape index: {}]
  %s4 = inlined_call_operand.vmem [shape: f32[1,128], index: 4, kind: input, shape index: {}]
  %s5 = inlined_call_operand.hbm [shape: f32[2,128], index: 5, kind: output, shape index: {}]
  %s6 = sld [smem:[#allocation0]]
  $region30: #{forward.5} parent=0
    _
  %s8 = ssub.s32 1, %s6
  %s9 = scalar_select 0, %s8, %s6
  $region1: #{forward.5} parent=0
    #allocation2 [shape = 'u8[1024]{0}', space=vmem, size = 0x400, scoped, tag = 'output window, operand 0, single buffered']
    #allocation3 [shape = 's32[1]{0}', space=sflag, size = 0x4, scoped, tag = 'scoped memory for forward.5']
    %10 = vsyncpa [#allocation3], 0
    // Predicated region
    $region2: #{forward.5} parent=1 // pred_check
      _
    $region3: #{forward.5} parent=1 // pred_check_branch
      %12 = sbr.rel (0) target = $region5
    $region4: #{forward.5} parent=1 // pred_region
      _
    $region5: #{forward.5} parent=1 // pred_fallthru
      _
    // Predicated region
    $region6: #{forward.5} parent=1 // pred_check
      _
    $region7: #{forward.5} parent=1 // pred_check_branch
      %14 = sbr.rel (0) target = $region9
    $region8: #{forward.5} parent=1 // pred_region
      _
    $region9: #{forward.5} parent=1 // pred_fallthru
      _
    // Predicated region
    $region10: #{forward.5} parent=1 // pred_check
      _
    $region11: #{forward.5} parent=1 // pred_check_branch
      %16 = sbr.rel (0) target = $region13
    $region12: #{forward.5} parent=1 // pred_region
      _
    $region13: #{forward.5} parent=1 // pred_fallthru
      _
    // Predicated region
    $region14: #{forward.5} parent=1 // pred_check
      _
    $region15: #{forward.5} parent=1 // pred_check_branch
      %18 = sbr.rel (0) target = $region17
    $region16: #{forward.5} parent=1 // pred_region
      _
    $region17: #{forward.5} parent=1 // pred_fallthru
      _
    // Predicated region
    $region18: #{forward.5} parent=1 // pred_check
      _
    $region19: #{forward.5} parent=1 // pred_check_branch
      %20 = sbr.rel (0) target = $region21
    $region20: #{forward.5} parent=1 // pred_region
      _
    $region21: #{forward.5} parent=1 // pred_fallthru
      _
    %v22 = vld [vmem:[%s0] sm:$0xff]
    %v23 = vld [vmem:[%s0 + $0x8] sm:$0xff]
    %v24 = vld [vmem:[%s0 + $0x10] sm:$0xff]
    %v25 = vld [vmem:[%s0 + $0x18] sm:$0xff]
    %v26 = vld [vmem:[%s0 + $0x20] sm:$0xff]
    %v27 = vld [vmem:[%s0 + $0x28] sm:$0xff]
    %v28 = vld [vmem:[%s0 + $0x30] sm:$0x1]
    %v29 = vld [vmem:[%s1] sm:$0xf]
    %v30 = vld [vmem:[%s1 + $0x4] sm:$0xf]
    %v31 = vld [vmem:[%s1 + $0x8] sm:$0xf]
    %v32 = vld [vmem:[%s1 + $0xc] sm:$0xf]
    %v33 = vld [vmem:[%s1 + $0x10] sm:$0xf]
    %v34 = vld [vmem:[%s1 + $0x14] sm:$0xf]
    %v35 = vld [vmem:[%s1 + $0x18] sm:$0xf]
    %v36 = vld [vmem:[%s1 + $0x1c] sm:$0xf]
    %v37 = vld [vmem:[%s1 + $0x20] sm:$0xf]
    %v38 = vld [vmem:[%s1 + $0x24] sm:$0xf]
    %v39 = vld [vmem:[%s1 + $0x28] sm:$0xf]
    %v40 = vld [vmem:[%s1 + $0x2c] sm:$0xf]
    %v41 = vld [vmem:[%s1 + $0x30] sm:$0xf]
    %v42 = vld [vmem:[%s1 + $0x34] sm:$0xf]
    %v43 = vld [vmem:[%s1 + $0x38] sm:$0xf]
    %v44 = vld [vmem:[%s1 + $0x3c] sm:$0xf]
    %v45 = vld [vmem:[%s1 + $0x40] sm:$0xf]
    %v46 = vld [vmem:[%s1 + $0x44] sm:$0xf]
    %v47 = vld [vmem:[%s1 + $0x48] sm:$0xf]
    %v48 = vld [vmem:[%s1 + $0x4c] sm:$0xf]
    %v49 = vld [vmem:[%s1 + $0x50] sm:$0xf]
    %v50 = vld [vmem:[%s1 + $0x54] sm:$0xf]
    %v51 = vld [vmem:[%s1 + $0x58] sm:$0xf]
    %v52 = vld [vmem:[%s1 + $0x5c] sm:$0xf]
    %v53 = vld [vmem:[%s1 + $0x60] sm:$0xf]
    %v54 = vld [vmem:[%s1 + $0x64] sm:$0xf]
    %v55 = vld [vmem:[%s1 + $0x68] sm:$0xf]
    %v56 = vld [vmem:[%s1 + $0x6c] sm:$0xf]
    %v57 = vld [vmem:[%s1 + $0x70] sm:$0xf]
    %v58 = vld [vmem:[%s1 + $0x74] sm:$0xf]
    %v59 = vld [vmem:[%s1 + $0x78] sm:$0xf]
    %v60 = vld [vmem:[%s1 + $0x7c] sm:$0xf]
    %v61 = vld [vmem:[%s1 + $0x80] sm:$0xf]
    %v62 = vld [vmem:[%s1 + $0x84] sm:$0xf]
    %v63 = vld [vmem:[%s1 + $0x88] sm:$0xf]
    %v64 = vld [vmem:[%s1 + $0x8c] sm:$0xf]
    %v65 = vld [vmem:[%s1 + $0x90] sm:$0xf]
    %v66 = vld [vmem:[%s1 + $0x94] sm:$0xf]
    %v67 = vld [vmem:[%s1 + $0x98] sm:$0xf]
    %v68 = vld [vmem:[%s1 + $0x9c] sm:$0xf]
    %v69 = vld [vmem:[%s1 + $0xa0] sm:$0xf]
    %v70 = vld [vmem:[%s1 + $0xa4] sm:$0xf]
    %v71 = vld [vmem:[%s1 + $0xa8] sm:$0xf]
    %v72 = vld [vmem:[%s1 + $0xac] sm:$0xf]
    %v73 = vld [vmem:[%s1 + $0xb0] sm:$0xf]
    %v74 = vld [vmem:[%s1 + $0xb4] sm:$0xf]
    %v75 = vld [vmem:[%s1 + $0xb8] sm:$0xf]
    %v76 = vld [vmem:[%s1 + $0xbc] sm:$0xf]
    %v77 = vld [vmem:[%s1 + $0xc0] sm:$0xf]
    %v78 = vld [vmem:[%s1 + $0xc4] sm:$0xf]
    %v79 = vld [vmem:[%s1 + $0xc8] sm:$0xf]
    %v80 = vld [vmem:[%s1 + $0xcc] sm:$0xf]
    %v81 = vld [vmem:[%s1 + $0xd0] sm:$0xf]
    %v82 = vld [vmem:[%s1 + $0xd4] sm:$0xf]
    %v83 = vld [vmem:[%s1 + $0xd8] sm:$0xf]
    %v84 = vld [vmem:[%s1 + $0xdc] sm:$0xf]
    %v85 = vld [vmem:[%s1 + $0xe0] sm:$0xf]
    %v86 = vld [vmem:[%s1 + $0xe4] sm:$0xf]
    %v87 = vld [vmem:[%s1 + $0xe8] sm:$0xf]
    %v88 = vld [vmem:[%s1 + $0xec] sm:$0xf]
    %v89 = vld [vmem:[%s1 + $0xf0] sm:$0xf]
    %v90 = vld [vmem:[%s1 + $0xf4] sm:$0xf]
    %v91 = vld [vmem:[%s1 + $0xf8] sm:$0xf]
    %v92 = vld [vmem:[%s1 + $0xfc] sm:$0xf]
    %v93 = vld [vmem:[%s1 + $0x100] sm:$0xf]
    %v94 = vld [vmem:[%s1 + $0x104] sm:$0xf]
    %v95 = vld [vmem:[%s1 + $0x108] sm:$0xf]
    %v96 = vld [vmem:[%s1 + $0x10c] sm:$0xf]
    %v97 = vld [vmem:[%s1 + $0x110] sm:$0xf]
    %v98 = vld [vmem:[%s1 + $0x114] sm:$0xf]
    %v99 = vld [vmem:[%s1 + $0x118] sm:$0xf]
    %v100 = vld [vmem:[%s1 + $0x11c] sm:$0xf]
    %v101 = vld [vmem:[%s1 + $0x120] sm:$0xf]
    %v102 = vld [vmem:[%s1 + $0x124] sm:$0xf]
    %v103 = vld [vmem:[%s1 + $0x128] sm:$0xf]
    %v104 = vld [vmem:[%s1 + $0x12c] sm:$0xf]
    %v105 = vld [vmem:[%s1 + $0x130] sm:$0xf]
    %v106 = vld [vmem:[%s1 + $0x134] sm:$0xf]
    %v107 = vld [vmem:[%s1 + $0x138] sm:$0xf]
    %v108 = vld [vmem:[%s1 + $0x13c] sm:$0xf]
    %v109 = vld [vmem:[%s1 + $0x140] sm:$0xf]
    %v110 = vld [vmem:[%s1 + $0x144] sm:$0xf]
    %v111 = vld [vmem:[%s1 + $0x148] sm:$0xf]
    %v112 = vld [vmem:[%s1 + $0x14c] sm:$0xf]
    %v113 = vld [vmem:[%s1 + $0x150] sm:$0xf]
    %v114 = vld [vmem:[%s1 + $0x154] sm:$0xf]
    %v115 = vld [vmem:[%s1 + $0x158] sm:$0xf]
    %v116 = vld [vmem:[%s1 + $0x15c] sm:$0xf]
    %v117 = vld [vmem:[%s1 + $0x160] sm:$0xf]
    %v118 = vld [vmem:[%s1 + $0x164] sm:$0xf]
    %v119 = vld [vmem:[%s1 + $0x168] sm:$0xf]
    %v120 = vld [vmem:[%s1 + $0x16c] sm:$0xf]
    %v121 = vld [vmem:[%s1 + $0x170] sm:$0xf]
    %v122 = vld [vmem:[%s1 + $0x174] sm:$0xf]
    %v123 = vld [vmem:[%s1 + $0x178] sm:$0xf]
    %v124 = vld [vmem:[%s1 + $0x17c] sm:$0xf]
    %v125 = vld [vmem:[%s1 + $0x180] sm:$0xf]
    %v126 = vld [vmem:[%s1 + $0x184] sm:$0xf]
    %v127 = vld [vmem:[%s1 + $0x188] sm:$0xf]
    %v128 = vld [vmem:[%s1 + $0x18c] sm:$0xf]
    %v129 = vld [vmem:[%s1 + $0x190] sm:$0xf]
    %v130 = vld [vmem:[%s1 + $0x194] sm:$0xf]
    %v131 = vld [vmem:[%s1 + $0x198] sm:$0xf]
    %v132 = vld [vmem:[%s1 + $0x19c] sm:$0xf]
    %v133 = vld [vmem:[%s1 + $0x1a0] sm:$0xf]
    %v134 = vld [vmem:[%s1 + $0x1a4] sm:$0xf]
    %v135 = vld [vmem:[%s1 + $0x1a8] sm:$0xf]
    %v136 = vld [vmem:[%s1 + $0x1ac] sm:$0xf]
    %v137 = vld [vmem:[%s1 + $0x1b0] sm:$0xf]
    %v138 = vld [vmem:[%s1 + $0x1b4] sm:$0xf]
    %v139 = vld [vmem:[%s1 + $0x1b8] sm:$0xf]
    %v140 = vld [vmem:[%s1 + $0x1bc] sm:$0xf]
    %v141 = vld [vmem:[%s1 + $0x1c0] sm:$0xf]
    %v142 = vld [vmem:[%s1 + $0x1c4] sm:$0xf]
    %v143 = vld [vmem:[%s1 + $0x1c8] sm:$0xf]
    %v144 = vld [vmem:[%s1 + $0x1cc] sm:$0xf]
    %v145 = vld [vmem:[%s1 + $0x1d0] sm:$0xf]
    %v146 = vld [vmem:[%s1 + $0x1d4] sm:$0xf]
    %v147 = vld [vmem:[%s1 + $0x1d8] sm:$0xf]
    %v148 = vld [vmem:[%s1 + $0x1dc] sm:$0xf]
    %v149 = vld [vmem:[%s1 + $0x1e0] sm:$0xf]
    %v150 = vld [vmem:[%s1 + $0x1e4] sm:$0xf]
    %v151 = vld [vmem:[%s1 + $0x1e8] sm:$0xf]
    %v152 = vld [vmem:[%s1 + $0x1ec] sm:$0xf]
    %v153 = vld [vmem:[%s1 + $0x1f0] sm:$0xf]
    %v154 = vld [vmem:[%s1 + $0x1f4] sm:$0xf]
    %v155 = vld [vmem:[%s1 + $0x1f8] sm:$0xf]
    %v156 = vld [vmem:[%s1 + $0x1fc] sm:$0xf]
    %v157 = vld [vmem:[%s1 + $0x200] sm:$0xf]
    %v158 = vld [vmem:[%s1 + $0x204] sm:$0xf]
    %v159 = vld [vmem:[%s1 + $0x208] sm:$0xf]
    %v160 = vld [vmem:[%s1 + $0x20c] sm:$0xf]
    %v161 = vld [vmem:[%s1 + $0x210] sm:$0xf]
    %v162 = vld [vmem:[%s1 + $0x214] sm:$0xf]
    %v163 = vld [vmem:[%s1 + $0x218] sm:$0xf]
    %v164 = vld [vmem:[%s1 + $0x21c] sm:$0xf]
    %v165 = vld [vmem:[%s1 + $0x220] sm:$0xf]
    %v166 = vld [vmem:[%s1 + $0x224] sm:$0xf]
    %v167 = vld [vmem:[%s1 + $0x228] sm:$0xf]
    %v168 = vld [vmem:[%s1 + $0x22c] sm:$0xf]
    %v169 = vld [vmem:[%s1 + $0x230] sm:$0xf]
    %v170 = vld [vmem:[%s1 + $0x234] sm:$0xf]
    %v171 = vld [vmem:[%s1 + $0x238] sm:$0xf]
    %v172 = vld [vmem:[%s1 + $0x23c] sm:$0xf]
    %v173 = vld [vmem:[%s1 + $0x240] sm:$0xf]
    %v174 = vld [vmem:[%s1 + $0x244] sm:$0xf]
    %v175 = vld [vmem:[%s1 + $0x248] sm:$0xf]
    %v176 = vld [vmem:[%s1 + $0x24c] sm:$0xf]
    %v177 = vld [vmem:[%s1 + $0x250] sm:$0xf]
    %v178 = vld [vmem:[%s1 + $0x254] sm:$0xf]
    %v179 = vld [vmem:[%s1 + $0x258] sm:$0xf]
    %v180 = vld [vmem:[%s1 + $0x25c] sm:$0xf]
    %v181 = vld [vmem:[%s1 + $0x260] sm:$0xf]
    %v182 = vld [vmem:[%s1 + $0x264] sm:$0xf]
    %v183 = vld [vmem:[%s1 + $0x268] sm:$0xf]
    %v184 = vld [vmem:[%s1 + $0x26c] sm:$0xf]
    %v185 = vld [vmem:[%s1 + $0x270] sm:$0xf]
    %v186 = vld [vmem:[%s1 + $0x274] sm:$0xf]
    %v187 = vld [vmem:[%s1 + $0x278] sm:$0xf]
    %v188 = vld [vmem:[%s1 + $0x27c] sm:$0xf]
    %v189 = vld [vmem:[%s1 + $0x280] sm:$0xf]
    %v190 = vld [vmem:[%s1 + $0x284] sm:$0xf]
    %v191 = vld [vmem:[%s1 + $0x288] sm:$0xf]
    %v192 = vld [vmem:[%s1 + $0x28c] sm:$0xf]
    %v193 = vld [vmem:[%s1 + $0x290] sm:$0xf]
    %v194 = vld [vmem:[%s1 + $0x294] sm:$0xf]
    %v195 = vld [vmem:[%s1 + $0x298] sm:$0xf]
    %v196 = vld [vmem:[%s1 + $0x29c] sm:$0xf]
    %v197 = vld [vmem:[%s1 + $0x2a0] sm:$0xf]
    %v198 = vld [vmem:[%s1 + $0x2a4] sm:$0xf]
    %v199 = vld [vmem:[%s1 + $0x2a8] sm:$0xf]
    %v200 = vld [vmem:[%s1 + $0x2ac] sm:$0xf]
    %v201 = vld [vmem:[%s1 + $0x2b0] sm:$0xf]
    %v202 = vld [vmem:[%s1 + $0x2b4] sm:$0xf]
    %v203 = vld [vmem:[%s1 + $0x2b8] sm:$0xf]
    %v204 = vld [vmem:[%s1 + $0x2bc] sm:$0xf]
    %v205 = vld [vmem:[%s1 + $0x2c0] sm:$0xf]
    %v206 = vld [vmem:[%s1 + $0x2c4] sm:$0xf]
    %v207 = vld [vmem:[%s1 + $0x2c8] sm:$0xf]
    %v208 = vld [vmem:[%s1 + $0x2cc] sm:$0xf]
    %v209 = vld [vmem:[%s1 + $0x2d0] sm:$0xf]
    %v210 = vld [vmem:[%s1 + $0x2d4] sm:$0xf]
    %v211 = vld [vmem:[%s1 + $0x2d8] sm:$0xf]
    %v212 = vld [vmem:[%s1 + $0x2dc] sm:$0xf]
    %v213 = vld [vmem:[%s1 + $0x2e0] sm:$0xf]
    %v214 = vld [vmem:[%s1 + $0x2e4] sm:$0xf]
    %v215 = vld [vmem:[%s1 + $0x2e8] sm:$0xf]
    %v216 = vld [vmem:[%s1 + $0x2ec] sm:$0xf]
    %v217 = vld [vmem:[%s1 + $0x2f0] sm:$0xf]
    %v218 = vld [vmem:[%s1 + $0x2f4] sm:$0xf]
    %v219 = vld [vmem:[%s1 + $0x2f8] sm:$0xf]
    %v220 = vld [vmem:[%s1 + $0x2fc] sm:$0xf]
    %v221 = vld [vmem:[%s1 + $0x300] sm:$0xf]
    %v222 = vld [vmem:[%s1 + $0x304] sm:$0xf]
    %v223 = vld [vmem:[%s1 + $0x308] sm:$0xf]
    %v224 = vld [vmem:[%s1 + $0x30c] sm:$0xf]
    %v225 = vld [vmem:[%s1 + $0x310] sm:$0xf]
    %v226 = vld [vmem:[%s1 + $0x314] sm:$0xf]
    %v227 = vld [vmem:[%s1 + $0x318] sm:$0xf]
    %v228 = vld [vmem:[%s1 + $0x31c] sm:$0xf]
    %v229 = vld [vmem:[%s1 + $0x320] sm:$0xf]
    %v230 = vld [vmem:[%s1 + $0x324] sm:$0xf]
    %v231 = vld [vmem:[%s1 + $0x328] sm:$0xf]
    %v232 = vld [vmem:[%s1 + $0x32c] sm:$0xf]
    %v233 = vld [vmem:[%s1 + $0x330] sm:$0xf]
    %v234 = vld [vmem:[%s1 + $0x334] sm:$0xf]
    %v235 = vld [vmem:[%s1 + $0x338] sm:$0xf]
    %v236 = vld [vmem:[%s1 + $0x33c] sm:$0xf]
    %v237 = vld [vmem:[%s1 + $0x340] sm:$0xf]
    %v238 = vld [vmem:[%s1 + $0x344] sm:$0xf]
    %v239 = vld [vmem:[%s1 + $0x348] sm:$0xf]
    %v240 = vld [vmem:[%s1 + $0x34c] sm:$0xf]
    %v241 = vld [vmem:[%s1 + $0x350] sm:$0xf]
    %v242 = vld [vmem:[%s1 + $0x354] sm:$0xf]
    %v243 = vld [vmem:[%s1 + $0x358] sm:$0xf]
    %v244 = vld [vmem:[%s1 + $0x35c] sm:$0xf]
    %v245 = vld [vmem:[%s1 + $0x360] sm:$0xf]
    %v246 = vld [vmem:[%s1 + $0x364] sm:$0xf]
    %v247 = vld [vmem:[%s1 + $0x368] sm:$0xf]
    %v248 = vld [vmem:[%s1 + $0x36c] sm:$0xf]
    %v249 = vld [vmem:[%s1 + $0x370] sm:$0xf]
    %v250 = vld [vmem:[%s1 + $0x374] sm:$0xf]
    %v251 = vld [vmem:[%s1 + $0x378] sm:$0xf]
    %v252 = vld [vmem:[%s1 + $0x37c] sm:$0xf]
    %v253 = vld [vmem:[%s1 + $0x380] sm:$0xf]
    %v254 = vld [vmem:[%s1 + $0x384] sm:$0xf]
    %v255 = vld [vmem:[%s1 + $0x388] sm:$0xf]
    %v256 = vld [vmem:[%s1 + $0x38c] sm:$0xf]
    %v257 = vld [vmem:[%s1 + $0x390] sm:$0xf]
    %v258 = vld [vmem:[%s1 + $0x394] sm:$0xf]
    %v259 = vld [vmem:[%s1 + $0x398] sm:$0xf]
    %v260 = vld [vmem:[%s1 + $0x39c] sm:$0xf]
    %v261 = vld [vmem:[%s1 + $0x3a0] sm:$0xf]
    %v262 = vld [vmem:[%s1 + $0x3a4] sm:$0xf]
    %v263 = vld [vmem:[%s1 + $0x3a8] sm:$0xf]
    %v264 = vld [vmem:[%s1 + $0x3ac] sm:$0xf]
    %v265 = vld [vmem:[%s1 + $0x3b0] sm:$0xf]
    %v266 = vld [vmem:[%s1 + $0x3b4] sm:$0xf]
    %v267 = vld [vmem:[%s1 + $0x3b8] sm:$0xf]
    %v268 = vld [vmem:[%s1 + $0x3bc] sm:$0xf]
    %v269 = vld [vmem:[%s1 + $0x3c0] sm:$0xf]
    %v270 = vld [vmem:[%s1 + $0x3c4] sm:$0xf]
    %v271 = vld [vmem:[%s1 + $0x3c8] sm:$0xf]
    %v272 = vld [vmem:[%s1 + $0x3cc] sm:$0xf]
    %v273 = vld [vmem:[%s1 + $0x3d0] sm:$0xf]
    %v274 = vld [vmem:[%s1 + $0x3d4] sm:$0xf]
    %v275 = vld [vmem:[%s1 + $0x3d8] sm:$0xf]
    %v276 = vld [vmem:[%s1 + $0x3dc] sm:$0xf]
    %v277 = vld [vmem:[%s1 + $0x3e0] sm:$0xf]
    %v278 = vld [vmem:[%s1 + $0x3e4] sm:$0xf]
    %v279 = vld [vmem:[%s1 + $0x3e8] sm:$0xf]
    %v280 = vld [vmem:[%s1 + $0x3ec] sm:$0xf]
    %v281 = vld [vmem:[%s1 + $0x3f0] sm:$0xf]
    %v282 = vld [vmem:[%s1 + $0x3f4] sm:$0xf]
    %v283 = vld [vmem:[%s1 + $0x3f8] sm:$0xf]
    %v284 = vld [vmem:[%s1 + $0x3fc] sm:$0xf]
    %v285 = vld [vmem:[%s1 + $0x400] sm:$0xf]
    %v286 = vld [vmem:[%s1 + $0x404] sm:$0xf]
    %v287 = vld [vmem:[%s1 + $0x408] sm:$0xf]
    %v288 = vld [vmem:[%s1 + $0x40c] sm:$0xf]
    %v289 = vld [vmem:[%s1 + $0x410] sm:$0xf]
    %v290 = vld [vmem:[%s1 + $0x414] sm:$0xf]
    %v291 = vld [vmem:[%s1 + $0x418] sm:$0xf]
    %v292 = vld [vmem:[%s1 + $0x41c] sm:$0xf]
    %v293 = vld [vmem:[%s1 + $0x420] sm:$0xf]
    %v294 = vld [vmem:[%s1 + $0x424] sm:$0xf]
    %v295 = vld [vmem:[%s1 + $0x428] sm:$0xf]
    %v296 = vld [vmem:[%s1 + $0x42c] sm:$0xf]
    %v297 = vld [vmem:[%s1 + $0x430] sm:$0xf]
    %v298 = vld [vmem:[%s1 + $0x434] sm:$0xf]
    %v299 = vld [vmem:[%s1 + $0x438] sm:$0xf]
    %v300 = vld [vmem:[%s1 + $0x43c] sm:$0xf]
    %v301 = vld [vmem:[%s1 + $0x440] sm:$0xf]
    %v302 = vld [vmem:[%s1 + $0x444] sm:$0xf]
    %v303 = vld [vmem:[%s1 + $0x448] sm:$0xf]
    %v304 = vld [vmem:[%s1 + $0x44c] sm:$0xf]
    %v305 = vld [vmem:[%s1 + $0x450] sm:$0xf]
    %v306 = vld [vmem:[%s1 + $0x454] sm:$0xf]
    %v307 = vld [vmem:[%s1 + $0x458] sm:$0xf]
    %v308 = vld [vmem:[%s1 + $0x45c] sm:$0xf]
    %v309 = vld [vmem:[%s1 + $0x460] sm:$0xf]
    %v310 = vld [vmem:[%s1 + $0x464] sm:$0xf]
    %v311 = vld [vmem:[%s1 + $0x468] sm:$0xf]
    %v312 = vld [vmem:[%s1 + $0x46c] sm:$0xf]
    %v313 = vld [vmem:[%s1 + $0x470] sm:$0xf]
    %v314 = vld [vmem:[%s1 + $0x474] sm:$0xf]
    %v315 = vld [vmem:[%s1 + $0x478] sm:$0xf]
    %v316 = vld [vmem:[%s1 + $0x47c] sm:$0xf]
    %v317 = vld [vmem:[%s1 + $0x480] sm:$0xf]
    %v318 = vld [vmem:[%s1 + $0x484] sm:$0xf]
    %v319 = vld [vmem:[%s1 + $0x488] sm:$0xf]
    %v320 = vld [vmem:[%s1 + $0x48c] sm:$0xf]
    %v321 = vld [vmem:[%s1 + $0x490] sm:$0xf]
    %v322 = vld [vmem:[%s1 + $0x494] sm:$0xf]
    %v323 = vld [vmem:[%s1 + $0x498] sm:$0xf]
    %v324 = vld [vmem:[%s1 + $0x49c] sm:$0xf]
    %v325 = vld [vmem:[%s1 + $0x4a0] sm:$0xf]
    %v326 = vld [vmem:[%s1 + $0x4a4] sm:$0xf]
    %v327 = vld [vmem:[%s1 + $0x4a8] sm:$0xf]
    %v328 = vld [vmem:[%s1 + $0x4ac] sm:$0xf]
    %v329 = vld [vmem:[%s1 + $0x4b0] sm:$0xf]
    %v330 = vld [vmem:[%s1 + $0x4b4] sm:$0xf]
    %v331 = vld [vmem:[%s1 + $0x4b8] sm:$0xf]
    %v332 = vld [vmem:[%s1 + $0x4bc] sm:$0xf]
    %v333 = vld [vmem:[%s1 + $0x4c0] sm:$0xf]
    %v334 = vld [vmem:[%s1 + $0x4c4] sm:$0xf]
    %v335 = vld [vmem:[%s1 + $0x4c8] sm:$0xf]
    %v336 = vld [vmem:[%s1 + $0x4cc] sm:$0xf]
    %v337 = vld [vmem:[%s1 + $0x4d0] sm:$0xf]
    %v338 = vld [vmem:[%s1 + $0x4d4] sm:$0xf]
    %v339 = vld [vmem:[%s1 + $0x4d8] sm:$0xf]
    %v340 = vld [vmem:[%s1 + $0x4dc] sm:$0xf]
    %v341 = vld [vmem:[%s1 + $0x4e0] sm:$0xf]
    %v342 = vld [vmem:[%s1 + $0x4e4] sm:$0xf]
    %v343 = vld [vmem:[%s1 + $0x4e8] sm:$0xf]
    %v344 = vld [vmem:[%s1 + $0x4ec] sm:$0xf]
    %v345 = vld [vmem:[%s1 + $0x4f0] sm:$0xf]
    %v346 = vld [vmem:[%s1 + $0x4f4] sm:$0xf]
    %v347 = vld [vmem:[%s1 + $0x4f8] sm:$0xf]
    %v348 = vld [vmem:[%s1 + $0x4fc] sm:$0xf]
    %v349 = vld [vmem:[%s1 + $0x500] sm:$0xf]
    %v350 = vld [vmem:[%s1 + $0x504] sm:$0xf]
    %v351 = vld [vmem:[%s1 + $0x508] sm:$0xf]
    %v352 = vld [vmem:[%s1 + $0x50c] sm:$0xf]
    %v353 = vld [vmem:[%s1 + $0x510] sm:$0xf]
    %v354 = vld [vmem:[%s1 + $0x514] sm:$0xf]
    %v355 = vld [vmem:[%s1 + $0x518] sm:$0xf]
    %v356 = vld [vmem:[%s1 + $0x51c] sm:$0xf]
    %v357 = vld [vmem:[%s1 + $0x520] sm:$0xf]
    %v358 = vld [vmem:[%s1 + $0x524] sm:$0xf]
    %v359 = vld [vmem:[%s1 + $0x528] sm:$0xf]
    %v360 = vld [vmem:[%s1 + $0x52c] sm:$0xf]
    %v361 = vld [vmem:[%s1 + $0x530] sm:$0xf]
    %v362 = vld [vmem:[%s1 + $0x534] sm:$0xf]
    %v363 = vld [vmem:[%s1 + $0x538] sm:$0xf]
    %v364 = vld [vmem:[%s1 + $0x53c] sm:$0xf]
    %v365 = vld [vmem:[%s1 + $0x540] sm:$0xf]
    %v366 = vld [vmem:[%s1 + $0x544] sm:$0xf]
    %v367 = vld [vmem:[%s1 + $0x548] sm:$0xf]
    %v368 = vld [vmem:[%s1 + $0x54c] sm:$0xf]
    %v369 = vld [vmem:[%s1 + $0x550] sm:$0xf]
    %v370 = vld [vmem:[%s1 + $0x554] sm:$0xf]
    %v371 = vld [vmem:[%s1 + $0x558] sm:$0xf]
    %v372 = vld [vmem:[%s1 + $0x55c] sm:$0xf]
    %v373 = vld [vmem:[%s1 + $0x560] sm:$0xf]
    %v374 = vld [vmem:[%s1 + $0x564] sm:$0xf]
    %v375 = vld [vmem:[%s1 + $0x568] sm:$0xf]
    %v376 = vld [vmem:[%s1 + $0x56c] sm:$0xf]
    %v377 = vld [vmem:[%s1 + $0x570] sm:$0xf]
    %v378 = vld [vmem:[%s1 + $0x574] sm:$0xf]
    %v379 = vld [vmem:[%s1 + $0x578] sm:$0xf]
    %v380 = vld [vmem:[%s1 + $0x57c] sm:$0xf]
    %v381 = vld [vmem:[%s1 + $0x580] sm:$0xf]
    %v382 = vld [vmem:[%s1 + $0x584] sm:$0xf]
    %v383 = vld [vmem:[%s1 + $0x588] sm:$0xf]
    %v384 = vld [vmem:[%s1 + $0x58c] sm:$0xf]
    %v385 = vld [vmem:[%s1 + $0x590] sm:$0xf]
    %v386 = vld [vmem:[%s1 + $0x594] sm:$0xf]
    %v387 = vld [vmem:[%s1 + $0x598] sm:$0xf]
    %v388 = vld [vmem:[%s1 + $0x59c] sm:$0xf]
    %v389 = vld [vmem:[%s1 + $0x5a0] sm:$0xf]
    %v390 = vld [vmem:[%s1 + $0x5a4] sm:$0xf]
    %v391 = vld [vmem:[%s1 + $0x5a8] sm:$0xf]
    %v392 = vld [vmem:[%s1 + $0x5ac] sm:$0xf]
    %v393 = vld [vmem:[%s1 + $0x5b0] sm:$0xf]
    %v394 = vld [vmem:[%s1 + $0x5b4] sm:$0xf]
    %v395 = vld [vmem:[%s1 + $0x5b8] sm:$0xf]
    %v396 = vld [vmem:[%s1 + $0x5bc] sm:$0xf]
    %v397 = vld [vmem:[%s1 + $0x5c0] sm:$0xf]
    %v398 = vld [vmem:[%s1 + $0x5c4] sm:$0xf]
    %v399 = vld [vmem:[%s1 + $0x5c8] sm:$0xf]
    %v400 = vld [vmem:[%s1 + $0x5cc] sm:$0xf]
    %v401 = vld [vmem:[%s1 + $0x5d0] sm:$0xf]
    %v402 = vld [vmem:[%s1 + $0x5d4] sm:$0xf]
    %v403 = vld [vmem:[%s1 + $0x5d8] sm:$0xf]
    %v404 = vld [vmem:[%s1 + $0x5dc] sm:$0xf]
    %v405 = vld [vmem:[%s1 + $0x5e0] sm:$0xf]
    %v406 = vld [vmem:[%s1 + $0x5e4] sm:$0xf]
    %v407 = vld [vmem:[%s1 + $0x5e8] sm:$0xf]
    %v408 = vld [vmem:[%s1 + $0x5ec] sm:$0xf]
    %v409 = vld [vmem:[%s1 + $0x5f0] sm:$0xf]
    %v410 = vld [vmem:[%s1 + $0x5f4] sm:$0xf]
    %v411 = vld [vmem:[%s1 + $0x5f8] sm:$0xf]
    %v412 = vld [vmem:[%s1 + $0x5fc] sm:$0xf]
    %v413 = vld [vmem:[%s1 + $0x600] sm:$0xf]
    %v414 = vld [vmem:[%s1 + $0x604] sm:$0xf]
    %v415 = vld [vmem:[%s1 + $0x608] sm:$0xf]
    %v416 = vld [vmem:[%s1 + $0x60c] sm:$0xf]
    %v417 = vld [vmem:[%s1 + $0x610] sm:$0xf]
    %v418 = vld [vmem:[%s1 + $0x614] sm:$0xf]
    %v419 = vld [vmem:[%s1 + $0x618] sm:$0xf]
    %v420 = vld [vmem:[%s1 + $0x61c] sm:$0xf]
    %v421 = vld [vmem:[%s1 + $0x620] sm:$0xf]
    %v422 = vld [vmem:[%s1 + $0x624] sm:$0xf]
    %v423 = vld [vmem:[%s1 + $0x628] sm:$0xf]
    %v424 = vld [vmem:[%s1 + $0x62c] sm:$0xf]
    %v425 = vld [vmem:[%s1 + $0x630] sm:$0xf]
    %v426 = vld [vmem:[%s1 + $0x634] sm:$0xf]
    %v427 = vld [vmem:[%s1 + $0x638] sm:$0xf]
    %v428 = vld [vmem:[%s1 + $0x63c] sm:$0xf]
    %v429 = vld [vmem:[%s1 + $0x640] sm:$0xf]
    %v430 = vld [vmem:[%s1 + $0x644] sm:$0xf]
    %v431 = vld [vmem:[%s1 + $0x648] sm:$0xf]
    %v432 = vld [vmem:[%s1 + $0x64c] sm:$0xf]
    %v433 = vld [vmem:[%s1 + $0x650] sm:$0xf]
    %v434 = vld [vmem:[%s1 + $0x654] sm:$0xf]
    %v435 = vld [vmem:[%s1 + $0x658] sm:$0xf]
    %v436 = vld [vmem:[%s1 + $0x65c] sm:$0xf]
    %v437 = vld [vmem:[%s1 + $0x660] sm:$0xf]
    %v438 = vld [vmem:[%s1 + $0x664] sm:$0xf]
    %v439 = vld [vmem:[%s1 + $0x668] sm:$0xf]
    %v440 = vld [vmem:[%s1 + $0x66c] sm:$0xf]
    %v441 = vld [vmem:[%s1 + $0x670] sm:$0xf]
    %v442 = vld [vmem:[%s1 + $0x674] sm:$0xf]
    %v443 = vld [vmem:[%s1 + $0x678] sm:$0xf]
    %v444 = vld [vmem:[%s1 + $0x67c] sm:$0xf]
    %v445 = vld [vmem:[%s1 + $0x680] sm:$0xf]
    %v446 = vld [vmem:[%s1 + $0x684] sm:$0xf]
    %v447 = vld [vmem:[%s1 + $0x688] sm:$0xf]
    %v448 = vld [vmem:[%s1 + $0x68c] sm:$0xf]
    %v449 = vld [vmem:[%s1 + $0x690] sm:$0xf]
    %v450 = vld [vmem:[%s1 + $0x694] sm:$0xf]
    %v451 = vld [vmem:[%s1 + $0x698] sm:$0xf]
    %v452 = vld [vmem:[%s1 + $0x69c] sm:$0xf]
    %v453 = vld [vmem:[%s1 + $0x6a0] sm:$0xf]
    %v454 = vld [vmem:[%s1 + $0x6a4] sm:$0xf]
    %v455 = vld [vmem:[%s1 + $0x6a8] sm:$0xf]
    %v456 = vld [vmem:[%s1 + $0x6ac] sm:$0xf]
    %v457 = vld [vmem:[%s1 + $0x6b0] sm:$0xf]
    %v458 = vld [vmem:[%s1 + $0x6b4] sm:$0xf]
    %v459 = vld [vmem:[%s1 + $0x6b8] sm:$0xf]
    %v460 = vld [vmem:[%s1 + $0x6bc] sm:$0xf]
    %v461 = vld [vmem:[%s1 + $0x6c0] sm:$0xf]
    %v462 = vld [vmem:[%s1 + $0x6c4] sm:$0xf]
    %v463 = vld [vmem:[%s1 + $0x6c8] sm:$0xf]
    %v464 = vld [vmem:[%s1 + $0x6cc] sm:$0xf]
    %v465 = vld [vmem:[%s1 + $0x6d0] sm:$0xf]
    %v466 = vld [vmem:[%s1 + $0x6d4] sm:$0xf]
    %v467 = vld [vmem:[%s1 + $0x6d8] sm:$0xf]
    %v468 = vld [vmem:[%s1 + $0x6dc] sm:$0xf]
    %v469 = vld [vmem:[%s1 + $0x6e0] sm:$0xf]
    %v470 = vld [vmem:[%s1 + $0x6e4] sm:$0xf]
    %v471 = vld [vmem:[%s1 + $0x6e8] sm:$0xf]
    %v472 = vld [vmem:[%s1 + $0x6ec] sm:$0xf]
    %v473 = vld [vmem:[%s1 + $0x6f0] sm:$0xf]
    %v474 = vld [vmem:[%s1 + $0x6f4] sm:$0xf]
    %v475 = vld [vmem:[%s1 + $0x6f8] sm:$0xf]
    %v476 = vld [vmem:[%s1 + $0x6fc] sm:$0xf]
    %v477 = vld [vmem:[%s1 + $0x700] sm:$0xf]
    %v478 = vld [vmem:[%s1 + $0x704] sm:$0xf]
    %v479 = vld [vmem:[%s1 + $0x708] sm:$0xf]
    %v480 = vld [vmem:[%s1 + $0x70c] sm:$0xf]
    %v481 = vld [vmem:[%s1 + $0x710] sm:$0xf]
    %v482 = vld [vmem:[%s1 + $0x714] sm:$0xf]
    %v483 = vld [vmem:[%s1 + $0x718] sm:$0xf]
    %v484 = vld [vmem:[%s1 + $0x71c] sm:$0xf]
    %v485 = vld [vmem:[%s1 + $0x720] sm:$0xf]
    %v486 = vld [vmem:[%s1 + $0x724] sm:$0xf]
    %v487 = vld [vmem:[%s1 + $0x728] sm:$0xf]
    %v488 = vld [vmem:[%s1 + $0x72c] sm:$0xf]
    %v489 = vld [vmem:[%s1 + $0x730] sm:$0xf]
    %v490 = vld [vmem:[%s1 + $0x734] sm:$0xf]
    %v491 = vld [vmem:[%s1 + $0x738] sm:$0xf]
    %v492 = vld [vmem:[%s1 + $0x73c] sm:$0xf]
    %v493 = vld [vmem:[%s1 + $0x740] sm:$0xf]
    %v494 = vld [vmem:[%s1 + $0x744] sm:$0xf]
    %v495 = vld [vmem:[%s1 + $0x748] sm:$0xf]
    %v496 = vld [vmem:[%s1 + $0x74c] sm:$0xf]
    %v497 = vld [vmem:[%s1 + $0x750] sm:$0xf]
    %v498 = vld [vmem:[%s1 + $0x754] sm:$0xf]
    %v499 = vld [vmem:[%s1 + $0x758] sm:$0xf]
    %v500 = vld [vmem:[%s1 + $0x75c] sm:$0xf]
    %v501 = vld [vmem:[%s1 + $0x760] sm:$0xf]
    %v502 = vld [vmem:[%s1 + $0x764] sm:$0xf]
    %v503 = vld [vmem:[%s1 + $0x768] sm:$0xf]
    %v504 = vld [vmem:[%s1 + $0x76c] sm:$0xf]
    %v505 = vld [vmem:[%s1 + $0x770] sm:$0xf]
    %v506 = vld [vmem:[%s1 + $0x774] sm:$0xf]
    %v507 = vld [vmem:[%s1 + $0x778] sm:$0xf]
    %v508 = vld [vmem:[%s1 + $0x77c] sm:$0xf]
    %v509 = vld [vmem:[%s1 + $0x780] sm:$0xf]
    %v510 = vld [vmem:[%s1 + $0x784] sm:$0xf]
    %v511 = vld [vmem:[%s1 + $0x788] sm:$0xf]
    %v512 = vld [vmem:[%s1 + $0x78c] sm:$0xf]
    %v513 = vld [vmem:[%s1 + $0x790] sm:$0xf]
    %v514 = vld [vmem:[%s1 + $0x794] sm:$0xf]
    %v515 = vld [vmem:[%s1 + $0x798] sm:$0xf]
    %v516 = vld [vmem:[%s1 + $0x79c] sm:$0xf]
    %v517 = vld [vmem:[%s1 + $0x7a0] sm:$0xf]
    %v518 = vld [vmem:[%s1 + $0x7a4] sm:$0xf]
    %v519 = vld [vmem:[%s1 + $0x7a8] sm:$0xf]
    %v520 = vld [vmem:[%s1 + $0x7ac] sm:$0xf]
    %v521 = vld [vmem:[%s1 + $0x7b0] sm:$0xf]
    %v522 = vld [vmem:[%s1 + $0x7b4] sm:$0xf]
    %v523 = vld [vmem:[%s1 + $0x7b8] sm:$0xf]
    %v524 = vld [vmem:[%s1 + $0x7bc] sm:$0xf]
    %v525 = vld [vmem:[%s1 + $0x7c0] sm:$0xf]
    %v526 = vld [vmem:[%s1 + $0x7c4] sm:$0xf]
    %v527 = vld [vmem:[%s1 + $0x7c8] sm:$0xf]
    %v528 = vld [vmem:[%s1 + $0x7cc] sm:$0xf]
    %v529 = vld [vmem:[%s1 + $0x7d0] sm:$0xf]
    %v530 = vld [vmem:[%s1 + $0x7d4] sm:$0xf]
    %v531 = vld [vmem:[%s1 + $0x7d8] sm:$0xf]
    %v532 = vld [vmem:[%s1 + $0x7dc] sm:$0xf]
    %v533 = vld [vmem:[%s1 + $0x7e0] sm:$0xf]
    %v534 = vld [vmem:[%s1 + $0x7e4] sm:$0xf]
    %v535 = vld [vmem:[%s1 + $0x7e8] sm:$0xf]
    %v536 = vld [vmem:[%s1 + $0x7ec] sm:$0xf]
    %v537 = vld [vmem:[%s1 + $0x7f0] sm:$0xf]
    %v538 = vld [vmem:[%s1 + $0x7f4] sm:$0xf]
    %v539 = vld [vmem:[%s1 + $0x7f8] sm:$0xf]
    %v540 = vld [vmem:[%s1 + $0x7fc] sm:$0xf]
    %v541 = vld [vmem:[%s1 + $0x800] sm:$0xf]
    %v542 = vld [vmem:[%s1 + $0x804] sm:$0xf]
    %v543 = vld [vmem:[%s1 + $0x808] sm:$0xf]
    %v544 = vld [vmem:[%s1 + $0x80c] sm:$0xf]
    %v545 = vld [vmem:[%s1 + $0x810] sm:$0xf]
    %v546 = vld [vmem:[%s1 + $0x814] sm:$0xf]
    %v547 = vld [vmem:[%s1 + $0x818] sm:$0xf]
    %v548 = vld [vmem:[%s1 + $0x81c] sm:$0xf]
    %v549 = vld [vmem:[%s1 + $0x820] sm:$0xf]
    %v550 = vld [vmem:[%s1 + $0x824] sm:$0xf]
    %v551 = vld [vmem:[%s1 + $0x828] sm:$0xf]
    %v552 = vld [vmem:[%s1 + $0x82c] sm:$0xf]
    %v553 = vld [vmem:[%s1 + $0x830] sm:$0xf]
    %v554 = vld [vmem:[%s1 + $0x834] sm:$0xf]
    %v555 = vld [vmem:[%s1 + $0x838] sm:$0xf]
    %v556 = vld [vmem:[%s1 + $0x83c] sm:$0xf]
    %v557 = vld [vmem:[%s1 + $0x840] sm:$0xf]
    %v558 = vld [vmem:[%s1 + $0x844] sm:$0xf]
    %v559 = vld [vmem:[%s1 + $0x848] sm:$0xf]
    %v560 = vld [vmem:[%s1 + $0x84c] sm:$0xf]
    %v561 = vld [vmem:[%s1 + $0x850] sm:$0xf]
    %v562 = vld [vmem:[%s1 + $0x854] sm:$0xf]
    %v563 = vld [vmem:[%s1 + $0x858] sm:$0xf]
    %v564 = vld [vmem:[%s1 + $0x85c] sm:$0xf]
    %v565 = vld [vmem:[%s1 + $0x860] sm:$0xf]
    %v566 = vld [vmem:[%s1 + $0x864] sm:$0xf]
    %v567 = vld [vmem:[%s1 + $0x868] sm:$0xf]
    %v568 = vld [vmem:[%s1 + $0x86c] sm:$0xf]
    %v569 = vld [vmem:[%s1 + $0x870] sm:$0xf]
    %v570 = vld [vmem:[%s1 + $0x874] sm:$0xf]
    %v571 = vld [vmem:[%s1 + $0x878] sm:$0xf]
    %v572 = vld [vmem:[%s1 + $0x87c] sm:$0xf]
    %v573 = vld [vmem:[%s1 + $0x880] sm:$0xf]
    %v574 = vld [vmem:[%s1 + $0x884] sm:$0xf]
    %v575 = vld [vmem:[%s1 + $0x888] sm:$0xf]
    %v576 = vld [vmem:[%s1 + $0x88c] sm:$0xf]
    %v577 = vld [vmem:[%s1 + $0x890] sm:$0xf]
    %v578 = vld [vmem:[%s1 + $0x894] sm:$0xf]
    %v579 = vld [vmem:[%s1 + $0x898] sm:$0xf]
    %v580 = vld [vmem:[%s1 + $0x89c] sm:$0xf]
    %v581 = vld [vmem:[%s1 + $0x8a0] sm:$0xf]
    %v582 = vld [vmem:[%s1 + $0x8a4] sm:$0xf]
    %v583 = vld [vmem:[%s1 + $0x8a8] sm:$0xf]
    %v584 = vld [vmem:[%s1 + $0x8ac] sm:$0xf]
    %v585 = vld [vmem:[%s1 + $0x8b0] sm:$0xf]
    %v586 = vld [vmem:[%s1 + $0x8b4] sm:$0xf]
    %v587 = vld [vmem:[%s1 + $0x8b8] sm:$0xf]
    %v588 = vld [vmem:[%s1 + $0x8bc] sm:$0xf]
    %v589 = vld [vmem:[%s1 + $0x8c0] sm:$0xf]
    %v590 = vld [vmem:[%s1 + $0x8c4] sm:$0xf]
    %v591 = vld [vmem:[%s1 + $0x8c8] sm:$0xf]
    %v592 = vld [vmem:[%s1 + $0x8cc] sm:$0xf]
    %v593 = vld [vmem:[%s1 + $0x8d0] sm:$0xf]
    %v594 = vld [vmem:[%s1 + $0x8d4] sm:$0xf]
    %v595 = vld [vmem:[%s1 + $0x8d8] sm:$0xf]
    %v596 = vld [vmem:[%s1 + $0x8dc] sm:$0xf]
    %v597 = vld [vmem:[%s1 + $0x8e0] sm:$0xf]
    %v598 = vld [vmem:[%s1 + $0x8e4] sm:$0xf]
    %v599 = vld [vmem:[%s1 + $0x8e8] sm:$0xf]
    %v600 = vld [vmem:[%s1 + $0x8ec] sm:$0xf]
    %v601 = vld [vmem:[%s1 + $0x8f0] sm:$0xf]
    %v602 = vld [vmem:[%s1 + $0x8f4] sm:$0xf]
    %v603 = vld [vmem:[%s1 + $0x8f8] sm:$0xf]
    %v604 = vld [vmem:[%s1 + $0x8fc] sm:$0xf]
    %v605 = vld [vmem:[%s1 + $0x900] sm:$0xf]
    %v606 = vld [vmem:[%s1 + $0x904] sm:$0xf]
    %v607 = vld [vmem:[%s1 + $0x908] sm:$0xf]
    %v608 = vld [vmem:[%s1 + $0x90c] sm:$0xf]
    %v609 = vld [vmem:[%s1 + $0x910] sm:$0xf]
    %v610 = vld [vmem:[%s1 + $0x914] sm:$0xf]
    %v611 = vld [vmem:[%s1 + $0x918] sm:$0xf]
    %v612 = vld [vmem:[%s1 + $0x91c] sm:$0xf]
    %v613 = vld [vmem:[%s1 + $0x920] sm:$0xf]
    %v614 = vld [vmem:[%s1 + $0x924] sm:$0xf]
    %v615 = vld [vmem:[%s1 + $0x928] sm:$0xf]
    %v616 = vld [vmem:[%s1 + $0x92c] sm:$0xf]
    %v617 = vld [vmem:[%s1 + $0x930] sm:$0xf]
    %v618 = vld [vmem:[%s1 + $0x934] sm:$0xf]
    %v619 = vld [vmem:[%s1 + $0x938] sm:$0xf]
    %v620 = vld [vmem:[%s1 + $0x93c] sm:$0xf]
    %v621 = vld [vmem:[%s1 + $0x940] sm:$0xf]
    %v622 = vld [vmem:[%s1 + $0x944] sm:$0xf]
    %v623 = vld [vmem:[%s1 + $0x948] sm:$0xf]
    %v624 = vld [vmem:[%s1 + $0x94c] sm:$0xf]
    %v625 = vld [vmem:[%s1 + $0x950] sm:$0xf]
    %v626 = vld [vmem:[%s1 + $0x954] sm:$0xf]
    %v627 = vld [vmem:[%s1 + $0x958] sm:$0xf]
    %v628 = vld [vmem:[%s1 + $0x95c] sm:$0xf]
    %v629 = vld [vmem:[%s1 + $0x960] sm:$0xf]
    %v630 = vld [vmem:[%s1 + $0x964] sm:$0xf]
    %v631 = vld [vmem:[%s1 + $0x968] sm:$0xf]
    %v632 = vld [vmem:[%s1 + $0x96c] sm:$0xf]
    %v633 = vld [vmem:[%s1 + $0x970] sm:$0xf]
    %v634 = vld [vmem:[%s1 + $0x974] sm:$0xf]
    %v635 = vld [vmem:[%s1 + $0x978] sm:$0xf]
    %v636 = vld [vmem:[%s1 + $0x97c] sm:$0xf]
    %v637 = vld [vmem:[%s1 + $0x980] sm:$0xf]
    %v638 = vld [vmem:[%s1 + $0x984] sm:$0xf]
    %v639 = vld [vmem:[%s1 + $0x988] sm:$0xf]
    %v640 = vld [vmem:[%s1 + $0x98c] sm:$0xf]
    %v641 = vld [vmem:[%s1 + $0x990] sm:$0xf]
    %v642 = vld [vmem:[%s1 + $0x994] sm:$0xf]
    %v643 = vld [vmem:[%s1 + $0x998] sm:$0xf]
    %v644 = vld [vmem:[%s1 + $0x99c] sm:$0xf]
    %v645 = vld [vmem:[%s1 + $0x9a0] sm:$0xf]
    %v646 = vld [vmem:[%s1 + $0x9a4] sm:$0xf]
    %v647 = vld [vmem:[%s1 + $0x9a8] sm:$0xf]
    %v648 = vld [vmem:[%s1 + $0x9ac] sm:$0xf]
    %v649 = vld [vmem:[%s1 + $0x9b0] sm:$0xf]
    %v650 = vld [vmem:[%s1 + $0x9b4] sm:$0xf]
    %v651 = vld [vmem:[%s1 + $0x9b8] sm:$0xf]
    %v652 = vld [vmem:[%s1 + $0x9bc] sm:$0xf]
    %v653 = vld [vmem:[%s1 + $0x9c0] sm:$0xf]
    %v654 = vld [vmem:[%s1 + $0x9c4] sm:$0xf]
    %v655 = vld [vmem:[%s1 + $0x9c8] sm:$0xf]
    %v656 = vld [vmem:[%s1 + $0x9cc] sm:$0xf]
    %v657 = vld [vmem:[%s1 + $0x9d0] sm:$0xf]
    %v658 = vld [vmem:[%s1 + $0x9d4] sm:$0xf]
    %v659 = vld [vmem:[%s1 + $0x9d8] sm:$0xf]
    %v660 = vld [vmem:[%s1 + $0x9dc] sm:$0xf]
    %v661 = vld [vmem:[%s1 + $0x9e0] sm:$0xf]
    %v662 = vld [vmem:[%s1 + $0x9e4] sm:$0xf]
    %v663 = vld [vmem:[%s1 + $0x9e8] sm:$0xf]
    %v664 = vld [vmem:[%s1 + $0x9ec] sm:$0xf]
    %v665 = vld [vmem:[%s1 + $0x9f0] sm:$0xf]
    %v666 = vld [vmem:[%s1 + $0x9f4] sm:$0xf]
    %v667 = vld [vmem:[%s1 + $0x9f8] sm:$0xf]
    %v668 = vld [vmem:[%s1 + $0x9fc] sm:$0xf]
    %v669 = vld [vmem:[%s1 + $0xa00] sm:$0xf]
    %v670 = vld [vmem:[%s1 + $0xa04] sm:$0xf]
    %v671 = vld [vmem:[%s1 + $0xa08] sm:$0xf]
    %v672 = vld [vmem:[%s1 + $0xa0c] sm:$0xf]
    %v673 = vld [vmem:[%s1 + $0xa10] sm:$0xf]
    %v674 = vld [vmem:[%s1 + $0xa14] sm:$0xf]
    %v675 = vld [vmem:[%s1 + $0xa18] sm:$0xf]
    %v676 = vld [vmem:[%s1 + $0xa1c] sm:$0xf]
    %v677 = vld [vmem:[%s1 + $0xa20] sm:$0xf]
    %v678 = vld [vmem:[%s1 + $0xa24] sm:$0xf]
    %v679 = vld [vmem:[%s1 + $0xa28] sm:$0xf]
    %v680 = vld [vmem:[%s1 + $0xa2c] sm:$0xf]
    %v681 = vld [vmem:[%s1 + $0xa30] sm:$0xf]
    %v682 = vld [vmem:[%s1 + $0xa34] sm:$0xf]
    %v683 = vld [vmem:[%s1 + $0xa38] sm:$0xf]
    %v684 = vld [vmem:[%s1 + $0xa3c] sm:$0xf]
    %v685 = vld [vmem:[%s1 + $0xa40] sm:$0xf]
    %v686 = vld [vmem:[%s1 + $0xa44] sm:$0xf]
    %v687 = vld [vmem:[%s1 + $0xa48] sm:$0xf]
    %v688 = vld [vmem:[%s1 + $0xa4c] sm:$0xf]
    %v689 = vld [vmem:[%s1 + $0xa50] sm:$0xf]
    %v690 = vld [vmem:[%s1 + $0xa54] sm:$0xf]
    %v691 = vld [vmem:[%s1 + $0xa58] sm:$0xf]
    %v692 = vld [vmem:[%s1 + $0xa5c] sm:$0xf]
    %v693 = vld [vmem:[%s1 + $0xa60] sm:$0xf]
    %v694 = vld [vmem:[%s1 + $0xa64] sm:$0xf]
    %v695 = vld [vmem:[%s1 + $0xa68] sm:$0xf]
    %v696 = vld [vmem:[%s1 + $0xa6c] sm:$0xf]
    %v697 = vld [vmem:[%s1 + $0xa70] sm:$0xf]
    %v698 = vld [vmem:[%s1 + $0xa74] sm:$0xf]
    %v699 = vld [vmem:[%s1 + $0xa78] sm:$0xf]
    %v700 = vld [vmem:[%s1 + $0xa7c] sm:$0xf]
    %v701 = vld [vmem:[%s1 + $0xa80] sm:$0xf]
    %v702 = vld [vmem:[%s1 + $0xa84] sm:$0xf]
    %v703 = vld [vmem:[%s1 + $0xa88] sm:$0xf]
    %v704 = vld [vmem:[%s1 + $0xa8c] sm:$0xf]
    %v705 = vld [vmem:[%s1 + $0xa90] sm:$0xf]
    %v706 = vld [vmem:[%s1 + $0xa94] sm:$0xf]
    %v707 = vld [vmem:[%s1 + $0xa98] sm:$0xf]
    %v708 = vld [vmem:[%s1 + $0xa9c] sm:$0xf]
    %v709 = vld [vmem:[%s1 + $0xaa0] sm:$0xf]
    %v710 = vld [vmem:[%s1 + $0xaa4] sm:$0xf]
    %v711 = vld [vmem:[%s1 + $0xaa8] sm:$0xf]
    %v712 = vld [vmem:[%s1 + $0xaac] sm:$0xf]
    %v713 = vld [vmem:[%s1 + $0xab0] sm:$0xf]
    %v714 = vld [vmem:[%s1 + $0xab4] sm:$0xf]
    %v715 = vld [vmem:[%s1 + $0xab8] sm:$0xf]
    %v716 = vld [vmem:[%s1 + $0xabc] sm:$0xf]
    %v717 = vld [vmem:[%s1 + $0xac0] sm:$0xf]
    %v718 = vld [vmem:[%s1 + $0xac4] sm:$0xf]
    %v719 = vld [vmem:[%s1 + $0xac8] sm:$0xf]
    %v720 = vld [vmem:[%s1 + $0xacc] sm:$0xf]
    %v721 = vld [vmem:[%s1 + $0xad0] sm:$0xf]
    %v722 = vld [vmem:[%s1 + $0xad4] sm:$0xf]
    %v723 = vld [vmem:[%s1 + $0xad8] sm:$0xf]
    %v724 = vld [vmem:[%s1 + $0xadc] sm:$0xf]
    %v725 = vld [vmem:[%s1 + $0xae0] sm:$0xf]
    %v726 = vld [vmem:[%s1 + $0xae4] sm:$0xf]
    %v727 = vld [vmem:[%s1 + $0xae8] sm:$0xf]
    %v728 = vld [vmem:[%s1 + $0xaec] sm:$0xf]
    %v729 = vld [vmem:[%s1 + $0xaf0] sm:$0xf]
    %v730 = vld [vmem:[%s1 + $0xaf4] sm:$0xf]
    %v731 = vld [vmem:[%s1 + $0xaf8] sm:$0xf]
    %v732 = vld [vmem:[%s1 + $0xafc] sm:$0xf]
    %v733 = vld [vmem:[%s1 + $0xb00] sm:$0xf]
    %v734 = vld [vmem:[%s1 + $0xb04] sm:$0xf]
    %v735 = vld [vmem:[%s1 + $0xb08] sm:$0xf]
    %v736 = vld [vmem:[%s1 + $0xb0c] sm:$0xf]
    %v737 = vld [vmem:[%s1 + $0xb10] sm:$0xf]
    %v738 = vld [vmem:[%s1 + $0xb14] sm:$0xf]
    %v739 = vld [vmem:[%s1 + $0xb18] sm:$0xf]
    %v740 = vld [vmem:[%s1 + $0xb1c] sm:$0xf]
    %v741 = vld [vmem:[%s1 + $0xb20] sm:$0xf]
    %v742 = vld [vmem:[%s1 + $0xb24] sm:$0xf]
    %v743 = vld [vmem:[%s1 + $0xb28] sm:$0xf]
    %v744 = vld [vmem:[%s1 + $0xb2c] sm:$0xf]
    %v745 = vld [vmem:[%s1 + $0xb30] sm:$0xf]
    %v746 = vld [vmem:[%s1 + $0xb34] sm:$0xf]
    %v747 = vld [vmem:[%s1 + $0xb38] sm:$0xf]
    %v748 = vld [vmem:[%s1 + $0xb3c] sm:$0xf]
    %v749 = vld [vmem:[%s1 + $0xb40] sm:$0xf]
    %v750 = vld [vmem:[%s1 + $0xb44] sm:$0xf]
    %v751 = vld [vmem:[%s1 + $0xb48] sm:$0xf]
    %v752 = vld [vmem:[%s1 + $0xb4c] sm:$0xf]
    %v753 = vld [vmem:[%s1 + $0xb50] sm:$0xf]
    %v754 = vld [vmem:[%s1 + $0xb54] sm:$0xf]
    %v755 = vld [vmem:[%s1 + $0xb58] sm:$0xf]
    %v756 = vld [vmem:[%s1 + $0xb5c] sm:$0xf]
    %v757 = vld [vmem:[%s1 + $0xb60] sm:$0xf]
    %v758 = vld [vmem:[%s1 + $0xb64] sm:$0xf]
    %v759 = vld [vmem:[%s1 + $0xb68] sm:$0xf]
    %v760 = vld [vmem:[%s1 + $0xb6c] sm:$0xf]
    %v761 = vld [vmem:[%s1 + $0xb70] sm:$0xf]
    %v762 = vld [vmem:[%s1 + $0xb74] sm:$0xf]
    %v763 = vld [vmem:[%s1 + $0xb78] sm:$0xf]
    %v764 = vld [vmem:[%s1 + $0xb7c] sm:$0xf]
    %v765 = vld [vmem:[%s1 + $0xb80] sm:$0xf]
    %v766 = vld [vmem:[%s1 + $0xb84] sm:$0xf]
    %v767 = vld [vmem:[%s1 + $0xb88] sm:$0xf]
    %v768 = vld [vmem:[%s1 + $0xb8c] sm:$0xf]
    %v769 = vld [vmem:[%s1 + $0xb90] sm:$0xf]
    %v770 = vld [vmem:[%s1 + $0xb94] sm:$0xf]
    %v771 = vld [vmem:[%s1 + $0xb98] sm:$0xf]
    %v772 = vld [vmem:[%s1 + $0xb9c] sm:$0xf]
    %v773 = vld [vmem:[%s1 + $0xba0] sm:$0xf]
    %v774 = vld [vmem:[%s1 + $0xba4] sm:$0xf]
    %v775 = vld [vmem:[%s1 + $0xba8] sm:$0xf]
    %v776 = vld [vmem:[%s1 + $0xbac] sm:$0xf]
    %v777 = vld [vmem:[%s1 + $0xbb0] sm:$0xf]
    %v778 = vld [vmem:[%s1 + $0xbb4] sm:$0xf]
    %v779 = vld [vmem:[%s1 + $0xbb8] sm:$0xf]
    %v780 = vld [vmem:[%s1 + $0xbbc] sm:$0xf]
    %v781 = vld [vmem:[%s1 + $0xbc0] sm:$0xf]
    %v782 = vld [vmem:[%s1 + $0xbc4] sm:$0xf]
    %v783 = vld [vmem:[%s1 + $0xbc8] sm:$0xf]
    %v784 = vld [vmem:[%s1 + $0xbcc] sm:$0xf]
    %v785 = vld [vmem:[%s1 + $0xbd0] sm:$0xf]
    %v786 = vld [vmem:[%s1 + $0xbd4] sm:$0xf]
    %v787 = vld [vmem:[%s1 + $0xbd8] sm:$0xf]
    %v788 = vld [vmem:[%s1 + $0xbdc] sm:$0xf]
    %v789 = vld [vmem:[%s1 + $0xbe0] sm:$0xf]
    %v790 = vld [vmem:[%s1 + $0xbe4] sm:$0xf]
    %v791 = vld [vmem:[%s1 + $0xbe8] sm:$0xf]
    %v792 = vld [vmem:[%s1 + $0xbec] sm:$0xf]
    %v793 = vld [vmem:[%s1 + $0xbf0] sm:$0xf]
    %v794 = vld [vmem:[%s1 + $0xbf4] sm:$0xf]
    %v795 = vld [vmem:[%s1 + $0xbf8] sm:$0xf]
    %v796 = vld [vmem:[%s1 + $0xbfc] sm:$0xf]
    %v797 = vld [vmem:[%s1 + $0xc00] sm:$0xf]
    %v798 = vld [vmem:[%s1 + $0xc04] sm:$0xf]
    %v799 = vld [vmem:[%s1 + $0xc08] sm:$0xf]
    %v800 = vld [vmem:[%s1 + $0xc0c] sm:$0xf]
    %v801 = vld [vmem:[%s1 + $0xc10] sm:$0xf]
    %v802 = vld [vmem:[%s1 + $0xc14] sm:$0xf]
    %v803 = vld [vmem:[%s1 + $0xc18] sm:$0xf]
    %v804 = vld [vmem:[%s1 + $0xc1c] sm:$0xf]
    %v805 = vld [vmem:[%s1 + $0xc20] sm:$0xf]
    %v806 = vld [vmem:[%s1 + $0xc24] sm:$0xf]
    %v807 = vld [vmem:[%s1 + $0xc28] sm:$0xf]
    %v808 = vld [vmem:[%s1 + $0xc2c] sm:$0xf]
    %v809 = vld [vmem:[%s1 + $0xc30] sm:$0xf]
    %v810 = vld [vmem:[%s1 + $0xc34] sm:$0xf]
    %v811 = vld [vmem:[%s1 + $0xc38] sm:$0xf]
    %v812 = vld [vmem:[%s1 + $0xc3c] sm:$0xf]
    %v813 = vld [vmem:[%s2] sm:$0x1]
    %v815 = vlaneseq
    %v816 = vshrl.u32 %v815, 7
    %v817 = vsub.s32 0, %v816
    %v818 = vrot.slane %v813, %v817
    %v827 = vcombine.high %v22, %v22
    %v829 = vunpack.c.l.s4 1966171168
    %v830 = vunpack.c.0.s8 %v829
    %v831 = vlaneseq
    %v832 = vshrl.u32 %v831, 7
    %v833 = vsub.s32 %v830, %v832
    %v834 = vrot.slane %v22, %v833
    %v836 = vunpack.c.l.s4 1966171168
    %v837 = vunpack.c.0.s8 %v836
    %v838 = vlaneseq
    %v839 = vshrl.u32 %v838, 7
    %v840 = vsub.s32 %v837, %v839
    %v841 = vrot.slane %v827, %v840
    %v842 = vcombine.high %v834, %v834
    %v843 = vcombine.high %v841, %v841
    %v845 = vunpack.c.l.s4 1966171168
    %v846 = vunpack.c.0.s8 %v845
    %v847 = vlaneseq
    %v848 = vshrl.u32 %v847, 7
    %v849 = vsub.s32 %v846, %v848
    %v850 = vrot.slane %v834, %v849
    %v852 = vunpack.c.l.s4 1966171168
    %v853 = vunpack.c.0.s8 %v852
    %v854 = vlaneseq
    %v855 = vshrl.u32 %v854, 7
    %v856 = vsub.s32 %v853, %v855
    %v857 = vrot.slane %v841, %v856
    %v859 = vunpack.c.l.s4 1966171168
    %v860 = vunpack.c.0.s8 %v859
    %v861 = vlaneseq
    %v862 = vshrl.u32 %v861, 7
    %v863 = vsub.s32 %v860, %v862
    %v864 = vrot.slane %v842, %v863
    %v866 = vunpack.c.l.s4 1966171168
    %v867 = vunpack.c.0.s8 %v866
    %v868 = vlaneseq
    %v869 = vshrl.u32 %v868, 7
    %v870 = vsub.s32 %v867, %v869
    %v871 = vrot.slane %v843, %v870
    %v872 = vcombine.high %v850, %v850
    %v873 = vcombine.high %v857, %v857
    %v874 = vcombine.high %v864, %v864
    %v875 = vcombine.high %v871, %v871
    %v876 = vcombine.high %v23, %v23
    %v878 = vunpack.c.l.s4 1966171168
    %v879 = vunpack.c.0.s8 %v878
    %v880 = vlaneseq
    %v881 = vshrl.u32 %v880, 7
    %v882 = vsub.s32 %v879, %v881
    %v883 = vrot.slane %v23, %v882
    %v885 = vunpack.c.l.s4 1966171168
    %v886 = vunpack.c.0.s8 %v885
    %v887 = vlaneseq
    %v888 = vshrl.u32 %v887, 7
    %v889 = vsub.s32 %v886, %v888
    %v890 = vrot.slane %v876, %v889
    %v891 = vcombine.high %v883, %v883
    %v892 = vcombine.high %v890, %v890
    %v894 = vunpack.c.l.s4 1966171168
    %v895 = vunpack.c.0.s8 %v894
    %v896 = vlaneseq
    %v897 = vshrl.u32 %v896, 7
    %v898 = vsub.s32 %v895, %v897
    %v899 = vrot.slane %v883, %v898
    %v901 = vunpack.c.l.s4 1966171168
    %v902 = vunpack.c.0.s8 %v901
    %v903 = vlaneseq
    %v904 = vshrl.u32 %v903, 7
    %v905 = vsub.s32 %v902, %v904
    %v906 = vrot.slane %v890, %v905
    %v908 = vunpack.c.l.s4 1966171168
    %v909 = vunpack.c.0.s8 %v908
    %v910 = vlaneseq
    %v911 = vshrl.u32 %v910, 7
    %v912 = vsub.s32 %v909, %v911
    %v913 = vrot.slane %v891, %v912
    %v915 = vunpack.c.l.s4 1966171168
    %v916 = vunpack.c.0.s8 %v915
    %v917 = vlaneseq
    %v918 = vshrl.u32 %v917, 7
    %v919 = vsub.s32 %v916, %v918
    %v920 = vrot.slane %v892, %v919
    %v921 = vcombine.high %v899, %v899
    %v922 = vcombine.high %v906, %v906
    %v923 = vcombine.high %v913, %v913
    %v924 = vcombine.high %v920, %v920
    %v925 = vcombine.high %v24, %v24
    %v927 = vunpack.c.l.s4 1966171168
    %v928 = vunpack.c.0.s8 %v927
    %v929 = vlaneseq
    %v930 = vshrl.u32 %v929, 7
    %v931 = vsub.s32 %v928, %v930
    %v932 = vrot.slane %v24, %v931
    %v934 = vunpack.c.l.s4 1966171168
    %v935 = vunpack.c.0.s8 %v934
    %v936 = vlaneseq
    %v937 = vshrl.u32 %v936, 7
    %v938 = vsub.s32 %v935, %v937
    %v939 = vrot.slane %v925, %v938
    %v940 = vcombine.high %v932, %v932
    %v941 = vcombine.high %v939, %v939
    %v943 = vunpack.c.l.s4 1966171168
    %v944 = vunpack.c.0.s8 %v943
    %v945 = vlaneseq
    %v946 = vshrl.u32 %v945, 7
    %v947 = vsub.s32 %v944, %v946
    %v948 = vrot.slane %v932, %v947
    %v950 = vunpack.c.l.s4 1966171168
    %v951 = vunpack.c.0.s8 %v950
    %v952 = vlaneseq
    %v953 = vshrl.u32 %v952, 7
    %v954 = vsub.s32 %v951, %v953
    %v955 = vrot.slane %v939, %v954
    %v957 = vunpack.c.l.s4 1966171168
    %v958 = vunpack.c.0.s8 %v957
    %v959 = vlaneseq
    %v960 = vshrl.u32 %v959, 7
    %v961 = vsub.s32 %v958, %v960
    %v962 = vrot.slane %v940, %v961
    %v964 = vunpack.c.l.s4 1966171168
    %v965 = vunpack.c.0.s8 %v964
    %v966 = vlaneseq
    %v967 = vshrl.u32 %v966, 7
    %v968 = vsub.s32 %v965, %v967
    %v969 = vrot.slane %v941, %v968
    %v970 = vcombine.high %v948, %v948
    %v971 = vcombine.high %v955, %v955
    %v972 = vcombine.high %v962, %v962
    %v973 = vcombine.high %v969, %v969
    %v974 = vcombine.high %v25, %v25
    %v976 = vunpack.c.l.s4 1966171168
    %v977 = vunpack.c.0.s8 %v976
    %v978 = vlaneseq
    %v979 = vshrl.u32 %v978, 7
    %v980 = vsub.s32 %v977, %v979
    %v981 = vrot.slane %v25, %v980
    %v983 = vunpack.c.l.s4 1966171168
    %v984 = vunpack.c.0.s8 %v983
    %v985 = vlaneseq
    %v986 = vshrl.u32 %v985, 7
    %v987 = vsub.s32 %v984, %v986
    %v988 = vrot.slane %v974, %v987
    %v989 = vcombine.high %v981, %v981
    %v990 = vcombine.high %v988, %v988
    %v992 = vunpack.c.l.s4 1966171168
    %v993 = vunpack.c.0.s8 %v992
    %v994 = vlaneseq
    %v995 = vshrl.u32 %v994, 7
    %v996 = vsub.s32 %v993, %v995
    %v997 = vrot.slane %v981, %v996
    %v999 = vunpack.c.l.s4 1966171168
    %v1000 = vunpack.c.0.s8 %v999
    %v1001 = vlaneseq
    %v1002 = vshrl.u32 %v1001, 7
    %v1003 = vsub.s32 %v1000, %v1002
    %v1004 = vrot.slane %v988, %v1003
    %v1006 = vunpack.c.l.s4 1966171168
    %v1007 = vunpack.c.0.s8 %v1006
    %v1008 = vlaneseq
    %v1009 = vshrl.u32 %v1008, 7
    %v1010 = vsub.s32 %v1007, %v1009
    %v1011 = vrot.slane %v989, %v1010
    %v1013 = vunpack.c.l.s4 1966171168
    %v1014 = vunpack.c.0.s8 %v1013
    %v1015 = vlaneseq
    %v1016 = vshrl.u32 %v1015, 7
    %v1017 = vsub.s32 %v1014, %v1016
    %v1018 = vrot.slane %v990, %v1017
    %v1019 = vcombine.high %v997, %v997
    %v1020 = vcombine.high %v1004, %v1004
    %v1021 = vcombine.high %v1011, %v1011
    %v1022 = vcombine.high %v1018, %v1018
    %v1023 = vcombine.high %v26, %v26
    %v1025 = vunpack.c.l.s4 1966171168
    %v1026 = vunpack.c.0.s8 %v1025
    %v1027 = vlaneseq
    %v1028 = vshrl.u32 %v1027, 7
    %v1029 = vsub.s32 %v1026, %v1028
    %v1030 = vrot.slane %v26, %v1029
    %v1032 = vunpack.c.l.s4 1966171168
    %v1033 = vunpack.c.0.s8 %v1032
    %v1034 = vlaneseq
    %v1035 = vshrl.u32 %v1034, 7
    %v1036 = vsub.s32 %v1033, %v1035
    %v1037 = vrot.slane %v1023, %v1036
    %v1038 = vcombine.high %v1030, %v1030
    %v1039 = vcombine.high %v1037, %v1037
    %v1041 = vunpack.c.l.s4 1966171168
    %v1042 = vunpack.c.0.s8 %v1041
    %v1043 = vlaneseq
    %v1044 = vshrl.u32 %v1043, 7
    %v1045 = vsub.s32 %v1042, %v1044
    %v1046 = vrot.slane %v1030, %v1045
    %v1048 = vunpack.c.l.s4 1966171168
    %v1049 = vunpack.c.0.s8 %v1048
    %v1050 = vlaneseq
    %v1051 = vshrl.u32 %v1050, 7
    %v1052 = vsub.s32 %v1049, %v1051
    %v1053 = vrot.slane %v1037, %v1052
    %v1055 = vunpack.c.l.s4 1966171168
    %v1056 = vunpack.c.0.s8 %v1055
    %v1057 = vlaneseq
    %v1058 = vshrl.u32 %v1057, 7
    %v1059 = vsub.s32 %v1056, %v1058
    %v1060 = vrot.slane %v1038, %v1059
    %v1062 = vunpack.c.l.s4 1966171168
    %v1063 = vunpack.c.0.s8 %v1062
    %v1064 = vlaneseq
    %v1065 = vshrl.u32 %v1064, 7
    %v1066 = vsub.s32 %v1063, %v1065
    %v1067 = vrot.slane %v1039, %v1066
    %v1068 = vcombine.high %v1046, %v1046
    %v1069 = vcombine.high %v1053, %v1053
    %v1070 = vcombine.high %v1060, %v1060
    %v1071 = vcombine.high %v1067, %v1067
    %v1072 = vcombine.high %v27, %v27
    %v1074 = vunpack.c.l.s4 1966171168
    %v1075 = vunpack.c.0.s8 %v1074
    %v1076 = vlaneseq
    %v1077 = vshrl.u32 %v1076, 7
    %v1078 = vsub.s32 %v1075, %v1077
    %v1079 = vrot.slane %v27, %v1078
    %v1081 = vunpack.c.l.s4 1966171168
    %v1082 = vunpack.c.0.s8 %v1081
    %v1083 = vlaneseq
    %v1084 = vshrl.u32 %v1083, 7
    %v1085 = vsub.s32 %v1082, %v1084
    %v1086 = vrot.slane %v1072, %v1085
    %v1087 = vcombine.high %v1079, %v1079
    %v1088 = vcombine.high %v1086, %v1086
    %v1090 = vunpack.c.l.s4 1966171168
    %v1091 = vunpack.c.0.s8 %v1090
    %v1092 = vlaneseq
    %v1093 = vshrl.u32 %v1092, 7
    %v1094 = vsub.s32 %v1091, %v1093
    %v1095 = vrot.slane %v1079, %v1094
    %v1097 = vunpack.c.l.s4 1966171168
    %v1098 = vunpack.c.0.s8 %v1097
    %v1099 = vlaneseq
    %v1100 = vshrl.u32 %v1099, 7
    %v1101 = vsub.s32 %v1098, %v1100
    %v1102 = vrot.slane %v1086, %v1101
    %v1104 = vunpack.c.l.s4 1966171168
    %v1105 = vunpack.c.0.s8 %v1104
    %v1106 = vlaneseq
    %v1107 = vshrl.u32 %v1106, 7
    %v1108 = vsub.s32 %v1105, %v1107
    %v1109 = vrot.slane %v1087, %v1108
    %v1111 = vunpack.c.l.s4 1966171168
    %v1112 = vunpack.c.0.s8 %v1111
    %v1113 = vlaneseq
    %v1114 = vshrl.u32 %v1113, 7
    %v1115 = vsub.s32 %v1112, %v1114
    %v1116 = vrot.slane %v1088, %v1115
    %v1117 = vcombine.high %v1095, %v1095
    %v1118 = vcombine.high %v1102, %v1102
    %v1119 = vcombine.high %v1109, %v1109
    %v1120 = vcombine.high %v1116, %v1116
    %v1122 = vunpack.c.l.s4 1966171168
    %v1123 = vunpack.c.0.s8 %v1122
    %v1124 = vlaneseq
    %v1125 = vshrl.u32 %v1124, 7
    %v1126 = vsub.s32 %v1123, %v1125
    %v1127 = vrot.slane %v28, %v1126
    %v1129 = vunpack.c.l.s4 1966171168
    %v1130 = vunpack.c.0.s8 %v1129
    %v1131 = vlaneseq
    %v1132 = vshrl.u32 %v1131, 7
    %v1133 = vsub.s32 %v1130, %v1132
    %v1134 = vrot.slane %v1127, %v1133
    %v1968 = vunpack.c.l.b16 %v29
    %v1969 = vunpack.c.l.b16 %v30
    %v1970 = vunpack.c.l.b16 %v31
    %v1971 = vunpack.c.l.b16 %v32
    %v1972 = vunpack.c.l.b16 %v33
    %v1973 = vunpack.c.l.b16 %v34
    %v1974 = vunpack.c.l.b16 %v35
    %v1975 = vunpack.c.l.b16 %v36
    %v1976 = vunpack.c.l.b16 %v37
    %v1977 = vunpack.c.l.b16 %v38
    %v1978 = vunpack.c.l.b16 %v39
    %v1979 = vunpack.c.l.b16 %v40
    %v1980 = vunpack.c.l.b16 %v41
    %v1981 = vunpack.c.l.b16 %v42
    %v1982 = vunpack.c.l.b16 %v43
    %v1983 = vunpack.c.l.b16 %v44
    %v1984 = vunpack.c.l.b16 %v45
    %v1985 = vunpack.c.l.b16 %v46
    %v1986 = vunpack.c.l.b16 %v47
    %v1987 = vunpack.c.l.b16 %v48
    %v1988 = vunpack.c.l.b16 %v49
    %v1989 = vunpack.c.l.b16 %v50
    %v1990 = vunpack.c.l.b16 %v51
    %v1991 = vunpack.c.l.b16 %v52
    %v1992 = vunpack.c.l.b16 %v53
    %v1993 = vunpack.c.l.b16 %v54
    %v1994 = vunpack.c.l.b16 %v55
    %v1995 = vunpack.c.l.b16 %v56
    %v1996 = vunpack.c.l.b16 %v57
    %v1997 = vunpack.c.l.b16 %v58
    %v1998 = vunpack.c.l.b16 %v59
    %v1999 = vunpack.c.l.b16 %v60
    %v2000 = vunpack.c.l.b16 %v61
    %v2001 = vunpack.c.l.b16 %v62
    %v2002 = vunpack.c.l.b16 %v63
    %v2003 = vunpack.c.l.b16 %v64
    %v2004 = vunpack.c.l.b16 %v65
    %v2005 = vunpack.c.l.b16 %v66
    %v2006 = vunpack.c.l.b16 %v67
    %v2007 = vunpack.c.l.b16 %v68
    %v2008 = vunpack.c.l.b16 %v69
    %v2009 = vunpack.c.l.b16 %v70
    %v2010 = vunpack.c.l.b16 %v71
    %v2011 = vunpack.c.l.b16 %v72
    %v2012 = vunpack.c.l.b16 %v73
    %v2013 = vunpack.c.l.b16 %v74
    %v2014 = vunpack.c.l.b16 %v75
    %v2015 = vunpack.c.l.b16 %v76
    %v2016 = vunpack.c.l.b16 %v77
    %v2017 = vunpack.c.l.b16 %v78
    %v2018 = vunpack.c.l.b16 %v79
    %v2019 = vunpack.c.l.b16 %v80
    %v2020 = vunpack.c.l.b16 %v81
    %v2021 = vunpack.c.l.b16 %v82
    %v2022 = vunpack.c.l.b16 %v83
    %v2023 = vunpack.c.l.b16 %v84
    %v2024 = vunpack.c.l.b16 %v85
    %v2025 = vunpack.c.l.b16 %v86
    %v2026 = vunpack.c.l.b16 %v87
    %v2027 = vunpack.c.l.b16 %v88
    %v2028 = vunpack.c.l.b16 %v89
    %v2029 = vunpack.c.l.b16 %v90
    %v2030 = vunpack.c.l.b16 %v91
    %v2031 = vunpack.c.l.b16 %v92
    %v2032 = vunpack.c.l.b16 %v93
    %v2033 = vunpack.c.l.b16 %v94
    %v2034 = vunpack.c.l.b16 %v95
    %v2035 = vunpack.c.l.b16 %v96
    %v2036 = vunpack.c.l.b16 %v97
    %v2037 = vunpack.c.l.b16 %v98
    %v2038 = vunpack.c.l.b16 %v99
    %v2039 = vunpack.c.l.b16 %v100
    %v2040 = vunpack.c.l.b16 %v101
    %v2041 = vunpack.c.l.b16 %v102
    %v2042 = vunpack.c.l.b16 %v103
    %v2043 = vunpack.c.l.b16 %v104
    %v2044 = vunpack.c.l.b16 %v105
    %v2045 = vunpack.c.l.b16 %v106
    %v2046 = vunpack.c.l.b16 %v107
    %v2047 = vunpack.c.l.b16 %v108
    %v2048 = vunpack.c.l.b16 %v109
    %v2049 = vunpack.c.l.b16 %v110
    %v2050 = vunpack.c.l.b16 %v111
    %v2051 = vunpack.c.l.b16 %v112
    %v2052 = vunpack.c.l.b16 %v113
    %v2053 = vunpack.c.l.b16 %v114
    %v2054 = vunpack.c.l.b16 %v115
    %v2055 = vunpack.c.l.b16 %v116
    %v2056 = vunpack.c.l.b16 %v117
    %v2057 = vunpack.c.l.b16 %v118
    %v2058 = vunpack.c.l.b16 %v119
    %v2059 = vunpack.c.l.b16 %v120
    %v2060 = vunpack.c.l.b16 %v121
    %v2061 = vunpack.c.l.b16 %v122
    %v2062 = vunpack.c.l.b16 %v123
    %v2063 = vunpack.c.l.b16 %v124
    %v2064 = vunpack.c.l.b16 %v125
    %v2065 = vunpack.c.l.b16 %v126
    %v2066 = vunpack.c.l.b16 %v127
    %v2067 = vunpack.c.l.b16 %v128
    %v2068 = vunpack.c.l.b16 %v129
    %v2069 = vunpack.c.l.b16 %v130
    %v2070 = vunpack.c.l.b16 %v131
    %v2071 = vunpack.c.l.b16 %v132
    %v2072 = vunpack.c.l.b16 %v133
    %v2073 = vunpack.c.l.b16 %v134
    %v2074 = vunpack.c.l.b16 %v135
    %v2075 = vunpack.c.l.b16 %v136
    %v2076 = vunpack.c.l.b16 %v137
    %v2077 = vunpack.c.l.b16 %v138
    %v2078 = vunpack.c.l.b16 %v139
    %v2079 = vunpack.c.l.b16 %v140
    %v2080 = vunpack.c.l.b16 %v141
    %v2081 = vunpack.c.l.b16 %v142
    %v2082 = vunpack.c.l.b16 %v143
    %v2083 = vunpack.c.l.b16 %v144
    %v2084 = vunpack.c.l.b16 %v145
    %v2085 = vunpack.c.l.b16 %v146
    %v2086 = vunpack.c.l.b16 %v147
    %v2087 = vunpack.c.l.b16 %v148
    %v2088 = vunpack.c.l.b16 %v149
    %v2089 = vunpack.c.l.b16 %v150
    %v2090 = vunpack.c.l.b16 %v151
    %v2091 = vunpack.c.l.b16 %v152
    %v2092 = vunpack.c.l.b16 %v153
    %v2093 = vunpack.c.l.b16 %v154
    %v2094 = vunpack.c.l.b16 %v155
    %v2095 = vunpack.c.l.b16 %v156
    %v2096 = vunpack.c.l.b16 %v157
    %v2097 = vunpack.c.l.b16 %v158
    %v2098 = vunpack.c.l.b16 %v159
    %v2099 = vunpack.c.l.b16 %v160
    %v2100 = vunpack.c.l.b16 %v161
    %v2101 = vunpack.c.l.b16 %v162
    %v2102 = vunpack.c.l.b16 %v163
    %v2103 = vunpack.c.l.b16 %v164
    %v2104 = vunpack.c.l.b16 %v165
    %v2105 = vunpack.c.l.b16 %v166
    %v2106 = vunpack.c.l.b16 %v167
    %v2107 = vunpack.c.l.b16 %v168
    %v2108 = vunpack.c.l.b16 %v169
    %v2109 = vunpack.c.l.b16 %v170
    %v2110 = vunpack.c.l.b16 %v171
    %v2111 = vunpack.c.l.b16 %v172
    %v2112 = vunpack.c.l.b16 %v173
    %v2113 = vunpack.c.l.b16 %v174
    %v2114 = vunpack.c.l.b16 %v175
    %v2115 = vunpack.c.l.b16 %v176
    %v2116 = vunpack.c.l.b16 %v177
    %v2117 = vunpack.c.l.b16 %v178
    %v2118 = vunpack.c.l.b16 %v179
    %v2119 = vunpack.c.l.b16 %v180
    %v2120 = vunpack.c.l.b16 %v181
    %v2121 = vunpack.c.l.b16 %v182
    %v2122 = vunpack.c.l.b16 %v183
    %v2123 = vunpack.c.l.b16 %v184
    %v2124 = vunpack.c.l.b16 %v185
    %v2125 = vunpack.c.l.b16 %v186
    %v2126 = vunpack.c.l.b16 %v187
    %v2127 = vunpack.c.l.b16 %v188
    %v2128 = vunpack.c.l.b16 %v189
    %v2129 = vunpack.c.l.b16 %v190
    %v2130 = vunpack.c.l.b16 %v191
    %v2131 = vunpack.c.l.b16 %v192
    %v2132 = vunpack.c.l.b16 %v193
    %v2133 = vunpack.c.l.b16 %v194
    %v2134 = vunpack.c.l.b16 %v195
    %v2135 = vunpack.c.l.b16 %v196
    %v2136 = vunpack.c.l.b16 %v197
    %v2137 = vunpack.c.l.b16 %v198
    %v2138 = vunpack.c.l.b16 %v199
    %v2139 = vunpack.c.l.b16 %v200
    %v2140 = vunpack.c.l.b16 %v201
    %v2141 = vunpack.c.l.b16 %v202
    %v2142 = vunpack.c.l.b16 %v203
    %v2143 = vunpack.c.l.b16 %v204
    %v2144 = vunpack.c.l.b16 %v205
    %v2145 = vunpack.c.l.b16 %v206
    %v2146 = vunpack.c.l.b16 %v207
    %v2147 = vunpack.c.l.b16 %v208
    %v2148 = vunpack.c.l.b16 %v209
    %v2149 = vunpack.c.l.b16 %v210
    %v2150 = vunpack.c.l.b16 %v211
    %v2151 = vunpack.c.l.b16 %v212
    %v2152 = vunpack.c.l.b16 %v213
    %v2153 = vunpack.c.l.b16 %v214
    %v2154 = vunpack.c.l.b16 %v215
    %v2155 = vunpack.c.l.b16 %v216
    %v2156 = vunpack.c.l.b16 %v217
    %v2157 = vunpack.c.l.b16 %v218
    %v2158 = vunpack.c.l.b16 %v219
    %v2159 = vunpack.c.l.b16 %v220
    %v2160 = vunpack.c.l.b16 %v221
    %v2161 = vunpack.c.l.b16 %v222
    %v2162 = vunpack.c.l.b16 %v223
    %v2163 = vunpack.c.l.b16 %v224
    %v2164 = vunpack.c.l.b16 %v225
    %v2165 = vunpack.c.l.b16 %v226
    %v2166 = vunpack.c.l.b16 %v227
    %v2167 = vunpack.c.l.b16 %v228
    %v2168 = vunpack.c.l.b16 %v229
    %v2169 = vunpack.c.l.b16 %v230
    %v2170 = vunpack.c.l.b16 %v231
    %v2171 = vunpack.c.l.b16 %v232
    %v2172 = vunpack.c.l.b16 %v233
    %v2173 = vunpack.c.l.b16 %v234
    %v2174 = vunpack.c.l.b16 %v235
    %v2175 = vunpack.c.l.b16 %v236
    %v2176 = vunpack.c.l.b16 %v237
    %v2177 = vunpack.c.l.b16 %v238
    %v2178 = vunpack.c.l.b16 %v239
    %v2179 = vunpack.c.l.b16 %v240
    %v2180 = vunpack.c.l.b16 %v241
    %v2181 = vunpack.c.l.b16 %v242
    %v2182 = vunpack.c.l.b16 %v243
    %v2183 = vunpack.c.l.b16 %v244
    %v2184 = vunpack.c.l.b16 %v245
    %v2185 = vunpack.c.l.b16 %v246
    %v2186 = vunpack.c.l.b16 %v247
    %v2187 = vunpack.c.l.b16 %v248
    %v2188 = vunpack.c.l.b16 %v249
    %v2189 = vunpack.c.l.b16 %v250
    %v2190 = vunpack.c.l.b16 %v251
    %v2191 = vunpack.c.l.b16 %v252
    %v2192 = vunpack.c.l.b16 %v253
    %v2193 = vunpack.c.l.b16 %v254
    %v2194 = vunpack.c.l.b16 %v255
    %v2195 = vunpack.c.l.b16 %v256
    %v2196 = vunpack.c.l.b16 %v257
    %v2197 = vunpack.c.l.b16 %v258
    %v2198 = vunpack.c.l.b16 %v259
    %v2199 = vunpack.c.l.b16 %v260
    %v2200 = vunpack.c.l.b16 %v261
    %v2201 = vunpack.c.l.b16 %v262
    %v2202 = vunpack.c.l.b16 %v263
    %v2203 = vunpack.c.l.b16 %v264
    %v2204 = vunpack.c.l.b16 %v265
    %v2205 = vunpack.c.l.b16 %v266
    %v2206 = vunpack.c.l.b16 %v267
    %v2207 = vunpack.c.l.b16 %v268
    %v2208 = vunpack.c.l.b16 %v269
    %v2209 = vunpack.c.l.b16 %v270
    %v2210 = vunpack.c.l.b16 %v271
    %v2211 = vunpack.c.l.b16 %v272
    %v2212 = vunpack.c.l.b16 %v273
    %v2213 = vunpack.c.l.b16 %v274
    %v2214 = vunpack.c.l.b16 %v275
    %v2215 = vunpack.c.l.b16 %v276
    %v2216 = vunpack.c.l.b16 %v277
    %v2217 = vunpack.c.l.b16 %v278
    %v2218 = vunpack.c.l.b16 %v279
    %v2219 = vunpack.c.l.b16 %v280
    %v2220 = vunpack.c.l.b16 %v281
    %v2221 = vunpack.c.l.b16 %v282
    %v2222 = vunpack.c.l.b16 %v283
    %v2223 = vunpack.c.l.b16 %v284
    %v2224 = vunpack.c.l.b16 %v285
    %v2225 = vunpack.c.l.b16 %v286
    %v2226 = vunpack.c.l.b16 %v287
    %v2227 = vunpack.c.l.b16 %v288
    %v2228 = vunpack.c.l.b16 %v289
    %v2229 = vunpack.c.l.b16 %v290
    %v2230 = vunpack.c.l.b16 %v291
    %v2231 = vunpack.c.l.b16 %v292
    %v2232 = vunpack.c.l.b16 %v293
    %v2233 = vunpack.c.l.b16 %v294
    %v2234 = vunpack.c.l.b16 %v295
    %v2235 = vunpack.c.l.b16 %v296
    %v2236 = vunpack.c.l.b16 %v297
    %v2237 = vunpack.c.l.b16 %v298
    %v2238 = vunpack.c.l.b16 %v299
    %v2239 = vunpack.c.l.b16 %v300
    %v2240 = vunpack.c.l.b16 %v301
    %v2241 = vunpack.c.l.b16 %v302
    %v2242 = vunpack.c.l.b16 %v303
    %v2243 = vunpack.c.l.b16 %v304
    %v2244 = vunpack.c.l.b16 %v305
    %v2245 = vunpack.c.l.b16 %v306
    %v2246 = vunpack.c.l.b16 %v307
    %v2247 = vunpack.c.l.b16 %v308
    %v2248 = vunpack.c.l.b16 %v309
    %v2249 = vunpack.c.l.b16 %v310
    %v2250 = vunpack.c.l.b16 %v311
    %v2251 = vunpack.c.l.b16 %v312
    %v2252 = vunpack.c.l.b16 %v313
    %v2253 = vunpack.c.l.b16 %v314
    %v2254 = vunpack.c.l.b16 %v315
    %v2255 = vunpack.c.l.b16 %v316
    %v2256 = vunpack.c.l.b16 %v317
    %v2257 = vunpack.c.l.b16 %v318
    %v2258 = vunpack.c.l.b16 %v319
    %v2259 = vunpack.c.l.b16 %v320
    %v2260 = vunpack.c.l.b16 %v321
    %v2261 = vunpack.c.l.b16 %v322
    %v2262 = vunpack.c.l.b16 %v323
    %v2263 = vunpack.c.l.b16 %v324
    %v2264 = vunpack.c.l.b16 %v325
    %v2265 = vunpack.c.l.b16 %v326
    %v2266 = vunpack.c.l.b16 %v327
    %v2267 = vunpack.c.l.b16 %v328
    %v2268 = vunpack.c.l.b16 %v329
    %v2269 = vunpack.c.l.b16 %v330
    %v2270 = vunpack.c.l.b16 %v331
    %v2271 = vunpack.c.l.b16 %v332
    %v2272 = vunpack.c.l.b16 %v333
    %v2273 = vunpack.c.l.b16 %v334
    %v2274 = vunpack.c.l.b16 %v335
    %v2275 = vunpack.c.l.b16 %v336
    %v2276 = vunpack.c.l.b16 %v337
    %v2277 = vunpack.c.l.b16 %v338
    %v2278 = vunpack.c.l.b16 %v339
    %v2279 = vunpack.c.l.b16 %v340
    %v2280 = vunpack.c.l.b16 %v341
    %v2281 = vunpack.c.l.b16 %v342
    %v2282 = vunpack.c.l.b16 %v343
    %v2283 = vunpack.c.l.b16 %v344
    %v2284 = vunpack.c.l.b16 %v345
    %v2285 = vunpack.c.l.b16 %v346
    %v2286 = vunpack.c.l.b16 %v347
    %v2287 = vunpack.c.l.b16 %v348
    %v2288 = vunpack.c.l.b16 %v349
    %v2289 = vunpack.c.l.b16 %v350
    %v2290 = vunpack.c.l.b16 %v351
    %v2291 = vunpack.c.l.b16 %v352
    %v2292 = vunpack.c.l.b16 %v353
    %v2293 = vunpack.c.l.b16 %v354
    %v2294 = vunpack.c.l.b16 %v355
    %v2295 = vunpack.c.l.b16 %v356
    %v2296 = vunpack.c.l.b16 %v357
    %v2297 = vunpack.c.l.b16 %v358
    %v2298 = vunpack.c.l.b16 %v359
    %v2299 = vunpack.c.l.b16 %v360
    %v2300 = vunpack.c.l.b16 %v361
    %v2301 = vunpack.c.l.b16 %v362
    %v2302 = vunpack.c.l.b16 %v363
    %v2303 = vunpack.c.l.b16 %v364
    %v2304 = vunpack.c.l.b16 %v365
    %v2305 = vunpack.c.l.b16 %v366
    %v2306 = vunpack.c.l.b16 %v367
    %v2307 = vunpack.c.l.b16 %v368
    %v2308 = vunpack.c.l.b16 %v369
    %v2309 = vunpack.c.l.b16 %v370
    %v2310 = vunpack.c.l.b16 %v371
    %v2311 = vunpack.c.l.b16 %v372
    %v2312 = vunpack.c.l.b16 %v373
    %v2313 = vunpack.c.l.b16 %v374
    %v2314 = vunpack.c.l.b16 %v375
    %v2315 = vunpack.c.l.b16 %v376
    %v2316 = vunpack.c.l.b16 %v377
    %v2317 = vunpack.c.l.b16 %v378
    %v2318 = vunpack.c.l.b16 %v379
    %v2319 = vunpack.c.l.b16 %v380
    %v2320 = vunpack.c.l.b16 %v381
    %v2321 = vunpack.c.l.b16 %v382
    %v2322 = vunpack.c.l.b16 %v383
    %v2323 = vunpack.c.l.b16 %v384
    %v2324 = vunpack.c.l.b16 %v385
    %v2325 = vunpack.c.l.b16 %v386
    %v2326 = vunpack.c.l.b16 %v387
    %v2327 = vunpack.c.l.b16 %v388
    %v2328 = vunpack.c.l.b16 %v389
    %v2329 = vunpack.c.l.b16 %v390
    %v2330 = vunpack.c.l.b16 %v391
    %v2331 = vunpack.c.l.b16 %v392
    %v2332 = vunpack.c.l.b16 %v393
    %v2333 = vunpack.c.l.b16 %v394
    %v2334 = vunpack.c.l.b16 %v395
    %v2335 = vunpack.c.l.b16 %v396
    %v2336 = vunpack.c.l.b16 %v397
    %v2337 = vunpack.c.l.b16 %v398
    %v2338 = vunpack.c.l.b16 %v399
    %v2339 = vunpack.c.l.b16 %v400
    %v2340 = vunpack.c.l.b16 %v401
    %v2341 = vunpack.c.l.b16 %v402
    %v2342 = vunpack.c.l.b16 %v403
    %v2343 = vunpack.c.l.b16 %v404
    %v2344 = vunpack.c.l.b16 %v405
    %v2345 = vunpack.c.l.b16 %v406
    %v2346 = vunpack.c.l.b16 %v407
    %v2347 = vunpack.c.l.b16 %v408
    %v2348 = vunpack.c.l.b16 %v409
    %v2349 = vunpack.c.l.b16 %v410
    %v2350 = vunpack.c.l.b16 %v411
    %v2351 = vunpack.c.l.b16 %v412
    %v2352 = vunpack.c.l.b16 %v413
    %v2353 = vunpack.c.l.b16 %v414
    %v2354 = vunpack.c.l.b16 %v415
    %v2355 = vunpack.c.l.b16 %v416
    %v2356 = vunpack.c.l.b16 %v417
    %v2357 = vunpack.c.l.b16 %v418
    %v2358 = vunpack.c.l.b16 %v419
    %v2359 = vunpack.c.l.b16 %v420
    %v2360 = vunpack.c.l.b16 %v421
    %v2361 = vunpack.c.l.b16 %v422
    %v2362 = vunpack.c.l.b16 %v423
    %v2363 = vunpack.c.l.b16 %v424
    %v2364 = vunpack.c.l.b16 %v425
    %v2365 = vunpack.c.l.b16 %v426
    %v2366 = vunpack.c.l.b16 %v427
    %v2367 = vunpack.c.l.b16 %v428
    %v2368 = vunpack.c.l.b16 %v429
    %v2369 = vunpack.c.l.b16 %v430
    %v2370 = vunpack.c.l.b16 %v431
    %v2371 = vunpack.c.l.b16 %v432
    %v2372 = vunpack.c.l.b16 %v433
    %v2373 = vunpack.c.l.b16 %v434
    %v2374 = vunpack.c.l.b16 %v435
    %v2375 = vunpack.c.l.b16 %v436
    %v2376 = vunpack.c.l.b16 %v437
    %v2377 = vunpack.c.l.b16 %v438
    %v2378 = vunpack.c.l.b16 %v439
    %v2379 = vunpack.c.l.b16 %v440
    %v2380 = vunpack.c.l.b16 %v441
    %v2381 = vunpack.c.l.b16 %v442
    %v2382 = vunpack.c.l.b16 %v443
    %v2383 = vunpack.c.l.b16 %v444
    %v2384 = vunpack.c.l.b16 %v445
    %v2385 = vunpack.c.l.b16 %v446
    %v2386 = vunpack.c.l.b16 %v447
    %v2387 = vunpack.c.l.b16 %v448
    %v2388 = vunpack.c.l.b16 %v449
    %v2389 = vunpack.c.l.b16 %v450
    %v2390 = vunpack.c.l.b16 %v451
    %v2391 = vunpack.c.l.b16 %v452
    %v2392 = vunpack.c.l.b16 %v453
    %v2393 = vunpack.c.l.b16 %v454
    %v2394 = vunpack.c.l.b16 %v455
    %v2395 = vunpack.c.l.b16 %v456
    %v2396 = vunpack.c.l.b16 %v457
    %v2397 = vunpack.c.l.b16 %v458
    %v2398 = vunpack.c.l.b16 %v459
    %v2399 = vunpack.c.l.b16 %v460
    %v2400 = vunpack.c.l.b16 %v461
    %v2401 = vunpack.c.l.b16 %v462
    %v2402 = vunpack.c.l.b16 %v463
    %v2403 = vunpack.c.l.b16 %v464
    %v2404 = vunpack.c.l.b16 %v465
    %v2405 = vunpack.c.l.b16 %v466
    %v2406 = vunpack.c.l.b16 %v467
    %v2407 = vunpack.c.l.b16 %v468
    %v2408 = vunpack.c.l.b16 %v469
    %v2409 = vunpack.c.l.b16 %v470
    %v2410 = vunpack.c.l.b16 %v471
    %v2411 = vunpack.c.l.b16 %v472
    %v2412 = vunpack.c.l.b16 %v473
    %v2413 = vunpack.c.l.b16 %v474
    %v2414 = vunpack.c.l.b16 %v475
    %v2415 = vunpack.c.l.b16 %v476
    %v2416 = vunpack.c.l.b16 %v477
    %v2417 = vunpack.c.l.b16 %v478
    %v2418 = vunpack.c.l.b16 %v479
    %v2419 = vunpack.c.l.b16 %v480
    %v2420 = vunpack.c.l.b16 %v481
    %v2421 = vunpack.c.l.b16 %v482
    %v2422 = vunpack.c.l.b16 %v483
    %v2423 = vunpack.c.l.b16 %v484
    %v2424 = vunpack.c.l.b16 %v485
    %v2425 = vunpack.c.l.b16 %v486
    %v2426 = vunpack.c.l.b16 %v487
    %v2427 = vunpack.c.l.b16 %v488
    %v2428 = vunpack.c.l.b16 %v489
    %v2429 = vunpack.c.l.b16 %v490
    %v2430 = vunpack.c.l.b16 %v491
    %v2431 = vunpack.c.l.b16 %v492
    %v2432 = vunpack.c.l.b16 %v493
    %v2433 = vunpack.c.l.b16 %v494
    %v2434 = vunpack.c.l.b16 %v495
    %v2435 = vunpack.c.l.b16 %v496
    %v2436 = vunpack.c.l.b16 %v497
    %v2437 = vunpack.c.l.b16 %v498
    %v2438 = vunpack.c.l.b16 %v499
    %v2439 = vunpack.c.l.b16 %v500
    %v2440 = vunpack.c.l.b16 %v501
    %v2441 = vunpack.c.l.b16 %v502
    %v2442 = vunpack.c.l.b16 %v503
    %v2443 = vunpack.c.l.b16 %v504
    %v2444 = vunpack.c.l.b16 %v505
    %v2445 = vunpack.c.l.b16 %v506
    %v2446 = vunpack.c.l.b16 %v507
    %v2447 = vunpack.c.l.b16 %v508
    %v2448 = vunpack.c.l.b16 %v509
    %v2449 = vunpack.c.l.b16 %v510
    %v2450 = vunpack.c.l.b16 %v511
    %v2451 = vunpack.c.l.b16 %v512
    %v2452 = vunpack.c.l.b16 %v513
    %v2453 = vunpack.c.l.b16 %v514
    %v2454 = vunpack.c.l.b16 %v515
    %v2455 = vunpack.c.l.b16 %v516
    %v2456 = vunpack.c.l.b16 %v517
    %v2457 = vunpack.c.l.b16 %v518
    %v2458 = vunpack.c.l.b16 %v519
    %v2459 = vunpack.c.l.b16 %v520
    %v2460 = vunpack.c.l.b16 %v521
    %v2461 = vunpack.c.l.b16 %v522
    %v2462 = vunpack.c.l.b16 %v523
    %v2463 = vunpack.c.l.b16 %v524
    %v2464 = vunpack.c.l.b16 %v525
    %v2465 = vunpack.c.l.b16 %v526
    %v2466 = vunpack.c.l.b16 %v527
    %v2467 = vunpack.c.l.b16 %v528
    %v2468 = vunpack.c.l.b16 %v529
    %v2469 = vunpack.c.l.b16 %v530
    %v2470 = vunpack.c.l.b16 %v531
    %v2471 = vunpack.c.l.b16 %v532
    %v2472 = vunpack.c.l.b16 %v533
    %v2473 = vunpack.c.l.b16 %v534
    %v2474 = vunpack.c.l.b16 %v535
    %v2475 = vunpack.c.l.b16 %v536
    %v2476 = vunpack.c.l.b16 %v537
    %v2477 = vunpack.c.l.b16 %v538
    %v2478 = vunpack.c.l.b16 %v539
    %v2479 = vunpack.c.l.b16 %v540
    %v2480 = vunpack.c.l.b16 %v541
    %v2481 = vunpack.c.l.b16 %v542
    %v2482 = vunpack.c.l.b16 %v543
    %v2483 = vunpack.c.l.b16 %v544
    %v2484 = vunpack.c.l.b16 %v545
    %v2485 = vunpack.c.l.b16 %v546
    %v2486 = vunpack.c.l.b16 %v547
    %v2487 = vunpack.c.l.b16 %v548
    %v2488 = vunpack.c.l.b16 %v549
    %v2489 = vunpack.c.l.b16 %v550
    %v2490 = vunpack.c.l.b16 %v551
    %v2491 = vunpack.c.l.b16 %v552
    %v2492 = vunpack.c.l.b16 %v553
    %v2493 = vunpack.c.l.b16 %v554
    %v2494 = vunpack.c.l.b16 %v555
    %v2495 = vunpack.c.l.b16 %v556
    %v2496 = vunpack.c.l.b16 %v557
    %v2497 = vunpack.c.l.b16 %v558
    %v2498 = vunpack.c.l.b16 %v559
    %v2499 = vunpack.c.l.b16 %v560
    %v2500 = vunpack.c.l.b16 %v561
    %v2501 = vunpack.c.l.b16 %v562
    %v2502 = vunpack.c.l.b16 %v563
    %v2503 = vunpack.c.l.b16 %v564
    %v2504 = vunpack.c.l.b16 %v565
    %v2505 = vunpack.c.l.b16 %v566
    %v2506 = vunpack.c.l.b16 %v567
    %v2507 = vunpack.c.l.b16 %v568
    %v2508 = vunpack.c.l.b16 %v569
    %v2509 = vunpack.c.l.b16 %v570
    %v2510 = vunpack.c.l.b16 %v571
    %v2511 = vunpack.c.l.b16 %v572
    %v2512 = vunpack.c.l.b16 %v573
    %v2513 = vunpack.c.l.b16 %v574
    %v2514 = vunpack.c.l.b16 %v575
    %v2515 = vunpack.c.l.b16 %v576
    %v2516 = vunpack.c.l.b16 %v577
    %v2517 = vunpack.c.l.b16 %v578
    %v2518 = vunpack.c.l.b16 %v579
    %v2519 = vunpack.c.l.b16 %v580
    %v2520 = vunpack.c.l.b16 %v581
    %v2521 = vunpack.c.l.b16 %v582
    %v2522 = vunpack.c.l.b16 %v583
    %v2523 = vunpack.c.l.b16 %v584
    %v2524 = vunpack.c.l.b16 %v585
    %v2525 = vunpack.c.l.b16 %v586
    %v2526 = vunpack.c.l.b16 %v587
    %v2527 = vunpack.c.l.b16 %v588
    %v2528 = vunpack.c.l.b16 %v589
    %v2529 = vunpack.c.l.b16 %v590
    %v2530 = vunpack.c.l.b16 %v591
    %v2531 = vunpack.c.l.b16 %v592
    %v2532 = vunpack.c.l.b16 %v593
    %v2533 = vunpack.c.l.b16 %v594
    %v2534 = vunpack.c.l.b16 %v595
    %v2535 = vunpack.c.l.b16 %v596
    %v2536 = vunpack.c.l.b16 %v597
    %v2537 = vunpack.c.l.b16 %v598
    %v2538 = vunpack.c.l.b16 %v599
    %v2539 = vunpack.c.l.b16 %v600
    %v2540 = vunpack.c.l.b16 %v601
    %v2541 = vunpack.c.l.b16 %v602
    %v2542 = vunpack.c.l.b16 %v603
    %v2543 = vunpack.c.l.b16 %v604
    %v2544 = vunpack.c.l.b16 %v605
    %v2545 = vunpack.c.l.b16 %v606
    %v2546 = vunpack.c.l.b16 %v607
    %v2547 = vunpack.c.l.b16 %v608
    %v2548 = vunpack.c.l.b16 %v609
    %v2549 = vunpack.c.l.b16 %v610
    %v2550 = vunpack.c.l.b16 %v611
    %v2551 = vunpack.c.l.b16 %v612
    %v2552 = vunpack.c.l.b16 %v613
    %v2553 = vunpack.c.l.b16 %v614
    %v2554 = vunpack.c.l.b16 %v615
    %v2555 = vunpack.c.l.b16 %v616
    %v2556 = vunpack.c.l.b16 %v617
    %v2557 = vunpack.c.l.b16 %v618
    %v2558 = vunpack.c.l.b16 %v619
    %v2559 = vunpack.c.l.b16 %v620
    %v2560 = vunpack.c.l.b16 %v621
    %v2561 = vunpack.c.l.b16 %v622
    %v2562 = vunpack.c.l.b16 %v623
    %v2563 = vunpack.c.l.b16 %v624
    %v2564 = vunpack.c.l.b16 %v625
    %v2565 = vunpack.c.l.b16 %v626
    %v2566 = vunpack.c.l.b16 %v627
    %v2567 = vunpack.c.l.b16 %v628
    %v2568 = vunpack.c.l.b16 %v629
    %v2569 = vunpack.c.l.b16 %v630
    %v2570 = vunpack.c.l.b16 %v631
    %v2571 = vunpack.c.l.b16 %v632
    %v2572 = vunpack.c.l.b16 %v633
    %v2573 = vunpack.c.l.b16 %v634
    %v2574 = vunpack.c.l.b16 %v635
    %v2575 = vunpack.c.l.b16 %v636
    %v2576 = vunpack.c.l.b16 %v637
    %v2577 = vunpack.c.l.b16 %v638
    %v2578 = vunpack.c.l.b16 %v639
    %v2579 = vunpack.c.l.b16 %v640
    %v2580 = vunpack.c.l.b16 %v641
    %v2581 = vunpack.c.l.b16 %v642
    %v2582 = vunpack.c.l.b16 %v643
    %v2583 = vunpack.c.l.b16 %v644
    %v2584 = vunpack.c.l.b16 %v645
    %v2585 = vunpack.c.l.b16 %v646
    %v2586 = vunpack.c.l.b16 %v647
    %v2587 = vunpack.c.l.b16 %v648
    %v2588 = vunpack.c.l.b16 %v649
    %v2589 = vunpack.c.l.b16 %v650
    %v2590 = vunpack.c.l.b16 %v651
    %v2591 = vunpack.c.l.b16 %v652
    %v2592 = vunpack.c.l.b16 %v653
    %v2593 = vunpack.c.l.b16 %v654
    %v2594 = vunpack.c.l.b16 %v655
    %v2595 = vunpack.c.l.b16 %v656
    %v2596 = vunpack.c.l.b16 %v657
    %v2597 = vunpack.c.l.b16 %v658
    %v2598 = vunpack.c.l.b16 %v659
    %v2599 = vunpack.c.l.b16 %v660
    %v2600 = vunpack.c.l.b16 %v661
    %v2601 = vunpack.c.l.b16 %v662
    %v2602 = vunpack.c.l.b16 %v663
    %v2603 = vunpack.c.l.b16 %v664
    %v2604 = vunpack.c.l.b16 %v665
    %v2605 = vunpack.c.l.b16 %v666
    %v2606 = vunpack.c.l.b16 %v667
    %v2607 = vunpack.c.l.b16 %v668
    %v2608 = vunpack.c.l.b16 %v669
    %v2609 = vunpack.c.l.b16 %v670
    %v2610 = vunpack.c.l.b16 %v671
    %v2611 = vunpack.c.l.b16 %v672
    %v2612 = vunpack.c.l.b16 %v673
    %v2613 = vunpack.c.l.b16 %v674
    %v2614 = vunpack.c.l.b16 %v675
    %v2615 = vunpack.c.l.b16 %v676
    %v2616 = vunpack.c.l.b16 %v677
    %v2617 = vunpack.c.l.b16 %v678
    %v2618 = vunpack.c.l.b16 %v679
    %v2619 = vunpack.c.l.b16 %v680
    %v2620 = vunpack.c.l.b16 %v681
    %v2621 = vunpack.c.l.b16 %v682
    %v2622 = vunpack.c.l.b16 %v683
    %v2623 = vunpack.c.l.b16 %v684
    %v2624 = vunpack.c.l.b16 %v685
    %v2625 = vunpack.c.l.b16 %v686
    %v2626 = vunpack.c.l.b16 %v687
    %v2627 = vunpack.c.l.b16 %v688
    %v2628 = vunpack.c.l.b16 %v689
    %v2629 = vunpack.c.l.b16 %v690
    %v2630 = vunpack.c.l.b16 %v691
    %v2631 = vunpack.c.l.b16 %v692
    %v2632 = vunpack.c.l.b16 %v693
    %v2633 = vunpack.c.l.b16 %v694
    %v2634 = vunpack.c.l.b16 %v695
    %v2635 = vunpack.c.l.b16 %v696
    %v2636 = vunpack.c.l.b16 %v697
    %v2637 = vunpack.c.l.b16 %v698
    %v2638 = vunpack.c.l.b16 %v699
    %v2639 = vunpack.c.l.b16 %v700
    %v2640 = vunpack.c.l.b16 %v701
    %v2641 = vunpack.c.l.b16 %v702
    %v2642 = vunpack.c.l.b16 %v703
    %v2643 = vunpack.c.l.b16 %v704
    %v2644 = vunpack.c.l.b16 %v705
    %v2645 = vunpack.c.l.b16 %v706
    %v2646 = vunpack.c.l.b16 %v707
    %v2647 = vunpack.c.l.b16 %v708
    %v2648 = vunpack.c.l.b16 %v709
    %v2649 = vunpack.c.l.b16 %v710
    %v2650 = vunpack.c.l.b16 %v711
    %v2651 = vunpack.c.l.b16 %v712
    %v2652 = vunpack.c.l.b16 %v713
    %v2653 = vunpack.c.l.b16 %v714
    %v2654 = vunpack.c.l.b16 %v715
    %v2655 = vunpack.c.l.b16 %v716
    %v2656 = vunpack.c.l.b16 %v717
    %v2657 = vunpack.c.l.b16 %v718
    %v2658 = vunpack.c.l.b16 %v719
    %v2659 = vunpack.c.l.b16 %v720
    %v2660 = vunpack.c.l.b16 %v721
    %v2661 = vunpack.c.l.b16 %v722
    %v2662 = vunpack.c.l.b16 %v723
    %v2663 = vunpack.c.l.b16 %v724
    %v2664 = vunpack.c.l.b16 %v725
    %v2665 = vunpack.c.l.b16 %v726
    %v2666 = vunpack.c.l.b16 %v727
    %v2667 = vunpack.c.l.b16 %v728
    %v2668 = vunpack.c.l.b16 %v729
    %v2669 = vunpack.c.l.b16 %v730
    %v2670 = vunpack.c.l.b16 %v731
    %v2671 = vunpack.c.l.b16 %v732
    %v2672 = vunpack.c.l.b16 %v733
    %v2673 = vunpack.c.l.b16 %v734
    %v2674 = vunpack.c.l.b16 %v735
    %v2675 = vunpack.c.l.b16 %v736
    %v2676 = vunpack.c.l.b16 %v737
    %v2677 = vunpack.c.l.b16 %v738
    %v2678 = vunpack.c.l.b16 %v739
    %v2679 = vunpack.c.l.b16 %v740
    %v2680 = vunpack.c.l.b16 %v741
    %v2681 = vunpack.c.l.b16 %v742
    %v2682 = vunpack.c.l.b16 %v743
    %v2683 = vunpack.c.l.b16 %v744
    %v2684 = vunpack.c.l.b16 %v745
    %v2685 = vunpack.c.l.b16 %v746
    %v2686 = vunpack.c.l.b16 %v747
    %v2687 = vunpack.c.l.b16 %v748
    %v2688 = vunpack.c.l.b16 %v749
    %v2689 = vunpack.c.l.b16 %v750
    %v2690 = vunpack.c.l.b16 %v751
    %v2691 = vunpack.c.l.b16 %v752
    %v2692 = vunpack.c.l.b16 %v753
    %v2693 = vunpack.c.l.b16 %v754
    %v2694 = vunpack.c.l.b16 %v755
    %v2695 = vunpack.c.l.b16 %v756
    %v2696 = vunpack.c.l.b16 %v757
    %v2697 = vunpack.c.l.b16 %v758
    %v2698 = vunpack.c.l.b16 %v759
    %v2699 = vunpack.c.l.b16 %v760
    %v2700 = vunpack.c.l.b16 %v761
    %v2701 = vunpack.c.l.b16 %v762
    %v2702 = vunpack.c.l.b16 %v763
    %v2703 = vunpack.c.l.b16 %v764
    %v2704 = vunpack.c.l.b16 %v765
    %v2705 = vunpack.c.l.b16 %v766
    %v2706 = vunpack.c.l.b16 %v767
    %v2707 = vunpack.c.l.b16 %v768
    %v2708 = vunpack.c.l.b16 %v769
    %v2709 = vunpack.c.l.b16 %v770
    %v2710 = vunpack.c.l.b16 %v771
    %v2711 = vunpack.c.l.b16 %v772
    %v2712 = vunpack.c.l.b16 %v773
    %v2713 = vunpack.c.l.b16 %v774
    %v2714 = vunpack.c.l.b16 %v775
    %v2715 = vunpack.c.l.b16 %v776
    %v2716 = vunpack.c.l.b16 %v777
    %v2717 = vunpack.c.l.b16 %v778
    %v2718 = vunpack.c.l.b16 %v779
    %v2719 = vunpack.c.l.b16 %v780
    %v2720 = vunpack.c.l.b16 %v781
    %v2721 = vunpack.c.l.b16 %v782
    %v2722 = vunpack.c.l.b16 %v783
    %v2723 = vunpack.c.l.b16 %v784
    %v2724 = vunpack.c.l.b16 %v785
    %v2725 = vunpack.c.l.b16 %v786
    %v2726 = vunpack.c.l.b16 %v787
    %v2727 = vunpack.c.l.b16 %v788
    %v2728 = vunpack.c.l.b16 %v789
    %v2729 = vunpack.c.l.b16 %v790
    %v2730 = vunpack.c.l.b16 %v791
    %v2731 = vunpack.c.l.b16 %v792
    %v2732 = vunpack.c.l.b16 %v793
    %v2733 = vunpack.c.l.b16 %v794
    %v2734 = vunpack.c.l.b16 %v795
    %v2735 = vunpack.c.l.b16 %v796
    %v2736 = vunpack.c.l.b16 %v797
    %v2737 = vunpack.c.l.b16 %v798
    %v2738 = vunpack.c.l.b16 %v799
    %v2739 = vunpack.c.l.b16 %v800
    %v2740 = vunpack.c.l.b16 %v801
    %v2741 = vunpack.c.l.b16 %v802
    %v2742 = vunpack.c.l.b16 %v803
    %v2743 = vunpack.c.l.b16 %v804
    %v2744 = vunpack.c.l.b16 %v805
    %v2745 = vunpack.c.l.b16 %v806
    %v2746 = vunpack.c.l.b16 %v807
    %v2747 = vunpack.c.l.b16 %v808
    %v2748 = vunpack.c.l.b16 %v809
    %v2749 = vunpack.c.l.b16 %v810
    %v2750 = vunpack.c.l.b16 %v811
    %v2751 = vunpack.c.l.b16 %v812
    %v2752 = vpack.c.b16 %v1969, %v1968
    %v2753 = vpack.c.b16 %v1971, %v1970
    %v2754 = vpack.c.b16 %v1973, %v1972
    %v2755 = vpack.c.b16 %v1975, %v1974
    %v2756 = vpack.c.b16 %v1977, %v1976
    %v2757 = vpack.c.b16 %v1979, %v1978
    %v2758 = vpack.c.b16 %v1981, %v1980
    %v2759 = vpack.c.b16 %v1983, %v1982
    %v2760 = vpack.c.b16 %v1985, %v1984
    %v2761 = vpack.c.b16 %v1987, %v1986
    %v2762 = vpack.c.b16 %v1989, %v1988
    %v2763 = vpack.c.b16 %v1991, %v1990
    %v2764 = vpack.c.b16 %v1993, %v1992
    %v2765 = vpack.c.b16 %v1995, %v1994
    %v2766 = vpack.c.b16 %v1997, %v1996
    %v2767 = vpack.c.b16 %v1999, %v1998
    %v2768 = vpack.c.b16 %v2001, %v2000
    %v2769 = vpack.c.b16 %v2003, %v2002
    %v2770 = vpack.c.b16 %v2005, %v2004
    %v2771 = vpack.c.b16 %v2007, %v2006
    %v2772 = vpack.c.b16 %v2009, %v2008
    %v2773 = vpack.c.b16 %v2011, %v2010
    %v2774 = vpack.c.b16 %v2013, %v2012
    %v2775 = vpack.c.b16 %v2015, %v2014
    %v2776 = vpack.c.b16 %v2017, %v2016
    %v2777 = vpack.c.b16 %v2019, %v2018
    %v2778 = vpack.c.b16 %v2021, %v2020
    %v2779 = vpack.c.b16 %v2023, %v2022
    %v2780 = vpack.c.b16 %v2025, %v2024
    %v2781 = vpack.c.b16 %v2027, %v2026
    %v2782 = vpack.c.b16 %v2029, %v2028
    %v2783 = vpack.c.b16 %v2031, %v2030
    %v2784 = vpack.c.b16 %v2033, %v2032
    %v2785 = vpack.c.b16 %v2035, %v2034
    %v2786 = vpack.c.b16 %v2037, %v2036
    %v2787 = vpack.c.b16 %v2039, %v2038
    %v2788 = vpack.c.b16 %v2041, %v2040
    %v2789 = vpack.c.b16 %v2043, %v2042
    %v2790 = vpack.c.b16 %v2045, %v2044
    %v2791 = vpack.c.b16 %v2047, %v2046
    %v2792 = vpack.c.b16 %v2049, %v2048
    %v2793 = vpack.c.b16 %v2051, %v2050
    %v2794 = vpack.c.b16 %v2053, %v2052
    %v2795 = vpack.c.b16 %v2055, %v2054
    %v2796 = vpack.c.b16 %v2057, %v2056
    %v2797 = vpack.c.b16 %v2059, %v2058
    %v2798 = vpack.c.b16 %v2061, %v2060
    %v2799 = vpack.c.b16 %v2063, %v2062
    %v2800 = vpack.c.b16 %v2065, %v2064
    %v2801 = vpack.c.b16 %v2067, %v2066
    %v2802 = vpack.c.b16 %v2069, %v2068
    %v2803 = vpack.c.b16 %v2071, %v2070
    %v2804 = vpack.c.b16 %v2073, %v2072
    %v2805 = vpack.c.b16 %v2075, %v2074
    %v2806 = vpack.c.b16 %v2077, %v2076
    %v2807 = vpack.c.b16 %v2079, %v2078
    %v2808 = vpack.c.b16 %v2081, %v2080
    %v2809 = vpack.c.b16 %v2083, %v2082
    %v2810 = vpack.c.b16 %v2085, %v2084
    %v2811 = vpack.c.b16 %v2087, %v2086
    %v2812 = vpack.c.b16 %v2089, %v2088
    %v2813 = vpack.c.b16 %v2091, %v2090
    %v2814 = vpack.c.b16 %v2093, %v2092
    %v2815 = vpack.c.b16 %v2095, %v2094
    %v2816 = vpack.c.b16 %v2097, %v2096
    %v2817 = vpack.c.b16 %v2099, %v2098
    %v2818 = vpack.c.b16 %v2101, %v2100
    %v2819 = vpack.c.b16 %v2103, %v2102
    %v2820 = vpack.c.b16 %v2105, %v2104
    %v2821 = vpack.c.b16 %v2107, %v2106
    %v2822 = vpack.c.b16 %v2109, %v2108
    %v2823 = vpack.c.b16 %v2111, %v2110
    %v2824 = vpack.c.b16 %v2113, %v2112
    %v2825 = vpack.c.b16 %v2115, %v2114
    %v2826 = vpack.c.b16 %v2117, %v2116
    %v2827 = vpack.c.b16 %v2119, %v2118
    %v2828 = vpack.c.b16 %v2121, %v2120
    %v2829 = vpack.c.b16 %v2123, %v2122
    %v2830 = vpack.c.b16 %v2125, %v2124
    %v2831 = vpack.c.b16 %v2127, %v2126
    %v2832 = vpack.c.b16 %v2129, %v2128
    %v2833 = vpack.c.b16 %v2131, %v2130
    %v2834 = vpack.c.b16 %v2133, %v2132
    %v2835 = vpack.c.b16 %v2135, %v2134
    %v2836 = vpack.c.b16 %v2137, %v2136
    %v2837 = vpack.c.b16 %v2139, %v2138
    %v2838 = vpack.c.b16 %v2141, %v2140
    %v2839 = vpack.c.b16 %v2143, %v2142
    %v2840 = vpack.c.b16 %v2145, %v2144
    %v2841 = vpack.c.b16 %v2147, %v2146
    %v2842 = vpack.c.b16 %v2149, %v2148
    %v2843 = vpack.c.b16 %v2151, %v2150
    %v2844 = vpack.c.b16 %v2153, %v2152
    %v2845 = vpack.c.b16 %v2155, %v2154
    %v2846 = vpack.c.b16 %v2157, %v2156
    %v2847 = vpack.c.b16 %v2159, %v2158
    %v2848 = vpack.c.b16 %v2161, %v2160
    %v2849 = vpack.c.b16 %v2163, %v2162
    %v2850 = vpack.c.b16 %v2165, %v2164
    %v2851 = vpack.c.b16 %v2167, %v2166
    %v2852 = vpack.c.b16 %v2169, %v2168
    %v2853 = vpack.c.b16 %v2171, %v2170
    %v2854 = vpack.c.b16 %v2173, %v2172
    %v2855 = vpack.c.b16 %v2175, %v2174
    %v2856 = vpack.c.b16 %v2177, %v2176
    %v2857 = vpack.c.b16 %v2179, %v2178
    %v2858 = vpack.c.b16 %v2181, %v2180
    %v2859 = vpack.c.b16 %v2183, %v2182
    %v2860 = vpack.c.b16 %v2185, %v2184
    %v2861 = vpack.c.b16 %v2187, %v2186
    %v2862 = vpack.c.b16 %v2189, %v2188
    %v2863 = vpack.c.b16 %v2191, %v2190
    %v2864 = vpack.c.b16 %v2193, %v2192
    %v2865 = vpack.c.b16 %v2195, %v2194
    %v2866 = vpack.c.b16 %v2197, %v2196
    %v2867 = vpack.c.b16 %v2199, %v2198
    %v2868 = vpack.c.b16 %v2201, %v2200
    %v2869 = vpack.c.b16 %v2203, %v2202
    %v2870 = vpack.c.b16 %v2205, %v2204
    %v2871 = vpack.c.b16 %v2207, %v2206
    %v2872 = vpack.c.b16 %v2209, %v2208
    %v2873 = vpack.c.b16 %v2211, %v2210
    %v2874 = vpack.c.b16 %v2213, %v2212
    %v2875 = vpack.c.b16 %v2215, %v2214
    %v2876 = vpack.c.b16 %v2217, %v2216
    %v2877 = vpack.c.b16 %v2219, %v2218
    %v2878 = vpack.c.b16 %v2221, %v2220
    %v2879 = vpack.c.b16 %v2223, %v2222
    %v2880 = vpack.c.b16 %v2225, %v2224
    %v2881 = vpack.c.b16 %v2227, %v2226
    %v2882 = vpack.c.b16 %v2229, %v2228
    %v2883 = vpack.c.b16 %v2231, %v2230
    %v2884 = vpack.c.b16 %v2233, %v2232
    %v2885 = vpack.c.b16 %v2235, %v2234
    %v2886 = vpack.c.b16 %v2237, %v2236
    %v2887 = vpack.c.b16 %v2239, %v2238
    %v2888 = vpack.c.b16 %v2241, %v2240
    %v2889 = vpack.c.b16 %v2243, %v2242
    %v2890 = vpack.c.b16 %v2245, %v2244
    %v2891 = vpack.c.b16 %v2247, %v2246
    %v2892 = vpack.c.b16 %v2249, %v2248
    %v2893 = vpack.c.b16 %v2251, %v2250
    %v2894 = vpack.c.b16 %v2253, %v2252
    %v2895 = vpack.c.b16 %v2255, %v2254
    %v2896 = vpack.c.b16 %v2257, %v2256
    %v2897 = vpack.c.b16 %v2259, %v2258
    %v2898 = vpack.c.b16 %v2261, %v2260
    %v2899 = vpack.c.b16 %v2263, %v2262
    %v2900 = vpack.c.b16 %v2265, %v2264
    %v2901 = vpack.c.b16 %v2267, %v2266
    %v2902 = vpack.c.b16 %v2269, %v2268
    %v2903 = vpack.c.b16 %v2271, %v2270
    %v2904 = vpack.c.b16 %v2273, %v2272
    %v2905 = vpack.c.b16 %v2275, %v2274
    %v2906 = vpack.c.b16 %v2277, %v2276
    %v2907 = vpack.c.b16 %v2279, %v2278
    %v2908 = vpack.c.b16 %v2281, %v2280
    %v2909 = vpack.c.b16 %v2283, %v2282
    %v2910 = vpack.c.b16 %v2285, %v2284
    %v2911 = vpack.c.b16 %v2287, %v2286
    %v2912 = vpack.c.b16 %v2289, %v2288
    %v2913 = vpack.c.b16 %v2291, %v2290
    %v2914 = vpack.c.b16 %v2293, %v2292
    %v2915 = vpack.c.b16 %v2295, %v2294
    %v2916 = vpack.c.b16 %v2297, %v2296
    %v2917 = vpack.c.b16 %v2299, %v2298
    %v2918 = vpack.c.b16 %v2301, %v2300
    %v2919 = vpack.c.b16 %v2303, %v2302
    %v2920 = vpack.c.b16 %v2305, %v2304
    %v2921 = vpack.c.b16 %v2307, %v2306
    %v2922 = vpack.c.b16 %v2309, %v2308
    %v2923 = vpack.c.b16 %v2311, %v2310
    %v2924 = vpack.c.b16 %v2313, %v2312
    %v2925 = vpack.c.b16 %v2315, %v2314
    %v2926 = vpack.c.b16 %v2317, %v2316
    %v2927 = vpack.c.b16 %v2319, %v2318
    %v2928 = vpack.c.b16 %v2321, %v2320
    %v2929 = vpack.c.b16 %v2323, %v2322
    %v2930 = vpack.c.b16 %v2325, %v2324
    %v2931 = vpack.c.b16 %v2327, %v2326
    %v2932 = vpack.c.b16 %v2329, %v2328
    %v2933 = vpack.c.b16 %v2331, %v2330
    %v2934 = vpack.c.b16 %v2333, %v2332
    %v2935 = vpack.c.b16 %v2335, %v2334
    %v2936 = vpack.c.b16 %v2337, %v2336
    %v2937 = vpack.c.b16 %v2339, %v2338
    %v2938 = vpack.c.b16 %v2341, %v2340
    %v2939 = vpack.c.b16 %v2343, %v2342
    %v2940 = vpack.c.b16 %v2345, %v2344
    %v2941 = vpack.c.b16 %v2347, %v2346
    %v2942 = vpack.c.b16 %v2349, %v2348
    %v2943 = vpack.c.b16 %v2351, %v2350
    %v2944 = vpack.c.b16 %v2353, %v2352
    %v2945 = vpack.c.b16 %v2355, %v2354
    %v2946 = vpack.c.b16 %v2357, %v2356
    %v2947 = vpack.c.b16 %v2359, %v2358
    %v2948 = vpack.c.b16 %v2361, %v2360
    %v2949 = vpack.c.b16 %v2363, %v2362
    %v2950 = vpack.c.b16 %v2365, %v2364
    %v2951 = vpack.c.b16 %v2367, %v2366
    %v2952 = vpack.c.b16 %v2369, %v2368
    %v2953 = vpack.c.b16 %v2371, %v2370
    %v2954 = vpack.c.b16 %v2373, %v2372
    %v2955 = vpack.c.b16 %v2375, %v2374
    %v2956 = vpack.c.b16 %v2377, %v2376
    %v2957 = vpack.c.b16 %v2379, %v2378
    %v2958 = vpack.c.b16 %v2381, %v2380
    %v2959 = vpack.c.b16 %v2383, %v2382
    %v2960 = vpack.c.b16 %v2385, %v2384
    %v2961 = vpack.c.b16 %v2387, %v2386
    %v2962 = vpack.c.b16 %v2389, %v2388
    %v2963 = vpack.c.b16 %v2391, %v2390
    %v2964 = vpack.c.b16 %v2393, %v2392
    %v2965 = vpack.c.b16 %v2395, %v2394
    %v2966 = vpack.c.b16 %v2397, %v2396
    %v2967 = vpack.c.b16 %v2399, %v2398
    %v2968 = vpack.c.b16 %v2401, %v2400
    %v2969 = vpack.c.b16 %v2403, %v2402
    %v2970 = vpack.c.b16 %v2405, %v2404
    %v2971 = vpack.c.b16 %v2407, %v2406
    %v2972 = vpack.c.b16 %v2409, %v2408
    %v2973 = vpack.c.b16 %v2411, %v2410
    %v2974 = vpack.c.b16 %v2413, %v2412
    %v2975 = vpack.c.b16 %v2415, %v2414
    %v2976 = vpack.c.b16 %v2417, %v2416
    %v2977 = vpack.c.b16 %v2419, %v2418
    %v2978 = vpack.c.b16 %v2421, %v2420
    %v2979 = vpack.c.b16 %v2423, %v2422
    %v2980 = vpack.c.b16 %v2425, %v2424
    %v2981 = vpack.c.b16 %v2427, %v2426
    %v2982 = vpack.c.b16 %v2429, %v2428
    %v2983 = vpack.c.b16 %v2431, %v2430
    %v2984 = vpack.c.b16 %v2433, %v2432
    %v2985 = vpack.c.b16 %v2435, %v2434
    %v2986 = vpack.c.b16 %v2437, %v2436
    %v2987 = vpack.c.b16 %v2439, %v2438
    %v2988 = vpack.c.b16 %v2441, %v2440
    %v2989 = vpack.c.b16 %v2443, %v2442
    %v2990 = vpack.c.b16 %v2445, %v2444
    %v2991 = vpack.c.b16 %v2447, %v2446
    %v2992 = vpack.c.b16 %v2449, %v2448
    %v2993 = vpack.c.b16 %v2451, %v2450
    %v2994 = vpack.c.b16 %v2453, %v2452
    %v2995 = vpack.c.b16 %v2455, %v2454
    %v2996 = vpack.c.b16 %v2457, %v2456
    %v2997 = vpack.c.b16 %v2459, %v2458
    %v2998 = vpack.c.b16 %v2461, %v2460
    %v2999 = vpack.c.b16 %v2463, %v2462
    %v3000 = vpack.c.b16 %v2465, %v2464
    %v3001 = vpack.c.b16 %v2467, %v2466
    %v3002 = vpack.c.b16 %v2469, %v2468
    %v3003 = vpack.c.b16 %v2471, %v2470
    %v3004 = vpack.c.b16 %v2473, %v2472
    %v3005 = vpack.c.b16 %v2475, %v2474
    %v3006 = vpack.c.b16 %v2477, %v2476
    %v3007 = vpack.c.b16 %v2479, %v2478
    %v3008 = vpack.c.b16 %v2481, %v2480
    %v3009 = vpack.c.b16 %v2483, %v2482
    %v3010 = vpack.c.b16 %v2485, %v2484
    %v3011 = vpack.c.b16 %v2487, %v2486
    %v3012 = vpack.c.b16 %v2489, %v2488
    %v3013 = vpack.c.b16 %v2491, %v2490
    %v3014 = vpack.c.b16 %v2493, %v2492
    %v3015 = vpack.c.b16 %v2495, %v2494
    %v3016 = vpack.c.b16 %v2497, %v2496
    %v3017 = vpack.c.b16 %v2499, %v2498
    %v3018 = vpack.c.b16 %v2501, %v2500
    %v3019 = vpack.c.b16 %v2503, %v2502
    %v3020 = vpack.c.b16 %v2505, %v2504
    %v3021 = vpack.c.b16 %v2507, %v2506
    %v3022 = vpack.c.b16 %v2509, %v2508
    %v3023 = vpack.c.b16 %v2511, %v2510
    %v3024 = vpack.c.b16 %v2513, %v2512
    %v3025 = vpack.c.b16 %v2515, %v2514
    %v3026 = vpack.c.b16 %v2517, %v2516
    %v3027 = vpack.c.b16 %v2519, %v2518
    %v3028 = vpack.c.b16 %v2521, %v2520
    %v3029 = vpack.c.b16 %v2523, %v2522
    %v3030 = vpack.c.b16 %v2525, %v2524
    %v3031 = vpack.c.b16 %v2527, %v2526
    %v3032 = vpack.c.b16 %v2529, %v2528
    %v3033 = vpack.c.b16 %v2531, %v2530
    %v3034 = vpack.c.b16 %v2533, %v2532
    %v3035 = vpack.c.b16 %v2535, %v2534
    %v3036 = vpack.c.b16 %v2537, %v2536
    %v3037 = vpack.c.b16 %v2539, %v2538
    %v3038 = vpack.c.b16 %v2541, %v2540
    %v3039 = vpack.c.b16 %v2543, %v2542
    %v3040 = vpack.c.b16 %v2545, %v2544
    %v3041 = vpack.c.b16 %v2547, %v2546
    %v3042 = vpack.c.b16 %v2549, %v2548
    %v3043 = vpack.c.b16 %v2551, %v2550
    %v3044 = vpack.c.b16 %v2553, %v2552
    %v3045 = vpack.c.b16 %v2555, %v2554
    %v3046 = vpack.c.b16 %v2557, %v2556
    %v3047 = vpack.c.b16 %v2559, %v2558
    %v3048 = vpack.c.b16 %v2561, %v2560
    %v3049 = vpack.c.b16 %v2563, %v2562
    %v3050 = vpack.c.b16 %v2565, %v2564
    %v3051 = vpack.c.b16 %v2567, %v2566
    %v3052 = vpack.c.b16 %v2569, %v2568
    %v3053 = vpack.c.b16 %v2571, %v2570
    %v3054 = vpack.c.b16 %v2573, %v2572
    %v3055 = vpack.c.b16 %v2575, %v2574
    %v3056 = vpack.c.b16 %v2577, %v2576
    %v3057 = vpack.c.b16 %v2579, %v2578
    %v3058 = vpack.c.b16 %v2581, %v2580
    %v3059 = vpack.c.b16 %v2583, %v2582
    %v3060 = vpack.c.b16 %v2585, %v2584
    %v3061 = vpack.c.b16 %v2587, %v2586
    %v3062 = vpack.c.b16 %v2589, %v2588
    %v3063 = vpack.c.b16 %v2591, %v2590
    %v3064 = vpack.c.b16 %v2593, %v2592
    %v3065 = vpack.c.b16 %v2595, %v2594
    %v3066 = vpack.c.b16 %v2597, %v2596
    %v3067 = vpack.c.b16 %v2599, %v2598
    %v3068 = vpack.c.b16 %v2601, %v2600
    %v3069 = vpack.c.b16 %v2603, %v2602
    %v3070 = vpack.c.b16 %v2605, %v2604
    %v3071 = vpack.c.b16 %v2607, %v2606
    %v3072 = vpack.c.b16 %v2609, %v2608
    %v3073 = vpack.c.b16 %v2611, %v2610
    %v3074 = vpack.c.b16 %v2613, %v2612
    %v3075 = vpack.c.b16 %v2615, %v2614
    %v3076 = vpack.c.b16 %v2617, %v2616
    %v3077 = vpack.c.b16 %v2619, %v2618
    %v3078 = vpack.c.b16 %v2621, %v2620
    %v3079 = vpack.c.b16 %v2623, %v2622
    %v3080 = vpack.c.b16 %v2625, %v2624
    %v3081 = vpack.c.b16 %v2627, %v2626
    %v3082 = vpack.c.b16 %v2629, %v2628
    %v3083 = vpack.c.b16 %v2631, %v2630
    %v3084 = vpack.c.b16 %v2633, %v2632
    %v3085 = vpack.c.b16 %v2635, %v2634
    %v3086 = vpack.c.b16 %v2637, %v2636
    %v3087 = vpack.c.b16 %v2639, %v2638
    %v3088 = vpack.c.b16 %v2641, %v2640
    %v3089 = vpack.c.b16 %v2643, %v2642
    %v3090 = vpack.c.b16 %v2645, %v2644
    %v3091 = vpack.c.b16 %v2647, %v2646
    %v3092 = vpack.c.b16 %v2649, %v2648
    %v3093 = vpack.c.b16 %v2651, %v2650
    %v3094 = vpack.c.b16 %v2653, %v2652
    %v3095 = vpack.c.b16 %v2655, %v2654
    %v3096 = vpack.c.b16 %v2657, %v2656
    %v3097 = vpack.c.b16 %v2659, %v2658
    %v3098 = vpack.c.b16 %v2661, %v2660
    %v3099 = vpack.c.b16 %v2663, %v2662
    %v3100 = vpack.c.b16 %v2665, %v2664
    %v3101 = vpack.c.b16 %v2667, %v2666
    %v3102 = vpack.c.b16 %v2669, %v2668
    %v3103 = vpack.c.b16 %v2671, %v2670
    %v3104 = vpack.c.b16 %v2673, %v2672
    %v3105 = vpack.c.b16 %v2675, %v2674
    %v3106 = vpack.c.b16 %v2677, %v2676
    %v3107 = vpack.c.b16 %v2679, %v2678
    %v3108 = vpack.c.b16 %v2681, %v2680
    %v3109 = vpack.c.b16 %v2683, %v2682
    %v3110 = vpack.c.b16 %v2685, %v2684
    %v3111 = vpack.c.b16 %v2687, %v2686
    %v3112 = vpack.c.b16 %v2689, %v2688
    %v3113 = vpack.c.b16 %v2691, %v2690
    %v3114 = vpack.c.b16 %v2693, %v2692
    %v3115 = vpack.c.b16 %v2695, %v2694
    %v3116 = vpack.c.b16 %v2697, %v2696
    %v3117 = vpack.c.b16 %v2699, %v2698
    %v3118 = vpack.c.b16 %v2701, %v2700
    %v3119 = vpack.c.b16 %v2703, %v2702
    %v3120 = vpack.c.b16 %v2705, %v2704
    %v3121 = vpack.c.b16 %v2707, %v2706
    %v3122 = vpack.c.b16 %v2709, %v2708
    %v3123 = vpack.c.b16 %v2711, %v2710
    %v3124 = vpack.c.b16 %v2713, %v2712
    %v3125 = vpack.c.b16 %v2715, %v2714
    %v3126 = vpack.c.b16 %v2717, %v2716
    %v3127 = vpack.c.b16 %v2719, %v2718
    %v3128 = vpack.c.b16 %v2721, %v2720
    %v3129 = vpack.c.b16 %v2723, %v2722
    %v3130 = vpack.c.b16 %v2725, %v2724
    %v3131 = vpack.c.b16 %v2727, %v2726
    %v3132 = vpack.c.b16 %v2729, %v2728
    %v3133 = vpack.c.b16 %v2731, %v2730
    %v3134 = vpack.c.b16 %v2733, %v2732
    %v3135 = vpack.c.b16 %v2735, %v2734
    %v3136 = vpack.c.b16 %v2737, %v2736
    %v3137 = vpack.c.b16 %v2739, %v2738
    %v3138 = vpack.c.b16 %v2741, %v2740
    %v3139 = vpack.c.b16 %v2743, %v2742
    %v3140 = vpack.c.b16 %v2745, %v2744
    %v3141 = vpack.c.b16 %v2747, %v2746
    %v3142 = vpack.c.b16 %v2749, %v2748
    %v3143 = vpack.c.b16 %v2751, %v2750
    %3536 = vmatprep.subr.bf16.mxu0 0
    %3537 = vmatpush1.bf16.msra.mxu0 %v2759
    %3538 = vmatprep.subr.bf16.mxu0 0
    %3539 = vmatpush1.bf16.msra.mxu0 %v2758
    %3540 = vmatprep.subr.bf16.mxu0 0
    %3541 = vmatpush1.bf16.msra.mxu0 %v2757
    %3542 = vmatprep.subr.bf16.mxu0 0
    %3543 = vmatpush1.bf16.msra.mxu0 %v2756
    %3544 = vmatprep.subr.bf16.mxu0 0
    %3545 = vmatpush1.bf16.msra.mxu0 %v2755
    %3546 = vmatprep.subr.bf16.mxu0 0
    %3547 = vmatpush1.bf16.msra.mxu0 %v2754
    %3548 = vmatprep.subr.bf16.mxu0 0
    %3549 = vmatpush1.bf16.msra.mxu0 %v2753
    %3550 = vmatprep.subr.bf16.mxu0 0
    %3551 = vmatpush1.bf16.msra.mxu0 %v2752
    %3552 = vmatprep.subr.bf16.mxu0 0
    %3553 = vmatpush2.bf16.msra.mxu0 %v2767
    %3554 = vmatprep.subr.bf16.mxu0 0
    %3555 = vmatpush2.bf16.msra.mxu0 %v2766
    %3556 = vmatprep.subr.bf16.mxu0 0
    %3557 = vmatpush2.bf16.msra.mxu0 %v2765
    %3558 = vmatprep.subr.bf16.mxu0 0
    %3559 = vmatpush2.bf16.msra.mxu0 %v2764
    %3560 = vmatprep.subr.bf16.mxu0 0
    %3561 = vmatpush2.bf16.msra.mxu0 %v2763
    %3562 = vmatprep.subr.bf16.mxu0 0
    %3563 = vmatpush2.bf16.msra.mxu0 %v2762
    %3564 = vmatprep.subr.bf16.mxu0 0
    %3565 = vmatpush2.bf16.msra.mxu0 %v2761
    %3566 = vmatprep.subr.bf16.mxu0 0
    %3567 = vmatpush2.bf16.msra.mxu0 %v2760
    %3568 = vmatprep.mubr.bf16.mxu0 %v864
    %3569 = vmatmul.mubr.bf16.gmra.mxu0 %v850
    %v3570 = vpop.f32.mrf.mxu0
    %v3571 = vadd.f32 %v818, %v3570
    %v3572 = vpop.f32.mrf.mxu0
    %v3573 = vpop.f32.mrf.mxu0
    %v3574 = vpop.f32.mrf.mxu0
    %3575 = vdwg.mxu0
    %3576 = vmatprep.subr.bf16.mxu0 0
    %3577 = vmatpush1.bf16.msra.mxu0 %v2775
    %3578 = vmatprep.subr.bf16.mxu0 0
    %3579 = vmatpush1.bf16.msra.mxu0 %v2774
    %3580 = vmatprep.subr.bf16.mxu0 0
    %3581 = vmatpush1.bf16.msra.mxu0 %v2773
    %3582 = vmatprep.subr.bf16.mxu0 0
    %3583 = vmatpush1.bf16.msra.mxu0 %v2772
    %3584 = vmatprep.subr.bf16.mxu0 0
    %3585 = vmatpush1.bf16.msra.mxu0 %v2771
    %3586 = vmatprep.subr.bf16.mxu0 0
    %3587 = vmatpush1.bf16.msra.mxu0 %v2770
    %3588 = vmatprep.subr.bf16.mxu0 0
    %3589 = vmatpush1.bf16.msra.mxu0 %v2769
    %3590 = vmatprep.subr.bf16.mxu0 0
    %3591 = vmatpush1.bf16.msra.mxu0 %v2768
    %3592 = vmatprep.subr.bf16.mxu0 0
    %3593 = vmatpush2.bf16.msra.mxu0 %v2783
    %3594 = vmatprep.subr.bf16.mxu0 0
    %3595 = vmatpush2.bf16.msra.mxu0 %v2782
    %3596 = vmatprep.subr.bf16.mxu0 0
    %3597 = vmatpush2.bf16.msra.mxu0 %v2781
    %3598 = vmatprep.subr.bf16.mxu0 0
    %3599 = vmatpush2.bf16.msra.mxu0 %v2780
    %3600 = vmatprep.subr.bf16.mxu0 0
    %3601 = vmatpush2.bf16.msra.mxu0 %v2779
    %3602 = vmatprep.subr.bf16.mxu0 0
    %3603 = vmatpush2.bf16.msra.mxu0 %v2778
    %3604 = vmatprep.subr.bf16.mxu0 0
    %3605 = vmatpush2.bf16.msra.mxu0 %v2777
    %3606 = vmatprep.subr.bf16.mxu0 0
    %3607 = vmatpush2.bf16.msra.mxu0 %v2776
    %3608 = vmatprep.mubr.bf16.mxu0 %v874
    %3609 = vmatmul.mubr.bf16.gmra.mxu0 %v872
    %v3610 = vpop.f32.mrf.mxu0
    %v3611 = vadd.f32 %v3571, %v3610
    %v3612 = vpop.f32.mrf.mxu0
    %v3613 = vpop.f32.mrf.mxu0
    %v3614 = vpop.f32.mrf.mxu0
    %3615 = vdwg.mxu0
    %3616 = vmatprep.subr.bf16.mxu0 0
    %3617 = vmatpush1.bf16.msra.mxu0 %v2791
    %3618 = vmatprep.subr.bf16.mxu0 0
    %3619 = vmatpush1.bf16.msra.mxu0 %v2790
    %3620 = vmatprep.subr.bf16.mxu0 0
    %3621 = vmatpush1.bf16.msra.mxu0 %v2789
    %3622 = vmatprep.subr.bf16.mxu0 0
    %3623 = vmatpush1.bf16.msra.mxu0 %v2788
    %3624 = vmatprep.subr.bf16.mxu0 0
    %3625 = vmatpush1.bf16.msra.mxu0 %v2787
    %3626 = vmatprep.subr.bf16.mxu0 0
    %3627 = vmatpush1.bf16.msra.mxu0 %v2786
    %3628 = vmatprep.subr.bf16.mxu0 0
    %3629 = vmatpush1.bf16.msra.mxu0 %v2785
    %3630 = vmatprep.subr.bf16.mxu0 0
    %3631 = vmatpush1.bf16.msra.mxu0 %v2784
    %3632 = vmatprep.subr.bf16.mxu0 0
    %3633 = vmatpush2.bf16.msra.mxu0 %v2799
    %3634 = vmatprep.subr.bf16.mxu0 0
    %3635 = vmatpush2.bf16.msra.mxu0 %v2798
    %3636 = vmatprep.subr.bf16.mxu0 0
    %3637 = vmatpush2.bf16.msra.mxu0 %v2797
    %3638 = vmatprep.subr.bf16.mxu0 0
    %3639 = vmatpush2.bf16.msra.mxu0 %v2796
    %3640 = vmatprep.subr.bf16.mxu0 0
    %3641 = vmatpush2.bf16.msra.mxu0 %v2795
    %3642 = vmatprep.subr.bf16.mxu0 0
    %3643 = vmatpush2.bf16.msra.mxu0 %v2794
    %3644 = vmatprep.subr.bf16.mxu0 0
    %3645 = vmatpush2.bf16.msra.mxu0 %v2793
    %3646 = vmatprep.subr.bf16.mxu0 0
    %3647 = vmatpush2.bf16.msra.mxu0 %v2792
    %3648 = vmatprep.mubr.bf16.mxu0 %v871
    %3649 = vmatmul.mubr.bf16.gmra.mxu0 %v857
    %v3650 = vpop.f32.mrf.mxu0
    %v3651 = vadd.f32 %v3611, %v3650
    %v3652 = vpop.f32.mrf.mxu0
    %v3653 = vpop.f32.mrf.mxu0
    %v3654 = vpop.f32.mrf.mxu0
    %3655 = vdwg.mxu0
    %3656 = vmatprep.subr.bf16.mxu0 0
    %3657 = vmatpush1.bf16.msra.mxu0 %v2807
    %3658 = vmatprep.subr.bf16.mxu0 0
    %3659 = vmatpush1.bf16.msra.mxu0 %v2806
    %3660 = vmatprep.subr.bf16.mxu0 0
    %3661 = vmatpush1.bf16.msra.mxu0 %v2805
    %3662 = vmatprep.subr.bf16.mxu0 0
    %3663 = vmatpush1.bf16.msra.mxu0 %v2804
    %3664 = vmatprep.subr.bf16.mxu0 0
    %3665 = vmatpush1.bf16.msra.mxu0 %v2803
    %3666 = vmatprep.subr.bf16.mxu0 0
    %3667 = vmatpush1.bf16.msra.mxu0 %v2802
    %3668 = vmatprep.subr.bf16.mxu0 0
    %3669 = vmatpush1.bf16.msra.mxu0 %v2801
    %3670 = vmatprep.subr.bf16.mxu0 0
    %3671 = vmatpush1.bf16.msra.mxu0 %v2800
    %3672 = vmatprep.subr.bf16.mxu0 0
    %3673 = vmatpush2.bf16.msra.mxu0 %v2815
    %3674 = vmatprep.subr.bf16.mxu0 0
    %3675 = vmatpush2.bf16.msra.mxu0 %v2814
    %3676 = vmatprep.subr.bf16.mxu0 0
    %3677 = vmatpush2.bf16.msra.mxu0 %v2813
    %3678 = vmatprep.subr.bf16.mxu0 0
    %3679 = vmatpush2.bf16.msra.mxu0 %v2812
    %3680 = vmatprep.subr.bf16.mxu0 0
    %3681 = vmatpush2.bf16.msra.mxu0 %v2811
    %3682 = vmatprep.subr.bf16.mxu0 0
    %3683 = vmatpush2.bf16.msra.mxu0 %v2810
    %3684 = vmatprep.subr.bf16.mxu0 0
    %3685 = vmatpush2.bf16.msra.mxu0 %v2809
    %3686 = vmatprep.subr.bf16.mxu0 0
    %3687 = vmatpush2.bf16.msra.mxu0 %v2808
    %3688 = vmatprep.mubr.bf16.mxu0 %v875
    %3689 = vmatmul.mubr.bf16.gmra.mxu0 %v873
    %v3690 = vpop.f32.mrf.mxu0
    %v3691 = vadd.f32 %v3651, %v3690
    %v3692 = vpop.f32.mrf.mxu0
    %v3693 = vpop.f32.mrf.mxu0
    %v3694 = vpop.f32.mrf.mxu0
    %3695 = vdwg.mxu0
    %3696 = vmatprep.subr.bf16.mxu0 0
    %3697 = vmatpush1.bf16.msra.mxu0 %v2823
    %3698 = vmatprep.subr.bf16.mxu0 0
    %3699 = vmatpush1.bf16.msra.mxu0 %v2822
    %3700 = vmatprep.subr.bf16.mxu0 0
    %3701 = vmatpush1.bf16.msra.mxu0 %v2821
    %3702 = vmatprep.subr.bf16.mxu0 0
    %3703 = vmatpush1.bf16.msra.mxu0 %v2820
    %3704 = vmatprep.subr.bf16.mxu0 0
    %3705 = vmatpush1.bf16.msra.mxu0 %v2819
    %3706 = vmatprep.subr.bf16.mxu0 0
    %3707 = vmatpush1.bf16.msra.mxu0 %v2818
    %3708 = vmatprep.subr.bf16.mxu0 0
    %3709 = vmatpush1.bf16.msra.mxu0 %v2817
    %3710 = vmatprep.subr.bf16.mxu0 0
    %3711 = vmatpush1.bf16.msra.mxu0 %v2816
    %3712 = vmatprep.subr.bf16.mxu0 0
    %3713 = vmatpush2.bf16.msra.mxu0 %v2831
    %3714 = vmatprep.subr.bf16.mxu0 0
    %3715 = vmatpush2.bf16.msra.mxu0 %v2830
    %3716 = vmatprep.subr.bf16.mxu0 0
    %3717 = vmatpush2.bf16.msra.mxu0 %v2829
    %3718 = vmatprep.subr.bf16.mxu0 0
    %3719 = vmatpush2.bf16.msra.mxu0 %v2828
    %3720 = vmatprep.subr.bf16.mxu0 0
    %3721 = vmatpush2.bf16.msra.mxu0 %v2827
    %3722 = vmatprep.subr.bf16.mxu0 0
    %3723 = vmatpush2.bf16.msra.mxu0 %v2826
    %3724 = vmatprep.subr.bf16.mxu0 0
    %3725 = vmatpush2.bf16.msra.mxu0 %v2825
    %3726 = vmatprep.subr.bf16.mxu0 0
    %3727 = vmatpush2.bf16.msra.mxu0 %v2824
    %3728 = vmatprep.mubr.bf16.mxu0 %v913
    %3729 = vmatmul.mubr.bf16.gmra.mxu0 %v899
    %v3730 = vpop.f32.mrf.mxu0
    %v3731 = vadd.f32 %v3691, %v3730
    %v3732 = vpop.f32.mrf.mxu0
    %v3733 = vpop.f32.mrf.mxu0
    %v3734 = vpop.f32.mrf.mxu0
    %3735 = vdwg.mxu0
    %3736 = vmatprep.subr.bf16.mxu0 0
    %3737 = vmatpush1.bf16.msra.mxu0 %v2839
    %3738 = vmatprep.subr.bf16.mxu0 0
    %3739 = vmatpush1.bf16.msra.mxu0 %v2838
    %3740 = vmatprep.subr.bf16.mxu0 0
    %3741 = vmatpush1.bf16.msra.mxu0 %v2837
    %3742 = vmatprep.subr.bf16.mxu0 0
    %3743 = vmatpush1.bf16.msra.mxu0 %v2836
    %3744 = vmatprep.subr.bf16.mxu0 0
    %3745 = vmatpush1.bf16.msra.mxu0 %v2835
    %3746 = vmatprep.subr.bf16.mxu0 0
    %3747 = vmatpush1.bf16.msra.mxu0 %v2834
    %3748 = vmatprep.subr.bf16.mxu0 0
    %3749 = vmatpush1.bf16.msra.mxu0 %v2833
    %3750 = vmatprep.subr.bf16.mxu0 0
    %3751 = vmatpush1.bf16.msra.mxu0 %v2832
    %3752 = vmatprep.subr.bf16.mxu0 0
    %3753 = vmatpush2.bf16.msra.mxu0 %v2847
    %3754 = vmatprep.subr.bf16.mxu0 0
    %3755 = vmatpush2.bf16.msra.mxu0 %v2846
    %3756 = vmatprep.subr.bf16.mxu0 0
    %3757 = vmatpush2.bf16.msra.mxu0 %v2845
    %3758 = vmatprep.subr.bf16.mxu0 0
    %3759 = vmatpush2.bf16.msra.mxu0 %v2844
    %3760 = vmatprep.subr.bf16.mxu0 0
    %3761 = vmatpush2.bf16.msra.mxu0 %v2843
    %3762 = vmatprep.subr.bf16.mxu0 0
    %3763 = vmatpush2.bf16.msra.mxu0 %v2842
    %3764 = vmatprep.subr.bf16.mxu0 0
    %3765 = vmatpush2.bf16.msra.mxu0 %v2841
    %3766 = vmatprep.subr.bf16.mxu0 0
    %3767 = vmatpush2.bf16.msra.mxu0 %v2840
    %3768 = vmatprep.mubr.bf16.mxu0 %v923
    %3769 = vmatmul.mubr.bf16.gmra.mxu0 %v921
    %v3770 = vpop.f32.mrf.mxu0
    %v3771 = vadd.f32 %v3731, %v3770
    %v3772 = vpop.f32.mrf.mxu0
    %v3773 = vpop.f32.mrf.mxu0
    %v3774 = vpop.f32.mrf.mxu0
    %3775 = vdwg.mxu0
    %3776 = vmatprep.subr.bf16.mxu0 0
    %3777 = vmatpush1.bf16.msra.mxu0 %v2855
    %3778 = vmatprep.subr.bf16.mxu0 0
    %3779 = vmatpush1.bf16.msra.mxu0 %v2854
    %3780 = vmatprep.subr.bf16.mxu0 0
    %3781 = vmatpush1.bf16.msra.mxu0 %v2853
    %3782 = vmatprep.subr.bf16.mxu0 0
    %3783 = vmatpush1.bf16.msra.mxu0 %v2852
    %3784 = vmatprep.subr.bf16.mxu0 0
    %3785 = vmatpush1.bf16.msra.mxu0 %v2851
    %3786 = vmatprep.subr.bf16.mxu0 0
    %3787 = vmatpush1.bf16.msra.mxu0 %v2850
    %3788 = vmatprep.subr.bf16.mxu0 0
    %3789 = vmatpush1.bf16.msra.mxu0 %v2849
    %3790 = vmatprep.subr.bf16.mxu0 0
    %3791 = vmatpush1.bf16.msra.mxu0 %v2848
    %3792 = vmatprep.subr.bf16.mxu0 0
    %3793 = vmatpush2.bf16.msra.mxu0 %v2863
    %3794 = vmatprep.subr.bf16.mxu0 0
    %3795 = vmatpush2.bf16.msra.mxu0 %v2862
    %3796 = vmatprep.subr.bf16.mxu0 0
    %3797 = vmatpush2.bf16.msra.mxu0 %v2861
    %3798 = vmatprep.subr.bf16.mxu0 0
    %3799 = vmatpush2.bf16.msra.mxu0 %v2860
    %3800 = vmatprep.subr.bf16.mxu0 0
    %3801 = vmatpush2.bf16.msra.mxu0 %v2859
    %3802 = vmatprep.subr.bf16.mxu0 0
    %3803 = vmatpush2.bf16.msra.mxu0 %v2858
    %3804 = vmatprep.subr.bf16.mxu0 0
    %3805 = vmatpush2.bf16.msra.mxu0 %v2857
    %3806 = vmatprep.subr.bf16.mxu0 0
    %3807 = vmatpush2.bf16.msra.mxu0 %v2856
    %3808 = vmatprep.mubr.bf16.mxu0 %v920
    %3809 = vmatmul.mubr.bf16.gmra.mxu0 %v906
    %v3810 = vpop.f32.mrf.mxu0
    %v3811 = vadd.f32 %v3771, %v3810
    %v3812 = vpop.f32.mrf.mxu0
    %v3813 = vpop.f32.mrf.mxu0
    %v3814 = vpop.f32.mrf.mxu0
    %3815 = vdwg.mxu0
    %3816 = vmatprep.subr.bf16.mxu0 0
    %3817 = vmatpush1.bf16.msra.mxu0 %v2871
    %3818 = vmatprep.subr.bf16.mxu0 0
    %3819 = vmatpush1.bf16.msra.mxu0 %v2870
    %3820 = vmatprep.subr.bf16.mxu0 0
    %3821 = vmatpush1.bf16.msra.mxu0 %v2869
    %3822 = vmatprep.subr.bf16.mxu0 0
    %3823 = vmatpush1.bf16.msra.mxu0 %v2868
    %3824 = vmatprep.subr.bf16.mxu0 0
    %3825 = vmatpush1.bf16.msra.mxu0 %v2867
    %3826 = vmatprep.subr.bf16.mxu0 0
    %3827 = vmatpush1.bf16.msra.mxu0 %v2866
    %3828 = vmatprep.subr.bf16.mxu0 0
    %3829 = vmatpush1.bf16.msra.mxu0 %v2865
    %3830 = vmatprep.subr.bf16.mxu0 0
    %3831 = vmatpush1.bf16.msra.mxu0 %v2864
    %3832 = vmatprep.subr.bf16.mxu0 0
    %3833 = vmatpush2.bf16.msra.mxu0 %v2879
    %3834 = vmatprep.subr.bf16.mxu0 0
    %3835 = vmatpush2.bf16.msra.mxu0 %v2878
    %3836 = vmatprep.subr.bf16.mxu0 0
    %3837 = vmatpush2.bf16.msra.mxu0 %v2877
    %3838 = vmatprep.subr.bf16.mxu0 0
    %3839 = vmatpush2.bf16.msra.mxu0 %v2876
    %3840 = vmatprep.subr.bf16.mxu0 0
    %3841 = vmatpush2.bf16.msra.mxu0 %v2875
    %3842 = vmatprep.subr.bf16.mxu0 0
    %3843 = vmatpush2.bf16.msra.mxu0 %v2874
    %3844 = vmatprep.subr.bf16.mxu0 0
    %3845 = vmatpush2.bf16.msra.mxu0 %v2873
    %3846 = vmatprep.subr.bf16.mxu0 0
    %3847 = vmatpush2.bf16.msra.mxu0 %v2872
    %3848 = vmatprep.mubr.bf16.mxu0 %v924
    %3849 = vmatmul.mubr.bf16.gmra.mxu0 %v922
    %v3850 = vpop.f32.mrf.mxu0
    %v3851 = vadd.f32 %v3811, %v3850
    %v3852 = vpop.f32.mrf.mxu0
    %v3853 = vpop.f32.mrf.mxu0
    %v3854 = vpop.f32.mrf.mxu0
    %3855 = vdwg.mxu0
    %3856 = vmatprep.subr.bf16.mxu0 0
    %3857 = vmatpush1.bf16.msra.mxu0 %v2887
    %3858 = vmatprep.subr.bf16.mxu0 0
    %3859 = vmatpush1.bf16.msra.mxu0 %v2886
    %3860 = vmatprep.subr.bf16.mxu0 0
    %3861 = vmatpush1.bf16.msra.mxu0 %v2885
    %3862 = vmatprep.subr.bf16.mxu0 0
    %3863 = vmatpush1.bf16.msra.mxu0 %v2884
    %3864 = vmatprep.subr.bf16.mxu0 0
    %3865 = vmatpush1.bf16.msra.mxu0 %v2883
    %3866 = vmatprep.subr.bf16.mxu0 0
    %3867 = vmatpush1.bf16.msra.mxu0 %v2882
    %3868 = vmatprep.subr.bf16.mxu0 0
    %3869 = vmatpush1.bf16.msra.mxu0 %v2881
    %3870 = vmatprep.subr.bf16.mxu0 0
    %3871 = vmatpush1.bf16.msra.mxu0 %v2880
    %3872 = vmatprep.subr.bf16.mxu0 0
    %3873 = vmatpush2.bf16.msra.mxu0 %v2895
    %3874 = vmatprep.subr.bf16.mxu0 0
    %3875 = vmatpush2.bf16.msra.mxu0 %v2894
    %3876 = vmatprep.subr.bf16.mxu0 0
    %3877 = vmatpush2.bf16.msra.mxu0 %v2893
    %3878 = vmatprep.subr.bf16.mxu0 0
    %3879 = vmatpush2.bf16.msra.mxu0 %v2892
    %3880 = vmatprep.subr.bf16.mxu0 0
    %3881 = vmatpush2.bf16.msra.mxu0 %v2891
    %3882 = vmatprep.subr.bf16.mxu0 0
    %3883 = vmatpush2.bf16.msra.mxu0 %v2890
    %3884 = vmatprep.subr.bf16.mxu0 0
    %3885 = vmatpush2.bf16.msra.mxu0 %v2889
    %3886 = vmatprep.subr.bf16.mxu0 0
    %3887 = vmatpush2.bf16.msra.mxu0 %v2888
    %3888 = vmatprep.mubr.bf16.mxu0 %v962
    %3889 = vmatmul.mubr.bf16.gmra.mxu0 %v948
    %v3890 = vpop.f32.mrf.mxu0
    %v3891 = vadd.f32 %v3851, %v3890
    %v3892 = vpop.f32.mrf.mxu0
    %v3893 = vpop.f32.mrf.mxu0
    %v3894 = vpop.f32.mrf.mxu0
    %3895 = vdwg.mxu0
    %3896 = vmatprep.subr.bf16.mxu0 0
    %3897 = vmatpush1.bf16.msra.mxu0 %v2903
    %3898 = vmatprep.subr.bf16.mxu0 0
    %3899 = vmatpush1.bf16.msra.mxu0 %v2902
    %3900 = vmatprep.subr.bf16.mxu0 0
    %3901 = vmatpush1.bf16.msra.mxu0 %v2901
    %3902 = vmatprep.subr.bf16.mxu0 0
    %3903 = vmatpush1.bf16.msra.mxu0 %v2900
    %3904 = vmatprep.subr.bf16.mxu0 0
    %3905 = vmatpush1.bf16.msra.mxu0 %v2899
    %3906 = vmatprep.subr.bf16.mxu0 0
    %3907 = vmatpush1.bf16.msra.mxu0 %v2898
    %3908 = vmatprep.subr.bf16.mxu0 0
    %3909 = vmatpush1.bf16.msra.mxu0 %v2897
    %3910 = vmatprep.subr.bf16.mxu0 0
    %3911 = vmatpush1.bf16.msra.mxu0 %v2896
    %3912 = vmatprep.subr.bf16.mxu0 0
    %3913 = vmatpush2.bf16.msra.mxu0 %v2911
    %3914 = vmatprep.subr.bf16.mxu0 0
    %3915 = vmatpush2.bf16.msra.mxu0 %v2910
    %3916 = vmatprep.subr.bf16.mxu0 0
    %3917 = vmatpush2.bf16.msra.mxu0 %v2909
    %3918 = vmatprep.subr.bf16.mxu0 0
    %3919 = vmatpush2.bf16.msra.mxu0 %v2908
    %3920 = vmatprep.subr.bf16.mxu0 0
    %3921 = vmatpush2.bf16.msra.mxu0 %v2907
    %3922 = vmatprep.subr.bf16.mxu0 0
    %3923 = vmatpush2.bf16.msra.mxu0 %v2906
    %3924 = vmatprep.subr.bf16.mxu0 0
    %3925 = vmatpush2.bf16.msra.mxu0 %v2905
    %3926 = vmatprep.subr.bf16.mxu0 0
    %3927 = vmatpush2.bf16.msra.mxu0 %v2904
    %3928 = vmatprep.mubr.bf16.mxu0 %v972
    %3929 = vmatmul.mubr.bf16.gmra.mxu0 %v970
    %v3930 = vpop.f32.mrf.mxu0
    %v3931 = vadd.f32 %v3891, %v3930
    %v3932 = vpop.f32.mrf.mxu0
    %v3933 = vpop.f32.mrf.mxu0
    %v3934 = vpop.f32.mrf.mxu0
    %3935 = vdwg.mxu0
    %3936 = vmatprep.subr.bf16.mxu0 0
    %3937 = vmatpush1.bf16.msra.mxu0 %v2919
    %3938 = vmatprep.subr.bf16.mxu0 0
    %3939 = vmatpush1.bf16.msra.mxu0 %v2918
    %3940 = vmatprep.subr.bf16.mxu0 0
    %3941 = vmatpush1.bf16.msra.mxu0 %v2917
    %3942 = vmatprep.subr.bf16.mxu0 0
    %3943 = vmatpush1.bf16.msra.mxu0 %v2916
    %3944 = vmatprep.subr.bf16.mxu0 0
    %3945 = vmatpush1.bf16.msra.mxu0 %v2915
    %3946 = vmatprep.subr.bf16.mxu0 0
    %3947 = vmatpush1.bf16.msra.mxu0 %v2914
    %3948 = vmatprep.subr.bf16.mxu0 0
    %3949 = vmatpush1.bf16.msra.mxu0 %v2913
    %3950 = vmatprep.subr.bf16.mxu0 0
    %3951 = vmatpush1.bf16.msra.mxu0 %v2912
    %3952 = vmatprep.subr.bf16.mxu0 0
    %3953 = vmatpush2.bf16.msra.mxu0 %v2927
    %3954 = vmatprep.subr.bf16.mxu0 0
    %3955 = vmatpush2.bf16.msra.mxu0 %v2926
    %3956 = vmatprep.subr.bf16.mxu0 0
    %3957 = vmatpush2.bf16.msra.mxu0 %v2925
    %3958 = vmatprep.subr.bf16.mxu0 0
    %3959 = vmatpush2.bf16.msra.mxu0 %v2924
    %3960 = vmatprep.subr.bf16.mxu0 0
    %3961 = vmatpush2.bf16.msra.mxu0 %v2923
    %3962 = vmatprep.subr.bf16.mxu0 0
    %3963 = vmatpush2.bf16.msra.mxu0 %v2922
    %3964 = vmatprep.subr.bf16.mxu0 0
    %3965 = vmatpush2.bf16.msra.mxu0 %v2921
    %3966 = vmatprep.subr.bf16.mxu0 0
    %3967 = vmatpush2.bf16.msra.mxu0 %v2920
    %3968 = vmatprep.mubr.bf16.mxu0 %v969
    %3969 = vmatmul.mubr.bf16.gmra.mxu0 %v955
    %v3970 = vpop.f32.mrf.mxu0
    %v3971 = vadd.f32 %v3931, %v3970
    %v3972 = vpop.f32.mrf.mxu0
    %v3973 = vpop.f32.mrf.mxu0
    %v3974 = vpop.f32.mrf.mxu0
    %3975 = vdwg.mxu0
    %3976 = vmatprep.subr.bf16.mxu0 0
    %3977 = vmatpush1.bf16.msra.mxu0 %v2935
    %3978 = vmatprep.subr.bf16.mxu0 0
    %3979 = vmatpush1.bf16.msra.mxu0 %v2934
    %3980 = vmatprep.subr.bf16.mxu0 0
    %3981 = vmatpush1.bf16.msra.mxu0 %v2933
    %3982 = vmatprep.subr.bf16.mxu0 0
    %3983 = vmatpush1.bf16.msra.mxu0 %v2932
    %3984 = vmatprep.subr.bf16.mxu0 0
    %3985 = vmatpush1.bf16.msra.mxu0 %v2931
    %3986 = vmatprep.subr.bf16.mxu0 0
    %3987 = vmatpush1.bf16.msra.mxu0 %v2930
    %3988 = vmatprep.subr.bf16.mxu0 0
    %3989 = vmatpush1.bf16.msra.mxu0 %v2929
    %3990 = vmatprep.subr.bf16.mxu0 0
    %3991 = vmatpush1.bf16.msra.mxu0 %v2928
    %3992 = vmatprep.subr.bf16.mxu0 0
    %3993 = vmatpush2.bf16.msra.mxu0 %v2943
    %3994 = vmatprep.subr.bf16.mxu0 0
    %3995 = vmatpush2.bf16.msra.mxu0 %v2942
    %3996 = vmatprep.subr.bf16.mxu0 0
    %3997 = vmatpush2.bf16.msra.mxu0 %v2941
    %3998 = vmatprep.subr.bf16.mxu0 0
    %3999 = vmatpush2.bf16.msra.mxu0 %v2940
    %4000 = vmatprep.subr.bf16.mxu0 0
    %4001 = vmatpush2.bf16.msra.mxu0 %v2939
    %4002 = vmatprep.subr.bf16.mxu0 0
    %4003 = vmatpush2.bf16.msra.mxu0 %v2938
    %4004 = vmatprep.subr.bf16.mxu0 0
    %4005 = vmatpush2.bf16.msra.mxu0 %v2937
    %4006 = vmatprep.subr.bf16.mxu0 0
    %4007 = vmatpush2.bf16.msra.mxu0 %v2936
    %4008 = vmatprep.mubr.bf16.mxu0 %v973
    %4009 = vmatmul.mubr.bf16.gmra.mxu0 %v971
    %v4010 = vpop.f32.mrf.mxu0
    %v4011 = vadd.f32 %v3971, %v4010
    %v4012 = vpop.f32.mrf.mxu0
    %v4013 = vpop.f32.mrf.mxu0
    %v4014 = vpop.f32.mrf.mxu0
    %4015 = vdwg.mxu0
    %4016 = vmatprep.subr.bf16.mxu0 0
    %4017 = vmatpush1.bf16.msra.mxu0 %v2951
    %4018 = vmatprep.subr.bf16.mxu0 0
    %4019 = vmatpush1.bf16.msra.mxu0 %v2950
    %4020 = vmatprep.subr.bf16.mxu0 0
    %4021 = vmatpush1.bf16.msra.mxu0 %v2949
    %4022 = vmatprep.subr.bf16.mxu0 0
    %4023 = vmatpush1.bf16.msra.mxu0 %v2948
    %4024 = vmatprep.subr.bf16.mxu0 0
    %4025 = vmatpush1.bf16.msra.mxu0 %v2947
    %4026 = vmatprep.subr.bf16.mxu0 0
    %4027 = vmatpush1.bf16.msra.mxu0 %v2946
    %4028 = vmatprep.subr.bf16.mxu0 0
    %4029 = vmatpush1.bf16.msra.mxu0 %v2945
    %4030 = vmatprep.subr.bf16.mxu0 0
    %4031 = vmatpush1.bf16.msra.mxu0 %v2944
    %4032 = vmatprep.subr.bf16.mxu0 0
    %4033 = vmatpush2.bf16.msra.mxu0 %v2959
    %4034 = vmatprep.subr.bf16.mxu0 0
    %4035 = vmatpush2.bf16.msra.mxu0 %v2958
    %4036 = vmatprep.subr.bf16.mxu0 0
    %4037 = vmatpush2.bf16.msra.mxu0 %v2957
    %4038 = vmatprep.subr.bf16.mxu0 0
    %4039 = vmatpush2.bf16.msra.mxu0 %v2956
    %4040 = vmatprep.subr.bf16.mxu0 0
    %4041 = vmatpush2.bf16.msra.mxu0 %v2955
    %4042 = vmatprep.subr.bf16.mxu0 0
    %4043 = vmatpush2.bf16.msra.mxu0 %v2954
    %4044 = vmatprep.subr.bf16.mxu0 0
    %4045 = vmatpush2.bf16.msra.mxu0 %v2953
    %4046 = vmatprep.subr.bf16.mxu0 0
    %4047 = vmatpush2.bf16.msra.mxu0 %v2952
    %4048 = vmatprep.mubr.bf16.mxu0 %v1011
    %4049 = vmatmul.mubr.bf16.gmra.mxu0 %v997
    %v4050 = vpop.f32.mrf.mxu0
    %v4051 = vadd.f32 %v4011, %v4050
    %v4052 = vpop.f32.mrf.mxu0
    %v4053 = vpop.f32.mrf.mxu0
    %v4054 = vpop.f32.mrf.mxu0
    %4055 = vdwg.mxu0
    %4056 = vmatprep.subr.bf16.mxu0 0
    %4057 = vmatpush1.bf16.msra.mxu0 %v2967
    %4058 = vmatprep.subr.bf16.mxu0 0
    %4059 = vmatpush1.bf16.msra.mxu0 %v2966
    %4060 = vmatprep.subr.bf16.mxu0 0
    %4061 = vmatpush1.bf16.msra.mxu0 %v2965
    %4062 = vmatprep.subr.bf16.mxu0 0
    %4063 = vmatpush1.bf16.msra.mxu0 %v2964
    %4064 = vmatprep.subr.bf16.mxu0 0
    %4065 = vmatpush1.bf16.msra.mxu0 %v2963
    %4066 = vmatprep.subr.bf16.mxu0 0
    %4067 = vmatpush1.bf16.msra.mxu0 %v2962
    %4068 = vmatprep.subr.bf16.mxu0 0
    %4069 = vmatpush1.bf16.msra.mxu0 %v2961
    %4070 = vmatprep.subr.bf16.mxu0 0
    %4071 = vmatpush1.bf16.msra.mxu0 %v2960
    %4072 = vmatprep.subr.bf16.mxu0 0
    %4073 = vmatpush2.bf16.msra.mxu0 %v2975
    %4074 = vmatprep.subr.bf16.mxu0 0
    %4075 = vmatpush2.bf16.msra.mxu0 %v2974
    %4076 = vmatprep.subr.bf16.mxu0 0
    %4077 = vmatpush2.bf16.msra.mxu0 %v2973
    %4078 = vmatprep.subr.bf16.mxu0 0
    %4079 = vmatpush2.bf16.msra.mxu0 %v2972
    %4080 = vmatprep.subr.bf16.mxu0 0
    %4081 = vmatpush2.bf16.msra.mxu0 %v2971
    %4082 = vmatprep.subr.bf16.mxu0 0
    %4083 = vmatpush2.bf16.msra.mxu0 %v2970
    %4084 = vmatprep.subr.bf16.mxu0 0
    %4085 = vmatpush2.bf16.msra.mxu0 %v2969
    %4086 = vmatprep.subr.bf16.mxu0 0
    %4087 = vmatpush2.bf16.msra.mxu0 %v2968
    %4088 = vmatprep.mubr.bf16.mxu0 %v1021
    %4089 = vmatmul.mubr.bf16.gmra.mxu0 %v1019
    %v4090 = vpop.f32.mrf.mxu0
    %v4091 = vadd.f32 %v4051, %v4090
    %v4092 = vpop.f32.mrf.mxu0
    %v4093 = vpop.f32.mrf.mxu0
    %v4094 = vpop.f32.mrf.mxu0
    %4095 = vdwg.mxu0
    %4096 = vmatprep.subr.bf16.mxu0 0
    %4097 = vmatpush1.bf16.msra.mxu0 %v2983
    %4098 = vmatprep.subr.bf16.mxu0 0
    %4099 = vmatpush1.bf16.msra.mxu0 %v2982
    %4100 = vmatprep.subr.bf16.mxu0 0
    %4101 = vmatpush1.bf16.msra.mxu0 %v2981
    %4102 = vmatprep.subr.bf16.mxu0 0
    %4103 = vmatpush1.bf16.msra.mxu0 %v2980
    %4104 = vmatprep.subr.bf16.mxu0 0
    %4105 = vmatpush1.bf16.msra.mxu0 %v2979
    %4106 = vmatprep.subr.bf16.mxu0 0
    %4107 = vmatpush1.bf16.msra.mxu0 %v2978
    %4108 = vmatprep.subr.bf16.mxu0 0
    %4109 = vmatpush1.bf16.msra.mxu0 %v2977
    %4110 = vmatprep.subr.bf16.mxu0 0
    %4111 = vmatpush1.bf16.msra.mxu0 %v2976
    %4112 = vmatprep.subr.bf16.mxu0 0
    %4113 = vmatpush2.bf16.msra.mxu0 %v2991
    %4114 = vmatprep.subr.bf16.mxu0 0
    %4115 = vmatpush2.bf16.msra.mxu0 %v2990
    %4116 = vmatprep.subr.bf16.mxu0 0
    %4117 = vmatpush2.bf16.msra.mxu0 %v2989
    %4118 = vmatprep.subr.bf16.mxu0 0
    %4119 = vmatpush2.bf16.msra.mxu0 %v2988
    %4120 = vmatprep.subr.bf16.mxu0 0
    %4121 = vmatpush2.bf16.msra.mxu0 %v2987
    %4122 = vmatprep.subr.bf16.mxu0 0
    %4123 = vmatpush2.bf16.msra.mxu0 %v2986
    %4124 = vmatprep.subr.bf16.mxu0 0
    %4125 = vmatpush2.bf16.msra.mxu0 %v2985
    %4126 = vmatprep.subr.bf16.mxu0 0
    %4127 = vmatpush2.bf16.msra.mxu0 %v2984
    %4128 = vmatprep.mubr.bf16.mxu0 %v1018
    %4129 = vmatmul.mubr.bf16.gmra.mxu0 %v1004
    %v4130 = vpop.f32.mrf.mxu0
    %v4131 = vadd.f32 %v4091, %v4130
    %v4132 = vpop.f32.mrf.mxu0
    %v4133 = vpop.f32.mrf.mxu0
    %v4134 = vpop.f32.mrf.mxu0
    %4135 = vdwg.mxu0
    %4136 = vmatprep.subr.bf16.mxu0 0
    %4137 = vmatpush1.bf16.msra.mxu0 %v2999
    %4138 = vmatprep.subr.bf16.mxu0 0
    %4139 = vmatpush1.bf16.msra.mxu0 %v2998
    %4140 = vmatprep.subr.bf16.mxu0 0
    %4141 = vmatpush1.bf16.msra.mxu0 %v2997
    %4142 = vmatprep.subr.bf16.mxu0 0
    %4143 = vmatpush1.bf16.msra.mxu0 %v2996
    %4144 = vmatprep.subr.bf16.mxu0 0
    %4145 = vmatpush1.bf16.msra.mxu0 %v2995
    %4146 = vmatprep.subr.bf16.mxu0 0
    %4147 = vmatpush1.bf16.msra.mxu0 %v2994
    %4148 = vmatprep.subr.bf16.mxu0 0
    %4149 = vmatpush1.bf16.msra.mxu0 %v2993
    %4150 = vmatprep.subr.bf16.mxu0 0
    %4151 = vmatpush1.bf16.msra.mxu0 %v2992
    %4152 = vmatprep.subr.bf16.mxu0 0
    %4153 = vmatpush2.bf16.msra.mxu0 %v3007
    %4154 = vmatprep.subr.bf16.mxu0 0
    %4155 = vmatpush2.bf16.msra.mxu0 %v3006
    %4156 = vmatprep.subr.bf16.mxu0 0
    %4157 = vmatpush2.bf16.msra.mxu0 %v3005
    %4158 = vmatprep.subr.bf16.mxu0 0
    %4159 = vmatpush2.bf16.msra.mxu0 %v3004
    %4160 = vmatprep.subr.bf16.mxu0 0
    %4161 = vmatpush2.bf16.msra.mxu0 %v3003
    %4162 = vmatprep.subr.bf16.mxu0 0
    %4163 = vmatpush2.bf16.msra.mxu0 %v3002
    %4164 = vmatprep.subr.bf16.mxu0 0
    %4165 = vmatpush2.bf16.msra.mxu0 %v3001
    %4166 = vmatprep.subr.bf16.mxu0 0
    %4167 = vmatpush2.bf16.msra.mxu0 %v3000
    %4168 = vmatprep.mubr.bf16.mxu0 %v1022
    %4169 = vmatmul.mubr.bf16.gmra.mxu0 %v1020
    %v4170 = vpop.f32.mrf.mxu0
    %v4171 = vadd.f32 %v4131, %v4170
    %v4172 = vpop.f32.mrf.mxu0
    %v4173 = vpop.f32.mrf.mxu0
    %v4174 = vpop.f32.mrf.mxu0
    %4175 = vdwg.mxu0
    %4176 = vmatprep.subr.bf16.mxu0 0
    %4177 = vmatpush1.bf16.msra.mxu0 %v3015
    %4178 = vmatprep.subr.bf16.mxu0 0
    %4179 = vmatpush1.bf16.msra.mxu0 %v3014
    %4180 = vmatprep.subr.bf16.mxu0 0
    %4181 = vmatpush1.bf16.msra.mxu0 %v3013
    %4182 = vmatprep.subr.bf16.mxu0 0
    %4183 = vmatpush1.bf16.msra.mxu0 %v3012
    %4184 = vmatprep.subr.bf16.mxu0 0
    %4185 = vmatpush1.bf16.msra.mxu0 %v3011
    %4186 = vmatprep.subr.bf16.mxu0 0
    %4187 = vmatpush1.bf16.msra.mxu0 %v3010
    %4188 = vmatprep.subr.bf16.mxu0 0
    %4189 = vmatpush1.bf16.msra.mxu0 %v3009
    %4190 = vmatprep.subr.bf16.mxu0 0
    %4191 = vmatpush1.bf16.msra.mxu0 %v3008
    %4192 = vmatprep.subr.bf16.mxu0 0
    %4193 = vmatpush2.bf16.msra.mxu0 %v3023
    %4194 = vmatprep.subr.bf16.mxu0 0
    %4195 = vmatpush2.bf16.msra.mxu0 %v3022
    %4196 = vmatprep.subr.bf16.mxu0 0
    %4197 = vmatpush2.bf16.msra.mxu0 %v3021
    %4198 = vmatprep.subr.bf16.mxu0 0
    %4199 = vmatpush2.bf16.msra.mxu0 %v3020
    %4200 = vmatprep.subr.bf16.mxu0 0
    %4201 = vmatpush2.bf16.msra.mxu0 %v3019
    %4202 = vmatprep.subr.bf16.mxu0 0
    %4203 = vmatpush2.bf16.msra.mxu0 %v3018
    %4204 = vmatprep.subr.bf16.mxu0 0
    %4205 = vmatpush2.bf16.msra.mxu0 %v3017
    %4206 = vmatprep.subr.bf16.mxu0 0
    %4207 = vmatpush2.bf16.msra.mxu0 %v3016
    %4208 = vmatprep.mubr.bf16.mxu0 %v1060
    %4209 = vmatmul.mubr.bf16.gmra.mxu0 %v1046
    %v4210 = vpop.f32.mrf.mxu0
    %v4211 = vadd.f32 %v4171, %v4210
    %v4212 = vpop.f32.mrf.mxu0
    %v4213 = vpop.f32.mrf.mxu0
    %v4214 = vpop.f32.mrf.mxu0
    %4215 = vdwg.mxu0
    %4216 = vmatprep.subr.bf16.mxu0 0
    %4217 = vmatpush1.bf16.msra.mxu0 %v3031
    %4218 = vmatprep.subr.bf16.mxu0 0
    %4219 = vmatpush1.bf16.msra.mxu0 %v3030
    %4220 = vmatprep.subr.bf16.mxu0 0
    %4221 = vmatpush1.bf16.msra.mxu0 %v3029
    %4222 = vmatprep.subr.bf16.mxu0 0
    %4223 = vmatpush1.bf16.msra.mxu0 %v3028
    %4224 = vmatprep.subr.bf16.mxu0 0
    %4225 = vmatpush1.bf16.msra.mxu0 %v3027
    %4226 = vmatprep.subr.bf16.mxu0 0
    %4227 = vmatpush1.bf16.msra.mxu0 %v3026
    %4228 = vmatprep.subr.bf16.mxu0 0
    %4229 = vmatpush1.bf16.msra.mxu0 %v3025
    %4230 = vmatprep.subr.bf16.mxu0 0
    %4231 = vmatpush1.bf16.msra.mxu0 %v3024
    %4232 = vmatprep.subr.bf16.mxu0 0
    %4233 = vmatpush2.bf16.msra.mxu0 %v3039
    %4234 = vmatprep.subr.bf16.mxu0 0
    %4235 = vmatpush2.bf16.msra.mxu0 %v3038
    %4236 = vmatprep.subr.bf16.mxu0 0
    %4237 = vmatpush2.bf16.msra.mxu0 %v3037
    %4238 = vmatprep.subr.bf16.mxu0 0
    %4239 = vmatpush2.bf16.msra.mxu0 %v3036
    %4240 = vmatprep.subr.bf16.mxu0 0
    %4241 = vmatpush2.bf16.msra.mxu0 %v3035
    %4242 = vmatprep.subr.bf16.mxu0 0
    %4243 = vmatpush2.bf16.msra.mxu0 %v3034
    %4244 = vmatprep.subr.bf16.mxu0 0
    %4245 = vmatpush2.bf16.msra.mxu0 %v3033
    %4246 = vmatprep.subr.bf16.mxu0 0
    %4247 = vmatpush2.bf16.msra.mxu0 %v3032
    %4248 = vmatprep.mubr.bf16.mxu0 %v1070
    %4249 = vmatmul.mubr.bf16.gmra.mxu0 %v1068
    %v4250 = vpop.f32.mrf.mxu0
    %v4251 = vadd.f32 %v4211, %v4250
    %v4252 = vpop.f32.mrf.mxu0
    %v4253 = vpop.f32.mrf.mxu0
    %v4254 = vpop.f32.mrf.mxu0
    %4255 = vdwg.mxu0
    %4256 = vmatprep.subr.bf16.mxu0 0
    %4257 = vmatpush1.bf16.msra.mxu0 %v3047
    %4258 = vmatprep.subr.bf16.mxu0 0
    %4259 = vmatpush1.bf16.msra.mxu0 %v3046
    %4260 = vmatprep.subr.bf16.mxu0 0
    %4261 = vmatpush1.bf16.msra.mxu0 %v3045
    %4262 = vmatprep.subr.bf16.mxu0 0
    %4263 = vmatpush1.bf16.msra.mxu0 %v3044
    %4264 = vmatprep.subr.bf16.mxu0 0
    %4265 = vmatpush1.bf16.msra.mxu0 %v3043
    %4266 = vmatprep.subr.bf16.mxu0 0
    %4267 = vmatpush1.bf16.msra.mxu0 %v3042
    %4268 = vmatprep.subr.bf16.mxu0 0
    %4269 = vmatpush1.bf16.msra.mxu0 %v3041
    %4270 = vmatprep.subr.bf16.mxu0 0
    %4271 = vmatpush1.bf16.msra.mxu0 %v3040
    %4272 = vmatprep.subr.bf16.mxu0 0
    %4273 = vmatpush2.bf16.msra.mxu0 %v3055
    %4274 = vmatprep.subr.bf16.mxu0 0
    %4275 = vmatpush2.bf16.msra.mxu0 %v3054
    %4276 = vmatprep.subr.bf16.mxu0 0
    %4277 = vmatpush2.bf16.msra.mxu0 %v3053
    %4278 = vmatprep.subr.bf16.mxu0 0
    %4279 = vmatpush2.bf16.msra.mxu0 %v3052
    %4280 = vmatprep.subr.bf16.mxu0 0
    %4281 = vmatpush2.bf16.msra.mxu0 %v3051
    %4282 = vmatprep.subr.bf16.mxu0 0
    %4283 = vmatpush2.bf16.msra.mxu0 %v3050
    %4284 = vmatprep.subr.bf16.mxu0 0
    %4285 = vmatpush2.bf16.msra.mxu0 %v3049
    %4286 = vmatprep.subr.bf16.mxu0 0
    %4287 = vmatpush2.bf16.msra.mxu0 %v3048
    %4288 = vmatprep.mubr.bf16.mxu0 %v1067
    %4289 = vmatmul.mubr.bf16.gmra.mxu0 %v1053
    %v4290 = vpop.f32.mrf.mxu0
    %v4291 = vadd.f32 %v4251, %v4290
    %v4292 = vpop.f32.mrf.mxu0
    %v4293 = vpop.f32.mrf.mxu0
    %v4294 = vpop.f32.mrf.mxu0
    %4295 = vdwg.mxu0
    %4296 = vmatprep.subr.bf16.mxu0 0
    %4297 = vmatpush1.bf16.msra.mxu0 %v3063
    %4298 = vmatprep.subr.bf16.mxu0 0
    %4299 = vmatpush1.bf16.msra.mxu0 %v3062
    %4300 = vmatprep.subr.bf16.mxu0 0
    %4301 = vmatpush1.bf16.msra.mxu0 %v3061
    %4302 = vmatprep.subr.bf16.mxu0 0
    %4303 = vmatpush1.bf16.msra.mxu0 %v3060
    %4304 = vmatprep.subr.bf16.mxu0 0
    %4305 = vmatpush1.bf16.msra.mxu0 %v3059
    %4306 = vmatprep.subr.bf16.mxu0 0
    %4307 = vmatpush1.bf16.msra.mxu0 %v3058
    %4308 = vmatprep.subr.bf16.mxu0 0
    %4309 = vmatpush1.bf16.msra.mxu0 %v3057
    %4310 = vmatprep.subr.bf16.mxu0 0
    %4311 = vmatpush1.bf16.msra.mxu0 %v3056
    %4312 = vmatprep.subr.bf16.mxu0 0
    %4313 = vmatpush2.bf16.msra.mxu0 %v3071
    %4314 = vmatprep.subr.bf16.mxu0 0
    %4315 = vmatpush2.bf16.msra.mxu0 %v3070
    %4316 = vmatprep.subr.bf16.mxu0 0
    %4317 = vmatpush2.bf16.msra.mxu0 %v3069
    %4318 = vmatprep.subr.bf16.mxu0 0
    %4319 = vmatpush2.bf16.msra.mxu0 %v3068
    %4320 = vmatprep.subr.bf16.mxu0 0
    %4321 = vmatpush2.bf16.msra.mxu0 %v3067
    %4322 = vmatprep.subr.bf16.mxu0 0
    %4323 = vmatpush2.bf16.msra.mxu0 %v3066
    %4324 = vmatprep.subr.bf16.mxu0 0
    %4325 = vmatpush2.bf16.msra.mxu0 %v3065
    %4326 = vmatprep.subr.bf16.mxu0 0
    %4327 = vmatpush2.bf16.msra.mxu0 %v3064
    %4328 = vmatprep.mubr.bf16.mxu0 %v1071
    %4329 = vmatmul.mubr.bf16.gmra.mxu0 %v1069
    %v4330 = vpop.f32.mrf.mxu0
    %v4331 = vadd.f32 %v4291, %v4330
    %v4332 = vpop.f32.mrf.mxu0
    %v4333 = vpop.f32.mrf.mxu0
    %v4334 = vpop.f32.mrf.mxu0
    %4335 = vdwg.mxu0
    %4336 = vmatprep.subr.bf16.mxu0 0
    %4337 = vmatpush1.bf16.msra.mxu0 %v3079
    %4338 = vmatprep.subr.bf16.mxu0 0
    %4339 = vmatpush1.bf16.msra.mxu0 %v3078
    %4340 = vmatprep.subr.bf16.mxu0 0
    %4341 = vmatpush1.bf16.msra.mxu0 %v3077
    %4342 = vmatprep.subr.bf16.mxu0 0
    %4343 = vmatpush1.bf16.msra.mxu0 %v3076
    %4344 = vmatprep.subr.bf16.mxu0 0
    %4345 = vmatpush1.bf16.msra.mxu0 %v3075
    %4346 = vmatprep.subr.bf16.mxu0 0
    %4347 = vmatpush1.bf16.msra.mxu0 %v3074
    %4348 = vmatprep.subr.bf16.mxu0 0
    %4349 = vmatpush1.bf16.msra.mxu0 %v3073
    %4350 = vmatprep.subr.bf16.mxu0 0
    %4351 = vmatpush1.bf16.msra.mxu0 %v3072
    %4352 = vmatprep.subr.bf16.mxu0 0
    %4353 = vmatpush2.bf16.msra.mxu0 %v3087
    %4354 = vmatprep.subr.bf16.mxu0 0
    %4355 = vmatpush2.bf16.msra.mxu0 %v3086
    %4356 = vmatprep.subr.bf16.mxu0 0
    %4357 = vmatpush2.bf16.msra.mxu0 %v3085
    %4358 = vmatprep.subr.bf16.mxu0 0
    %4359 = vmatpush2.bf16.msra.mxu0 %v3084
    %4360 = vmatprep.subr.bf16.mxu0 0
    %4361 = vmatpush2.bf16.msra.mxu0 %v3083
    %4362 = vmatprep.subr.bf16.mxu0 0
    %4363 = vmatpush2.bf16.msra.mxu0 %v3082
    %4364 = vmatprep.subr.bf16.mxu0 0
    %4365 = vmatpush2.bf16.msra.mxu0 %v3081
    %4366 = vmatprep.subr.bf16.mxu0 0
    %4367 = vmatpush2.bf16.msra.mxu0 %v3080
    %4368 = vmatprep.mubr.bf16.mxu0 %v1109
    %4369 = vmatmul.mubr.bf16.gmra.mxu0 %v1095
    %v4370 = vpop.f32.mrf.mxu0
    %v4371 = vadd.f32 %v4331, %v4370
    %v4372 = vpop.f32.mrf.mxu0
    %v4373 = vpop.f32.mrf.mxu0
    %v4374 = vpop.f32.mrf.mxu0
    %4375 = vdwg.mxu0
    %4376 = vmatprep.subr.bf16.mxu0 0
    %4377 = vmatpush1.bf16.msra.mxu0 %v3095
    %4378 = vmatprep.subr.bf16.mxu0 0
    %4379 = vmatpush1.bf16.msra.mxu0 %v3094
    %4380 = vmatprep.subr.bf16.mxu0 0
    %4381 = vmatpush1.bf16.msra.mxu0 %v3093
    %4382 = vmatprep.subr.bf16.mxu0 0
    %4383 = vmatpush1.bf16.msra.mxu0 %v3092
    %4384 = vmatprep.subr.bf16.mxu0 0
    %4385 = vmatpush1.bf16.msra.mxu0 %v3091
    %4386 = vmatprep.subr.bf16.mxu0 0
    %4387 = vmatpush1.bf16.msra.mxu0 %v3090
    %4388 = vmatprep.subr.bf16.mxu0 0
    %4389 = vmatpush1.bf16.msra.mxu0 %v3089
    %4390 = vmatprep.subr.bf16.mxu0 0
    %4391 = vmatpush1.bf16.msra.mxu0 %v3088
    %4392 = vmatprep.subr.bf16.mxu0 0
    %4393 = vmatpush2.bf16.msra.mxu0 %v3103
    %4394 = vmatprep.subr.bf16.mxu0 0
    %4395 = vmatpush2.bf16.msra.mxu0 %v3102
    %4396 = vmatprep.subr.bf16.mxu0 0
    %4397 = vmatpush2.bf16.msra.mxu0 %v3101
    %4398 = vmatprep.subr.bf16.mxu0 0
    %4399 = vmatpush2.bf16.msra.mxu0 %v3100
    %4400 = vmatprep.subr.bf16.mxu0 0
    %4401 = vmatpush2.bf16.msra.mxu0 %v3099
    %4402 = vmatprep.subr.bf16.mxu0 0
    %4403 = vmatpush2.bf16.msra.mxu0 %v3098
    %4404 = vmatprep.subr.bf16.mxu0 0
    %4405 = vmatpush2.bf16.msra.mxu0 %v3097
    %4406 = vmatprep.subr.bf16.mxu0 0
    %4407 = vmatpush2.bf16.msra.mxu0 %v3096
    %4408 = vmatprep.mubr.bf16.mxu0 %v1119
    %4409 = vmatmul.mubr.bf16.gmra.mxu0 %v1117
    %v4410 = vpop.f32.mrf.mxu0
    %v4411 = vadd.f32 %v4371, %v4410
    %v4412 = vpop.f32.mrf.mxu0
    %v4413 = vpop.f32.mrf.mxu0
    %v4414 = vpop.f32.mrf.mxu0
    %4415 = vdwg.mxu0
    %4416 = vmatprep.subr.bf16.mxu0 0
    %4417 = vmatpush1.bf16.msra.mxu0 %v3111
    %4418 = vmatprep.subr.bf16.mxu0 0
    %4419 = vmatpush1.bf16.msra.mxu0 %v3110
    %4420 = vmatprep.subr.bf16.mxu0 0
    %4421 = vmatpush1.bf16.msra.mxu0 %v3109
    %4422 = vmatprep.subr.bf16.mxu0 0
    %4423 = vmatpush1.bf16.msra.mxu0 %v3108
    %4424 = vmatprep.subr.bf16.mxu0 0
    %4425 = vmatpush1.bf16.msra.mxu0 %v3107
    %4426 = vmatprep.subr.bf16.mxu0 0
    %4427 = vmatpush1.bf16.msra.mxu0 %v3106
    %4428 = vmatprep.subr.bf16.mxu0 0
    %4429 = vmatpush1.bf16.msra.mxu0 %v3105
    %4430 = vmatprep.subr.bf16.mxu0 0
    %4431 = vmatpush1.bf16.msra.mxu0 %v3104
    %4432 = vmatprep.subr.bf16.mxu0 0
    %4433 = vmatpush2.bf16.msra.mxu0 %v3119
    %4434 = vmatprep.subr.bf16.mxu0 0
    %4435 = vmatpush2.bf16.msra.mxu0 %v3118
    %4436 = vmatprep.subr.bf16.mxu0 0
    %4437 = vmatpush2.bf16.msra.mxu0 %v3117
    %4438 = vmatprep.subr.bf16.mxu0 0
    %4439 = vmatpush2.bf16.msra.mxu0 %v3116
    %4440 = vmatprep.subr.bf16.mxu0 0
    %4441 = vmatpush2.bf16.msra.mxu0 %v3115
    %4442 = vmatprep.subr.bf16.mxu0 0
    %4443 = vmatpush2.bf16.msra.mxu0 %v3114
    %4444 = vmatprep.subr.bf16.mxu0 0
    %4445 = vmatpush2.bf16.msra.mxu0 %v3113
    %4446 = vmatprep.subr.bf16.mxu0 0
    %4447 = vmatpush2.bf16.msra.mxu0 %v3112
    %4448 = vmatprep.mubr.bf16.mxu0 %v1116
    %4449 = vmatmul.mubr.bf16.gmra.mxu0 %v1102
    %v4450 = vpop.f32.mrf.mxu0
    %v4451 = vadd.f32 %v4411, %v4450
    %v4452 = vpop.f32.mrf.mxu0
    %v4453 = vpop.f32.mrf.mxu0
    %v4454 = vpop.f32.mrf.mxu0
    %4455 = vdwg.mxu0
    %4456 = vmatprep.subr.bf16.mxu0 0
    %4457 = vmatpush1.bf16.msra.mxu0 %v3127
    %4458 = vmatprep.subr.bf16.mxu0 0
    %4459 = vmatpush1.bf16.msra.mxu0 %v3126
    %4460 = vmatprep.subr.bf16.mxu0 0
    %4461 = vmatpush1.bf16.msra.mxu0 %v3125
    %4462 = vmatprep.subr.bf16.mxu0 0
    %4463 = vmatpush1.bf16.msra.mxu0 %v3124
    %4464 = vmatprep.subr.bf16.mxu0 0
    %4465 = vmatpush1.bf16.msra.mxu0 %v3123
    %4466 = vmatprep.subr.bf16.mxu0 0
    %4467 = vmatpush1.bf16.msra.mxu0 %v3122
    %4468 = vmatprep.subr.bf16.mxu0 0
    %4469 = vmatpush1.bf16.msra.mxu0 %v3121
    %4470 = vmatprep.subr.bf16.mxu0 0
    %4471 = vmatpush1.bf16.msra.mxu0 %v3120
    %4472 = vmatprep.subr.bf16.mxu0 0
    %4473 = vmatpush2.bf16.msra.mxu0 %v3135
    %4474 = vmatprep.subr.bf16.mxu0 0
    %4475 = vmatpush2.bf16.msra.mxu0 %v3134
    %4476 = vmatprep.subr.bf16.mxu0 0
    %4477 = vmatpush2.bf16.msra.mxu0 %v3133
    %4478 = vmatprep.subr.bf16.mxu0 0
    %4479 = vmatpush2.bf16.msra.mxu0 %v3132
    %4480 = vmatprep.subr.bf16.mxu0 0
    %4481 = vmatpush2.bf16.msra.mxu0 %v3131
    %4482 = vmatprep.subr.bf16.mxu0 0
    %4483 = vmatpush2.bf16.msra.mxu0 %v3130
    %4484 = vmatprep.subr.bf16.mxu0 0
    %4485 = vmatpush2.bf16.msra.mxu0 %v3129
    %4486 = vmatprep.subr.bf16.mxu0 0
    %4487 = vmatpush2.bf16.msra.mxu0 %v3128
    %4488 = vmatprep.mubr.bf16.mxu0 %v1120
    %4489 = vmatmul.mubr.bf16.gmra.mxu0 %v1118
    %v4490 = vpop.f32.mrf.mxu0
    %v4491 = vadd.f32 %v4451, %v4490
    %v4492 = vpop.f32.mrf.mxu0
    %v4493 = vpop.f32.mrf.mxu0
    %v4494 = vpop.f32.mrf.mxu0
    %4495 = vdwg.mxu0
    %4496 = vmatprep.subr.bf16.mxu0 0
    %4497 = vmatpush1.bf16.msra.mxu0 %v3143
    %4498 = vmatprep.subr.bf16.mxu0 0
    %4499 = vmatpush1.bf16.msra.mxu0 %v3142
    %4500 = vmatprep.subr.bf16.mxu0 0
    %4501 = vmatpush1.bf16.msra.mxu0 %v3141
    %4502 = vmatprep.subr.bf16.mxu0 0
    %4503 = vmatpush1.bf16.msra.mxu0 %v3140
    %4504 = vmatprep.subr.bf16.mxu0 0
    %4505 = vmatpush1.bf16.msra.mxu0 %v3139
    %4506 = vmatprep.subr.bf16.mxu0 0
    %4507 = vmatpush1.bf16.msra.mxu0 %v3138
    %4508 = vmatprep.subr.bf16.mxu0 0
    %4509 = vmatpush1.bf16.msra.mxu0 %v3137
    %4510 = vmatprep.subr.bf16.mxu0 0
    %4511 = vmatpush1.bf16.msra.mxu0 %v3136
    %4512 = vmatprep.subr.bf16.mxu0 0
    %4513 = vmatpush2.bf16.msra.mxu0 0
    %4514 = vmatprep.subr.bf16.mxu0 0
    %4515 = vmatpush2.bf16.msra.mxu0 0
    %4516 = vmatprep.subr.bf16.mxu0 0
    %4517 = vmatpush2.bf16.msra.mxu0 0
    %4518 = vmatprep.subr.bf16.mxu0 0
    %4519 = vmatpush2.bf16.msra.mxu0 0
    %4520 = vmatprep.subr.bf16.mxu0 0
    %4521 = vmatpush2.bf16.msra.mxu0 0
    %4522 = vmatprep.subr.bf16.mxu0 0
    %4523 = vmatpush2.bf16.msra.mxu0 0
    %4524 = vmatprep.subr.bf16.mxu0 0
    %4525 = vmatpush2.bf16.msra.mxu0 0
    %4526 = vmatprep.subr.bf16.mxu0 0
    %4527 = vmatpush2.bf16.msra.mxu0 0
    %4528 = vmatprep.mubr.bf16.mxu0 0
    %4529 = vmatmul.mubr.bf16.gmra.mxu0 %v1134
    %v4530 = vpop.f32.mrf.mxu0
    %v4531 = vadd.f32 %v4491, %v4530
    %v4532 = vpop.f32.mrf.mxu0
    %v4533 = vpop.f32.mrf.mxu0
    %v4534 = vpop.f32.mrf.mxu0
    %4535 = vdwg.mxu0
    %v4536 = vmax.f32 %v4531, 0.0
    %v4537 = vpack.c.bf16 %v4536, %v4536
    %v4538 = vld [vmem:[%s3] sm:$0xf]
    %v4539 = vld [vmem:[%s3 + $0x4] sm:$0xf]
    %v4540 = vld [vmem:[%s3 + $0x8] sm:$0xf]
    %v4541 = vld [vmem:[%s3 + $0xc] sm:$0xf]
    %v4542 = vld [vmem:[%s3 + $0x10] sm:$0xf]
    %v4543 = vld [vmem:[%s3 + $0x14] sm:$0xf]
    %v4544 = vld [vmem:[%s3 + $0x18] sm:$0xf]
    %v4545 = vld [vmem:[%s3 + $0x1c] sm:$0xf]
    %v4546 = vld [vmem:[%s3 + $0x20] sm:$0xf]
    %v4547 = vld [vmem:[%s3 + $0x24] sm:$0xf]
    %v4548 = vld [vmem:[%s3 + $0x28] sm:$0xf]
    %v4549 = vld [vmem:[%s3 + $0x2c] sm:$0xf]
    %v4550 = vld [vmem:[%s3 + $0x30] sm:$0xf]
    %v4551 = vld [vmem:[%s3 + $0x34] sm:$0xf]
    %v4552 = vld [vmem:[%s3 + $0x38] sm:$0xf]
    %v4553 = vld [vmem:[%s3 + $0x3c] sm:$0xf]
    %v4554 = vld [vmem:[%s4] sm:$0x1]
    %v4556 = vlaneseq
    %v4557 = vshrl.u32 %v4556, 7
    %v4558 = vsub.s32 0, %v4557
    %v4559 = vrot.slane %v4554, %v4558
    %v4577 = vunpack.c.l.b16 %v4538
    %v4578 = vunpack.c.l.b16 %v4539
    %v4579 = vunpack.c.l.b16 %v4540
    %v4580 = vunpack.c.l.b16 %v4541
    %v4581 = vunpack.c.l.b16 %v4542
    %v4582 = vunpack.c.l.b16 %v4543
    %v4583 = vunpack.c.l.b16 %v4544
    %v4584 = vunpack.c.l.b16 %v4545
    %v4585 = vunpack.c.l.b16 %v4546
    %v4586 = vunpack.c.l.b16 %v4547
    %v4587 = vunpack.c.l.b16 %v4548
    %v4588 = vunpack.c.l.b16 %v4549
    %v4589 = vunpack.c.l.b16 %v4550
    %v4590 = vunpack.c.l.b16 %v4551
    %v4591 = vunpack.c.l.b16 %v4552
    %v4592 = vunpack.c.l.b16 %v4553
    %v4593 = vpack.c.b16 %v4578, %v4577
    %v4594 = vpack.c.b16 %v4580, %v4579
    %v4595 = vpack.c.b16 %v4582, %v4581
    %v4596 = vpack.c.b16 %v4584, %v4583
    %v4597 = vpack.c.b16 %v4586, %v4585
    %v4598 = vpack.c.b16 %v4588, %v4587
    %v4599 = vpack.c.b16 %v4590, %v4589
    %v4600 = vpack.c.b16 %v4592, %v4591
    %4609 = vmatprep.subr.bf16.mxu0 0
    %4610 = vmatpush1.bf16.msra.mxu0 %v4600
    %4611 = vmatprep.subr.bf16.mxu0 0
    %4612 = vmatpush1.bf16.msra.mxu0 %v4599
    %4613 = vmatprep.subr.bf16.mxu0 0
    %4614 = vmatpush1.bf16.msra.mxu0 %v4598
    %4615 = vmatprep.subr.bf16.mxu0 0
    %4616 = vmatpush1.bf16.msra.mxu0 %v4597
    %4617 = vmatprep.subr.bf16.mxu0 0
    %4618 = vmatpush1.bf16.msra.mxu0 %v4596
    %4619 = vmatprep.subr.bf16.mxu0 0
    %4620 = vmatpush1.bf16.msra.mxu0 %v4595
    %4621 = vmatprep.subr.bf16.mxu0 0
    %4622 = vmatpush1.bf16.msra.mxu0 %v4594
    %4623 = vmatprep.subr.bf16.mxu0 0
    %4624 = vmatpush1.bf16.msra.mxu0 %v4593
    %4625 = vmatprep.subr.bf16.mxu0 0
    %4626 = vmatpush2.bf16.msra.mxu0 0
    %4627 = vmatprep.subr.bf16.mxu0 0
    %4628 = vmatpush2.bf16.msra.mxu0 0
    %4629 = vmatprep.subr.bf16.mxu0 0
    %4630 = vmatpush2.bf16.msra.mxu0 0
    %4631 = vmatprep.subr.bf16.mxu0 0
    %4632 = vmatpush2.bf16.msra.mxu0 0
    %4633 = vmatprep.subr.bf16.mxu0 0
    %4634 = vmatpush2.bf16.msra.mxu0 0
    %4635 = vmatprep.subr.bf16.mxu0 0
    %4636 = vmatpush2.bf16.msra.mxu0 0
    %4637 = vmatprep.subr.bf16.mxu0 0
    %4638 = vmatpush2.bf16.msra.mxu0 0
    %4639 = vmatprep.subr.bf16.mxu0 0
    %4640 = vmatpush2.bf16.msra.mxu0 0
    %4641 = vmatprep.mubr.bf16.mxu0 0
    %4642 = vmatmul.mubr.bf16.gmra.mxu0 %v4537
    %v4643 = vpop.f32.mrf.mxu0
    %v4644 = vadd.f32 %v4559, %v4643
    %v4645 = vpop.f32.mrf.mxu0
    %v4646 = vpop.f32.mrf.mxu0
    %v4647 = vpop.f32.mrf.mxu0
    %4648 = vdwg.mxu0
    %4649 = vst [vmem:[#allocation2] sm:$0x3] %v4644
    // Predicated region
    $region22: #{forward.5} parent=1 // pred_check
      _
    $region23: #{forward.5} parent=1 // pred_check_branch
      %4651 = sbr.rel (0) target = $region25
    $region24: #{forward.5} parent=1 // pred_region
      %s4653 = ssub.s32 32, 32
      %4654 = vsyncadd [#allocation3], %s4653
      %s4656 = sshll.u32 [#allocation2], 4
      %s4657 = int_to_ptr.vmem [resolvable:$true] %s4656
      %4659 = dma.vmem_to_hbm [thread:$0]  %s4657, 32, %s5, [#allocation3]
    $region25: #{forward.5} parent=1 // pred_fallthru
      _
    // Predicated region
    $region26: #{forward.5} parent=1 // pred_check
      _
    $region27: #{forward.5} parent=1 // pred_check_branch
      %4661 = sbr.rel (0) target = $region29
    $region28: #{forward.5} parent=1 // pred_region
      %4662 = dma.done [#allocation3], 32
    $region29: #{forward.5} parent=1 // pred_fallthru
      _
    %4663 = vsyncpa [#allocation3], 1

</llo_original>
